<compile_context>
chip_gen: v7x
topology: tpu7x:2x2x1
jax: 0.10.0
libtpu: 0.0.40
codegen_flags: <defaults>
</compile_context>

<pallas_src>
import functools
import numpy as np
import jax
import jax.numpy as jnp
from jax import lax
from jax.experimental import pallas as pl
from jax.experimental.pallas import tpu as pltpu

NEG_SLOPE = 0.01                 # torch.nn.LeakyReLU() default
INV_SQRT2 = float(1.0 / np.sqrt(2.0))


def _leaky_relu(x):
    return jnp.where(x >= 0, x, NEG_SLOPE * x)


def _encoder_block_kernel(x_ref, w1_ref, b1_ref, w2_ref, b2_ref, *rest,
                          use_residual, nb, H, W, Cin, Cout):
    # x_ref  : (nb, H+2, W+2, Cin)  zero-padded NHWC input block
    # w1_ref : (9, Cin, Cout)       3x3 conv1 taps, tap index t = 3*dy + dx
    # w2_ref : (9, Cout, Cout)      3x3 conv2 taps
    # b*_ref : (1, Cout)            biases (f32)
    # wr_ref : (Cin, Cout), br_ref : (1, Cout)  (only if use_residual)
    # y_ref  : (nb, Cout, Ho*Wo)    lane-dense output block
    # h1p_ref: (nb, H+2, W+2, Cout) f32 scratch holding zero-padded conv1 output
    # rs_ref : (nb*Ho*W, Cout)      f32 scratch holding H-direction pair sums
    if use_residual:
        wr_ref, br_ref, y_ref, h1p_ref, rs_ref = rest
    else:
        y_ref, h1p_ref, rs_ref = rest

    f32 = jnp.float32
    cdt = w1_ref.dtype                    # MXU compute dtype (f32 or bf16)
    Ho, Wo = H // 2, W // 2
    M = nb * H * W                        # matmul M dimension (all pixels in block)
    Mo = nb * Ho * Wo

    # ---------------- conv1 (3x3, stride 1, pad 1) + LeakyReLU ----------------
    acc1 = jnp.zeros((M, Cout), f32)
    for t in range(9):
        dy, dx = t // 3, t % 3
        v = x_ref[:, dy:dy + H, dx:dx + W, :].reshape(M, Cin).astype(cdt)
        acc1 = acc1 + jnp.dot(v, w1_ref[t], preferred_element_type=f32)
    h1 = _leaky_relu(acc1 + b1_ref[...])                       # (M, Cout) f32

    # ------- zero-pad h1 for conv2: border-only zero + interior store -------
    # (interior is fully overwritten every step; border is re-zeroed every step
    #  so the kernel is safe under megacore grid sharding with per-core scratch)
    h1p_ref[:, 0, :, :] = jnp.zeros((nb, W + 2, Cout), f32)
    h1p_ref[:, H + 1, :, :] = jnp.zeros((nb, W + 2, Cout), f32)
    h1p_ref[:, :, 0:1, :] = jnp.zeros((nb, H + 2, 1, Cout), f32)
    h1p_ref[:, :, W + 1:W + 2, :] = jnp.zeros((nb, H + 2, 1, Cout), f32)
    h1p_ref[:, 1:H + 1, 1:W + 1, :] = h1.reshape(nb, H, W, Cout)

    # ---------------- conv2 (3x3, stride 1, pad 1) + LeakyReLU ----------------
    acc2 = jnp.zeros((M, Cout), f32)
    for t in range(9):
        dy, dx = t // 3, t % 3
        v = h1p_ref[:, dy:dy + H, dx:dx + W, :].reshape(M, Cout).astype(cdt)
        acc2 = acc2 + jnp.dot(v, w2_ref[t], preferred_element_type=f32)
    h2 = _leaky_relu(acc2 + b2_ref[...])                       # (M, Cout) f32

    # -------- optional 1x1 residual, folded in BEFORE the (linear) pool --------
    if use_residual:
        xc = x_ref[:, 1:H + 1, 1:W + 1, :].reshape(M, Cin).astype(cdt)
        r = _leaky_relu(jnp.dot(xc, wr_ref[...], preferred_element_type=f32)
                        + br_ref[...])
        h2 = h2 + r
        scale = 0.25 * INV_SQRT2          # avg-pool * 1/sqrt(2), applied once
    else:
        scale = 0.25

    # ---- AvgPool2d(2,2) on the VPU: H-pool in registers, W-pool via strided ----
    # ---- sublane reads of a small VMEM scratch (no pooling matrix, no MXU).  ----
    h5 = h2.reshape(nb, Ho, 2, W, Cout)
    rows = h5[:, :, 0] + h5[:, :, 1]                           # (nb, Ho, W, Cout)
    rs_ref[...] = rows.reshape(nb * Ho * W, Cout)
    even = rs_ref[pl.ds(0, Mo, stride=2), :]                   # columns j = 0,2,...
    odd = rs_ref[pl.ds(1, Mo, stride=2), :]                    # columns j = 1,3,...
    y_flat = (even + odd) * scale                              # (Mo, Cout), rows = (b, ho, wo)

    # -------- lane-dense output: (nb, Cout, Ho*Wo) --------
    for b in range(nb):
        blk = y_flat[b * Ho * Wo:(b + 1) * Ho * Wo, :]         # (Ho*Wo, Cout)
        y_ref[b] = jnp.transpose(blk).astype(y_ref.dtype)


def encoder_block_forward(x_nchw, params, use_residual=False, *,
                          block_n=1, compute_dtype=jnp.float32):
    """x_nchw: (N, Cin, H, W) float32 (PyTorch layout). Returns (N, Cout, H//2, W//2)."""
    N, Cin, H, W = x_nchw.shape
    Cout = params["w1"].shape[0]
    assert H % 2 == 0 and W % 2 == 0, "AvgPool2d(2,2) requires even H and W"
    assert W % 16 == 0, "kernel assumes W % 16 == 0 (sublane-aligned reshapes)"
    assert N % block_n == 0, "batch must be divisible by block_n"
    Ho, Wo = H // 2, W // 2

    # glue: layout / parameter plumbing (NCHW -> NHWC, OIHW -> taps x I x O)
    x_nhwc = jnp.transpose(x_nchw, (0, 2, 3, 1)).astype(jnp.float32)
    xpad = jnp.pad(x_nhwc, ((0, 0), (1, 1), (1, 1), (0, 0)))
    w1 = jnp.transpose(params["w1"], (2, 3, 1, 0)).reshape(9, Cin, Cout).astype(compute_dtype)
    w2 = jnp.transpose(params["w2"], (2, 3, 1, 0)).reshape(9, Cout, Cout).astype(compute_dtype)
    b1 = params["b1"].reshape(1, Cout).astype(jnp.float32)
    b2 = params["b2"].reshape(1, Cout).astype(jnp.float32)

    inputs = [xpad, w1, b1, w2, b2]
    in_specs = [
        pl.BlockSpec((block_n, H + 2, W + 2, Cin), lambda n: (n, 0, 0, 0)),
        pl.BlockSpec((9, Cin, Cout), lambda n: (0, 0, 0)),
        pl.BlockSpec((1, Cout), lambda n: (0, 0)),
        pl.BlockSpec((9, Cout, Cout), lambda n: (0, 0, 0)),
        pl.BlockSpec((1, Cout), lambda n: (0, 0)),
    ]
    if use_residual:
        wr = jnp.transpose(params["wr"][:, :, 0, 0], (1, 0)).astype(compute_dtype)   # (Cin, Cout)
        br = params["br"].reshape(1, Cout).astype(jnp.float32)
        inputs += [wr, br]
        in_specs += [
            pl.BlockSpec((Cin, Cout), lambda n: (0, 0)),
            pl.BlockSpec((1, Cout), lambda n: (0, 0)),
        ]

    scratch_shapes = [
        pltpu.VMEM((block_n, H + 2, W + 2, Cout), jnp.float32),   # zero-padded h1
        pltpu.VMEM((block_n * Ho * W, Cout), jnp.float32),        # H-pooled pair sums
    ]

    # explicit VMEM budget: double-buffered in/out blocks + resident weights + scratch
    est = 2 * block_n * (H + 2) * (W + 2) * Cin * 4
    est += 2 * (9 * Cin * Cout + 9 * Cout * Cout + 2 * Cout
                + (Cin * Cout + Cout if use_residual else 0)) * 4
    est += 2 * block_n * Cout * Ho * Wo * 4
    est += (block_n * (H + 2) * (W + 2) * Cout + block_n * Ho * W * Cout) * 4
    vmem_limit = int(min(64 << 20, max(2 * est + (16 << 20), 32 << 20)))

    kernel = functools.partial(_encoder_block_kernel, use_residual=use_residual,
                               nb=block_n, H=H, W=W, Cin=Cin, Cout=Cout)

    y_flat = pl.pallas_call(
        kernel,
        out_shape=jax.ShapeDtypeStruct((N, Cout, Ho * Wo), jnp.float32),
        grid_spec=pltpu.PrefetchScalarGridSpec(
            num_scalar_prefetch=0,
            grid=(N // block_n,),
            in_specs=in_specs,
            out_specs=pl.BlockSpec((block_n, Cout, Ho * Wo), lambda n: (n, 0, 0)),
            scratch_shapes=scratch_shapes,
        ),
        compiler_params=pltpu.CompilerParams(
            dimension_semantics=("parallel",),        # batch steps are independent -> v7x megacore
            vmem_limit_bytes=vmem_limit),
    )(*inputs)

    # (N, Cout, Ho*Wo) -> NCHW: pure layout plumbing outside the kernel.
    return y_flat.reshape(N, Cout, Ho, Wo)


# ----------------------------- pure-JAX reference -----------------------------
def encoder_block_reference(x_nchw, params, use_residual=False):
    def conv(x, w, b, pad):
        y = lax.conv_general_dilated(
            x, w, window_strides=(1, 1), padding=[(pad, pad), (pad, pad)],
            dimension_numbers=("NCHW", "OIHW", "NCHW"))
        return y + b[None, :, None, None]

    def avgpool(x):
        s = lax.reduce_window(x, 0.0, lax.add, (1, 1, 2, 2), (1, 1, 2, 2), "VALID")
        return s * 0.25

    h = _leaky_relu(conv(x_nchw, params["w1"], params["b1"], 1))
    h = _leaky_relu(conv(h, params["w2"], params["b2"], 1))
    y = avgpool(h)
    if use_residual:
        r = _leaky_relu(conv(x_nchw, params["wr"], params["br"], 0))
        r = avgpool(r)
        y = (y + r) * INV_SQRT2
    return y


if __name__ == "__main__":
    N, Cin, Cout, H, W = 2, 4, 8, 16, 16
    key = jax.random.PRNGKey(0)
    kx, k1, kb1, k2, kb2, kr, kbr = jax.random.split(key, 7)

    x = jax.random.normal(kx, (N, Cin, H, W), jnp.float32)
    params = {
        "w1": jax.random.normal(k1, (Cout, Cin, 3, 3), jnp.float32) * 0.1,
        "b1": jax.random.normal(kb1, (Cout,), jnp.float32) * 0.1,
        "w2": jax.random.normal(k2, (Cout, Cout, 3, 3), jnp.float32) * 0.1,
        "b2": jax.random.normal(kb2, (Cout,), jnp.float32) * 0.1,
        "wr": jax.random.normal(kr, (Cout, Cin, 1, 1), jnp.float32) * 0.1,
        "br": jax.random.normal(kbr, (Cout,), jnp.float32) * 0.1,
    }

    refs = {
        False: jax.block_until_ready(encoder_block_reference(x, params, False)),
        True: jax.block_until_ready(encoder_block_reference(x, params, True)),
    }

    # (name, use_residual, compute_dtype, block_n, tolerance)
    configs = [
        ("f32  / no-residual          ", False, jnp.float32, 1, 1e-4),
        ("f32  / residual             ", True, jnp.float32, 1, 1e-4),
        ("f32  / residual / block_n=2 ", True, jnp.float32, 2, 1e-4),
        ("bf16 / residual             ", True, jnp.bfloat16, 1, 1e-1),
    ]

    ok = True
    for name, use_res, cdt, bn, tol in configs:
        y = jax.block_until_ready(
            encoder_block_forward(x, params, use_res, block_n=bn, compute_dtype=cdt))
        y_ref = refs[use_res]
        assert y.shape == (N, Cout, H // 2, W // 2), y.shape
        if not jnp.allclose(y, y_ref, atol=tol, rtol=tol):
            ok = False
            print("MISMATCH (%s): max abs err %.3e"
                  % (name.strip(), float(jnp.max(jnp.abs(y - y_ref)))))

    if ok:
        print("KERNEL_OK")
</pallas_src>

<mosaic_0001>
module attributes {stable_mosaic.version = 11 : i64} {
  func.func @_encoder_block_kernel(%arg0: i32, %arg1: memref<1x18x18x4xf32, #tpu.memory_space<vmem>>, %arg2: memref<9x4x8xf32, #tpu.memory_space<vmem>>, %arg3: memref<1x8xf32, #tpu.memory_space<vmem>>, %arg4: memref<9x8x8xf32, #tpu.memory_space<vmem>>, %arg5: memref<1x8xf32, #tpu.memory_space<vmem>>, %arg6: memref<1x8x64xf32, #tpu.memory_space<vmem>>, %arg7: memref<1x18x18x8xf32, #tpu.memory_space<vmem>>, %arg8: memref<128x8xf32, #tpu.memory_space<vmem>>) attributes {dimension_semantics = [#tpu.dimension_semantics<parallel>], iteration_bounds = array<i64: 2>, scalar_prefetch = 0 : i64, scratch_operands = 2 : i64, tpu.core_type = #tpu.core_type<tc>, window_params = [{transform_indices = @transform_0, window_bounds = array<i64: 1, 18, 18, 4>}, {pipeline_mode = #tpu.pipeline_mode<synchronous>, transform_indices = @transform_1, window_bounds = array<i64: 9, 4, 8>}, {pipeline_mode = #tpu.pipeline_mode<synchronous>, transform_indices = @transform_2, window_bounds = array<i64: 1, 8>}, {pipeline_mode = #tpu.pipeline_mode<synchronous>, transform_indices = @transform_3, window_bounds = array<i64: 9, 8, 8>}, {pipeline_mode = #tpu.pipeline_mode<synchronous>, transform_indices = @transform_4, window_bounds = array<i64: 1, 8>}, {transform_indices = @transform_5, window_bounds = array<i64: 1, 8, 64>}]} {
    %cst = arith.constant 0.000000e+00 : f32
    %0 = vector.broadcast %cst : f32 to vector<256x8xf32>
    %c0 = arith.constant 0 : index
    %c0_0 = arith.constant 0 : index
    %c0_1 = arith.constant 0 : index
    %c0_2 = arith.constant 0 : index
    %1 = vector.load %arg1[%c0, %c0_0, %c0_1, %c0_2] : memref<1x18x18x4xf32, #tpu.memory_space<vmem>>, vector<1x16x16x4xf32>
    %2 = vector.shape_cast %1 : vector<1x16x16x4xf32> to vector<256x4xf32>
    %c0_3 = arith.constant 0 : index
    %c0_4 = arith.constant 0 : index
    %c0_5 = arith.constant 0 : index
    %3 = vector.load %arg2[%c0_3, %c0_4, %c0_5] : memref<9x4x8xf32, #tpu.memory_space<vmem>>, vector<1x4x8xf32>
    %4 = vector.shape_cast %3 : vector<1x4x8xf32> to vector<4x8xf32>
    %cst_6 = arith.constant dense<0.000000e+00> : vector<256x8xf32>
    %5 = tpu.matmul %2, %4, %cst_6 {dimension_numbers = #tpu.dot_dimension_numbers<[1], [0], [0], [1], [0, 0, 1, 1], [], []>} : vector<256x4xf32>, vector<4x8xf32>, vector<256x8xf32> -> vector<256x8xf32>
    %6 = arith.addf %0, %5 : vector<256x8xf32>
    %c0_7 = arith.constant 0 : index
    %c0_8 = arith.constant 0 : index
    %c1 = arith.constant 1 : index
    %c0_9 = arith.constant 0 : index
    %7 = vector.load %arg1[%c0_7, %c0_8, %c1, %c0_9] : memref<1x18x18x4xf32, #tpu.memory_space<vmem>>, vector<1x16x16x4xf32>
    %8 = vector.shape_cast %7 : vector<1x16x16x4xf32> to vector<256x4xf32>
    %c1_10 = arith.constant 1 : index
    %c0_11 = arith.constant 0 : index
    %c0_12 = arith.constant 0 : index
    %9 = vector.load %arg2[%c1_10, %c0_11, %c0_12] : memref<9x4x8xf32, #tpu.memory_space<vmem>>, vector<1x4x8xf32>
    %10 = vector.shape_cast %9 : vector<1x4x8xf32> to vector<4x8xf32>
    %cst_13 = arith.constant dense<0.000000e+00> : vector<256x8xf32>
    %11 = tpu.matmul %8, %10, %cst_13 {dimension_numbers = #tpu.dot_dimension_numbers<[1], [0], [0], [1], [0, 0, 1, 1], [], []>} : vector<256x4xf32>, vector<4x8xf32>, vector<256x8xf32> -> vector<256x8xf32>
    %12 = arith.addf %6, %11 : vector<256x8xf32>
    %c0_14 = arith.constant 0 : index
    %c0_15 = arith.constant 0 : index
    %c2 = arith.constant 2 : index
    %c0_16 = arith.constant 0 : index
    %13 = vector.load %arg1[%c0_14, %c0_15, %c2, %c0_16] : memref<1x18x18x4xf32, #tpu.memory_space<vmem>>, vector<1x16x16x4xf32>
    %14 = vector.shape_cast %13 : vector<1x16x16x4xf32> to vector<256x4xf32>
    %c2_17 = arith.constant 2 : index
    %c0_18 = arith.constant 0 : index
    %c0_19 = arith.constant 0 : index
    %15 = vector.load %arg2[%c2_17, %c0_18, %c0_19] : memref<9x4x8xf32, #tpu.memory_space<vmem>>, vector<1x4x8xf32>
    %16 = vector.shape_cast %15 : vector<1x4x8xf32> to vector<4x8xf32>
    %cst_20 = arith.constant dense<0.000000e+00> : vector<256x8xf32>
    %17 = tpu.matmul %14, %16, %cst_20 {dimension_numbers = #tpu.dot_dimension_numbers<[1], [0], [0], [1], [0, 0, 1, 1], [], []>} : vector<256x4xf32>, vector<4x8xf32>, vector<256x8xf32> -> vector<256x8xf32>
    %18 = arith.addf %12, %17 : vector<256x8xf32>
    %c0_21 = arith.constant 0 : index
    %c1_22 = arith.constant 1 : index
    %c0_23 = arith.constant 0 : index
    %c0_24 = arith.constant 0 : index
    %19 = vector.load %arg1[%c0_21, %c1_22, %c0_23, %c0_24] : memref<1x18x18x4xf32, #tpu.memory_space<vmem>>, vector<1x16x16x4xf32>
    %20 = vector.shape_cast %19 : vector<1x16x16x4xf32> to vector<256x4xf32>
    %c3 = arith.constant 3 : index
    %c0_25 = arith.constant 0 : index
    %c0_26 = arith.constant 0 : index
    %21 = vector.load %arg2[%c3, %c0_25, %c0_26] : memref<9x4x8xf32, #tpu.memory_space<vmem>>, vector<1x4x8xf32>
    %22 = vector.shape_cast %21 : vector<1x4x8xf32> to vector<4x8xf32>
    %cst_27 = arith.constant dense<0.000000e+00> : vector<256x8xf32>
    %23 = tpu.matmul %20, %22, %cst_27 {dimension_numbers = #tpu.dot_dimension_numbers<[1], [0], [0], [1], [0, 0, 1, 1], [], []>} : vector<256x4xf32>, vector<4x8xf32>, vector<256x8xf32> -> vector<256x8xf32>
    %24 = arith.addf %18, %23 : vector<256x8xf32>
    %c0_28 = arith.constant 0 : index
    %c1_29 = arith.constant 1 : index
    %c1_30 = arith.constant 1 : index
    %c0_31 = arith.constant 0 : index
    %25 = vector.load %arg1[%c0_28, %c1_29, %c1_30, %c0_31] : memref<1x18x18x4xf32, #tpu.memory_space<vmem>>, vector<1x16x16x4xf32>
    %26 = vector.shape_cast %25 : vector<1x16x16x4xf32> to vector<256x4xf32>
    %c4 = arith.constant 4 : index
    %c0_32 = arith.constant 0 : index
    %c0_33 = arith.constant 0 : index
    %27 = vector.load %arg2[%c4, %c0_32, %c0_33] : memref<9x4x8xf32, #tpu.memory_space<vmem>>, vector<1x4x8xf32>
    %28 = vector.shape_cast %27 : vector<1x4x8xf32> to vector<4x8xf32>
    %cst_34 = arith.constant dense<0.000000e+00> : vector<256x8xf32>
    %29 = tpu.matmul %26, %28, %cst_34 {dimension_numbers = #tpu.dot_dimension_numbers<[1], [0], [0], [1], [0, 0, 1, 1], [], []>} : vector<256x4xf32>, vector<4x8xf32>, vector<256x8xf32> -> vector<256x8xf32>
    %30 = arith.addf %24, %29 : vector<256x8xf32>
    %c0_35 = arith.constant 0 : index
    %c1_36 = arith.constant 1 : index
    %c2_37 = arith.constant 2 : index
    %c0_38 = arith.constant 0 : index
    %31 = vector.load %arg1[%c0_35, %c1_36, %c2_37, %c0_38] : memref<1x18x18x4xf32, #tpu.memory_space<vmem>>, vector<1x16x16x4xf32>
    %32 = vector.shape_cast %31 : vector<1x16x16x4xf32> to vector<256x4xf32>
    %c5 = arith.constant 5 : index
    %c0_39 = arith.constant 0 : index
    %c0_40 = arith.constant 0 : index
    %33 = vector.load %arg2[%c5, %c0_39, %c0_40] : memref<9x4x8xf32, #tpu.memory_space<vmem>>, vector<1x4x8xf32>
    %34 = vector.shape_cast %33 : vector<1x4x8xf32> to vector<4x8xf32>
    %cst_41 = arith.constant dense<0.000000e+00> : vector<256x8xf32>
    %35 = tpu.matmul %32, %34, %cst_41 {dimension_numbers = #tpu.dot_dimension_numbers<[1], [0], [0], [1], [0, 0, 1, 1], [], []>} : vector<256x4xf32>, vector<4x8xf32>, vector<256x8xf32> -> vector<256x8xf32>
    %36 = arith.addf %30, %35 : vector<256x8xf32>
    %c0_42 = arith.constant 0 : index
    %c2_43 = arith.constant 2 : index
    %c0_44 = arith.constant 0 : index
    %c0_45 = arith.constant 0 : index
    %37 = vector.load %arg1[%c0_42, %c2_43, %c0_44, %c0_45] : memref<1x18x18x4xf32, #tpu.memory_space<vmem>>, vector<1x16x16x4xf32>
    %38 = vector.shape_cast %37 : vector<1x16x16x4xf32> to vector<256x4xf32>
    %c6 = arith.constant 6 : index
    %c0_46 = arith.constant 0 : index
    %c0_47 = arith.constant 0 : index
    %39 = vector.load %arg2[%c6, %c0_46, %c0_47] : memref<9x4x8xf32, #tpu.memory_space<vmem>>, vector<1x4x8xf32>
    %40 = vector.shape_cast %39 : vector<1x4x8xf32> to vector<4x8xf32>
    %cst_48 = arith.constant dense<0.000000e+00> : vector<256x8xf32>
    %41 = tpu.matmul %38, %40, %cst_48 {dimension_numbers = #tpu.dot_dimension_numbers<[1], [0], [0], [1], [0, 0, 1, 1], [], []>} : vector<256x4xf32>, vector<4x8xf32>, vector<256x8xf32> -> vector<256x8xf32>
    %42 = arith.addf %36, %41 : vector<256x8xf32>
    %c0_49 = arith.constant 0 : index
    %c2_50 = arith.constant 2 : index
    %c1_51 = arith.constant 1 : index
    %c0_52 = arith.constant 0 : index
    %43 = vector.load %arg1[%c0_49, %c2_50, %c1_51, %c0_52] : memref<1x18x18x4xf32, #tpu.memory_space<vmem>>, vector<1x16x16x4xf32>
    %44 = vector.shape_cast %43 : vector<1x16x16x4xf32> to vector<256x4xf32>
    %c7 = arith.constant 7 : index
    %c0_53 = arith.constant 0 : index
    %c0_54 = arith.constant 0 : index
    %45 = vector.load %arg2[%c7, %c0_53, %c0_54] : memref<9x4x8xf32, #tpu.memory_space<vmem>>, vector<1x4x8xf32>
    %46 = vector.shape_cast %45 : vector<1x4x8xf32> to vector<4x8xf32>
    %cst_55 = arith.constant dense<0.000000e+00> : vector<256x8xf32>
    %47 = tpu.matmul %44, %46, %cst_55 {dimension_numbers = #tpu.dot_dimension_numbers<[1], [0], [0], [1], [0, 0, 1, 1], [], []>} : vector<256x4xf32>, vector<4x8xf32>, vector<256x8xf32> -> vector<256x8xf32>
    %48 = arith.addf %42, %47 : vector<256x8xf32>
    %c0_56 = arith.constant 0 : index
    %c2_57 = arith.constant 2 : index
    %c2_58 = arith.constant 2 : index
    %c0_59 = arith.constant 0 : index
    %49 = vector.load %arg1[%c0_56, %c2_57, %c2_58, %c0_59] : memref<1x18x18x4xf32, #tpu.memory_space<vmem>>, vector<1x16x16x4xf32>
    %50 = vector.shape_cast %49 : vector<1x16x16x4xf32> to vector<256x4xf32>
    %c8 = arith.constant 8 : index
    %c0_60 = arith.constant 0 : index
    %c0_61 = arith.constant 0 : index
    %51 = vector.load %arg2[%c8, %c0_60, %c0_61] : memref<9x4x8xf32, #tpu.memory_space<vmem>>, vector<1x4x8xf32>
    %52 = vector.shape_cast %51 : vector<1x4x8xf32> to vector<4x8xf32>
    %cst_62 = arith.constant dense<0.000000e+00> : vector<256x8xf32>
    %53 = tpu.matmul %50, %52, %cst_62 {dimension_numbers = #tpu.dot_dimension_numbers<[1], [0], [0], [1], [0, 0, 1, 1], [], []>} : vector<256x4xf32>, vector<4x8xf32>, vector<256x8xf32> -> vector<256x8xf32>
    %54 = arith.addf %48, %53 : vector<256x8xf32>
    %c0_63 = arith.constant 0 : index
    %c0_64 = arith.constant 0 : index
    %55 = vector.load %arg3[%c0_63, %c0_64] : memref<1x8xf32, #tpu.memory_space<vmem>>, vector<1x8xf32>
    %56 = vector.broadcast %55 : vector<1x8xf32> to vector<256x8xf32>
    %57 = arith.addf %54, %56 : vector<256x8xf32>
    %cst_65 = arith.constant 0.000000e+00 : f32
    %58 = vector.broadcast %cst_65 : f32 to vector<256x8xf32>
    %59 = arith.cmpf oge, %57, %58 : vector<256x8xf32>
    %cst_66 = arith.constant 0.00999999977 : f32
    %60 = vector.broadcast %cst_66 : f32 to vector<256x8xf32>
    %61 = arith.mulf %60, %57 : vector<256x8xf32>
    %62 = arith.select %59, %57, %61 : vector<256x8xi1>, vector<256x8xf32>
    %cst_67 = arith.constant 0.000000e+00 : f32
    %63 = vector.broadcast %cst_67 : f32 to vector<1x18x8xf32>
    %c0_68 = arith.constant 0 : index
    %c0_69 = arith.constant 0 : index
    %c0_70 = arith.constant 0 : index
    %c0_71 = arith.constant 0 : index
    %64 = vector.load %arg7[%c0_68, %c0_69, %c0_70, %c0_71] : memref<1x18x18x8xf32, #tpu.memory_space<vmem>>, vector<1x1x18x8xf32>
    %65 = vector.shape_cast %64 : vector<1x1x18x8xf32> to vector<1x18x8xf32>
    %66 = vector.shape_cast %63 : vector<1x18x8xf32> to vector<1x1x18x8xf32>
    tpu.vector_store %arg7[%c0_68, %c0_69, %c0_70, %c0_71], %66 {strides = array<i32>} : memref<1x18x18x8xf32, #tpu.memory_space<vmem>>, vector<1x1x18x8xf32>,
    %cst_72 = arith.constant 0.000000e+00 : f32
    %67 = vector.broadcast %cst_72 : f32 to vector<1x18x8xf32>
    %c0_73 = arith.constant 0 : index
    %c17 = arith.constant 17 : index
    %c0_74 = arith.constant 0 : index
    %c0_75 = arith.constant 0 : index
    %68 = vector.load %arg7[%c0_73, %c17, %c0_74, %c0_75] : memref<1x18x18x8xf32, #tpu.memory_space<vmem>>, vector<1x1x18x8xf32>
    %69 = vector.shape_cast %68 : vector<1x1x18x8xf32> to vector<1x18x8xf32>
    %70 = vector.shape_cast %67 : vector<1x18x8xf32> to vector<1x1x18x8xf32>
    tpu.vector_store %arg7[%c0_73, %c17, %c0_74, %c0_75], %70 {strides = array<i32>} : memref<1x18x18x8xf32, #tpu.memory_space<vmem>>, vector<1x1x18x8xf32>,
    %cst_76 = arith.constant 0.000000e+00 : f32
    %71 = vector.broadcast %cst_76 : f32 to vector<1x18x1x8xf32>
    %c0_77 = arith.constant 0 : index
    %c0_78 = arith.constant 0 : index
    %c0_79 = arith.constant 0 : index
    %c0_80 = arith.constant 0 : index
    %72 = vector.load %arg7[%c0_77, %c0_78, %c0_79, %c0_80] : memref<1x18x18x8xf32, #tpu.memory_space<vmem>>, vector<1x18x1x8xf32>
    tpu.vector_store %arg7[%c0_77, %c0_78, %c0_79, %c0_80], %71 {strides = array<i32>} : memref<1x18x18x8xf32, #tpu.memory_space<vmem>>, vector<1x18x1x8xf32>,
    %cst_81 = arith.constant 0.000000e+00 : f32
    %73 = vector.broadcast %cst_81 : f32 to vector<1x18x1x8xf32>
    %c0_82 = arith.constant 0 : index
    %c0_83 = arith.constant 0 : index
    %c17_84 = arith.constant 17 : index
    %c0_85 = arith.constant 0 : index
    %74 = vector.load %arg7[%c0_82, %c0_83, %c17_84, %c0_85] : memref<1x18x18x8xf32, #tpu.memory_space<vmem>>, vector<1x18x1x8xf32>
    tpu.vector_store %arg7[%c0_82, %c0_83, %c17_84, %c0_85], %73 {strides = array<i32>} : memref<1x18x18x8xf32, #tpu.memory_space<vmem>>, vector<1x18x1x8xf32>,
    %75 = vector.shape_cast %62 : vector<256x8xf32> to vector<1x16x16x8xf32>
    %c0_86 = arith.constant 0 : index
    %c1_87 = arith.constant 1 : index
    %c1_88 = arith.constant 1 : index
    %c0_89 = arith.constant 0 : index
    %76 = vector.load %arg7[%c0_86, %c1_87, %c1_88, %c0_89] : memref<1x18x18x8xf32, #tpu.memory_space<vmem>>, vector<1x16x16x8xf32>
    tpu.vector_store %arg7[%c0_86, %c1_87, %c1_88, %c0_89], %75 {strides = array<i32>} : memref<1x18x18x8xf32, #tpu.memory_space<vmem>>, vector<1x16x16x8xf32>,
    %cst_90 = arith.constant 0.000000e+00 : f32
    %77 = vector.broadcast %cst_90 : f32 to vector<256x8xf32>
    %c0_91 = arith.constant 0 : index
    %c0_92 = arith.constant 0 : index
    %c0_93 = arith.constant 0 : index
    %c0_94 = arith.constant 0 : index
    %78 = vector.load %arg7[%c0_91, %c0_92, %c0_93, %c0_94] : memref<1x18x18x8xf32, #tpu.memory_space<vmem>>, vector<1x16x16x8xf32>
    %79 = vector.shape_cast %78 : vector<1x16x16x8xf32> to vector<256x8xf32>
    %c0_95 = arith.constant 0 : index
    %c0_96 = arith.constant 0 : index
    %c0_97 = arith.constant 0 : index
    %80 = vector.load %arg4[%c0_95, %c0_96, %c0_97] : memref<9x8x8xf32, #tpu.memory_space<vmem>>, vector<1x8x8xf32>
    %81 = vector.shape_cast %80 : vector<1x8x8xf32> to vector<8x8xf32>
    %cst_98 = arith.constant dense<0.000000e+00> : vector<256x8xf32>
    %82 = tpu.matmul %79, %81, %cst_98 {dimension_numbers = #tpu.dot_dimension_numbers<[1], [0], [0], [1], [0, 0, 1, 1], [], []>} : vector<256x8xf32>, vector<8x8xf32>, vector<256x8xf32> -> vector<256x8xf32>
    %83 = arith.addf %77, %82 : vector<256x8xf32>
    %c0_99 = arith.constant 0 : index
    %c0_100 = arith.constant 0 : index
    %c1_101 = arith.constant 1 : index
    %c0_102 = arith.constant 0 : index
    %84 = vector.load %arg7[%c0_99, %c0_100, %c1_101, %c0_102] : memref<1x18x18x8xf32, #tpu.memory_space<vmem>>, vector<1x16x16x8xf32>
    %85 = vector.shape_cast %84 : vector<1x16x16x8xf32> to vector<256x8xf32>
    %c1_103 = arith.constant 1 : index
    %c0_104 = arith.constant 0 : index
    %c0_105 = arith.constant 0 : index
    %86 = vector.load %arg4[%c1_103, %c0_104, %c0_105] : memref<9x8x8xf32, #tpu.memory_space<vmem>>, vector<1x8x8xf32>
    %87 = vector.shape_cast %86 : vector<1x8x8xf32> to vector<8x8xf32>
    %cst_106 = arith.constant dense<0.000000e+00> : vector<256x8xf32>
    %88 = tpu.matmul %85, %87, %cst_106 {dimension_numbers = #tpu.dot_dimension_numbers<[1], [0], [0], [1], [0, 0, 1, 1], [], []>} : vector<256x8xf32>, vector<8x8xf32>, vector<256x8xf32> -> vector<256x8xf32>
    %89 = arith.addf %83, %88 : vector<256x8xf32>
    %c0_107 = arith.constant 0 : index
    %c0_108 = arith.constant 0 : index
    %c2_109 = arith.constant 2 : index
    %c0_110 = arith.constant 0 : index
    %90 = vector.load %arg7[%c0_107, %c0_108, %c2_109, %c0_110] : memref<1x18x18x8xf32, #tpu.memory_space<vmem>>, vector<1x16x16x8xf32>
    %91 = vector.shape_cast %90 : vector<1x16x16x8xf32> to vector<256x8xf32>
    %c2_111 = arith.constant 2 : index
    %c0_112 = arith.constant 0 : index
    %c0_113 = arith.constant 0 : index
    %92 = vector.load %arg4[%c2_111, %c0_112, %c0_113] : memref<9x8x8xf32, #tpu.memory_space<vmem>>, vector<1x8x8xf32>
    %93 = vector.shape_cast %92 : vector<1x8x8xf32> to vector<8x8xf32>
    %cst_114 = arith.constant dense<0.000000e+00> : vector<256x8xf32>
    %94 = tpu.matmul %91, %93, %cst_114 {dimension_numbers = #tpu.dot_dimension_numbers<[1], [0], [0], [1], [0, 0, 1, 1], [], []>} : vector<256x8xf32>, vector<8x8xf32>, vector<256x8xf32> -> vector<256x8xf32>
    %95 = arith.addf %89, %94 : vector<256x8xf32>
    %c0_115 = arith.constant 0 : index
    %c1_116 = arith.constant 1 : index
    %c0_117 = arith.constant 0 : index
    %c0_118 = arith.constant 0 : index
    %96 = vector.load %arg7[%c0_115, %c1_116, %c0_117, %c0_118] : memref<1x18x18x8xf32, #tpu.memory_space<vmem>>, vector<1x16x16x8xf32>
    %97 = vector.shape_cast %96 : vector<1x16x16x8xf32> to vector<256x8xf32>
    %c3_119 = arith.constant 3 : index
    %c0_120 = arith.constant 0 : index
    %c0_121 = arith.constant 0 : index
    %98 = vector.load %arg4[%c3_119, %c0_120, %c0_121] : memref<9x8x8xf32, #tpu.memory_space<vmem>>, vector<1x8x8xf32>
    %99 = vector.shape_cast %98 : vector<1x8x8xf32> to vector<8x8xf32>
    %cst_122 = arith.constant dense<0.000000e+00> : vector<256x8xf32>
    %100 = tpu.matmul %97, %99, %cst_122 {dimension_numbers = #tpu.dot_dimension_numbers<[1], [0], [0], [1], [0, 0, 1, 1], [], []>} : vector<256x8xf32>, vector<8x8xf32>, vector<256x8xf32> -> vector<256x8xf32>
    %101 = arith.addf %95, %100 : vector<256x8xf32>
    %c0_123 = arith.constant 0 : index
    %c1_124 = arith.constant 1 : index
    %c1_125 = arith.constant 1 : index
    %c0_126 = arith.constant 0 : index
    %102 = vector.load %arg7[%c0_123, %c1_124, %c1_125, %c0_126] : memref<1x18x18x8xf32, #tpu.memory_space<vmem>>, vector<1x16x16x8xf32>
    %103 = vector.shape_cast %102 : vector<1x16x16x8xf32> to vector<256x8xf32>
    %c4_127 = arith.constant 4 : index
    %c0_128 = arith.constant 0 : index
    %c0_129 = arith.constant 0 : index
    %104 = vector.load %arg4[%c4_127, %c0_128, %c0_129] : memref<9x8x8xf32, #tpu.memory_space<vmem>>, vector<1x8x8xf32>
    %105 = vector.shape_cast %104 : vector<1x8x8xf32> to vector<8x8xf32>
    %cst_130 = arith.constant dense<0.000000e+00> : vector<256x8xf32>
    %106 = tpu.matmul %103, %105, %cst_130 {dimension_numbers = #tpu.dot_dimension_numbers<[1], [0], [0], [1], [0, 0, 1, 1], [], []>} : vector<256x8xf32>, vector<8x8xf32>, vector<256x8xf32> -> vector<256x8xf32>
    %107 = arith.addf %101, %106 : vector<256x8xf32>
    %c0_131 = arith.constant 0 : index
    %c1_132 = arith.constant 1 : index
    %c2_133 = arith.constant 2 : index
    %c0_134 = arith.constant 0 : index
    %108 = vector.load %arg7[%c0_131, %c1_132, %c2_133, %c0_134] : memref<1x18x18x8xf32, #tpu.memory_space<vmem>>, vector<1x16x16x8xf32>
    %109 = vector.shape_cast %108 : vector<1x16x16x8xf32> to vector<256x8xf32>
    %c5_135 = arith.constant 5 : index
    %c0_136 = arith.constant 0 : index
    %c0_137 = arith.constant 0 : index
    %110 = vector.load %arg4[%c5_135, %c0_136, %c0_137] : memref<9x8x8xf32, #tpu.memory_space<vmem>>, vector<1x8x8xf32>
    %111 = vector.shape_cast %110 : vector<1x8x8xf32> to vector<8x8xf32>
    %cst_138 = arith.constant dense<0.000000e+00> : vector<256x8xf32>
    %112 = tpu.matmul %109, %111, %cst_138 {dimension_numbers = #tpu.dot_dimension_numbers<[1], [0], [0], [1], [0, 0, 1, 1], [], []>} : vector<256x8xf32>, vector<8x8xf32>, vector<256x8xf32> -> vector<256x8xf32>
    %113 = arith.addf %107, %112 : vector<256x8xf32>
    %c0_139 = arith.constant 0 : index
    %c2_140 = arith.constant 2 : index
    %c0_141 = arith.constant 0 : index
    %c0_142 = arith.constant 0 : index
    %114 = vector.load %arg7[%c0_139, %c2_140, %c0_141, %c0_142] : memref<1x18x18x8xf32, #tpu.memory_space<vmem>>, vector<1x16x16x8xf32>
    %115 = vector.shape_cast %114 : vector<1x16x16x8xf32> to vector<256x8xf32>
    %c6_143 = arith.constant 6 : index
    %c0_144 = arith.constant 0 : index
    %c0_145 = arith.constant 0 : index
    %116 = vector.load %arg4[%c6_143, %c0_144, %c0_145] : memref<9x8x8xf32, #tpu.memory_space<vmem>>, vector<1x8x8xf32>
    %117 = vector.shape_cast %116 : vector<1x8x8xf32> to vector<8x8xf32>
    %cst_146 = arith.constant dense<0.000000e+00> : vector<256x8xf32>
    %118 = tpu.matmul %115, %117, %cst_146 {dimension_numbers = #tpu.dot_dimension_numbers<[1], [0], [0], [1], [0, 0, 1, 1], [], []>} : vector<256x8xf32>, vector<8x8xf32>, vector<256x8xf32> -> vector<256x8xf32>
    %119 = arith.addf %113, %118 : vector<256x8xf32>
    %c0_147 = arith.constant 0 : index
    %c2_148 = arith.constant 2 : index
    %c1_149 = arith.constant 1 : index
    %c0_150 = arith.constant 0 : index
    %120 = vector.load %arg7[%c0_147, %c2_148, %c1_149, %c0_150] : memref<1x18x18x8xf32, #tpu.memory_space<vmem>>, vector<1x16x16x8xf32>
    %121 = vector.shape_cast %120 : vector<1x16x16x8xf32> to vector<256x8xf32>
    %c7_151 = arith.constant 7 : index
    %c0_152 = arith.constant 0 : index
    %c0_153 = arith.constant 0 : index
    %122 = vector.load %arg4[%c7_151, %c0_152, %c0_153] : memref<9x8x8xf32, #tpu.memory_space<vmem>>, vector<1x8x8xf32>
    %123 = vector.shape_cast %122 : vector<1x8x8xf32> to vector<8x8xf32>
    %cst_154 = arith.constant dense<0.000000e+00> : vector<256x8xf32>
    %124 = tpu.matmul %121, %123, %cst_154 {dimension_numbers = #tpu.dot_dimension_numbers<[1], [0], [0], [1], [0, 0, 1, 1], [], []>} : vector<256x8xf32>, vector<8x8xf32>, vector<256x8xf32> -> vector<256x8xf32>
    %125 = arith.addf %119, %124 : vector<256x8xf32>
    %c0_155 = arith.constant 0 : index
    %c2_156 = arith.constant 2 : index
    %c2_157 = arith.constant 2 : index
    %c0_158 = arith.constant 0 : index
    %126 = vector.load %arg7[%c0_155, %c2_156, %c2_157, %c0_158] : memref<1x18x18x8xf32, #tpu.memory_space<vmem>>, vector<1x16x16x8xf32>
    %127 = vector.shape_cast %126 : vector<1x16x16x8xf32> to vector<256x8xf32>
    %c8_159 = arith.constant 8 : index
    %c0_160 = arith.constant 0 : index
    %c0_161 = arith.constant 0 : index
    %128 = vector.load %arg4[%c8_159, %c0_160, %c0_161] : memref<9x8x8xf32, #tpu.memory_space<vmem>>, vector<1x8x8xf32>
    %129 = vector.shape_cast %128 : vector<1x8x8xf32> to vector<8x8xf32>
    %cst_162 = arith.constant dense<0.000000e+00> : vector<256x8xf32>
    %130 = tpu.matmul %127, %129, %cst_162 {dimension_numbers = #tpu.dot_dimension_numbers<[1], [0], [0], [1], [0, 0, 1, 1], [], []>} : vector<256x8xf32>, vector<8x8xf32>, vector<256x8xf32> -> vector<256x8xf32>
    %131 = arith.addf %125, %130 : vector<256x8xf32>
    %c0_163 = arith.constant 0 : index
    %c0_164 = arith.constant 0 : index
    %132 = vector.load %arg5[%c0_163, %c0_164] : memref<1x8xf32, #tpu.memory_space<vmem>>, vector<1x8xf32>
    %133 = vector.broadcast %132 : vector<1x8xf32> to vector<256x8xf32>
    %134 = arith.addf %131, %133 : vector<256x8xf32>
    %cst_165 = arith.constant 0.000000e+00 : f32
    %135 = vector.broadcast %cst_165 : f32 to vector<256x8xf32>
    %136 = arith.cmpf oge, %134, %135 : vector<256x8xf32>
    %cst_166 = arith.constant 0.00999999977 : f32
    %137 = vector.broadcast %cst_166 : f32 to vector<256x8xf32>
    %138 = arith.mulf %137, %134 : vector<256x8xf32>
    %139 = arith.select %136, %134, %138 : vector<256x8xi1>, vector<256x8xf32>
    %140 = vector.shape_cast %139 : vector<256x8xf32> to vector<1x8x2x16x8xf32>
    %141 = vector.extract_strided_slice %140 {offsets = [0, 0, 0, 0, 0], sizes = [1, 8, 1, 16, 8], strides = [1, 1, 1, 1, 1]} : vector<1x8x2x16x8xf32> to vector<1x8x1x16x8xf32>
    %142 = vector.shape_cast %141 : vector<1x8x1x16x8xf32> to vector<1x8x16x8xf32>
    %143 = vector.extract_strided_slice %140 {offsets = [0, 0, 1, 0, 0], sizes = [1, 8, 1, 16, 8], strides = [1, 1, 1, 1, 1]} : vector<1x8x2x16x8xf32> to vector<1x8x1x16x8xf32>
    %144 = vector.shape_cast %143 : vector<1x8x1x16x8xf32> to vector<1x8x16x8xf32>
    %145 = arith.addf %142, %144 : vector<1x8x16x8xf32>
    %146 = vector.shape_cast %145 : vector<1x8x16x8xf32> to vector<128x8xf32>
    %c0_167 = arith.constant 0 : index
    %c0_168 = arith.constant 0 : index
    %147 = vector.load %arg8[%c0_167, %c0_168] : memref<128x8xf32, #tpu.memory_space<vmem>>, vector<128x8xf32>
    tpu.vector_store %arg8[%c0_167, %c0_168], %146 {strides = array<i32>} : memref<128x8xf32, #tpu.memory_space<vmem>>, vector<128x8xf32>,
    %c0_169 = arith.constant 0 : index
    %c0_170 = arith.constant 0 : index
    %148 = tpu.strided_load %arg8[%c0_169, %c0_170] {strides = array<i32: 2, 1>} : memref<128x8xf32, #tpu.memory_space<vmem>>, vector<64x8xf32>
    %c1_171 = arith.constant 1 : index
    %c0_172 = arith.constant 0 : index
    %149 = tpu.strided_load %arg8[%c1_171, %c0_172] {strides = array<i32: 2, 1>} : memref<128x8xf32, #tpu.memory_space<vmem>>, vector<64x8xf32>
    %150 = arith.addf %148, %149 : vector<64x8xf32>
    %cst_173 = arith.constant 2.500000e-01 : f32
    %151 = vector.broadcast %cst_173 : f32 to vector<64x8xf32>
    %152 = arith.mulf %150, %151 : vector<64x8xf32>
    %153 = tpu.transpose %152, [1, 0] : vector<64x8xf32> -> vector<8x64xf32>
    %c0_174 = arith.constant 0 : index
    %c0_175 = arith.constant 0 : index
    %c0_176 = arith.constant 0 : index
    %154 = vector.load %arg6[%c0_174, %c0_175, %c0_176] : memref<1x8x64xf32, #tpu.memory_space<vmem>>, vector<1x8x64xf32>
    %155 = vector.shape_cast %154 : vector<1x8x64xf32> to vector<8x64xf32>
    %156 = vector.shape_cast %153 : vector<8x64xf32> to vector<1x8x64xf32>
    tpu.vector_store %arg6[%c0_174, %c0_175, %c0_176], %156 {strides = array<i32>} : memref<1x8x64xf32, #tpu.memory_space<vmem>>, vector<1x8x64xf32>,
    return
  }
  func.func @transform_0(%arg0: i32) -> (i32, i32, i32, i32) {
    %c0_i32 = arith.constant 0 : i32
    %c0_i32_0 = arith.constant 0 : i32
    %c0_i32_1 = arith.constant 0 : i32
    %c0_i32_2 = arith.constant 0 : i32
    return %arg0, %c0_i32, %c0_i32_0, %c0_i32_1 : i32, i32, i32, i32
  }
  func.func @transform_1(%arg0: i32) -> (i32, i32, i32) {
    %c0_i32 = arith.constant 0 : i32
    %c0_i32_0 = arith.constant 0 : i32
    %c0_i32_1 = arith.constant 0 : i32
    %c0_i32_2 = arith.constant 0 : i32
    return %c0_i32, %c0_i32_0, %c0_i32_1 : i32, i32, i32
  }
  func.func @transform_2(%arg0: i32) -> (i32, i32) {
    %c0_i32 = arith.constant 0 : i32
    %c0_i32_0 = arith.constant 0 : i32
    %c0_i32_1 = arith.constant 0 : i32
    return %c0_i32, %c0_i32_0 : i32, i32
  }
  func.func @transform_3(%arg0: i32) -> (i32, i32, i32) {
    %c0_i32 = arith.constant 0 : i32
    %c0_i32_0 = arith.constant 0 : i32
    %c0_i32_1 = arith.constant 0 : i32
    %c0_i32_2 = arith.constant 0 : i32
    return %c0_i32, %c0_i32_0, %c0_i32_1 : i32, i32, i32
  }
  func.func @transform_4(%arg0: i32) -> (i32, i32) {
    %c0_i32 = arith.constant 0 : i32
    %c0_i32_0 = arith.constant 0 : i32
    %c0_i32_1 = arith.constant 0 : i32
    return %c0_i32, %c0_i32_0 : i32, i32
  }
  func.func @transform_5(%arg0: i32) -> (i32, i32, i32) {
    %c0_i32 = arith.constant 0 : i32
    %c0_i32_0 = arith.constant 0 : i32
    %c0_i32_1 = arith.constant 0 : i32
    return %arg0, %c0_i32, %c0_i32_0 : i32, i32, i32
  }
}

</mosaic_0001>

<llo_original>
// kernel: tpu_custom_call.1
$region0: #{tpu_custom_call.1}
  #allocation0 [shape = 'u32[]', space=smem, size = 0x4, offset = 0x4, fixed_abs, tag = 'smem constant byte address 0x4 - core index']
  #allocation1 [shape = 'u32[144,128]{1,0:T(1,128)}', space=vmem, size = 0x12000, scoped, tag = 'internal scratch']
  #allocation2 [shape = 'f32[1,18,18,8]{3,2,1,0:T(8,128)}', space=vmem, size = 0x36000, scoped, tag = 'scratch operand']
  #allocation3 [shape = 'f32[128,8]{1,0:T(8,128)}', space=vmem, size = 0x10000, scoped, tag = 'scratch operand']
  %s0 = inlined_call_operand.vmem [shape: f32[2,18,18,4], index: 0, kind: input, shape index: {}]
  %s1 = inlined_call_operand.vmem [shape: f32[9,4,8], index: 1, kind: input, shape index: {}]
  %s2 = inlined_call_operand.vmem [shape: f32[1,8], index: 2, kind: input, shape index: {}]
  %s3 = inlined_call_operand.vmem [shape: f32[9,8,8], index: 3, kind: input, shape index: {}]
  %s4 = inlined_call_operand.vmem [shape: f32[1,8], index: 4, kind: input, shape index: {}]
  %s5 = inlined_call_operand.hbm [shape: f32[2,8,64], index: 5, kind: output, shape index: {}]
  %s6 = sld [smem:[#allocation0]]
  $region53: #{tpu_custom_call.1} parent=0
    _
  %s8 = ssub.s32 1, %s6
  %s9 = scalar_select 0, %s8, %s6
  $region1: #{tpu_custom_call.1} parent=0
    #allocation4 [shape = 'u8[8192]{0}', space=vmem, size = 0x2000, scoped, tag = 'output window, operand 0']
    #allocation5 [shape = 's32[2]{0}', space=sflag, size = 0x8, scoped, tag = 'scoped memory for tpu_custom_call.1']
    %10 = vsyncpa [#allocation5], 0
    %s11 = scalar_lea.sflag [#allocation5], 1
    %12 = vsyncpa %s11, 0
    loop: start=0, step=1, limit=4
    $region2: #{tpu_custom_call.1} parent=1 // loop_pre_header
      _
    $region3: #{tpu_custom_call.1} parent=1 // loop_header
      %s14 = sphi 0, %s18
      %p15 = scmp.ge.s32.totalorder %s14, 4
      %s24 = sphi 0, %s26
      %s27 = sphi 0, %s24
      %s28 = sphi 0, %s27
      %s44 = sphi 0, %s28
      %s48 = sphi 0, %s48
      %s50 = sphi 0, %s48
      %s51 = sphi 0, %s50
      %s65 = sphi 0, %s51
      %s69 = sphi 0, %s69
      %s71 = sphi 0, %s69
      %s72 = sphi 0, %s71
      %s86 = sphi 0, %s72
      %s90 = sphi 0, %s90
      %s92 = sphi 0, %s90
      %s93 = sphi 0, %s92
      %s107 = sphi 0, %s93
      %s111 = sphi 0, %s111
      %s113 = sphi 0, %s111
      %s114 = sphi 0, %s113
      %s128 = sphi 0, %s114
      %s134 = sphi 0, %s136
      %s137 = sphi 0, %s134
      %s138 = sphi 0, %s137
      %s154 = sphi 0, %s138
    $region4: #{tpu_custom_call.1} parent=1 // loop_header_branch
      %17 = sbr.rel (%p15) target = $region8
    $region5: #{tpu_custom_call.1} parent=1 // loop_body
      %s19 = ssub.s32 %s14, 1
      %s20 = ssub.s32 %s14, 2
      %s21 = sadd.s32 %s14, 1
      %s22 = ssub.s32 %s14, %s21
      %p23 = scmp.eq.s32.totalorder %s22, 0
      %s25 = sadd.s32 %s24, 1
      %s26 = scalar_select %p23, %s24, %s25
      %p29 = pneg %p23
      %p30 = scmp.eq.s32.totalorder %s14, 1
      %p31 = por %p29, %p30
      %p32 = scmp.ne.s32.totalorder %s24, %s27
      %p33 = scmp.eq.s32.totalorder %s14, 0
      %p34 = por %p32, %p33
      %p35 = scmp.ne.s32.totalorder %s24, %s27
      %p36 = scmp.eq.s32.totalorder %s19, 1
      %p37 = por %p35, %p36
      %p38 = scmp.ne.s32.totalorder %s27, %s28
      %p39 = scmp.eq.s32.totalorder %s19, 0
      %p40 = por %p38, %p39
      %p41 = scmp.ne.s32.totalorder %s27, %s28
      %p42 = scmp.eq.s32.totalorder %s20, 1
      %p43 = por %p41, %p42
      %p45 = scmp.ne.s32.totalorder %s28, %s44
      %p46 = scmp.eq.s32.totalorder %s20, 0
      %p47 = por %p45, %p46
      %s49 = sadd.s32 %s48, 1
      %p52 = scmp.eq.s32.totalorder %s14, 1
      %p53 = scmp.ne.s32.totalorder %s48, %s50
      %p54 = scmp.eq.s32.totalorder %s14, 0
      %p55 = por %p53, %p54
      %p56 = scmp.ne.s32.totalorder %s48, %s50
      %p57 = scmp.eq.s32.totalorder %s19, 1
      %p58 = por %p56, %p57
      %p59 = scmp.ne.s32.totalorder %s50, %s51
      %p60 = scmp.eq.s32.totalorder %s19, 0
      %p61 = por %p59, %p60
      %p62 = scmp.ne.s32.totalorder %s50, %s51
      %p63 = scmp.eq.s32.totalorder %s20, 1
      %p64 = por %p62, %p63
      %p66 = scmp.ne.s32.totalorder %s51, %s65
      %p67 = scmp.eq.s32.totalorder %s20, 0
      %p68 = por %p66, %p67
      %s70 = sadd.s32 %s69, 1
      %p73 = scmp.eq.s32.totalorder %s14, 1
      %p74 = scmp.ne.s32.totalorder %s69, %s71
      %p75 = scmp.eq.s32.totalorder %s14, 0
      %p76 = por %p74, %p75
      %p77 = scmp.ne.s32.totalorder %s69, %s71
      %p78 = scmp.eq.s32.totalorder %s19, 1
      %p79 = por %p77, %p78
      %p80 = scmp.ne.s32.totalorder %s71, %s72
      %p81 = scmp.eq.s32.totalorder %s19, 0
      %p82 = por %p80, %p81
      %p83 = scmp.ne.s32.totalorder %s71, %s72
      %p84 = scmp.eq.s32.totalorder %s20, 1
      %p85 = por %p83, %p84
      %p87 = scmp.ne.s32.totalorder %s72, %s86
      %p88 = scmp.eq.s32.totalorder %s20, 0
      %p89 = por %p87, %p88
      %s91 = sadd.s32 %s90, 1
      %p94 = scmp.eq.s32.totalorder %s14, 1
      %p95 = scmp.ne.s32.totalorder %s90, %s92
      %p96 = scmp.eq.s32.totalorder %s14, 0
      %p97 = por %p95, %p96
      %p98 = scmp.ne.s32.totalorder %s90, %s92
      %p99 = scmp.eq.s32.totalorder %s19, 1
      %p100 = por %p98, %p99
      %p101 = scmp.ne.s32.totalorder %s92, %s93
      %p102 = scmp.eq.s32.totalorder %s19, 0
      %p103 = por %p101, %p102
      %p104 = scmp.ne.s32.totalorder %s92, %s93
      %p105 = scmp.eq.s32.totalorder %s20, 1
      %p106 = por %p104, %p105
      %p108 = scmp.ne.s32.totalorder %s93, %s107
      %p109 = scmp.eq.s32.totalorder %s20, 0
      %p110 = por %p108, %p109
      %s112 = sadd.s32 %s111, 1
      %p115 = scmp.eq.s32.totalorder %s14, 1
      %p116 = scmp.ne.s32.totalorder %s111, %s113
      %p117 = scmp.eq.s32.totalorder %s14, 0
      %p118 = por %p116, %p117
      %p119 = scmp.ne.s32.totalorder %s111, %s113
      %p120 = scmp.eq.s32.totalorder %s19, 1
      %p121 = por %p119, %p120
      %p122 = scmp.ne.s32.totalorder %s113, %s114
      %p123 = scmp.eq.s32.totalorder %s19, 0
      %p124 = por %p122, %p123
      %p125 = scmp.ne.s32.totalorder %s113, %s114
      %p126 = scmp.eq.s32.totalorder %s20, 1
      %p127 = por %p125, %p126
      %p129 = scmp.ne.s32.totalorder %s114, %s128
      %p130 = scmp.eq.s32.totalorder %s20, 0
      %p131 = por %p129, %p130
      %s132 = ssub.s32 %s14, %s21
      %p133 = scmp.eq.s32.totalorder %s132, 0
      %s135 = sadd.s32 %s134, 1
      %s136 = scalar_select %p133, %s134, %s135
      %p139 = pneg %p133
      %p140 = scmp.eq.s32.totalorder %s14, 1
      %p141 = por %p139, %p140
      %p142 = scmp.ne.s32.totalorder %s134, %s137
      %p143 = scmp.eq.s32.totalorder %s14, 0
      %p144 = por %p142, %p143
      %p145 = scmp.ne.s32.totalorder %s134, %s137
      %p146 = scmp.eq.s32.totalorder %s19, 1
      %p147 = por %p145, %p146
      %p148 = scmp.ne.s32.totalorder %s137, %s138
      %p149 = scmp.eq.s32.totalorder %s19, 0
      %p150 = por %p148, %p149
      %p151 = scmp.ne.s32.totalorder %s137, %s138
      %p152 = scmp.eq.s32.totalorder %s20, 1
      %p153 = por %p151, %p152
      %p155 = scmp.ne.s32.totalorder %s138, %s154
      %p156 = scmp.eq.s32.totalorder %s20, 0
      %p157 = por %p155, %p156
      %p158 = scmp.le.s32.totalorder 1, %s14
      %p159 = scmp.lt.s32.totalorder %s14, 3
      %p160 = pnand %p158, %p159
      %p161 = pneg %p160
      // Predicated region
      $region9: #{tpu_custom_call.1} parent=5 // pred_check
        _
      $region10: #{tpu_custom_call.1} parent=5 // pred_check_branch
        %163 = sbr.rel (%p160) target = $region12
      $region11: #{tpu_custom_call.1} parent=5 // pred_region
        %s164 = ssub.s32 %s14, 1
        // Predicated region
        $region13: #{tpu_custom_call.1} parent=11 // pred_check
          %p165 = pneg %p61
        $region14: #{tpu_custom_call.1} parent=11 // pred_check_branch
          %167 = sbr.rel (%p165) target = $region16
        $region15: #{tpu_custom_call.1} parent=11 // pred_region
          _
        $region16: #{tpu_custom_call.1} parent=11 // pred_fallthru
          _
        // Predicated region
        $region17: #{tpu_custom_call.1} parent=11 // pred_check
          %p168 = pneg %p82
        $region18: #{tpu_custom_call.1} parent=11 // pred_check_branch
          %170 = sbr.rel (%p168) target = $region20
        $region19: #{tpu_custom_call.1} parent=11 // pred_region
          _
        $region20: #{tpu_custom_call.1} parent=11 // pred_fallthru
          _
        // Predicated region
        $region21: #{tpu_custom_call.1} parent=11 // pred_check
          %p171 = pneg %p103
        $region22: #{tpu_custom_call.1} parent=11 // pred_check_branch
          %173 = sbr.rel (%p171) target = $region24
        $region23: #{tpu_custom_call.1} parent=11 // pred_region
          _
        $region24: #{tpu_custom_call.1} parent=11 // pred_fallthru
          _
        // Predicated region
        $region25: #{tpu_custom_call.1} parent=11 // pred_check
          %p174 = pneg %p124
        $region26: #{tpu_custom_call.1} parent=11 // pred_check_branch
          %176 = sbr.rel (%p174) target = $region28
        $region27: #{tpu_custom_call.1} parent=11 // pred_region
          _
        $region28: #{tpu_custom_call.1} parent=11 // pred_fallthru
          _
      $region12: #{tpu_custom_call.1} parent=5 // pred_fallthru
        _
      %p177 = scmp.lt.s32.totalorder %s14, 2
      // Predicated region
      $region29: #{tpu_custom_call.1} parent=5 // pred_check
        %p178 = pneg %p177
      $region30: #{tpu_custom_call.1} parent=5 // pred_check_branch
        %180 = sbr.rel (%p178) target = $region32
      $region31: #{tpu_custom_call.1} parent=5 // pred_region
        // Predicated region
        $region33: #{tpu_custom_call.1} parent=31 // pred_check
          %p181 = pneg %p34
        $region34: #{tpu_custom_call.1} parent=31 // pred_check_branch
          %183 = sbr.rel (%p181) target = $region36
        $region35: #{tpu_custom_call.1} parent=31 // pred_region
          %p184 = scmp.lt.s32.totalorder %s14, 1
          %s185 = scalar_select %p184, %s14, 1
          %s186 = smul.addr %s185, 54
          %s187 = smul.addr %s186, 8
          %s188 = scalar_lea.vmem %s0, %s187
        $region36: #{tpu_custom_call.1} parent=31 // pred_fallthru
          _
      $region32: #{tpu_custom_call.1} parent=5 // pred_fallthru
        _
      %p189 = scmp.le.s32.totalorder 1, %s14
      %p190 = scmp.lt.s32.totalorder %s14, 3
      %p191 = pnand %p189, %p190
      %p192 = pneg %p191
      // Predicated region
      $region37: #{tpu_custom_call.1} parent=5 // pred_check
        _
      $region38: #{tpu_custom_call.1} parent=5 // pred_check_branch
        %194 = sbr.rel (%p191) target = $region40
      $region39: #{tpu_custom_call.1} parent=5 // pred_region
        %s195 = ssub.s32 %s14, 1
        %p196 = scmp.lt.s32.totalorder %s19, 1
        %s197 = scalar_select %p196, %s19, 1
        %s198 = smul.addr %s197, 54
        %s199 = smul.addr %s198, 8
        %s200 = scalar_lea.vmem %s0, %s199
        %p201 = pneg %p40
        %p202 = pneg %p37
        %p203 = pneg %p61
        %p204 = pneg %p58
        %p205 = pneg %p82
        %p206 = pneg %p79
        %p207 = pneg %p103
        %p208 = pneg %p100
        %p209 = pneg %p124
        %p210 = pneg %p121
        %p211 = pneg %p150
        %p212 = pneg %p147
        %s213 = sand.u32 %s137, 1
        %s214 = scalar_lea.sflag [#allocation5], %s213
        %s215 = sand.u32 %s137, 1
        %s216 = smul.addr %s215, 8
        %s217 = scalar_lea.vmem [#allocation4], %s216
        %p218 = scmp.lt.s32.totalorder %s19, 1
        %s219 = scalar_select %p218, %s19, 1
        %s220 = smul.addr %s219, 54
        %s221 = smul.addr %s220, 8
        %s222 = scalar_lea.vmem %s0, %s221
        %v223 = vld [vmem:[%s222] sm:$0xff]
        %v224 = vld [vmem:[%s222 + $0x8] sm:$0xff]
        %v225 = vld [vmem:[%s222 + $0x18] sm:$0xff]
        %v226 = vld [vmem:[%s222 + $0x20] sm:$0xff]
        %v227 = vld [vmem:[%s222 + $0x30] sm:$0xff]
        %v228 = vld [vmem:[%s222 + $0x38] sm:$0xff]
        %v229 = vld [vmem:[%s222 + $0x48] sm:$0xff]
        %v230 = vld [vmem:[%s222 + $0x50] sm:$0xff]
        %v231 = vld [vmem:[%s222 + $0x60] sm:$0xff]
        %v232 = vld [vmem:[%s222 + $0x68] sm:$0xff]
        %v233 = vld [vmem:[%s222 + $0x78] sm:$0xff]
        %v234 = vld [vmem:[%s222 + $0x80] sm:$0xff]
        %v235 = vld [vmem:[%s222 + $0x90] sm:$0xff]
        %v236 = vld [vmem:[%s222 + $0x98] sm:$0xff]
        %v237 = vld [vmem:[%s222 + $0xa8] sm:$0xff]
        %v238 = vld [vmem:[%s222 + $0xb0] sm:$0xff]
        %v239 = vld [vmem:[%s222 + $0xc0] sm:$0xff]
        %v240 = vld [vmem:[%s222 + $0xc8] sm:$0xff]
        %v241 = vld [vmem:[%s222 + $0xd8] sm:$0xff]
        %v242 = vld [vmem:[%s222 + $0xe0] sm:$0xff]
        %v243 = vld [vmem:[%s222 + $0xf0] sm:$0xff]
        %v244 = vld [vmem:[%s222 + $0xf8] sm:$0xff]
        %v245 = vld [vmem:[%s222 + $0x108] sm:$0xff]
        %v246 = vld [vmem:[%s222 + $0x110] sm:$0xff]
        %v247 = vld [vmem:[%s222 + $0x120] sm:$0xff]
        %v248 = vld [vmem:[%s222 + $0x128] sm:$0xff]
        %v249 = vld [vmem:[%s222 + $0x138] sm:$0xff]
        %v250 = vld [vmem:[%s222 + $0x140] sm:$0xff]
        %v251 = vld [vmem:[%s222 + $0x150] sm:$0xff]
        %v252 = vld [vmem:[%s222 + $0x158] sm:$0xff]
        %v253 = vld [vmem:[%s222 + $0x168] sm:$0xff]
        %v254 = vld [vmem:[%s222 + $0x170] sm:$0xff]
        %v255 = vld [vmem:[%s1] sm:$0xf]
        %v256 = vld [vmem:[%s222 + $0x1] sm:$0xff]
        %v257 = vld [vmem:[%s222 + $0x9] sm:$0xff]
        %v258 = vld [vmem:[%s222 + $0x19] sm:$0xff]
        %v259 = vld [vmem:[%s222 + $0x21] sm:$0xff]
        %v260 = vld [vmem:[%s222 + $0x31] sm:$0xff]
        %v261 = vld [vmem:[%s222 + $0x39] sm:$0xff]
        %v262 = vld [vmem:[%s222 + $0x49] sm:$0xff]
        %v263 = vld [vmem:[%s222 + $0x51] sm:$0xff]
        %v264 = vld [vmem:[%s222 + $0x61] sm:$0xff]
        %v265 = vld [vmem:[%s222 + $0x69] sm:$0xff]
        %v266 = vld [vmem:[%s222 + $0x79] sm:$0xff]
        %v267 = vld [vmem:[%s222 + $0x81] sm:$0xff]
        %v268 = vld [vmem:[%s222 + $0x91] sm:$0xff]
        %v269 = vld [vmem:[%s222 + $0x99] sm:$0xff]
        %v270 = vld [vmem:[%s222 + $0xa9] sm:$0xff]
        %v271 = vld [vmem:[%s222 + $0xb1] sm:$0xff]
        %v272 = vld [vmem:[%s222 + $0xc1] sm:$0xff]
        %v273 = vld [vmem:[%s222 + $0xc9] sm:$0xff]
        %v274 = vld [vmem:[%s222 + $0xd9] sm:$0xff]
        %v275 = vld [vmem:[%s222 + $0xe1] sm:$0xff]
        %v276 = vld [vmem:[%s222 + $0xf1] sm:$0xff]
        %v277 = vld [vmem:[%s222 + $0xf9] sm:$0xff]
        %v278 = vld [vmem:[%s222 + $0x109] sm:$0xff]
        %v279 = vld [vmem:[%s222 + $0x111] sm:$0xff]
        %v280 = vld [vmem:[%s222 + $0x121] sm:$0xff]
        %v281 = vld [vmem:[%s222 + $0x129] sm:$0xff]
        %v282 = vld [vmem:[%s222 + $0x139] sm:$0xff]
        %v283 = vld [vmem:[%s222 + $0x141] sm:$0xff]
        %v284 = vld [vmem:[%s222 + $0x151] sm:$0xff]
        %v285 = vld [vmem:[%s222 + $0x159] sm:$0xff]
        %v286 = vld [vmem:[%s222 + $0x169] sm:$0xff]
        %v287 = vld [vmem:[%s222 + $0x171] sm:$0xff]
        %s288 = scalar_lea.vmem %s1, 4
        %v289 = vld [vmem:[%s288] sm:$0xf]
        %vm290 = vcmask 31744
        %v292 = vsel %vm290, %v256, 0
        %v295 = vsel %vm290, %v257, 0
        %v298 = vsel %vm290, %v258, 0
        %v301 = vsel %vm290, %v259, 0
        %v304 = vsel %vm290, %v260, 0
        %v307 = vsel %vm290, %v261, 0
        %v310 = vsel %vm290, %v262, 0
        %v313 = vsel %vm290, %v263, 0
        %v316 = vsel %vm290, %v264, 0
        %v319 = vsel %vm290, %v265, 0
        %v322 = vsel %vm290, %v266, 0
        %v325 = vsel %vm290, %v267, 0
        %v328 = vsel %vm290, %v268, 0
        %v331 = vsel %vm290, %v269, 0
        %v334 = vsel %vm290, %v270, 0
        %v337 = vsel %vm290, %v271, 0
        %v340 = vsel %vm290, %v272, 0
        %v343 = vsel %vm290, %v273, 0
        %v346 = vsel %vm290, %v274, 0
        %v349 = vsel %vm290, %v275, 0
        %v352 = vsel %vm290, %v276, 0
        %v355 = vsel %vm290, %v277, 0
        %v358 = vsel %vm290, %v278, 0
        %v361 = vsel %vm290, %v279, 0
        %v364 = vsel %vm290, %v280, 0
        %v367 = vsel %vm290, %v281, 0
        %v370 = vsel %vm290, %v282, 0
        %v373 = vsel %vm290, %v283, 0
        %v376 = vsel %vm290, %v284, 0
        %v379 = vsel %vm290, %v285, 0
        %v382 = vsel %vm290, %v286, 0
        %v385 = vsel %vm290, %v287, 0
        %vm387 = vcmask 1043456
        %v389 = vsel %vm387, %v289, 0
        %391 = vmatprep.subr.mxu0 0.0
        %392 = vmatpush1.msra.mxu0 %v389
        %393 = vmatprep.subr.mxu0 0.0
        %394 = vmatpush1.msra.mxu0 0.0
        %395 = vmatprep.subr.mxu0 0.0
        %396 = vmatpush1.msra.mxu0 0.0
        %397 = vmatprep.subr.mxu0 0.0
        %398 = vmatpush1.msra.mxu0 0.0
        %399 = vmatprep.subr.mxu0 0.0
        %400 = vmatpush1.msra.mxu0 0.0
        %401 = vmatprep.subr.mxu0 0.0
        %402 = vmatpush1.msra.mxu0 0.0
        %403 = vmatprep.subr.mxu0 0.0
        %404 = vmatpush1.msra.mxu0 0.0
        %405 = vmatprep.subr.mxu0 0.0
        %406 = vmatpush1.msra.mxu0 0.0
        %407 = vmatprep.subr.mxu0 0.0
        %408 = vmatpush1.msra.mxu0 0.0
        %409 = vmatprep.subr.mxu0 0.0
        %410 = vmatpush1.msra.mxu0 0.0
        %411 = vmatprep.subr.mxu0 0.0
        %412 = vmatpush1.msra.mxu0 0.0
        %413 = vmatprep.subr.mxu0 0.0
        %414 = vmatpush1.msra.mxu0 0.0
        %415 = vmatprep.subr.mxu0 0.0
        %416 = vmatpush1.msra.mxu0 0.0
        %417 = vmatprep.subr.mxu0 0.0
        %418 = vmatpush1.msra.mxu0 0.0
        %419 = vmatprep.subr.mxu0 0.0
        %420 = vmatpush1.msra.mxu0 0.0
        %421 = vmatprep.subr.mxu0 0.0
        %422 = vmatpush1.msra.mxu0 0.0
        %423 = vmatprep.subr.mxu0 0.0
        %424 = vmatpush1.msra.mxu0 0.0
        %425 = vmatprep.subr.mxu0 0.0
        %426 = vmatpush1.msra.mxu0 0.0
        %427 = vmatprep.subr.mxu0 0.0
        %428 = vmatpush1.msra.mxu0 0.0
        %429 = vmatprep.subr.mxu0 0.0
        %430 = vmatpush1.msra.mxu0 0.0
        %431 = vmatprep.subr.mxu0 0.0
        %432 = vmatpush1.msra.mxu0 0.0
        %433 = vmatprep.subr.mxu0 0.0
        %434 = vmatpush1.msra.mxu0 0.0
        %435 = vmatprep.subr.mxu0 0.0
        %436 = vmatpush1.msra.mxu0 0.0
        %437 = vmatprep.subr.mxu0 0.0
        %438 = vmatpush1.msra.mxu0 0.0
        %439 = vmatprep.subr.mxu0 0.0
        %440 = vmatpush1.msra.mxu0 0.0
        %441 = vmatprep.subr.mxu0 0.0
        %442 = vmatpush1.msra.mxu0 0.0
        %443 = vmatprep.subr.mxu0 0.0
        %444 = vmatpush1.msra.mxu0 0.0
        %445 = vmatprep.subr.mxu0 0.0
        %446 = vmatpush1.msra.mxu0 0.0
        %447 = vmatprep.subr.mxu0 0.0
        %448 = vmatpush1.msra.mxu0 0.0
        %449 = vmatprep.subr.mxu0 0.0
        %450 = vmatpush1.msra.mxu0 0.0
        %451 = vmatprep.subr.mxu0 0.0
        %452 = vmatpush1.msra.mxu0 0.0
        %453 = vmatprep.subr.mxu0 0.0
        %454 = vmatpush1.msra.mxu0 0.0
        %455 = vmatprep.mubr.f32.mxu0 0.0
        %456 = vmatmul.mubr.f32.gmra.mrb[0].mxu0 %v292
        %v457 = vpop.f32.mrb[0].mxu0
        %v458 = vadd.f32 0.0, %v457
        %v459 = vpop.f32.mrb[0].mxu0
        %460 = vmatprep.mubr.f32.mxu0 0.0
        %461 = vmatmul.mubr.f32.gmra.mrb[0].mxu0 %v295
        %v462 = vpop.f32.mrb[0].mxu0
        %v463 = vadd.f32 0.0, %v462
        %v464 = vpop.f32.mrb[0].mxu0
        %465 = vmatprep.mubr.f32.mxu0 0.0
        %466 = vmatmul.mubr.f32.gmra.mrb[0].mxu0 %v298
        %v467 = vpop.f32.mrb[0].mxu0
        %v468 = vadd.f32 0.0, %v467
        %v469 = vpop.f32.mrb[0].mxu0
        %470 = vmatprep.mubr.f32.mxu0 0.0
        %471 = vmatmul.mubr.f32.gmra.mrb[0].mxu0 %v301
        %v472 = vpop.f32.mrb[0].mxu0
        %v473 = vadd.f32 0.0, %v472
        %v474 = vpop.f32.mrb[0].mxu0
        %475 = vmatprep.mubr.f32.mxu0 0.0
        %476 = vmatmul.mubr.f32.gmra.mrb[0].mxu0 %v304
        %v477 = vpop.f32.mrb[0].mxu0
        %v478 = vadd.f32 0.0, %v477
        %v479 = vpop.f32.mrb[0].mxu0
        %480 = vmatprep.mubr.f32.mxu0 0.0
        %481 = vmatmul.mubr.f32.gmra.mrb[0].mxu0 %v307
        %v482 = vpop.f32.mrb[0].mxu0
        %v483 = vadd.f32 0.0, %v482
        %v484 = vpop.f32.mrb[0].mxu0
        %485 = vmatprep.mubr.f32.mxu0 0.0
        %486 = vmatmul.mubr.f32.gmra.mrb[0].mxu0 %v310
        %v487 = vpop.f32.mrb[0].mxu0
        %v488 = vadd.f32 0.0, %v487
        %v489 = vpop.f32.mrb[0].mxu0
        %490 = vmatprep.mubr.f32.mxu0 0.0
        %491 = vmatmul.mubr.f32.gmra.mrb[0].mxu0 %v313
        %v492 = vpop.f32.mrb[0].mxu0
        %v493 = vadd.f32 0.0, %v492
        %v494 = vpop.f32.mrb[0].mxu0
        %495 = vmatprep.mubr.f32.mxu0 0.0
        %496 = vmatmul.mubr.f32.gmra.mrb[0].mxu0 %v316
        %v497 = vpop.f32.mrb[0].mxu0
        %v498 = vadd.f32 0.0, %v497
        %v499 = vpop.f32.mrb[0].mxu0
        %500 = vmatprep.mubr.f32.mxu0 0.0
        %501 = vmatmul.mubr.f32.gmra.mrb[0].mxu0 %v319
        %v502 = vpop.f32.mrb[0].mxu0
        %v503 = vadd.f32 0.0, %v502
        %v504 = vpop.f32.mrb[0].mxu0
        %505 = vmatprep.mubr.f32.mxu0 0.0
        %506 = vmatmul.mubr.f32.gmra.mrb[0].mxu0 %v322
        %v507 = vpop.f32.mrb[0].mxu0
        %v508 = vadd.f32 0.0, %v507
        %v509 = vpop.f32.mrb[0].mxu0
        %510 = vmatprep.mubr.f32.mxu0 0.0
        %511 = vmatmul.mubr.f32.gmra.mrb[0].mxu0 %v325
        %v512 = vpop.f32.mrb[0].mxu0
        %v513 = vadd.f32 0.0, %v512
        %v514 = vpop.f32.mrb[0].mxu0
        %515 = vmatprep.mubr.f32.mxu0 0.0
        %516 = vmatmul.mubr.f32.gmra.mrb[0].mxu0 %v328
        %v517 = vpop.f32.mrb[0].mxu0
        %v518 = vadd.f32 0.0, %v517
        %v519 = vpop.f32.mrb[0].mxu0
        %520 = vmatprep.mubr.f32.mxu0 0.0
        %521 = vmatmul.mubr.f32.gmra.mrb[0].mxu0 %v331
        %v522 = vpop.f32.mrb[0].mxu0
        %v523 = vadd.f32 0.0, %v522
        %v524 = vpop.f32.mrb[0].mxu0
        %525 = vmatprep.mubr.f32.mxu0 0.0
        %526 = vmatmul.mubr.f32.gmra.mrb[0].mxu0 %v334
        %v527 = vpop.f32.mrb[0].mxu0
        %v528 = vadd.f32 0.0, %v527
        %v529 = vpop.f32.mrb[0].mxu0
        %530 = vmatprep.mubr.f32.mxu0 0.0
        %531 = vmatmul.mubr.f32.gmra.mrb[0].mxu0 %v337
        %v532 = vpop.f32.mrb[0].mxu0
        %v533 = vadd.f32 0.0, %v532
        %v534 = vpop.f32.mrb[0].mxu0
        %535 = vmatprep.mubr.f32.mxu0 0.0
        %536 = vmatmul.mubr.f32.gmra.mrb[0].mxu0 %v340
        %v537 = vpop.f32.mrb[0].mxu0
        %v538 = vadd.f32 0.0, %v537
        %v539 = vpop.f32.mrb[0].mxu0
        %540 = vmatprep.mubr.f32.mxu0 0.0
        %541 = vmatmul.mubr.f32.gmra.mrb[0].mxu0 %v343
        %v542 = vpop.f32.mrb[0].mxu0
        %v543 = vadd.f32 0.0, %v542
        %v544 = vpop.f32.mrb[0].mxu0
        %545 = vmatprep.mubr.f32.mxu0 0.0
        %546 = vmatmul.mubr.f32.gmra.mrb[0].mxu0 %v346
        %v547 = vpop.f32.mrb[0].mxu0
        %v548 = vadd.f32 0.0, %v547
        %v549 = vpop.f32.mrb[0].mxu0
        %550 = vmatprep.mubr.f32.mxu0 0.0
        %551 = vmatmul.mubr.f32.gmra.mrb[0].mxu0 %v349
        %v552 = vpop.f32.mrb[0].mxu0
        %v553 = vadd.f32 0.0, %v552
        %v554 = vpop.f32.mrb[0].mxu0
        %555 = vmatprep.mubr.f32.mxu0 0.0
        %556 = vmatmul.mubr.f32.gmra.mrb[0].mxu0 %v352
        %v557 = vpop.f32.mrb[0].mxu0
        %v558 = vadd.f32 0.0, %v557
        %v559 = vpop.f32.mrb[0].mxu0
        %560 = vmatprep.mubr.f32.mxu0 0.0
        %561 = vmatmul.mubr.f32.gmra.mrb[0].mxu0 %v355
        %v562 = vpop.f32.mrb[0].mxu0
        %v563 = vadd.f32 0.0, %v562
        %v564 = vpop.f32.mrb[0].mxu0
        %565 = vmatprep.mubr.f32.mxu0 0.0
        %566 = vmatmul.mubr.f32.gmra.mrb[0].mxu0 %v358
        %v567 = vpop.f32.mrb[0].mxu0
        %v568 = vadd.f32 0.0, %v567
        %v569 = vpop.f32.mrb[0].mxu0
        %570 = vmatprep.mubr.f32.mxu0 0.0
        %571 = vmatmul.mubr.f32.gmra.mrb[0].mxu0 %v361
        %v572 = vpop.f32.mrb[0].mxu0
        %v573 = vadd.f32 0.0, %v572
        %v574 = vpop.f32.mrb[0].mxu0
        %575 = vmatprep.mubr.f32.mxu0 0.0
        %576 = vmatmul.mubr.f32.gmra.mrb[0].mxu0 %v364
        %v577 = vpop.f32.mrb[0].mxu0
        %v578 = vadd.f32 0.0, %v577
        %v579 = vpop.f32.mrb[0].mxu0
        %580 = vmatprep.mubr.f32.mxu0 0.0
        %581 = vmatmul.mubr.f32.gmra.mrb[0].mxu0 %v367
        %v582 = vpop.f32.mrb[0].mxu0
        %v583 = vadd.f32 0.0, %v582
        %v584 = vpop.f32.mrb[0].mxu0
        %585 = vmatprep.mubr.f32.mxu0 0.0
        %586 = vmatmul.mubr.f32.gmra.mrb[0].mxu0 %v370
        %v587 = vpop.f32.mrb[0].mxu0
        %v588 = vadd.f32 0.0, %v587
        %v589 = vpop.f32.mrb[0].mxu0
        %590 = vmatprep.mubr.f32.mxu0 0.0
        %591 = vmatmul.mubr.f32.gmra.mrb[0].mxu0 %v373
        %v592 = vpop.f32.mrb[0].mxu0
        %v593 = vadd.f32 0.0, %v592
        %v594 = vpop.f32.mrb[0].mxu0
        %595 = vmatprep.mubr.f32.mxu0 0.0
        %596 = vmatmul.mubr.f32.gmra.mrb[0].mxu0 %v376
        %v597 = vpop.f32.mrb[0].mxu0
        %v598 = vadd.f32 0.0, %v597
        %v599 = vpop.f32.mrb[0].mxu0
        %600 = vmatprep.mubr.f32.mxu0 0.0
        %601 = vmatmul.mubr.f32.gmra.mrb[0].mxu0 %v379
        %v602 = vpop.f32.mrb[0].mxu0
        %v603 = vadd.f32 0.0, %v602
        %v604 = vpop.f32.mrb[0].mxu0
        %605 = vmatprep.mubr.f32.mxu0 0.0
        %606 = vmatmul.mubr.f32.gmra.mrb[0].mxu0 %v382
        %v607 = vpop.f32.mrb[0].mxu0
        %v608 = vadd.f32 0.0, %v607
        %v609 = vpop.f32.mrb[0].mxu0
        %610 = vmatprep.mubr.f32.mxu0 0.0
        %611 = vmatmul.mubr.f32.gmra.mrb[0].mxu0 %v385
        %v612 = vpop.f32.mrb[0].mxu0
        %v613 = vadd.f32 0.0, %v612
        %v614 = vpop.f32.mrb[0].mxu0
        %615 = vdwg.mxu0
        %v617 = vsel %vm290, %v223, 0
        %v620 = vsel %vm290, %v224, 0
        %v623 = vsel %vm290, %v225, 0
        %v626 = vsel %vm290, %v226, 0
        %v629 = vsel %vm290, %v227, 0
        %v632 = vsel %vm290, %v228, 0
        %v635 = vsel %vm290, %v229, 0
        %v638 = vsel %vm290, %v230, 0
        %v641 = vsel %vm290, %v231, 0
        %v644 = vsel %vm290, %v232, 0
        %v647 = vsel %vm290, %v233, 0
        %v650 = vsel %vm290, %v234, 0
        %v653 = vsel %vm290, %v235, 0
        %v656 = vsel %vm290, %v236, 0
        %v659 = vsel %vm290, %v237, 0
        %v662 = vsel %vm290, %v238, 0
        %v665 = vsel %vm290, %v239, 0
        %v668 = vsel %vm290, %v240, 0
        %v671 = vsel %vm290, %v241, 0
        %v674 = vsel %vm290, %v242, 0
        %v677 = vsel %vm290, %v243, 0
        %v680 = vsel %vm290, %v244, 0
        %v683 = vsel %vm290, %v245, 0
        %v686 = vsel %vm290, %v246, 0
        %v689 = vsel %vm290, %v247, 0
        %v692 = vsel %vm290, %v248, 0
        %v695 = vsel %vm290, %v249, 0
        %v698 = vsel %vm290, %v250, 0
        %v701 = vsel %vm290, %v251, 0
        %v704 = vsel %vm290, %v252, 0
        %v707 = vsel %vm290, %v253, 0
        %v710 = vsel %vm290, %v254, 0
        %v713 = vsel %vm387, %v255, 0
        %715 = vmatprep.subr.mxu0 0.0
        %716 = vmatpush1.msra.mxu0 %v713
        %717 = vmatprep.subr.mxu0 0.0
        %718 = vmatpush1.msra.mxu0 0.0
        %719 = vmatprep.subr.mxu0 0.0
        %720 = vmatpush1.msra.mxu0 0.0
        %721 = vmatprep.subr.mxu0 0.0
        %722 = vmatpush1.msra.mxu0 0.0
        %723 = vmatprep.subr.mxu0 0.0
        %724 = vmatpush1.msra.mxu0 0.0
        %725 = vmatprep.subr.mxu0 0.0
        %726 = vmatpush1.msra.mxu0 0.0
        %727 = vmatprep.subr.mxu0 0.0
        %728 = vmatpush1.msra.mxu0 0.0
        %729 = vmatprep.subr.mxu0 0.0
        %730 = vmatpush1.msra.mxu0 0.0
        %731 = vmatprep.subr.mxu0 0.0
        %732 = vmatpush1.msra.mxu0 0.0
        %733 = vmatprep.subr.mxu0 0.0
        %734 = vmatpush1.msra.mxu0 0.0
        %735 = vmatprep.subr.mxu0 0.0
        %736 = vmatpush1.msra.mxu0 0.0
        %737 = vmatprep.subr.mxu0 0.0
        %738 = vmatpush1.msra.mxu0 0.0
        %739 = vmatprep.subr.mxu0 0.0
        %740 = vmatpush1.msra.mxu0 0.0
        %741 = vmatprep.subr.mxu0 0.0
        %742 = vmatpush1.msra.mxu0 0.0
        %743 = vmatprep.subr.mxu0 0.0
        %744 = vmatpush1.msra.mxu0 0.0
        %745 = vmatprep.subr.mxu0 0.0
        %746 = vmatpush1.msra.mxu0 0.0
        %747 = vmatprep.subr.mxu0 0.0
        %748 = vmatpush1.msra.mxu0 0.0
        %749 = vmatprep.subr.mxu0 0.0
        %750 = vmatpush1.msra.mxu0 0.0
        %751 = vmatprep.subr.mxu0 0.0
        %752 = vmatpush1.msra.mxu0 0.0
        %753 = vmatprep.subr.mxu0 0.0
        %754 = vmatpush1.msra.mxu0 0.0
        %755 = vmatprep.subr.mxu0 0.0
        %756 = vmatpush1.msra.mxu0 0.0
        %757 = vmatprep.subr.mxu0 0.0
        %758 = vmatpush1.msra.mxu0 0.0
        %759 = vmatprep.subr.mxu0 0.0
        %760 = vmatpush1.msra.mxu0 0.0
        %761 = vmatprep.subr.mxu0 0.0
        %762 = vmatpush1.msra.mxu0 0.0
        %763 = vmatprep.subr.mxu0 0.0
        %764 = vmatpush1.msra.mxu0 0.0
        %765 = vmatprep.subr.mxu0 0.0
        %766 = vmatpush1.msra.mxu0 0.0
        %767 = vmatprep.subr.mxu0 0.0
        %768 = vmatpush1.msra.mxu0 0.0
        %769 = vmatprep.subr.mxu0 0.0
        %770 = vmatpush1.msra.mxu0 0.0
        %771 = vmatprep.subr.mxu0 0.0
        %772 = vmatpush1.msra.mxu0 0.0
        %773 = vmatprep.subr.mxu0 0.0
        %774 = vmatpush1.msra.mxu0 0.0
        %775 = vmatprep.subr.mxu0 0.0
        %776 = vmatpush1.msra.mxu0 0.0
        %777 = vmatprep.subr.mxu0 0.0
        %778 = vmatpush1.msra.mxu0 0.0
        %779 = vmatprep.mubr.f32.mxu0 0.0
        %780 = vmatmul.mubr.f32.gmra.mrb[0].mxu0 %v617
        %v781 = vpop.f32.mrb[0].mxu0
        %v782 = vadd.f32 %v458, %v781
        %v783 = vpop.f32.mrb[0].mxu0
        %784 = vmatprep.mubr.f32.mxu0 0.0
        %785 = vmatmul.mubr.f32.gmra.mrb[0].mxu0 %v620
        %v786 = vpop.f32.mrb[0].mxu0
        %v787 = vadd.f32 %v463, %v786
        %v788 = vpop.f32.mrb[0].mxu0
        %789 = vmatprep.mubr.f32.mxu0 0.0
        %790 = vmatmul.mubr.f32.gmra.mrb[0].mxu0 %v623
        %v791 = vpop.f32.mrb[0].mxu0
        %v792 = vadd.f32 %v468, %v791
        %v793 = vpop.f32.mrb[0].mxu0
        %794 = vmatprep.mubr.f32.mxu0 0.0
        %795 = vmatmul.mubr.f32.gmra.mrb[0].mxu0 %v626
        %v796 = vpop.f32.mrb[0].mxu0
        %v797 = vadd.f32 %v473, %v796
        %v798 = vpop.f32.mrb[0].mxu0
        %799 = vmatprep.mubr.f32.mxu0 0.0
        %800 = vmatmul.mubr.f32.gmra.mrb[0].mxu0 %v629
        %v801 = vpop.f32.mrb[0].mxu0
        %v802 = vadd.f32 %v478, %v801
        %v803 = vpop.f32.mrb[0].mxu0
        %804 = vmatprep.mubr.f32.mxu0 0.0
        %805 = vmatmul.mubr.f32.gmra.mrb[0].mxu0 %v632
        %v806 = vpop.f32.mrb[0].mxu0
        %v807 = vadd.f32 %v483, %v806
        %v808 = vpop.f32.mrb[0].mxu0
        %809 = vmatprep.mubr.f32.mxu0 0.0
        %810 = vmatmul.mubr.f32.gmra.mrb[0].mxu0 %v635
        %v811 = vpop.f32.mrb[0].mxu0
        %v812 = vadd.f32 %v488, %v811
        %v813 = vpop.f32.mrb[0].mxu0
        %814 = vmatprep.mubr.f32.mxu0 0.0
        %815 = vmatmul.mubr.f32.gmra.mrb[0].mxu0 %v638
        %v816 = vpop.f32.mrb[0].mxu0
        %v817 = vadd.f32 %v493, %v816
        %v818 = vpop.f32.mrb[0].mxu0
        %819 = vmatprep.mubr.f32.mxu0 0.0
        %820 = vmatmul.mubr.f32.gmra.mrb[0].mxu0 %v641
        %v821 = vpop.f32.mrb[0].mxu0
        %v822 = vadd.f32 %v498, %v821
        %v823 = vpop.f32.mrb[0].mxu0
        %824 = vmatprep.mubr.f32.mxu0 0.0
        %825 = vmatmul.mubr.f32.gmra.mrb[0].mxu0 %v644
        %v826 = vpop.f32.mrb[0].mxu0
        %v827 = vadd.f32 %v503, %v826
        %v828 = vpop.f32.mrb[0].mxu0
        %829 = vmatprep.mubr.f32.mxu0 0.0
        %830 = vmatmul.mubr.f32.gmra.mrb[0].mxu0 %v647
        %v831 = vpop.f32.mrb[0].mxu0
        %v832 = vadd.f32 %v508, %v831
        %v833 = vpop.f32.mrb[0].mxu0
        %834 = vmatprep.mubr.f32.mxu0 0.0
        %835 = vmatmul.mubr.f32.gmra.mrb[0].mxu0 %v650
        %v836 = vpop.f32.mrb[0].mxu0
        %v837 = vadd.f32 %v513, %v836
        %v838 = vpop.f32.mrb[0].mxu0
        %839 = vmatprep.mubr.f32.mxu0 0.0
        %840 = vmatmul.mubr.f32.gmra.mrb[0].mxu0 %v653
        %v841 = vpop.f32.mrb[0].mxu0
        %v842 = vadd.f32 %v518, %v841
        %v843 = vpop.f32.mrb[0].mxu0
        %844 = vmatprep.mubr.f32.mxu0 0.0
        %845 = vmatmul.mubr.f32.gmra.mrb[0].mxu0 %v656
        %v846 = vpop.f32.mrb[0].mxu0
        %v847 = vadd.f32 %v523, %v846
        %v848 = vpop.f32.mrb[0].mxu0
        %849 = vmatprep.mubr.f32.mxu0 0.0
        %850 = vmatmul.mubr.f32.gmra.mrb[0].mxu0 %v659
        %v851 = vpop.f32.mrb[0].mxu0
        %v852 = vadd.f32 %v528, %v851
        %v853 = vpop.f32.mrb[0].mxu0
        %854 = vmatprep.mubr.f32.mxu0 0.0
        %855 = vmatmul.mubr.f32.gmra.mrb[0].mxu0 %v662
        %v856 = vpop.f32.mrb[0].mxu0
        %v857 = vadd.f32 %v533, %v856
        %v858 = vpop.f32.mrb[0].mxu0
        %859 = vmatprep.mubr.f32.mxu0 0.0
        %860 = vmatmul.mubr.f32.gmra.mrb[0].mxu0 %v665
        %v861 = vpop.f32.mrb[0].mxu0
        %v862 = vadd.f32 %v538, %v861
        %v863 = vpop.f32.mrb[0].mxu0
        %864 = vmatprep.mubr.f32.mxu0 0.0
        %865 = vmatmul.mubr.f32.gmra.mrb[0].mxu0 %v668
        %v866 = vpop.f32.mrb[0].mxu0
        %v867 = vadd.f32 %v543, %v866
        %v868 = vpop.f32.mrb[0].mxu0
        %869 = vmatprep.mubr.f32.mxu0 0.0
        %870 = vmatmul.mubr.f32.gmra.mrb[0].mxu0 %v671
        %v871 = vpop.f32.mrb[0].mxu0
        %v872 = vadd.f32 %v548, %v871
        %v873 = vpop.f32.mrb[0].mxu0
        %874 = vmatprep.mubr.f32.mxu0 0.0
        %875 = vmatmul.mubr.f32.gmra.mrb[0].mxu0 %v674
        %v876 = vpop.f32.mrb[0].mxu0
        %v877 = vadd.f32 %v553, %v876
        %v878 = vpop.f32.mrb[0].mxu0
        %879 = vmatprep.mubr.f32.mxu0 0.0
        %880 = vmatmul.mubr.f32.gmra.mrb[0].mxu0 %v677
        %v881 = vpop.f32.mrb[0].mxu0
        %v882 = vadd.f32 %v558, %v881
        %v883 = vpop.f32.mrb[0].mxu0
        %884 = vmatprep.mubr.f32.mxu0 0.0
        %885 = vmatmul.mubr.f32.gmra.mrb[0].mxu0 %v680
        %v886 = vpop.f32.mrb[0].mxu0
        %v887 = vadd.f32 %v563, %v886
        %v888 = vpop.f32.mrb[0].mxu0
        %889 = vmatprep.mubr.f32.mxu0 0.0
        %890 = vmatmul.mubr.f32.gmra.mrb[0].mxu0 %v683
        %v891 = vpop.f32.mrb[0].mxu0
        %v892 = vadd.f32 %v568, %v891
        %v893 = vpop.f32.mrb[0].mxu0
        %894 = vmatprep.mubr.f32.mxu0 0.0
        %895 = vmatmul.mubr.f32.gmra.mrb[0].mxu0 %v686
        %v896 = vpop.f32.mrb[0].mxu0
        %v897 = vadd.f32 %v573, %v896
        %v898 = vpop.f32.mrb[0].mxu0
        %899 = vmatprep.mubr.f32.mxu0 0.0
        %900 = vmatmul.mubr.f32.gmra.mrb[0].mxu0 %v689
        %v901 = vpop.f32.mrb[0].mxu0
        %v902 = vadd.f32 %v578, %v901
        %v903 = vpop.f32.mrb[0].mxu0
        %904 = vmatprep.mubr.f32.mxu0 0.0
        %905 = vmatmul.mubr.f32.gmra.mrb[0].mxu0 %v692
        %v906 = vpop.f32.mrb[0].mxu0
        %v907 = vadd.f32 %v583, %v906
        %v908 = vpop.f32.mrb[0].mxu0
        %909 = vmatprep.mubr.f32.mxu0 0.0
        %910 = vmatmul.mubr.f32.gmra.mrb[0].mxu0 %v695
        %v911 = vpop.f32.mrb[0].mxu0
        %v912 = vadd.f32 %v588, %v911
        %v913 = vpop.f32.mrb[0].mxu0
        %914 = vmatprep.mubr.f32.mxu0 0.0
        %915 = vmatmul.mubr.f32.gmra.mrb[0].mxu0 %v698
        %v916 = vpop.f32.mrb[0].mxu0
        %v917 = vadd.f32 %v593, %v916
        %v918 = vpop.f32.mrb[0].mxu0
        %919 = vmatprep.mubr.f32.mxu0 0.0
        %920 = vmatmul.mubr.f32.gmra.mrb[0].mxu0 %v701
        %v921 = vpop.f32.mrb[0].mxu0
        %v922 = vadd.f32 %v598, %v921
        %v923 = vpop.f32.mrb[0].mxu0
        %924 = vmatprep.mubr.f32.mxu0 0.0
        %925 = vmatmul.mubr.f32.gmra.mrb[0].mxu0 %v704
        %v926 = vpop.f32.mrb[0].mxu0
        %v927 = vadd.f32 %v603, %v926
        %v928 = vpop.f32.mrb[0].mxu0
        %929 = vmatprep.mubr.f32.mxu0 0.0
        %930 = vmatmul.mubr.f32.gmra.mrb[0].mxu0 %v707
        %v931 = vpop.f32.mrb[0].mxu0
        %v932 = vadd.f32 %v608, %v931
        %v933 = vpop.f32.mrb[0].mxu0
        %934 = vmatprep.mubr.f32.mxu0 0.0
        %935 = vmatmul.mubr.f32.gmra.mrb[0].mxu0 %v710
        %v936 = vpop.f32.mrb[0].mxu0
        %v937 = vadd.f32 %v613, %v936
        %v938 = vpop.f32.mrb[0].mxu0
        %939 = vdwg.mxu0
        %v940 = vld [vmem:[%s222 + $0x2] sm:$0xff]
        %v941 = vld [vmem:[%s222 + $0xa] sm:$0xff]
        %v942 = vld [vmem:[%s222 + $0x1a] sm:$0xff]
        %v943 = vld [vmem:[%s222 + $0x22] sm:$0xff]
        %v944 = vld [vmem:[%s222 + $0x32] sm:$0xff]
        %v945 = vld [vmem:[%s222 + $0x3a] sm:$0xff]
        %v946 = vld [vmem:[%s222 + $0x4a] sm:$0xff]
        %v947 = vld [vmem:[%s222 + $0x52] sm:$0xff]
        %v948 = vld [vmem:[%s222 + $0x62] sm:$0xff]
        %v949 = vld [vmem:[%s222 + $0x6a] sm:$0xff]
        %v950 = vld [vmem:[%s222 + $0x7a] sm:$0xff]
        %v951 = vld [vmem:[%s222 + $0x82] sm:$0xff]
        %v952 = vld [vmem:[%s222 + $0x92] sm:$0xff]
        %v953 = vld [vmem:[%s222 + $0x9a] sm:$0xff]
        %v954 = vld [vmem:[%s222 + $0xaa] sm:$0xff]
        %v955 = vld [vmem:[%s222 + $0xb2] sm:$0xff]
        %v956 = vld [vmem:[%s222 + $0xc2] sm:$0xff]
        %v957 = vld [vmem:[%s222 + $0xca] sm:$0xff]
        %v958 = vld [vmem:[%s222 + $0xda] sm:$0xff]
        %v959 = vld [vmem:[%s222 + $0xe2] sm:$0xff]
        %v960 = vld [vmem:[%s222 + $0xf2] sm:$0xff]
        %v961 = vld [vmem:[%s222 + $0xfa] sm:$0xff]
        %v962 = vld [vmem:[%s222 + $0x10a] sm:$0xff]
        %v963 = vld [vmem:[%s222 + $0x112] sm:$0xff]
        %v964 = vld [vmem:[%s222 + $0x122] sm:$0xff]
        %v965 = vld [vmem:[%s222 + $0x12a] sm:$0xff]
        %v966 = vld [vmem:[%s222 + $0x13a] sm:$0xff]
        %v967 = vld [vmem:[%s222 + $0x142] sm:$0xff]
        %v968 = vld [vmem:[%s222 + $0x152] sm:$0xff]
        %v969 = vld [vmem:[%s222 + $0x15a] sm:$0xff]
        %v970 = vld [vmem:[%s222 + $0x16a] sm:$0xff]
        %v971 = vld [vmem:[%s222 + $0x172] sm:$0xff]
        %s972 = scalar_lea.vmem %s1, 8
        %v973 = vld [vmem:[%s972] sm:$0xf]
        %v975 = vsel %vm290, %v940, 0
        %v978 = vsel %vm290, %v941, 0
        %v981 = vsel %vm290, %v942, 0
        %v984 = vsel %vm290, %v943, 0
        %v987 = vsel %vm290, %v944, 0
        %v990 = vsel %vm290, %v945, 0
        %v993 = vsel %vm290, %v946, 0
        %v996 = vsel %vm290, %v947, 0
        %v999 = vsel %vm290, %v948, 0
        %v1002 = vsel %vm290, %v949, 0
        %v1005 = vsel %vm290, %v950, 0
        %v1008 = vsel %vm290, %v951, 0
        %v1011 = vsel %vm290, %v952, 0
        %v1014 = vsel %vm290, %v953, 0
        %v1017 = vsel %vm290, %v954, 0
        %v1020 = vsel %vm290, %v955, 0
        %v1023 = vsel %vm290, %v956, 0
        %v1026 = vsel %vm290, %v957, 0
        %v1029 = vsel %vm290, %v958, 0
        %v1032 = vsel %vm290, %v959, 0
        %v1035 = vsel %vm290, %v960, 0
        %v1038 = vsel %vm290, %v961, 0
        %v1041 = vsel %vm290, %v962, 0
        %v1044 = vsel %vm290, %v963, 0
        %v1047 = vsel %vm290, %v964, 0
        %v1050 = vsel %vm290, %v965, 0
        %v1053 = vsel %vm290, %v966, 0
        %v1056 = vsel %vm290, %v967, 0
        %v1059 = vsel %vm290, %v968, 0
        %v1062 = vsel %vm290, %v969, 0
        %v1065 = vsel %vm290, %v970, 0
        %v1068 = vsel %vm290, %v971, 0
        %v1071 = vsel %vm387, %v973, 0
        %1073 = vmatprep.subr.mxu0 0.0
        %1074 = vmatpush1.msra.mxu0 %v1071
        %1075 = vmatprep.subr.mxu0 0.0
        %1076 = vmatpush1.msra.mxu0 0.0
        %1077 = vmatprep.subr.mxu0 0.0
        %1078 = vmatpush1.msra.mxu0 0.0
        %1079 = vmatprep.subr.mxu0 0.0
        %1080 = vmatpush1.msra.mxu0 0.0
        %1081 = vmatprep.subr.mxu0 0.0
        %1082 = vmatpush1.msra.mxu0 0.0
        %1083 = vmatprep.subr.mxu0 0.0
        %1084 = vmatpush1.msra.mxu0 0.0
        %1085 = vmatprep.subr.mxu0 0.0
        %1086 = vmatpush1.msra.mxu0 0.0
        %1087 = vmatprep.subr.mxu0 0.0
        %1088 = vmatpush1.msra.mxu0 0.0
        %1089 = vmatprep.subr.mxu0 0.0
        %1090 = vmatpush1.msra.mxu0 0.0
        %1091 = vmatprep.subr.mxu0 0.0
        %1092 = vmatpush1.msra.mxu0 0.0
        %1093 = vmatprep.subr.mxu0 0.0
        %1094 = vmatpush1.msra.mxu0 0.0
        %1095 = vmatprep.subr.mxu0 0.0
        %1096 = vmatpush1.msra.mxu0 0.0
        %1097 = vmatprep.subr.mxu0 0.0
        %1098 = vmatpush1.msra.mxu0 0.0
        %1099 = vmatprep.subr.mxu0 0.0
        %1100 = vmatpush1.msra.mxu0 0.0
        %1101 = vmatprep.subr.mxu0 0.0
        %1102 = vmatpush1.msra.mxu0 0.0
        %1103 = vmatprep.subr.mxu0 0.0
        %1104 = vmatpush1.msra.mxu0 0.0
        %1105 = vmatprep.subr.mxu0 0.0
        %1106 = vmatpush1.msra.mxu0 0.0
        %1107 = vmatprep.subr.mxu0 0.0
        %1108 = vmatpush1.msra.mxu0 0.0
        %1109 = vmatprep.subr.mxu0 0.0
        %1110 = vmatpush1.msra.mxu0 0.0
        %1111 = vmatprep.subr.mxu0 0.0
        %1112 = vmatpush1.msra.mxu0 0.0
        %1113 = vmatprep.subr.mxu0 0.0
        %1114 = vmatpush1.msra.mxu0 0.0
        %1115 = vmatprep.subr.mxu0 0.0
        %1116 = vmatpush1.msra.mxu0 0.0
        %1117 = vmatprep.subr.mxu0 0.0
        %1118 = vmatpush1.msra.mxu0 0.0
        %1119 = vmatprep.subr.mxu0 0.0
        %1120 = vmatpush1.msra.mxu0 0.0
        %1121 = vmatprep.subr.mxu0 0.0
        %1122 = vmatpush1.msra.mxu0 0.0
        %1123 = vmatprep.subr.mxu0 0.0
        %1124 = vmatpush1.msra.mxu0 0.0
        %1125 = vmatprep.subr.mxu0 0.0
        %1126 = vmatpush1.msra.mxu0 0.0
        %1127 = vmatprep.subr.mxu0 0.0
        %1128 = vmatpush1.msra.mxu0 0.0
        %1129 = vmatprep.subr.mxu0 0.0
        %1130 = vmatpush1.msra.mxu0 0.0
        %1131 = vmatprep.subr.mxu0 0.0
        %1132 = vmatpush1.msra.mxu0 0.0
        %1133 = vmatprep.subr.mxu0 0.0
        %1134 = vmatpush1.msra.mxu0 0.0
        %1135 = vmatprep.subr.mxu0 0.0
        %1136 = vmatpush1.msra.mxu0 0.0
        %1137 = vmatprep.mubr.f32.mxu0 0.0
        %1138 = vmatmul.mubr.f32.gmra.mrb[0].mxu0 %v975
        %v1139 = vpop.f32.mrb[0].mxu0
        %v1140 = vadd.f32 0.0, %v1139
        %v1141 = vpop.f32.mrb[0].mxu0
        %1142 = vmatprep.mubr.f32.mxu0 0.0
        %1143 = vmatmul.mubr.f32.gmra.mrb[0].mxu0 %v978
        %v1144 = vpop.f32.mrb[0].mxu0
        %v1145 = vadd.f32 0.0, %v1144
        %v1146 = vpop.f32.mrb[0].mxu0
        %1147 = vmatprep.mubr.f32.mxu0 0.0
        %1148 = vmatmul.mubr.f32.gmra.mrb[0].mxu0 %v981
        %v1149 = vpop.f32.mrb[0].mxu0
        %v1150 = vadd.f32 0.0, %v1149
        %v1151 = vpop.f32.mrb[0].mxu0
        %1152 = vmatprep.mubr.f32.mxu0 0.0
        %1153 = vmatmul.mubr.f32.gmra.mrb[0].mxu0 %v984
        %v1154 = vpop.f32.mrb[0].mxu0
        %v1155 = vadd.f32 0.0, %v1154
        %v1156 = vpop.f32.mrb[0].mxu0
        %1157 = vmatprep.mubr.f32.mxu0 0.0
        %1158 = vmatmul.mubr.f32.gmra.mrb[0].mxu0 %v987
        %v1159 = vpop.f32.mrb[0].mxu0
        %v1160 = vadd.f32 0.0, %v1159
        %v1161 = vpop.f32.mrb[0].mxu0
        %1162 = vmatprep.mubr.f32.mxu0 0.0
        %1163 = vmatmul.mubr.f32.gmra.mrb[0].mxu0 %v990
        %v1164 = vpop.f32.mrb[0].mxu0
        %v1165 = vadd.f32 0.0, %v1164
        %v1166 = vpop.f32.mrb[0].mxu0
        %1167 = vmatprep.mubr.f32.mxu0 0.0
        %1168 = vmatmul.mubr.f32.gmra.mrb[0].mxu0 %v993
        %v1169 = vpop.f32.mrb[0].mxu0
        %v1170 = vadd.f32 0.0, %v1169
        %v1171 = vpop.f32.mrb[0].mxu0
        %1172 = vmatprep.mubr.f32.mxu0 0.0
        %1173 = vmatmul.mubr.f32.gmra.mrb[0].mxu0 %v996
        %v1174 = vpop.f32.mrb[0].mxu0
        %v1175 = vadd.f32 0.0, %v1174
        %v1176 = vpop.f32.mrb[0].mxu0
        %1177 = vmatprep.mubr.f32.mxu0 0.0
        %1178 = vmatmul.mubr.f32.gmra.mrb[0].mxu0 %v999
        %v1179 = vpop.f32.mrb[0].mxu0
        %v1180 = vadd.f32 0.0, %v1179
        %v1181 = vpop.f32.mrb[0].mxu0
        %1182 = vmatprep.mubr.f32.mxu0 0.0
        %1183 = vmatmul.mubr.f32.gmra.mrb[0].mxu0 %v1002
        %v1184 = vpop.f32.mrb[0].mxu0
        %v1185 = vadd.f32 0.0, %v1184
        %v1186 = vpop.f32.mrb[0].mxu0
        %1187 = vmatprep.mubr.f32.mxu0 0.0
        %1188 = vmatmul.mubr.f32.gmra.mrb[0].mxu0 %v1005
        %v1189 = vpop.f32.mrb[0].mxu0
        %v1190 = vadd.f32 0.0, %v1189
        %v1191 = vpop.f32.mrb[0].mxu0
        %1192 = vmatprep.mubr.f32.mxu0 0.0
        %1193 = vmatmul.mubr.f32.gmra.mrb[0].mxu0 %v1008
        %v1194 = vpop.f32.mrb[0].mxu0
        %v1195 = vadd.f32 0.0, %v1194
        %v1196 = vpop.f32.mrb[0].mxu0
        %1197 = vmatprep.mubr.f32.mxu0 0.0
        %1198 = vmatmul.mubr.f32.gmra.mrb[0].mxu0 %v1011
        %v1199 = vpop.f32.mrb[0].mxu0
        %v1200 = vadd.f32 0.0, %v1199
        %v1201 = vpop.f32.mrb[0].mxu0
        %1202 = vmatprep.mubr.f32.mxu0 0.0
        %1203 = vmatmul.mubr.f32.gmra.mrb[0].mxu0 %v1014
        %v1204 = vpop.f32.mrb[0].mxu0
        %v1205 = vadd.f32 0.0, %v1204
        %v1206 = vpop.f32.mrb[0].mxu0
        %1207 = vmatprep.mubr.f32.mxu0 0.0
        %1208 = vmatmul.mubr.f32.gmra.mrb[0].mxu0 %v1017
        %v1209 = vpop.f32.mrb[0].mxu0
        %v1210 = vadd.f32 0.0, %v1209
        %v1211 = vpop.f32.mrb[0].mxu0
        %1212 = vmatprep.mubr.f32.mxu0 0.0
        %1213 = vmatmul.mubr.f32.gmra.mrb[0].mxu0 %v1020
        %v1214 = vpop.f32.mrb[0].mxu0
        %v1215 = vadd.f32 0.0, %v1214
        %v1216 = vpop.f32.mrb[0].mxu0
        %1217 = vmatprep.mubr.f32.mxu0 0.0
        %1218 = vmatmul.mubr.f32.gmra.mrb[0].mxu0 %v1023
        %v1219 = vpop.f32.mrb[0].mxu0
        %v1220 = vadd.f32 0.0, %v1219
        %v1221 = vpop.f32.mrb[0].mxu0
        %1222 = vmatprep.mubr.f32.mxu0 0.0
        %1223 = vmatmul.mubr.f32.gmra.mrb[0].mxu0 %v1026
        %v1224 = vpop.f32.mrb[0].mxu0
        %v1225 = vadd.f32 0.0, %v1224
        %v1226 = vpop.f32.mrb[0].mxu0
        %1227 = vmatprep.mubr.f32.mxu0 0.0
        %1228 = vmatmul.mubr.f32.gmra.mrb[0].mxu0 %v1029
        %v1229 = vpop.f32.mrb[0].mxu0
        %v1230 = vadd.f32 0.0, %v1229
        %v1231 = vpop.f32.mrb[0].mxu0
        %1232 = vmatprep.mubr.f32.mxu0 0.0
        %1233 = vmatmul.mubr.f32.gmra.mrb[0].mxu0 %v1032
        %v1234 = vpop.f32.mrb[0].mxu0
        %v1235 = vadd.f32 0.0, %v1234
        %v1236 = vpop.f32.mrb[0].mxu0
        %1237 = vmatprep.mubr.f32.mxu0 0.0
        %1238 = vmatmul.mubr.f32.gmra.mrb[0].mxu0 %v1035
        %v1239 = vpop.f32.mrb[0].mxu0
        %v1240 = vadd.f32 0.0, %v1239
        %v1241 = vpop.f32.mrb[0].mxu0
        %1242 = vmatprep.mubr.f32.mxu0 0.0
        %1243 = vmatmul.mubr.f32.gmra.mrb[0].mxu0 %v1038
        %v1244 = vpop.f32.mrb[0].mxu0
        %v1245 = vadd.f32 0.0, %v1244
        %v1246 = vpop.f32.mrb[0].mxu0
        %1247 = vmatprep.mubr.f32.mxu0 0.0
        %1248 = vmatmul.mubr.f32.gmra.mrb[0].mxu0 %v1041
        %v1249 = vpop.f32.mrb[0].mxu0
        %v1250 = vadd.f32 0.0, %v1249
        %v1251 = vpop.f32.mrb[0].mxu0
        %1252 = vmatprep.mubr.f32.mxu0 0.0
        %1253 = vmatmul.mubr.f32.gmra.mrb[0].mxu0 %v1044
        %v1254 = vpop.f32.mrb[0].mxu0
        %v1255 = vadd.f32 0.0, %v1254
        %v1256 = vpop.f32.mrb[0].mxu0
        %1257 = vmatprep.mubr.f32.mxu0 0.0
        %1258 = vmatmul.mubr.f32.gmra.mrb[0].mxu0 %v1047
        %v1259 = vpop.f32.mrb[0].mxu0
        %v1260 = vadd.f32 0.0, %v1259
        %v1261 = vpop.f32.mrb[0].mxu0
        %1262 = vmatprep.mubr.f32.mxu0 0.0
        %1263 = vmatmul.mubr.f32.gmra.mrb[0].mxu0 %v1050
        %v1264 = vpop.f32.mrb[0].mxu0
        %v1265 = vadd.f32 0.0, %v1264
        %v1266 = vpop.f32.mrb[0].mxu0
        %1267 = vmatprep.mubr.f32.mxu0 0.0
        %1268 = vmatmul.mubr.f32.gmra.mrb[0].mxu0 %v1053
        %v1269 = vpop.f32.mrb[0].mxu0
        %v1270 = vadd.f32 0.0, %v1269
        %v1271 = vpop.f32.mrb[0].mxu0
        %1272 = vmatprep.mubr.f32.mxu0 0.0
        %1273 = vmatmul.mubr.f32.gmra.mrb[0].mxu0 %v1056
        %v1274 = vpop.f32.mrb[0].mxu0
        %v1275 = vadd.f32 0.0, %v1274
        %v1276 = vpop.f32.mrb[0].mxu0
        %1277 = vmatprep.mubr.f32.mxu0 0.0
        %1278 = vmatmul.mubr.f32.gmra.mrb[0].mxu0 %v1059
        %v1279 = vpop.f32.mrb[0].mxu0
        %v1280 = vadd.f32 0.0, %v1279
        %v1281 = vpop.f32.mrb[0].mxu0
        %1282 = vmatprep.mubr.f32.mxu0 0.0
        %1283 = vmatmul.mubr.f32.gmra.mrb[0].mxu0 %v1062
        %v1284 = vpop.f32.mrb[0].mxu0
        %v1285 = vadd.f32 0.0, %v1284
        %v1286 = vpop.f32.mrb[0].mxu0
        %1287 = vmatprep.mubr.f32.mxu0 0.0
        %1288 = vmatmul.mubr.f32.gmra.mrb[0].mxu0 %v1065
        %v1289 = vpop.f32.mrb[0].mxu0
        %v1290 = vadd.f32 0.0, %v1289
        %v1291 = vpop.f32.mrb[0].mxu0
        %1292 = vmatprep.mubr.f32.mxu0 0.0
        %1293 = vmatmul.mubr.f32.gmra.mrb[0].mxu0 %v1068
        %v1294 = vpop.f32.mrb[0].mxu0
        %v1295 = vadd.f32 0.0, %v1294
        %v1296 = vpop.f32.mrb[0].mxu0
        %1297 = vdwg.mxu0
        %v1298 = vadd.f32 %v782, %v1140
        %v1299 = vadd.f32 %v787, %v1145
        %v1300 = vadd.f32 %v792, %v1150
        %v1301 = vadd.f32 %v797, %v1155
        %v1302 = vadd.f32 %v802, %v1160
        %v1303 = vadd.f32 %v807, %v1165
        %v1304 = vadd.f32 %v812, %v1170
        %v1305 = vadd.f32 %v817, %v1175
        %v1306 = vadd.f32 %v822, %v1180
        %v1307 = vadd.f32 %v827, %v1185
        %v1308 = vadd.f32 %v832, %v1190
        %v1309 = vadd.f32 %v837, %v1195
        %v1310 = vadd.f32 %v842, %v1200
        %v1311 = vadd.f32 %v847, %v1205
        %v1312 = vadd.f32 %v852, %v1210
        %v1313 = vadd.f32 %v857, %v1215
        %v1314 = vadd.f32 %v862, %v1220
        %v1315 = vadd.f32 %v867, %v1225
        %v1316 = vadd.f32 %v872, %v1230
        %v1317 = vadd.f32 %v877, %v1235
        %v1318 = vadd.f32 %v882, %v1240
        %v1319 = vadd.f32 %v887, %v1245
        %v1320 = vadd.f32 %v892, %v1250
        %v1321 = vadd.f32 %v897, %v1255
        %v1322 = vadd.f32 %v902, %v1260
        %v1323 = vadd.f32 %v907, %v1265
        %v1324 = vadd.f32 %v912, %v1270
        %v1325 = vadd.f32 %v917, %v1275
        %v1326 = vadd.f32 %v922, %v1280
        %v1327 = vadd.f32 %v927, %v1285
        %v1328 = vadd.f32 %v932, %v1290
        %v1329 = vadd.f32 %v937, %v1295
        %s1330 = scalar_lea.vmem %s222, 24
        %v1331 = vld [vmem:[%s1330] sm:$0xff]
        %v1332 = vld [vmem:[%s1330 + $0x8] sm:$0xff]
        %v1333 = vld [vmem:[%s1330 + $0x18] sm:$0xff]
        %v1334 = vld [vmem:[%s1330 + $0x20] sm:$0xff]
        %v1335 = vld [vmem:[%s1330 + $0x30] sm:$0xff]
        %v1336 = vld [vmem:[%s1330 + $0x38] sm:$0xff]
        %v1337 = vld [vmem:[%s1330 + $0x48] sm:$0xff]
        %v1338 = vld [vmem:[%s1330 + $0x50] sm:$0xff]
        %v1339 = vld [vmem:[%s1330 + $0x60] sm:$0xff]
        %v1340 = vld [vmem:[%s1330 + $0x68] sm:$0xff]
        %v1341 = vld [vmem:[%s1330 + $0x78] sm:$0xff]
        %v1342 = vld [vmem:[%s1330 + $0x80] sm:$0xff]
        %v1343 = vld [vmem:[%s1330 + $0x90] sm:$0xff]
        %v1344 = vld [vmem:[%s1330 + $0x98] sm:$0xff]
        %v1345 = vld [vmem:[%s1330 + $0xa8] sm:$0xff]
        %v1346 = vld [vmem:[%s1330 + $0xb0] sm:$0xff]
        %v1347 = vld [vmem:[%s1330 + $0xc0] sm:$0xff]
        %v1348 = vld [vmem:[%s1330 + $0xc8] sm:$0xff]
        %v1349 = vld [vmem:[%s1330 + $0xd8] sm:$0xff]
        %v1350 = vld [vmem:[%s1330 + $0xe0] sm:$0xff]
        %v1351 = vld [vmem:[%s1330 + $0xf0] sm:$0xff]
        %v1352 = vld [vmem:[%s1330 + $0xf8] sm:$0xff]
        %v1353 = vld [vmem:[%s1330 + $0x108] sm:$0xff]
        %v1354 = vld [vmem:[%s1330 + $0x110] sm:$0xff]
        %v1355 = vld [vmem:[%s1330 + $0x120] sm:$0xff]
        %v1356 = vld [vmem:[%s1330 + $0x128] sm:$0xff]
        %v1357 = vld [vmem:[%s1330 + $0x138] sm:$0xff]
        %v1358 = vld [vmem:[%s1330 + $0x140] sm:$0xff]
        %v1359 = vld [vmem:[%s1330 + $0x150] sm:$0xff]
        %v1360 = vld [vmem:[%s1330 + $0x158] sm:$0xff]
        %v1361 = vld [vmem:[%s1330 + $0x168] sm:$0xff]
        %v1362 = vld [vmem:[%s1330 + $0x170] sm:$0xff]
        %s1363 = scalar_lea.vmem %s1, 12
        %v1364 = vld [vmem:[%s1363] sm:$0xf]
        %v1366 = vsel %vm290, %v1331, 0
        %v1369 = vsel %vm290, %v1332, 0
        %v1372 = vsel %vm290, %v1333, 0
        %v1375 = vsel %vm290, %v1334, 0
        %v1378 = vsel %vm290, %v1335, 0
        %v1381 = vsel %vm290, %v1336, 0
        %v1384 = vsel %vm290, %v1337, 0
        %v1387 = vsel %vm290, %v1338, 0
        %v1390 = vsel %vm290, %v1339, 0
        %v1393 = vsel %vm290, %v1340, 0
        %v1396 = vsel %vm290, %v1341, 0
        %v1399 = vsel %vm290, %v1342, 0
        %v1402 = vsel %vm290, %v1343, 0
        %v1405 = vsel %vm290, %v1344, 0
        %v1408 = vsel %vm290, %v1345, 0
        %v1411 = vsel %vm290, %v1346, 0
        %v1414 = vsel %vm290, %v1347, 0
        %v1417 = vsel %vm290, %v1348, 0
        %v1420 = vsel %vm290, %v1349, 0
        %v1423 = vsel %vm290, %v1350, 0
        %v1426 = vsel %vm290, %v1351, 0
        %v1429 = vsel %vm290, %v1352, 0
        %v1432 = vsel %vm290, %v1353, 0
        %v1435 = vsel %vm290, %v1354, 0
        %v1438 = vsel %vm290, %v1355, 0
        %v1441 = vsel %vm290, %v1356, 0
        %v1444 = vsel %vm290, %v1357, 0
        %v1447 = vsel %vm290, %v1358, 0
        %v1450 = vsel %vm290, %v1359, 0
        %v1453 = vsel %vm290, %v1360, 0
        %v1456 = vsel %vm290, %v1361, 0
        %v1459 = vsel %vm290, %v1362, 0
        %v1462 = vsel %vm387, %v1364, 0
        %1464 = vmatprep.subr.mxu0 0.0
        %1465 = vmatpush1.msra.mxu0 %v1462
        %1466 = vmatprep.subr.mxu0 0.0
        %1467 = vmatpush1.msra.mxu0 0.0
        %1468 = vmatprep.subr.mxu0 0.0
        %1469 = vmatpush1.msra.mxu0 0.0
        %1470 = vmatprep.subr.mxu0 0.0
        %1471 = vmatpush1.msra.mxu0 0.0
        %1472 = vmatprep.subr.mxu0 0.0
        %1473 = vmatpush1.msra.mxu0 0.0
        %1474 = vmatprep.subr.mxu0 0.0
        %1475 = vmatpush1.msra.mxu0 0.0
        %1476 = vmatprep.subr.mxu0 0.0
        %1477 = vmatpush1.msra.mxu0 0.0
        %1478 = vmatprep.subr.mxu0 0.0
        %1479 = vmatpush1.msra.mxu0 0.0
        %1480 = vmatprep.subr.mxu0 0.0
        %1481 = vmatpush1.msra.mxu0 0.0
        %1482 = vmatprep.subr.mxu0 0.0
        %1483 = vmatpush1.msra.mxu0 0.0
        %1484 = vmatprep.subr.mxu0 0.0
        %1485 = vmatpush1.msra.mxu0 0.0
        %1486 = vmatprep.subr.mxu0 0.0
        %1487 = vmatpush1.msra.mxu0 0.0
        %1488 = vmatprep.subr.mxu0 0.0
        %1489 = vmatpush1.msra.mxu0 0.0
        %1490 = vmatprep.subr.mxu0 0.0
        %1491 = vmatpush1.msra.mxu0 0.0
        %1492 = vmatprep.subr.mxu0 0.0
        %1493 = vmatpush1.msra.mxu0 0.0
        %1494 = vmatprep.subr.mxu0 0.0
        %1495 = vmatpush1.msra.mxu0 0.0
        %1496 = vmatprep.subr.mxu0 0.0
        %1497 = vmatpush1.msra.mxu0 0.0
        %1498 = vmatprep.subr.mxu0 0.0
        %1499 = vmatpush1.msra.mxu0 0.0
        %1500 = vmatprep.subr.mxu0 0.0
        %1501 = vmatpush1.msra.mxu0 0.0
        %1502 = vmatprep.subr.mxu0 0.0
        %1503 = vmatpush1.msra.mxu0 0.0
        %1504 = vmatprep.subr.mxu0 0.0
        %1505 = vmatpush1.msra.mxu0 0.0
        %1506 = vmatprep.subr.mxu0 0.0
        %1507 = vmatpush1.msra.mxu0 0.0
        %1508 = vmatprep.subr.mxu0 0.0
        %1509 = vmatpush1.msra.mxu0 0.0
        %1510 = vmatprep.subr.mxu0 0.0
        %1511 = vmatpush1.msra.mxu0 0.0
        %1512 = vmatprep.subr.mxu0 0.0
        %1513 = vmatpush1.msra.mxu0 0.0
        %1514 = vmatprep.subr.mxu0 0.0
        %1515 = vmatpush1.msra.mxu0 0.0
        %1516 = vmatprep.subr.mxu0 0.0
        %1517 = vmatpush1.msra.mxu0 0.0
        %1518 = vmatprep.subr.mxu0 0.0
        %1519 = vmatpush1.msra.mxu0 0.0
        %1520 = vmatprep.subr.mxu0 0.0
        %1521 = vmatpush1.msra.mxu0 0.0
        %1522 = vmatprep.subr.mxu0 0.0
        %1523 = vmatpush1.msra.mxu0 0.0
        %1524 = vmatprep.subr.mxu0 0.0
        %1525 = vmatpush1.msra.mxu0 0.0
        %1526 = vmatprep.subr.mxu0 0.0
        %1527 = vmatpush1.msra.mxu0 0.0
        %1528 = vmatprep.mubr.f32.mxu0 0.0
        %1529 = vmatmul.mubr.f32.gmra.mrb[0].mxu0 %v1366
        %v1530 = vpop.f32.mrb[0].mxu0
        %v1531 = vadd.f32 0.0, %v1530
        %v1532 = vpop.f32.mrb[0].mxu0
        %1533 = vmatprep.mubr.f32.mxu0 0.0
        %1534 = vmatmul.mubr.f32.gmra.mrb[0].mxu0 %v1369
        %v1535 = vpop.f32.mrb[0].mxu0
        %v1536 = vadd.f32 0.0, %v1535
        %v1537 = vpop.f32.mrb[0].mxu0
        %1538 = vmatprep.mubr.f32.mxu0 0.0
        %1539 = vmatmul.mubr.f32.gmra.mrb[0].mxu0 %v1372
        %v1540 = vpop.f32.mrb[0].mxu0
        %v1541 = vadd.f32 0.0, %v1540
        %v1542 = vpop.f32.mrb[0].mxu0
        %1543 = vmatprep.mubr.f32.mxu0 0.0
        %1544 = vmatmul.mubr.f32.gmra.mrb[0].mxu0 %v1375
        %v1545 = vpop.f32.mrb[0].mxu0
        %v1546 = vadd.f32 0.0, %v1545
        %v1547 = vpop.f32.mrb[0].mxu0
        %1548 = vmatprep.mubr.f32.mxu0 0.0
        %1549 = vmatmul.mubr.f32.gmra.mrb[0].mxu0 %v1378
        %v1550 = vpop.f32.mrb[0].mxu0
        %v1551 = vadd.f32 0.0, %v1550
        %v1552 = vpop.f32.mrb[0].mxu0
        %1553 = vmatprep.mubr.f32.mxu0 0.0
        %1554 = vmatmul.mubr.f32.gmra.mrb[0].mxu0 %v1381
        %v1555 = vpop.f32.mrb[0].mxu0
        %v1556 = vadd.f32 0.0, %v1555
        %v1557 = vpop.f32.mrb[0].mxu0
        %1558 = vmatprep.mubr.f32.mxu0 0.0
        %1559 = vmatmul.mubr.f32.gmra.mrb[0].mxu0 %v1384
        %v1560 = vpop.f32.mrb[0].mxu0
        %v1561 = vadd.f32 0.0, %v1560
        %v1562 = vpop.f32.mrb[0].mxu0
        %1563 = vmatprep.mubr.f32.mxu0 0.0
        %1564 = vmatmul.mubr.f32.gmra.mrb[0].mxu0 %v1387
        %v1565 = vpop.f32.mrb[0].mxu0
        %v1566 = vadd.f32 0.0, %v1565
        %v1567 = vpop.f32.mrb[0].mxu0
        %1568 = vmatprep.mubr.f32.mxu0 0.0
        %1569 = vmatmul.mubr.f32.gmra.mrb[0].mxu0 %v1390
        %v1570 = vpop.f32.mrb[0].mxu0
        %v1571 = vadd.f32 0.0, %v1570
        %v1572 = vpop.f32.mrb[0].mxu0
        %1573 = vmatprep.mubr.f32.mxu0 0.0
        %1574 = vmatmul.mubr.f32.gmra.mrb[0].mxu0 %v1393
        %v1575 = vpop.f32.mrb[0].mxu0
        %v1576 = vadd.f32 0.0, %v1575
        %v1577 = vpop.f32.mrb[0].mxu0
        %1578 = vmatprep.mubr.f32.mxu0 0.0
        %1579 = vmatmul.mubr.f32.gmra.mrb[0].mxu0 %v1396
        %v1580 = vpop.f32.mrb[0].mxu0
        %v1581 = vadd.f32 0.0, %v1580
        %v1582 = vpop.f32.mrb[0].mxu0
        %1583 = vmatprep.mubr.f32.mxu0 0.0
        %1584 = vmatmul.mubr.f32.gmra.mrb[0].mxu0 %v1399
        %v1585 = vpop.f32.mrb[0].mxu0
        %v1586 = vadd.f32 0.0, %v1585
        %v1587 = vpop.f32.mrb[0].mxu0
        %1588 = vmatprep.mubr.f32.mxu0 0.0
        %1589 = vmatmul.mubr.f32.gmra.mrb[0].mxu0 %v1402
        %v1590 = vpop.f32.mrb[0].mxu0
        %v1591 = vadd.f32 0.0, %v1590
        %v1592 = vpop.f32.mrb[0].mxu0
        %1593 = vmatprep.mubr.f32.mxu0 0.0
        %1594 = vmatmul.mubr.f32.gmra.mrb[0].mxu0 %v1405
        %v1595 = vpop.f32.mrb[0].mxu0
        %v1596 = vadd.f32 0.0, %v1595
        %v1597 = vpop.f32.mrb[0].mxu0
        %1598 = vmatprep.mubr.f32.mxu0 0.0
        %1599 = vmatmul.mubr.f32.gmra.mrb[0].mxu0 %v1408
        %v1600 = vpop.f32.mrb[0].mxu0
        %v1601 = vadd.f32 0.0, %v1600
        %v1602 = vpop.f32.mrb[0].mxu0
        %1603 = vmatprep.mubr.f32.mxu0 0.0
        %1604 = vmatmul.mubr.f32.gmra.mrb[0].mxu0 %v1411
        %v1605 = vpop.f32.mrb[0].mxu0
        %v1606 = vadd.f32 0.0, %v1605
        %v1607 = vpop.f32.mrb[0].mxu0
        %1608 = vmatprep.mubr.f32.mxu0 0.0
        %1609 = vmatmul.mubr.f32.gmra.mrb[0].mxu0 %v1414
        %v1610 = vpop.f32.mrb[0].mxu0
        %v1611 = vadd.f32 0.0, %v1610
        %v1612 = vpop.f32.mrb[0].mxu0
        %1613 = vmatprep.mubr.f32.mxu0 0.0
        %1614 = vmatmul.mubr.f32.gmra.mrb[0].mxu0 %v1417
        %v1615 = vpop.f32.mrb[0].mxu0
        %v1616 = vadd.f32 0.0, %v1615
        %v1617 = vpop.f32.mrb[0].mxu0
        %1618 = vmatprep.mubr.f32.mxu0 0.0
        %1619 = vmatmul.mubr.f32.gmra.mrb[0].mxu0 %v1420
        %v1620 = vpop.f32.mrb[0].mxu0
        %v1621 = vadd.f32 0.0, %v1620
        %v1622 = vpop.f32.mrb[0].mxu0
        %1623 = vmatprep.mubr.f32.mxu0 0.0
        %1624 = vmatmul.mubr.f32.gmra.mrb[0].mxu0 %v1423
        %v1625 = vpop.f32.mrb[0].mxu0
        %v1626 = vadd.f32 0.0, %v1625
        %v1627 = vpop.f32.mrb[0].mxu0
        %1628 = vmatprep.mubr.f32.mxu0 0.0
        %1629 = vmatmul.mubr.f32.gmra.mrb[0].mxu0 %v1426
        %v1630 = vpop.f32.mrb[0].mxu0
        %v1631 = vadd.f32 0.0, %v1630
        %v1632 = vpop.f32.mrb[0].mxu0
        %1633 = vmatprep.mubr.f32.mxu0 0.0
        %1634 = vmatmul.mubr.f32.gmra.mrb[0].mxu0 %v1429
        %v1635 = vpop.f32.mrb[0].mxu0
        %v1636 = vadd.f32 0.0, %v1635
        %v1637 = vpop.f32.mrb[0].mxu0
        %1638 = vmatprep.mubr.f32.mxu0 0.0
        %1639 = vmatmul.mubr.f32.gmra.mrb[0].mxu0 %v1432
        %v1640 = vpop.f32.mrb[0].mxu0
        %v1641 = vadd.f32 0.0, %v1640
        %v1642 = vpop.f32.mrb[0].mxu0
        %1643 = vmatprep.mubr.f32.mxu0 0.0
        %1644 = vmatmul.mubr.f32.gmra.mrb[0].mxu0 %v1435
        %v1645 = vpop.f32.mrb[0].mxu0
        %v1646 = vadd.f32 0.0, %v1645
        %v1647 = vpop.f32.mrb[0].mxu0
        %1648 = vmatprep.mubr.f32.mxu0 0.0
        %1649 = vmatmul.mubr.f32.gmra.mrb[0].mxu0 %v1438
        %v1650 = vpop.f32.mrb[0].mxu0
        %v1651 = vadd.f32 0.0, %v1650
        %v1652 = vpop.f32.mrb[0].mxu0
        %1653 = vmatprep.mubr.f32.mxu0 0.0
        %1654 = vmatmul.mubr.f32.gmra.mrb[0].mxu0 %v1441
        %v1655 = vpop.f32.mrb[0].mxu0
        %v1656 = vadd.f32 0.0, %v1655
        %v1657 = vpop.f32.mrb[0].mxu0
        %1658 = vmatprep.mubr.f32.mxu0 0.0
        %1659 = vmatmul.mubr.f32.gmra.mrb[0].mxu0 %v1444
        %v1660 = vpop.f32.mrb[0].mxu0
        %v1661 = vadd.f32 0.0, %v1660
        %v1662 = vpop.f32.mrb[0].mxu0
        %1663 = vmatprep.mubr.f32.mxu0 0.0
        %1664 = vmatmul.mubr.f32.gmra.mrb[0].mxu0 %v1447
        %v1665 = vpop.f32.mrb[0].mxu0
        %v1666 = vadd.f32 0.0, %v1665
        %v1667 = vpop.f32.mrb[0].mxu0
        %1668 = vmatprep.mubr.f32.mxu0 0.0
        %1669 = vmatmul.mubr.f32.gmra.mrb[0].mxu0 %v1450
        %v1670 = vpop.f32.mrb[0].mxu0
        %v1671 = vadd.f32 0.0, %v1670
        %v1672 = vpop.f32.mrb[0].mxu0
        %1673 = vmatprep.mubr.f32.mxu0 0.0
        %1674 = vmatmul.mubr.f32.gmra.mrb[0].mxu0 %v1453
        %v1675 = vpop.f32.mrb[0].mxu0
        %v1676 = vadd.f32 0.0, %v1675
        %v1677 = vpop.f32.mrb[0].mxu0
        %1678 = vmatprep.mubr.f32.mxu0 0.0
        %1679 = vmatmul.mubr.f32.gmra.mrb[0].mxu0 %v1456
        %v1680 = vpop.f32.mrb[0].mxu0
        %v1681 = vadd.f32 0.0, %v1680
        %v1682 = vpop.f32.mrb[0].mxu0
        %1683 = vmatprep.mubr.f32.mxu0 0.0
        %1684 = vmatmul.mubr.f32.gmra.mrb[0].mxu0 %v1459
        %v1685 = vpop.f32.mrb[0].mxu0
        %v1686 = vadd.f32 0.0, %v1685
        %v1687 = vpop.f32.mrb[0].mxu0
        %1688 = vdwg.mxu0
        %v1689 = vadd.f32 %v1298, %v1531
        %v1690 = vadd.f32 %v1299, %v1536
        %v1691 = vadd.f32 %v1300, %v1541
        %v1692 = vadd.f32 %v1301, %v1546
        %v1693 = vadd.f32 %v1302, %v1551
        %v1694 = vadd.f32 %v1303, %v1556
        %v1695 = vadd.f32 %v1304, %v1561
        %v1696 = vadd.f32 %v1305, %v1566
        %v1697 = vadd.f32 %v1306, %v1571
        %v1698 = vadd.f32 %v1307, %v1576
        %v1699 = vadd.f32 %v1308, %v1581
        %v1700 = vadd.f32 %v1309, %v1586
        %v1701 = vadd.f32 %v1310, %v1591
        %v1702 = vadd.f32 %v1311, %v1596
        %v1703 = vadd.f32 %v1312, %v1601
        %v1704 = vadd.f32 %v1313, %v1606
        %v1705 = vadd.f32 %v1314, %v1611
        %v1706 = vadd.f32 %v1315, %v1616
        %v1707 = vadd.f32 %v1316, %v1621
        %v1708 = vadd.f32 %v1317, %v1626
        %v1709 = vadd.f32 %v1318, %v1631
        %v1710 = vadd.f32 %v1319, %v1636
        %v1711 = vadd.f32 %v1320, %v1641
        %v1712 = vadd.f32 %v1321, %v1646
        %v1713 = vadd.f32 %v1322, %v1651
        %v1714 = vadd.f32 %v1323, %v1656
        %v1715 = vadd.f32 %v1324, %v1661
        %v1716 = vadd.f32 %v1325, %v1666
        %v1717 = vadd.f32 %v1326, %v1671
        %v1718 = vadd.f32 %v1327, %v1676
        %v1719 = vadd.f32 %v1328, %v1681
        %v1720 = vadd.f32 %v1329, %v1686
        %v1721 = vld [vmem:[%s1330 + $0x1] sm:$0xff]
        %v1722 = vld [vmem:[%s1330 + $0x9] sm:$0xff]
        %v1723 = vld [vmem:[%s1330 + $0x19] sm:$0xff]
        %v1724 = vld [vmem:[%s1330 + $0x21] sm:$0xff]
        %v1725 = vld [vmem:[%s1330 + $0x31] sm:$0xff]
        %v1726 = vld [vmem:[%s1330 + $0x39] sm:$0xff]
        %v1727 = vld [vmem:[%s1330 + $0x49] sm:$0xff]
        %v1728 = vld [vmem:[%s1330 + $0x51] sm:$0xff]
        %v1729 = vld [vmem:[%s1330 + $0x61] sm:$0xff]
        %v1730 = vld [vmem:[%s1330 + $0x69] sm:$0xff]
        %v1731 = vld [vmem:[%s1330 + $0x79] sm:$0xff]
        %v1732 = vld [vmem:[%s1330 + $0x81] sm:$0xff]
        %v1733 = vld [vmem:[%s1330 + $0x91] sm:$0xff]
        %v1734 = vld [vmem:[%s1330 + $0x99] sm:$0xff]
        %v1735 = vld [vmem:[%s1330 + $0xa9] sm:$0xff]
        %v1736 = vld [vmem:[%s1330 + $0xb1] sm:$0xff]
        %v1737 = vld [vmem:[%s1330 + $0xc1] sm:$0xff]
        %v1738 = vld [vmem:[%s1330 + $0xc9] sm:$0xff]
        %v1739 = vld [vmem:[%s1330 + $0xd9] sm:$0xff]
        %v1740 = vld [vmem:[%s1330 + $0xe1] sm:$0xff]
        %v1741 = vld [vmem:[%s1330 + $0xf1] sm:$0xff]
        %v1742 = vld [vmem:[%s1330 + $0xf9] sm:$0xff]
        %v1743 = vld [vmem:[%s1330 + $0x109] sm:$0xff]
        %v1744 = vld [vmem:[%s1330 + $0x111] sm:$0xff]
        %v1745 = vld [vmem:[%s1330 + $0x121] sm:$0xff]
        %v1746 = vld [vmem:[%s1330 + $0x129] sm:$0xff]
        %v1747 = vld [vmem:[%s1330 + $0x139] sm:$0xff]
        %v1748 = vld [vmem:[%s1330 + $0x141] sm:$0xff]
        %v1749 = vld [vmem:[%s1330 + $0x151] sm:$0xff]
        %v1750 = vld [vmem:[%s1330 + $0x159] sm:$0xff]
        %v1751 = vld [vmem:[%s1330 + $0x169] sm:$0xff]
        %v1752 = vld [vmem:[%s1330 + $0x171] sm:$0xff]
        %s1753 = scalar_lea.vmem %s1, 16
        %v1754 = vld [vmem:[%s1753] sm:$0xf]
        %v1756 = vsel %vm290, %v1721, 0
        %v1759 = vsel %vm290, %v1722, 0
        %v1762 = vsel %vm290, %v1723, 0
        %v1765 = vsel %vm290, %v1724, 0
        %v1768 = vsel %vm290, %v1725, 0
        %v1771 = vsel %vm290, %v1726, 0
        %v1774 = vsel %vm290, %v1727, 0
        %v1777 = vsel %vm290, %v1728, 0
        %v1780 = vsel %vm290, %v1729, 0
        %v1783 = vsel %vm290, %v1730, 0
        %v1786 = vsel %vm290, %v1731, 0
        %v1789 = vsel %vm290, %v1732, 0
        %v1792 = vsel %vm290, %v1733, 0
        %v1795 = vsel %vm290, %v1734, 0
        %v1798 = vsel %vm290, %v1735, 0
        %v1801 = vsel %vm290, %v1736, 0
        %v1804 = vsel %vm290, %v1737, 0
        %v1807 = vsel %vm290, %v1738, 0
        %v1810 = vsel %vm290, %v1739, 0
        %v1813 = vsel %vm290, %v1740, 0
        %v1816 = vsel %vm290, %v1741, 0
        %v1819 = vsel %vm290, %v1742, 0
        %v1822 = vsel %vm290, %v1743, 0
        %v1825 = vsel %vm290, %v1744, 0
        %v1828 = vsel %vm290, %v1745, 0
        %v1831 = vsel %vm290, %v1746, 0
        %v1834 = vsel %vm290, %v1747, 0
        %v1837 = vsel %vm290, %v1748, 0
        %v1840 = vsel %vm290, %v1749, 0
        %v1843 = vsel %vm290, %v1750, 0
        %v1846 = vsel %vm290, %v1751, 0
        %v1849 = vsel %vm290, %v1752, 0
        %v1852 = vsel %vm387, %v1754, 0
        %1854 = vmatprep.subr.mxu0 0.0
        %1855 = vmatpush1.msra.mxu0 %v1852
        %1856 = vmatprep.subr.mxu0 0.0
        %1857 = vmatpush1.msra.mxu0 0.0
        %1858 = vmatprep.subr.mxu0 0.0
        %1859 = vmatpush1.msra.mxu0 0.0
        %1860 = vmatprep.subr.mxu0 0.0
        %1861 = vmatpush1.msra.mxu0 0.0
        %1862 = vmatprep.subr.mxu0 0.0
        %1863 = vmatpush1.msra.mxu0 0.0
        %1864 = vmatprep.subr.mxu0 0.0
        %1865 = vmatpush1.msra.mxu0 0.0
        %1866 = vmatprep.subr.mxu0 0.0
        %1867 = vmatpush1.msra.mxu0 0.0
        %1868 = vmatprep.subr.mxu0 0.0
        %1869 = vmatpush1.msra.mxu0 0.0
        %1870 = vmatprep.subr.mxu0 0.0
        %1871 = vmatpush1.msra.mxu0 0.0
        %1872 = vmatprep.subr.mxu0 0.0
        %1873 = vmatpush1.msra.mxu0 0.0
        %1874 = vmatprep.subr.mxu0 0.0
        %1875 = vmatpush1.msra.mxu0 0.0
        %1876 = vmatprep.subr.mxu0 0.0
        %1877 = vmatpush1.msra.mxu0 0.0
        %1878 = vmatprep.subr.mxu0 0.0
        %1879 = vmatpush1.msra.mxu0 0.0
        %1880 = vmatprep.subr.mxu0 0.0
        %1881 = vmatpush1.msra.mxu0 0.0
        %1882 = vmatprep.subr.mxu0 0.0
        %1883 = vmatpush1.msra.mxu0 0.0
        %1884 = vmatprep.subr.mxu0 0.0
        %1885 = vmatpush1.msra.mxu0 0.0
        %1886 = vmatprep.subr.mxu0 0.0
        %1887 = vmatpush1.msra.mxu0 0.0
        %1888 = vmatprep.subr.mxu0 0.0
        %1889 = vmatpush1.msra.mxu0 0.0
        %1890 = vmatprep.subr.mxu0 0.0
        %1891 = vmatpush1.msra.mxu0 0.0
        %1892 = vmatprep.subr.mxu0 0.0
        %1893 = vmatpush1.msra.mxu0 0.0
        %1894 = vmatprep.subr.mxu0 0.0
        %1895 = vmatpush1.msra.mxu0 0.0
        %1896 = vmatprep.subr.mxu0 0.0
        %1897 = vmatpush1.msra.mxu0 0.0
        %1898 = vmatprep.subr.mxu0 0.0
        %1899 = vmatpush1.msra.mxu0 0.0
        %1900 = vmatprep.subr.mxu0 0.0
        %1901 = vmatpush1.msra.mxu0 0.0
        %1902 = vmatprep.subr.mxu0 0.0
        %1903 = vmatpush1.msra.mxu0 0.0
        %1904 = vmatprep.subr.mxu0 0.0
        %1905 = vmatpush1.msra.mxu0 0.0
        %1906 = vmatprep.subr.mxu0 0.0
        %1907 = vmatpush1.msra.mxu0 0.0
        %1908 = vmatprep.subr.mxu0 0.0
        %1909 = vmatpush1.msra.mxu0 0.0
        %1910 = vmatprep.subr.mxu0 0.0
        %1911 = vmatpush1.msra.mxu0 0.0
        %1912 = vmatprep.subr.mxu0 0.0
        %1913 = vmatpush1.msra.mxu0 0.0
        %1914 = vmatprep.subr.mxu0 0.0
        %1915 = vmatpush1.msra.mxu0 0.0
        %1916 = vmatprep.subr.mxu0 0.0
        %1917 = vmatpush1.msra.mxu0 0.0
        %1918 = vmatprep.mubr.f32.mxu0 0.0
        %1919 = vmatmul.mubr.f32.gmra.mrb[0].mxu0 %v1756
        %v1920 = vpop.f32.mrb[0].mxu0
        %v1921 = vadd.f32 0.0, %v1920
        %v1922 = vpop.f32.mrb[0].mxu0
        %1923 = vmatprep.mubr.f32.mxu0 0.0
        %1924 = vmatmul.mubr.f32.gmra.mrb[0].mxu0 %v1759
        %v1925 = vpop.f32.mrb[0].mxu0
        %v1926 = vadd.f32 0.0, %v1925
        %v1927 = vpop.f32.mrb[0].mxu0
        %1928 = vmatprep.mubr.f32.mxu0 0.0
        %1929 = vmatmul.mubr.f32.gmra.mrb[0].mxu0 %v1762
        %v1930 = vpop.f32.mrb[0].mxu0
        %v1931 = vadd.f32 0.0, %v1930
        %v1932 = vpop.f32.mrb[0].mxu0
        %1933 = vmatprep.mubr.f32.mxu0 0.0
        %1934 = vmatmul.mubr.f32.gmra.mrb[0].mxu0 %v1765
        %v1935 = vpop.f32.mrb[0].mxu0
        %v1936 = vadd.f32 0.0, %v1935
        %v1937 = vpop.f32.mrb[0].mxu0
        %1938 = vmatprep.mubr.f32.mxu0 0.0
        %1939 = vmatmul.mubr.f32.gmra.mrb[0].mxu0 %v1768
        %v1940 = vpop.f32.mrb[0].mxu0
        %v1941 = vadd.f32 0.0, %v1940
        %v1942 = vpop.f32.mrb[0].mxu0
        %1943 = vmatprep.mubr.f32.mxu0 0.0
        %1944 = vmatmul.mubr.f32.gmra.mrb[0].mxu0 %v1771
        %v1945 = vpop.f32.mrb[0].mxu0
        %v1946 = vadd.f32 0.0, %v1945
        %v1947 = vpop.f32.mrb[0].mxu0
        %1948 = vmatprep.mubr.f32.mxu0 0.0
        %1949 = vmatmul.mubr.f32.gmra.mrb[0].mxu0 %v1774
        %v1950 = vpop.f32.mrb[0].mxu0
        %v1951 = vadd.f32 0.0, %v1950
        %v1952 = vpop.f32.mrb[0].mxu0
        %1953 = vmatprep.mubr.f32.mxu0 0.0
        %1954 = vmatmul.mubr.f32.gmra.mrb[0].mxu0 %v1777
        %v1955 = vpop.f32.mrb[0].mxu0
        %v1956 = vadd.f32 0.0, %v1955
        %v1957 = vpop.f32.mrb[0].mxu0
        %1958 = vmatprep.mubr.f32.mxu0 0.0
        %1959 = vmatmul.mubr.f32.gmra.mrb[0].mxu0 %v1780
        %v1960 = vpop.f32.mrb[0].mxu0
        %v1961 = vadd.f32 0.0, %v1960
        %v1962 = vpop.f32.mrb[0].mxu0
        %1963 = vmatprep.mubr.f32.mxu0 0.0
        %1964 = vmatmul.mubr.f32.gmra.mrb[0].mxu0 %v1783
        %v1965 = vpop.f32.mrb[0].mxu0
        %v1966 = vadd.f32 0.0, %v1965
        %v1967 = vpop.f32.mrb[0].mxu0
        %1968 = vmatprep.mubr.f32.mxu0 0.0
        %1969 = vmatmul.mubr.f32.gmra.mrb[0].mxu0 %v1786
        %v1970 = vpop.f32.mrb[0].mxu0
        %v1971 = vadd.f32 0.0, %v1970
        %v1972 = vpop.f32.mrb[0].mxu0
        %1973 = vmatprep.mubr.f32.mxu0 0.0
        %1974 = vmatmul.mubr.f32.gmra.mrb[0].mxu0 %v1789
        %v1975 = vpop.f32.mrb[0].mxu0
        %v1976 = vadd.f32 0.0, %v1975
        %v1977 = vpop.f32.mrb[0].mxu0
        %1978 = vmatprep.mubr.f32.mxu0 0.0
        %1979 = vmatmul.mubr.f32.gmra.mrb[0].mxu0 %v1792
        %v1980 = vpop.f32.mrb[0].mxu0
        %v1981 = vadd.f32 0.0, %v1980
        %v1982 = vpop.f32.mrb[0].mxu0
        %1983 = vmatprep.mubr.f32.mxu0 0.0
        %1984 = vmatmul.mubr.f32.gmra.mrb[0].mxu0 %v1795
        %v1985 = vpop.f32.mrb[0].mxu0
        %v1986 = vadd.f32 0.0, %v1985
        %v1987 = vpop.f32.mrb[0].mxu0
        %1988 = vmatprep.mubr.f32.mxu0 0.0
        %1989 = vmatmul.mubr.f32.gmra.mrb[0].mxu0 %v1798
        %v1990 = vpop.f32.mrb[0].mxu0
        %v1991 = vadd.f32 0.0, %v1990
        %v1992 = vpop.f32.mrb[0].mxu0
        %1993 = vmatprep.mubr.f32.mxu0 0.0
        %1994 = vmatmul.mubr.f32.gmra.mrb[0].mxu0 %v1801
        %v1995 = vpop.f32.mrb[0].mxu0
        %v1996 = vadd.f32 0.0, %v1995
        %v1997 = vpop.f32.mrb[0].mxu0
        %1998 = vmatprep.mubr.f32.mxu0 0.0
        %1999 = vmatmul.mubr.f32.gmra.mrb[0].mxu0 %v1804
        %v2000 = vpop.f32.mrb[0].mxu0
        %v2001 = vadd.f32 0.0, %v2000
        %v2002 = vpop.f32.mrb[0].mxu0
        %2003 = vmatprep.mubr.f32.mxu0 0.0
        %2004 = vmatmul.mubr.f32.gmra.mrb[0].mxu0 %v1807
        %v2005 = vpop.f32.mrb[0].mxu0
        %v2006 = vadd.f32 0.0, %v2005
        %v2007 = vpop.f32.mrb[0].mxu0
        %2008 = vmatprep.mubr.f32.mxu0 0.0
        %2009 = vmatmul.mubr.f32.gmra.mrb[0].mxu0 %v1810
        %v2010 = vpop.f32.mrb[0].mxu0
        %v2011 = vadd.f32 0.0, %v2010
        %v2012 = vpop.f32.mrb[0].mxu0
        %2013 = vmatprep.mubr.f32.mxu0 0.0
        %2014 = vmatmul.mubr.f32.gmra.mrb[0].mxu0 %v1813
        %v2015 = vpop.f32.mrb[0].mxu0
        %v2016 = vadd.f32 0.0, %v2015
        %v2017 = vpop.f32.mrb[0].mxu0
        %2018 = vmatprep.mubr.f32.mxu0 0.0
        %2019 = vmatmul.mubr.f32.gmra.mrb[0].mxu0 %v1816
        %v2020 = vpop.f32.mrb[0].mxu0
        %v2021 = vadd.f32 0.0, %v2020
        %v2022 = vpop.f32.mrb[0].mxu0
        %2023 = vmatprep.mubr.f32.mxu0 0.0
        %2024 = vmatmul.mubr.f32.gmra.mrb[0].mxu0 %v1819
        %v2025 = vpop.f32.mrb[0].mxu0
        %v2026 = vadd.f32 0.0, %v2025
        %v2027 = vpop.f32.mrb[0].mxu0
        %2028 = vmatprep.mubr.f32.mxu0 0.0
        %2029 = vmatmul.mubr.f32.gmra.mrb[0].mxu0 %v1822
        %v2030 = vpop.f32.mrb[0].mxu0
        %v2031 = vadd.f32 0.0, %v2030
        %v2032 = vpop.f32.mrb[0].mxu0
        %2033 = vmatprep.mubr.f32.mxu0 0.0
        %2034 = vmatmul.mubr.f32.gmra.mrb[0].mxu0 %v1825
        %v2035 = vpop.f32.mrb[0].mxu0
        %v2036 = vadd.f32 0.0, %v2035
        %v2037 = vpop.f32.mrb[0].mxu0
        %2038 = vmatprep.mubr.f32.mxu0 0.0
        %2039 = vmatmul.mubr.f32.gmra.mrb[0].mxu0 %v1828
        %v2040 = vpop.f32.mrb[0].mxu0
        %v2041 = vadd.f32 0.0, %v2040
        %v2042 = vpop.f32.mrb[0].mxu0
        %2043 = vmatprep.mubr.f32.mxu0 0.0
        %2044 = vmatmul.mubr.f32.gmra.mrb[0].mxu0 %v1831
        %v2045 = vpop.f32.mrb[0].mxu0
        %v2046 = vadd.f32 0.0, %v2045
        %v2047 = vpop.f32.mrb[0].mxu0
        %2048 = vmatprep.mubr.f32.mxu0 0.0
        %2049 = vmatmul.mubr.f32.gmra.mrb[0].mxu0 %v1834
        %v2050 = vpop.f32.mrb[0].mxu0
        %v2051 = vadd.f32 0.0, %v2050
        %v2052 = vpop.f32.mrb[0].mxu0
        %2053 = vmatprep.mubr.f32.mxu0 0.0
        %2054 = vmatmul.mubr.f32.gmra.mrb[0].mxu0 %v1837
        %v2055 = vpop.f32.mrb[0].mxu0
        %v2056 = vadd.f32 0.0, %v2055
        %v2057 = vpop.f32.mrb[0].mxu0
        %2058 = vmatprep.mubr.f32.mxu0 0.0
        %2059 = vmatmul.mubr.f32.gmra.mrb[0].mxu0 %v1840
        %v2060 = vpop.f32.mrb[0].mxu0
        %v2061 = vadd.f32 0.0, %v2060
        %v2062 = vpop.f32.mrb[0].mxu0
        %2063 = vmatprep.mubr.f32.mxu0 0.0
        %2064 = vmatmul.mubr.f32.gmra.mrb[0].mxu0 %v1843
        %v2065 = vpop.f32.mrb[0].mxu0
        %v2066 = vadd.f32 0.0, %v2065
        %v2067 = vpop.f32.mrb[0].mxu0
        %2068 = vmatprep.mubr.f32.mxu0 0.0
        %2069 = vmatmul.mubr.f32.gmra.mrb[0].mxu0 %v1846
        %v2070 = vpop.f32.mrb[0].mxu0
        %v2071 = vadd.f32 0.0, %v2070
        %v2072 = vpop.f32.mrb[0].mxu0
        %2073 = vmatprep.mubr.f32.mxu0 0.0
        %2074 = vmatmul.mubr.f32.gmra.mrb[0].mxu0 %v1849
        %v2075 = vpop.f32.mrb[0].mxu0
        %v2076 = vadd.f32 0.0, %v2075
        %v2077 = vpop.f32.mrb[0].mxu0
        %2078 = vdwg.mxu0
        %v2079 = vadd.f32 %v1689, %v1921
        %v2080 = vadd.f32 %v1690, %v1926
        %v2081 = vadd.f32 %v1691, %v1931
        %v2082 = vadd.f32 %v1692, %v1936
        %v2083 = vadd.f32 %v1693, %v1941
        %v2084 = vadd.f32 %v1694, %v1946
        %v2085 = vadd.f32 %v1695, %v1951
        %v2086 = vadd.f32 %v1696, %v1956
        %v2087 = vadd.f32 %v1697, %v1961
        %v2088 = vadd.f32 %v1698, %v1966
        %v2089 = vadd.f32 %v1699, %v1971
        %v2090 = vadd.f32 %v1700, %v1976
        %v2091 = vadd.f32 %v1701, %v1981
        %v2092 = vadd.f32 %v1702, %v1986
        %v2093 = vadd.f32 %v1703, %v1991
        %v2094 = vadd.f32 %v1704, %v1996
        %v2095 = vadd.f32 %v1705, %v2001
        %v2096 = vadd.f32 %v1706, %v2006
        %v2097 = vadd.f32 %v1707, %v2011
        %v2098 = vadd.f32 %v1708, %v2016
        %v2099 = vadd.f32 %v1709, %v2021
        %v2100 = vadd.f32 %v1710, %v2026
        %v2101 = vadd.f32 %v1711, %v2031
        %v2102 = vadd.f32 %v1712, %v2036
        %v2103 = vadd.f32 %v1713, %v2041
        %v2104 = vadd.f32 %v1714, %v2046
        %v2105 = vadd.f32 %v1715, %v2051
        %v2106 = vadd.f32 %v1716, %v2056
        %v2107 = vadd.f32 %v1717, %v2061
        %v2108 = vadd.f32 %v1718, %v2066
        %v2109 = vadd.f32 %v1719, %v2071
        %v2110 = vadd.f32 %v1720, %v2076
        %v2111 = vld [vmem:[%s1330 + $0x2] sm:$0xff]
        %v2112 = vld [vmem:[%s1330 + $0xa] sm:$0xff]
        %v2113 = vld [vmem:[%s1330 + $0x1a] sm:$0xff]
        %v2114 = vld [vmem:[%s1330 + $0x22] sm:$0xff]
        %v2115 = vld [vmem:[%s1330 + $0x32] sm:$0xff]
        %v2116 = vld [vmem:[%s1330 + $0x3a] sm:$0xff]
        %v2117 = vld [vmem:[%s1330 + $0x4a] sm:$0xff]
        %v2118 = vld [vmem:[%s1330 + $0x52] sm:$0xff]
        %v2119 = vld [vmem:[%s1330 + $0x62] sm:$0xff]
        %v2120 = vld [vmem:[%s1330 + $0x6a] sm:$0xff]
        %v2121 = vld [vmem:[%s1330 + $0x7a] sm:$0xff]
        %v2122 = vld [vmem:[%s1330 + $0x82] sm:$0xff]
        %v2123 = vld [vmem:[%s1330 + $0x92] sm:$0xff]
        %v2124 = vld [vmem:[%s1330 + $0x9a] sm:$0xff]
        %v2125 = vld [vmem:[%s1330 + $0xaa] sm:$0xff]
        %v2126 = vld [vmem:[%s1330 + $0xb2] sm:$0xff]
        %v2127 = vld [vmem:[%s1330 + $0xc2] sm:$0xff]
        %v2128 = vld [vmem:[%s1330 + $0xca] sm:$0xff]
        %v2129 = vld [vmem:[%s1330 + $0xda] sm:$0xff]
        %v2130 = vld [vmem:[%s1330 + $0xe2] sm:$0xff]
        %v2131 = vld [vmem:[%s1330 + $0xf2] sm:$0xff]
        %v2132 = vld [vmem:[%s1330 + $0xfa] sm:$0xff]
        %v2133 = vld [vmem:[%s1330 + $0x10a] sm:$0xff]
        %v2134 = vld [vmem:[%s1330 + $0x112] sm:$0xff]
        %v2135 = vld [vmem:[%s1330 + $0x122] sm:$0xff]
        %v2136 = vld [vmem:[%s1330 + $0x12a] sm:$0xff]
        %v2137 = vld [vmem:[%s1330 + $0x13a] sm:$0xff]
        %v2138 = vld [vmem:[%s1330 + $0x142] sm:$0xff]
        %v2139 = vld [vmem:[%s1330 + $0x152] sm:$0xff]
        %v2140 = vld [vmem:[%s1330 + $0x15a] sm:$0xff]
        %v2141 = vld [vmem:[%s1330 + $0x16a] sm:$0xff]
        %v2142 = vld [vmem:[%s1330 + $0x172] sm:$0xff]
        %s2143 = scalar_lea.vmem %s1, 20
        %v2144 = vld [vmem:[%s2143] sm:$0xf]
        %v2146 = vsel %vm290, %v2111, 0
        %v2149 = vsel %vm290, %v2112, 0
        %v2152 = vsel %vm290, %v2113, 0
        %v2155 = vsel %vm290, %v2114, 0
        %v2158 = vsel %vm290, %v2115, 0
        %v2161 = vsel %vm290, %v2116, 0
        %v2164 = vsel %vm290, %v2117, 0
        %v2167 = vsel %vm290, %v2118, 0
        %v2170 = vsel %vm290, %v2119, 0
        %v2173 = vsel %vm290, %v2120, 0
        %v2176 = vsel %vm290, %v2121, 0
        %v2179 = vsel %vm290, %v2122, 0
        %v2182 = vsel %vm290, %v2123, 0
        %v2185 = vsel %vm290, %v2124, 0
        %v2188 = vsel %vm290, %v2125, 0
        %v2191 = vsel %vm290, %v2126, 0
        %v2194 = vsel %vm290, %v2127, 0
        %v2197 = vsel %vm290, %v2128, 0
        %v2200 = vsel %vm290, %v2129, 0
        %v2203 = vsel %vm290, %v2130, 0
        %v2206 = vsel %vm290, %v2131, 0
        %v2209 = vsel %vm290, %v2132, 0
        %v2212 = vsel %vm290, %v2133, 0
        %v2215 = vsel %vm290, %v2134, 0
        %v2218 = vsel %vm290, %v2135, 0
        %v2221 = vsel %vm290, %v2136, 0
        %v2224 = vsel %vm290, %v2137, 0
        %v2227 = vsel %vm290, %v2138, 0
        %v2230 = vsel %vm290, %v2139, 0
        %v2233 = vsel %vm290, %v2140, 0
        %v2236 = vsel %vm290, %v2141, 0
        %v2239 = vsel %vm290, %v2142, 0
        %v2242 = vsel %vm387, %v2144, 0
        %2244 = vmatprep.subr.mxu0 0.0
        %2245 = vmatpush1.msra.mxu0 %v2242
        %2246 = vmatprep.subr.mxu0 0.0
        %2247 = vmatpush1.msra.mxu0 0.0
        %2248 = vmatprep.subr.mxu0 0.0
        %2249 = vmatpush1.msra.mxu0 0.0
        %2250 = vmatprep.subr.mxu0 0.0
        %2251 = vmatpush1.msra.mxu0 0.0
        %2252 = vmatprep.subr.mxu0 0.0
        %2253 = vmatpush1.msra.mxu0 0.0
        %2254 = vmatprep.subr.mxu0 0.0
        %2255 = vmatpush1.msra.mxu0 0.0
        %2256 = vmatprep.subr.mxu0 0.0
        %2257 = vmatpush1.msra.mxu0 0.0
        %2258 = vmatprep.subr.mxu0 0.0
        %2259 = vmatpush1.msra.mxu0 0.0
        %2260 = vmatprep.subr.mxu0 0.0
        %2261 = vmatpush1.msra.mxu0 0.0
        %2262 = vmatprep.subr.mxu0 0.0
        %2263 = vmatpush1.msra.mxu0 0.0
        %2264 = vmatprep.subr.mxu0 0.0
        %2265 = vmatpush1.msra.mxu0 0.0
        %2266 = vmatprep.subr.mxu0 0.0
        %2267 = vmatpush1.msra.mxu0 0.0
        %2268 = vmatprep.subr.mxu0 0.0
        %2269 = vmatpush1.msra.mxu0 0.0
        %2270 = vmatprep.subr.mxu0 0.0
        %2271 = vmatpush1.msra.mxu0 0.0
        %2272 = vmatprep.subr.mxu0 0.0
        %2273 = vmatpush1.msra.mxu0 0.0
        %2274 = vmatprep.subr.mxu0 0.0
        %2275 = vmatpush1.msra.mxu0 0.0
        %2276 = vmatprep.subr.mxu0 0.0
        %2277 = vmatpush1.msra.mxu0 0.0
        %2278 = vmatprep.subr.mxu0 0.0
        %2279 = vmatpush1.msra.mxu0 0.0
        %2280 = vmatprep.subr.mxu0 0.0
        %2281 = vmatpush1.msra.mxu0 0.0
        %2282 = vmatprep.subr.mxu0 0.0
        %2283 = vmatpush1.msra.mxu0 0.0
        %2284 = vmatprep.subr.mxu0 0.0
        %2285 = vmatpush1.msra.mxu0 0.0
        %2286 = vmatprep.subr.mxu0 0.0
        %2287 = vmatpush1.msra.mxu0 0.0
        %2288 = vmatprep.subr.mxu0 0.0
        %2289 = vmatpush1.msra.mxu0 0.0
        %2290 = vmatprep.subr.mxu0 0.0
        %2291 = vmatpush1.msra.mxu0 0.0
        %2292 = vmatprep.subr.mxu0 0.0
        %2293 = vmatpush1.msra.mxu0 0.0
        %2294 = vmatprep.subr.mxu0 0.0
        %2295 = vmatpush1.msra.mxu0 0.0
        %2296 = vmatprep.subr.mxu0 0.0
        %2297 = vmatpush1.msra.mxu0 0.0
        %2298 = vmatprep.subr.mxu0 0.0
        %2299 = vmatpush1.msra.mxu0 0.0
        %2300 = vmatprep.subr.mxu0 0.0
        %2301 = vmatpush1.msra.mxu0 0.0
        %2302 = vmatprep.subr.mxu0 0.0
        %2303 = vmatpush1.msra.mxu0 0.0
        %2304 = vmatprep.subr.mxu0 0.0
        %2305 = vmatpush1.msra.mxu0 0.0
        %2306 = vmatprep.subr.mxu0 0.0
        %2307 = vmatpush1.msra.mxu0 0.0
        %2308 = vmatprep.mubr.f32.mxu0 0.0
        %2309 = vmatmul.mubr.f32.gmra.mrb[0].mxu0 %v2146
        %v2310 = vpop.f32.mrb[0].mxu0
        %v2311 = vadd.f32 0.0, %v2310
        %v2312 = vpop.f32.mrb[0].mxu0
        %2313 = vmatprep.mubr.f32.mxu0 0.0
        %2314 = vmatmul.mubr.f32.gmra.mrb[0].mxu0 %v2149
        %v2315 = vpop.f32.mrb[0].mxu0
        %v2316 = vadd.f32 0.0, %v2315
        %v2317 = vpop.f32.mrb[0].mxu0
        %2318 = vmatprep.mubr.f32.mxu0 0.0
        %2319 = vmatmul.mubr.f32.gmra.mrb[0].mxu0 %v2152
        %v2320 = vpop.f32.mrb[0].mxu0
        %v2321 = vadd.f32 0.0, %v2320
        %v2322 = vpop.f32.mrb[0].mxu0
        %2323 = vmatprep.mubr.f32.mxu0 0.0
        %2324 = vmatmul.mubr.f32.gmra.mrb[0].mxu0 %v2155
        %v2325 = vpop.f32.mrb[0].mxu0
        %v2326 = vadd.f32 0.0, %v2325
        %v2327 = vpop.f32.mrb[0].mxu0
        %2328 = vmatprep.mubr.f32.mxu0 0.0
        %2329 = vmatmul.mubr.f32.gmra.mrb[0].mxu0 %v2158
        %v2330 = vpop.f32.mrb[0].mxu0
        %v2331 = vadd.f32 0.0, %v2330
        %v2332 = vpop.f32.mrb[0].mxu0
        %2333 = vmatprep.mubr.f32.mxu0 0.0
        %2334 = vmatmul.mubr.f32.gmra.mrb[0].mxu0 %v2161
        %v2335 = vpop.f32.mrb[0].mxu0
        %v2336 = vadd.f32 0.0, %v2335
        %v2337 = vpop.f32.mrb[0].mxu0
        %2338 = vmatprep.mubr.f32.mxu0 0.0
        %2339 = vmatmul.mubr.f32.gmra.mrb[0].mxu0 %v2164
        %v2340 = vpop.f32.mrb[0].mxu0
        %v2341 = vadd.f32 0.0, %v2340
        %v2342 = vpop.f32.mrb[0].mxu0
        %2343 = vmatprep.mubr.f32.mxu0 0.0
        %2344 = vmatmul.mubr.f32.gmra.mrb[0].mxu0 %v2167
        %v2345 = vpop.f32.mrb[0].mxu0
        %v2346 = vadd.f32 0.0, %v2345
        %v2347 = vpop.f32.mrb[0].mxu0
        %2348 = vmatprep.mubr.f32.mxu0 0.0
        %2349 = vmatmul.mubr.f32.gmra.mrb[0].mxu0 %v2170
        %v2350 = vpop.f32.mrb[0].mxu0
        %v2351 = vadd.f32 0.0, %v2350
        %v2352 = vpop.f32.mrb[0].mxu0
        %2353 = vmatprep.mubr.f32.mxu0 0.0
        %2354 = vmatmul.mubr.f32.gmra.mrb[0].mxu0 %v2173
        %v2355 = vpop.f32.mrb[0].mxu0
        %v2356 = vadd.f32 0.0, %v2355
        %v2357 = vpop.f32.mrb[0].mxu0
        %2358 = vmatprep.mubr.f32.mxu0 0.0
        %2359 = vmatmul.mubr.f32.gmra.mrb[0].mxu0 %v2176
        %v2360 = vpop.f32.mrb[0].mxu0
        %v2361 = vadd.f32 0.0, %v2360
        %v2362 = vpop.f32.mrb[0].mxu0
        %2363 = vmatprep.mubr.f32.mxu0 0.0
        %2364 = vmatmul.mubr.f32.gmra.mrb[0].mxu0 %v2179
        %v2365 = vpop.f32.mrb[0].mxu0
        %v2366 = vadd.f32 0.0, %v2365
        %v2367 = vpop.f32.mrb[0].mxu0
        %2368 = vmatprep.mubr.f32.mxu0 0.0
        %2369 = vmatmul.mubr.f32.gmra.mrb[0].mxu0 %v2182
        %v2370 = vpop.f32.mrb[0].mxu0
        %v2371 = vadd.f32 0.0, %v2370
        %v2372 = vpop.f32.mrb[0].mxu0
        %2373 = vmatprep.mubr.f32.mxu0 0.0
        %2374 = vmatmul.mubr.f32.gmra.mrb[0].mxu0 %v2185
        %v2375 = vpop.f32.mrb[0].mxu0
        %v2376 = vadd.f32 0.0, %v2375
        %v2377 = vpop.f32.mrb[0].mxu0
        %2378 = vmatprep.mubr.f32.mxu0 0.0
        %2379 = vmatmul.mubr.f32.gmra.mrb[0].mxu0 %v2188
        %v2380 = vpop.f32.mrb[0].mxu0
        %v2381 = vadd.f32 0.0, %v2380
        %v2382 = vpop.f32.mrb[0].mxu0
        %2383 = vmatprep.mubr.f32.mxu0 0.0
        %2384 = vmatmul.mubr.f32.gmra.mrb[0].mxu0 %v2191
        %v2385 = vpop.f32.mrb[0].mxu0
        %v2386 = vadd.f32 0.0, %v2385
        %v2387 = vpop.f32.mrb[0].mxu0
        %2388 = vmatprep.mubr.f32.mxu0 0.0
        %2389 = vmatmul.mubr.f32.gmra.mrb[0].mxu0 %v2194
        %v2390 = vpop.f32.mrb[0].mxu0
        %v2391 = vadd.f32 0.0, %v2390
        %v2392 = vpop.f32.mrb[0].mxu0
        %2393 = vmatprep.mubr.f32.mxu0 0.0
        %2394 = vmatmul.mubr.f32.gmra.mrb[0].mxu0 %v2197
        %v2395 = vpop.f32.mrb[0].mxu0
        %v2396 = vadd.f32 0.0, %v2395
        %v2397 = vpop.f32.mrb[0].mxu0
        %2398 = vmatprep.mubr.f32.mxu0 0.0
        %2399 = vmatmul.mubr.f32.gmra.mrb[0].mxu0 %v2200
        %v2400 = vpop.f32.mrb[0].mxu0
        %v2401 = vadd.f32 0.0, %v2400
        %v2402 = vpop.f32.mrb[0].mxu0
        %2403 = vmatprep.mubr.f32.mxu0 0.0
        %2404 = vmatmul.mubr.f32.gmra.mrb[0].mxu0 %v2203
        %v2405 = vpop.f32.mrb[0].mxu0
        %v2406 = vadd.f32 0.0, %v2405
        %v2407 = vpop.f32.mrb[0].mxu0
        %2408 = vmatprep.mubr.f32.mxu0 0.0
        %2409 = vmatmul.mubr.f32.gmra.mrb[0].mxu0 %v2206
        %v2410 = vpop.f32.mrb[0].mxu0
        %v2411 = vadd.f32 0.0, %v2410
        %v2412 = vpop.f32.mrb[0].mxu0
        %2413 = vmatprep.mubr.f32.mxu0 0.0
        %2414 = vmatmul.mubr.f32.gmra.mrb[0].mxu0 %v2209
        %v2415 = vpop.f32.mrb[0].mxu0
        %v2416 = vadd.f32 0.0, %v2415
        %v2417 = vpop.f32.mrb[0].mxu0
        %2418 = vmatprep.mubr.f32.mxu0 0.0
        %2419 = vmatmul.mubr.f32.gmra.mrb[0].mxu0 %v2212
        %v2420 = vpop.f32.mrb[0].mxu0
        %v2421 = vadd.f32 0.0, %v2420
        %v2422 = vpop.f32.mrb[0].mxu0
        %2423 = vmatprep.mubr.f32.mxu0 0.0
        %2424 = vmatmul.mubr.f32.gmra.mrb[0].mxu0 %v2215
        %v2425 = vpop.f32.mrb[0].mxu0
        %v2426 = vadd.f32 0.0, %v2425
        %v2427 = vpop.f32.mrb[0].mxu0
        %2428 = vmatprep.mubr.f32.mxu0 0.0
        %2429 = vmatmul.mubr.f32.gmra.mrb[0].mxu0 %v2218
        %v2430 = vpop.f32.mrb[0].mxu0
        %v2431 = vadd.f32 0.0, %v2430
        %v2432 = vpop.f32.mrb[0].mxu0
        %2433 = vmatprep.mubr.f32.mxu0 0.0
        %2434 = vmatmul.mubr.f32.gmra.mrb[0].mxu0 %v2221
        %v2435 = vpop.f32.mrb[0].mxu0
        %v2436 = vadd.f32 0.0, %v2435
        %v2437 = vpop.f32.mrb[0].mxu0
        %2438 = vmatprep.mubr.f32.mxu0 0.0
        %2439 = vmatmul.mubr.f32.gmra.mrb[0].mxu0 %v2224
        %v2440 = vpop.f32.mrb[0].mxu0
        %v2441 = vadd.f32 0.0, %v2440
        %v2442 = vpop.f32.mrb[0].mxu0
        %2443 = vmatprep.mubr.f32.mxu0 0.0
        %2444 = vmatmul.mubr.f32.gmra.mrb[0].mxu0 %v2227
        %v2445 = vpop.f32.mrb[0].mxu0
        %v2446 = vadd.f32 0.0, %v2445
        %v2447 = vpop.f32.mrb[0].mxu0
        %2448 = vmatprep.mubr.f32.mxu0 0.0
        %2449 = vmatmul.mubr.f32.gmra.mrb[0].mxu0 %v2230
        %v2450 = vpop.f32.mrb[0].mxu0
        %v2451 = vadd.f32 0.0, %v2450
        %v2452 = vpop.f32.mrb[0].mxu0
        %2453 = vmatprep.mubr.f32.mxu0 0.0
        %2454 = vmatmul.mubr.f32.gmra.mrb[0].mxu0 %v2233
        %v2455 = vpop.f32.mrb[0].mxu0
        %v2456 = vadd.f32 0.0, %v2455
        %v2457 = vpop.f32.mrb[0].mxu0
        %2458 = vmatprep.mubr.f32.mxu0 0.0
        %2459 = vmatmul.mubr.f32.gmra.mrb[0].mxu0 %v2236
        %v2460 = vpop.f32.mrb[0].mxu0
        %v2461 = vadd.f32 0.0, %v2460
        %v2462 = vpop.f32.mrb[0].mxu0
        %2463 = vmatprep.mubr.f32.mxu0 0.0
        %2464 = vmatmul.mubr.f32.gmra.mrb[0].mxu0 %v2239
        %v2465 = vpop.f32.mrb[0].mxu0
        %v2466 = vadd.f32 0.0, %v2465
        %v2467 = vpop.f32.mrb[0].mxu0
        %2468 = vdwg.mxu0
        %v2469 = vadd.f32 %v2079, %v2311
        %v2470 = vadd.f32 %v2080, %v2316
        %v2471 = vadd.f32 %v2081, %v2321
        %v2472 = vadd.f32 %v2082, %v2326
        %v2473 = vadd.f32 %v2083, %v2331
        %v2474 = vadd.f32 %v2084, %v2336
        %v2475 = vadd.f32 %v2085, %v2341
        %v2476 = vadd.f32 %v2086, %v2346
        %v2477 = vadd.f32 %v2087, %v2351
        %v2478 = vadd.f32 %v2088, %v2356
        %v2479 = vadd.f32 %v2089, %v2361
        %v2480 = vadd.f32 %v2090, %v2366
        %v2481 = vadd.f32 %v2091, %v2371
        %v2482 = vadd.f32 %v2092, %v2376
        %v2483 = vadd.f32 %v2093, %v2381
        %v2484 = vadd.f32 %v2094, %v2386
        %v2485 = vadd.f32 %v2095, %v2391
        %v2486 = vadd.f32 %v2096, %v2396
        %v2487 = vadd.f32 %v2097, %v2401
        %v2488 = vadd.f32 %v2098, %v2406
        %v2489 = vadd.f32 %v2099, %v2411
        %v2490 = vadd.f32 %v2100, %v2416
        %v2491 = vadd.f32 %v2101, %v2421
        %v2492 = vadd.f32 %v2102, %v2426
        %v2493 = vadd.f32 %v2103, %v2431
        %v2494 = vadd.f32 %v2104, %v2436
        %v2495 = vadd.f32 %v2105, %v2441
        %v2496 = vadd.f32 %v2106, %v2446
        %v2497 = vadd.f32 %v2107, %v2451
        %v2498 = vadd.f32 %v2108, %v2456
        %v2499 = vadd.f32 %v2109, %v2461
        %v2500 = vadd.f32 %v2110, %v2466
        %s2501 = scalar_lea.vmem %s222, 48
        %v2502 = vld [vmem:[%s2501] sm:$0xff]
        %v2503 = vld [vmem:[%s2501 + $0x8] sm:$0xff]
        %v2504 = vld [vmem:[%s2501 + $0x18] sm:$0xff]
        %v2505 = vld [vmem:[%s2501 + $0x20] sm:$0xff]
        %v2506 = vld [vmem:[%s2501 + $0x30] sm:$0xff]
        %v2507 = vld [vmem:[%s2501 + $0x38] sm:$0xff]
        %v2508 = vld [vmem:[%s2501 + $0x48] sm:$0xff]
        %v2509 = vld [vmem:[%s2501 + $0x50] sm:$0xff]
        %v2510 = vld [vmem:[%s2501 + $0x60] sm:$0xff]
        %v2511 = vld [vmem:[%s2501 + $0x68] sm:$0xff]
        %v2512 = vld [vmem:[%s2501 + $0x78] sm:$0xff]
        %v2513 = vld [vmem:[%s2501 + $0x80] sm:$0xff]
        %v2514 = vld [vmem:[%s2501 + $0x90] sm:$0xff]
        %v2515 = vld [vmem:[%s2501 + $0x98] sm:$0xff]
        %v2516 = vld [vmem:[%s2501 + $0xa8] sm:$0xff]
        %v2517 = vld [vmem:[%s2501 + $0xb0] sm:$0xff]
        %v2518 = vld [vmem:[%s2501 + $0xc0] sm:$0xff]
        %v2519 = vld [vmem:[%s2501 + $0xc8] sm:$0xff]
        %v2520 = vld [vmem:[%s2501 + $0xd8] sm:$0xff]
        %v2521 = vld [vmem:[%s2501 + $0xe0] sm:$0xff]
        %v2522 = vld [vmem:[%s2501 + $0xf0] sm:$0xff]
        %v2523 = vld [vmem:[%s2501 + $0xf8] sm:$0xff]
        %v2524 = vld [vmem:[%s2501 + $0x108] sm:$0xff]
        %v2525 = vld [vmem:[%s2501 + $0x110] sm:$0xff]
        %v2526 = vld [vmem:[%s2501 + $0x120] sm:$0xff]
        %v2527 = vld [vmem:[%s2501 + $0x128] sm:$0xff]
        %v2528 = vld [vmem:[%s2501 + $0x138] sm:$0xff]
        %v2529 = vld [vmem:[%s2501 + $0x140] sm:$0xff]
        %v2530 = vld [vmem:[%s2501 + $0x150] sm:$0xff]
        %v2531 = vld [vmem:[%s2501 + $0x158] sm:$0xff]
        %v2532 = vld [vmem:[%s2501 + $0x168] sm:$0xff]
        %v2533 = vld [vmem:[%s2501 + $0x170] sm:$0xff]
        %s2534 = scalar_lea.vmem %s1, 24
        %v2535 = vld [vmem:[%s2534] sm:$0xf]
        %v2537 = vsel %vm290, %v2502, 0
        %v2540 = vsel %vm290, %v2503, 0
        %v2543 = vsel %vm290, %v2504, 0
        %v2546 = vsel %vm290, %v2505, 0
        %v2549 = vsel %vm290, %v2506, 0
        %v2552 = vsel %vm290, %v2507, 0
        %v2555 = vsel %vm290, %v2508, 0
        %v2558 = vsel %vm290, %v2509, 0
        %v2561 = vsel %vm290, %v2510, 0
        %v2564 = vsel %vm290, %v2511, 0
        %v2567 = vsel %vm290, %v2512, 0
        %v2570 = vsel %vm290, %v2513, 0
        %v2573 = vsel %vm290, %v2514, 0
        %v2576 = vsel %vm290, %v2515, 0
        %v2579 = vsel %vm290, %v2516, 0
        %v2582 = vsel %vm290, %v2517, 0
        %v2585 = vsel %vm290, %v2518, 0
        %v2588 = vsel %vm290, %v2519, 0
        %v2591 = vsel %vm290, %v2520, 0
        %v2594 = vsel %vm290, %v2521, 0
        %v2597 = vsel %vm290, %v2522, 0
        %v2600 = vsel %vm290, %v2523, 0
        %v2603 = vsel %vm290, %v2524, 0
        %v2606 = vsel %vm290, %v2525, 0
        %v2609 = vsel %vm290, %v2526, 0
        %v2612 = vsel %vm290, %v2527, 0
        %v2615 = vsel %vm290, %v2528, 0
        %v2618 = vsel %vm290, %v2529, 0
        %v2621 = vsel %vm290, %v2530, 0
        %v2624 = vsel %vm290, %v2531, 0
        %v2627 = vsel %vm290, %v2532, 0
        %v2630 = vsel %vm290, %v2533, 0
        %v2633 = vsel %vm387, %v2535, 0
        %2635 = vmatprep.subr.mxu0 0.0
        %2636 = vmatpush1.msra.mxu0 %v2633
        %2637 = vmatprep.subr.mxu0 0.0
        %2638 = vmatpush1.msra.mxu0 0.0
        %2639 = vmatprep.subr.mxu0 0.0
        %2640 = vmatpush1.msra.mxu0 0.0
        %2641 = vmatprep.subr.mxu0 0.0
        %2642 = vmatpush1.msra.mxu0 0.0
        %2643 = vmatprep.subr.mxu0 0.0
        %2644 = vmatpush1.msra.mxu0 0.0
        %2645 = vmatprep.subr.mxu0 0.0
        %2646 = vmatpush1.msra.mxu0 0.0
        %2647 = vmatprep.subr.mxu0 0.0
        %2648 = vmatpush1.msra.mxu0 0.0
        %2649 = vmatprep.subr.mxu0 0.0
        %2650 = vmatpush1.msra.mxu0 0.0
        %2651 = vmatprep.subr.mxu0 0.0
        %2652 = vmatpush1.msra.mxu0 0.0
        %2653 = vmatprep.subr.mxu0 0.0
        %2654 = vmatpush1.msra.mxu0 0.0
        %2655 = vmatprep.subr.mxu0 0.0
        %2656 = vmatpush1.msra.mxu0 0.0
        %2657 = vmatprep.subr.mxu0 0.0
        %2658 = vmatpush1.msra.mxu0 0.0
        %2659 = vmatprep.subr.mxu0 0.0
        %2660 = vmatpush1.msra.mxu0 0.0
        %2661 = vmatprep.subr.mxu0 0.0
        %2662 = vmatpush1.msra.mxu0 0.0
        %2663 = vmatprep.subr.mxu0 0.0
        %2664 = vmatpush1.msra.mxu0 0.0
        %2665 = vmatprep.subr.mxu0 0.0
        %2666 = vmatpush1.msra.mxu0 0.0
        %2667 = vmatprep.subr.mxu0 0.0
        %2668 = vmatpush1.msra.mxu0 0.0
        %2669 = vmatprep.subr.mxu0 0.0
        %2670 = vmatpush1.msra.mxu0 0.0
        %2671 = vmatprep.subr.mxu0 0.0
        %2672 = vmatpush1.msra.mxu0 0.0
        %2673 = vmatprep.subr.mxu0 0.0
        %2674 = vmatpush1.msra.mxu0 0.0
        %2675 = vmatprep.subr.mxu0 0.0
        %2676 = vmatpush1.msra.mxu0 0.0
        %2677 = vmatprep.subr.mxu0 0.0
        %2678 = vmatpush1.msra.mxu0 0.0
        %2679 = vmatprep.subr.mxu0 0.0
        %2680 = vmatpush1.msra.mxu0 0.0
        %2681 = vmatprep.subr.mxu0 0.0
        %2682 = vmatpush1.msra.mxu0 0.0
        %2683 = vmatprep.subr.mxu0 0.0
        %2684 = vmatpush1.msra.mxu0 0.0
        %2685 = vmatprep.subr.mxu0 0.0
        %2686 = vmatpush1.msra.mxu0 0.0
        %2687 = vmatprep.subr.mxu0 0.0
        %2688 = vmatpush1.msra.mxu0 0.0
        %2689 = vmatprep.subr.mxu0 0.0
        %2690 = vmatpush1.msra.mxu0 0.0
        %2691 = vmatprep.subr.mxu0 0.0
        %2692 = vmatpush1.msra.mxu0 0.0
        %2693 = vmatprep.subr.mxu0 0.0
        %2694 = vmatpush1.msra.mxu0 0.0
        %2695 = vmatprep.subr.mxu0 0.0
        %2696 = vmatpush1.msra.mxu0 0.0
        %2697 = vmatprep.subr.mxu0 0.0
        %2698 = vmatpush1.msra.mxu0 0.0
        %2699 = vmatprep.mubr.f32.mxu0 0.0
        %2700 = vmatmul.mubr.f32.gmra.mrb[0].mxu0 %v2537
        %v2701 = vpop.f32.mrb[0].mxu0
        %v2702 = vadd.f32 0.0, %v2701
        %v2703 = vpop.f32.mrb[0].mxu0
        %2704 = vmatprep.mubr.f32.mxu0 0.0
        %2705 = vmatmul.mubr.f32.gmra.mrb[0].mxu0 %v2540
        %v2706 = vpop.f32.mrb[0].mxu0
        %v2707 = vadd.f32 0.0, %v2706
        %v2708 = vpop.f32.mrb[0].mxu0
        %2709 = vmatprep.mubr.f32.mxu0 0.0
        %2710 = vmatmul.mubr.f32.gmra.mrb[0].mxu0 %v2543
        %v2711 = vpop.f32.mrb[0].mxu0
        %v2712 = vadd.f32 0.0, %v2711
        %v2713 = vpop.f32.mrb[0].mxu0
        %2714 = vmatprep.mubr.f32.mxu0 0.0
        %2715 = vmatmul.mubr.f32.gmra.mrb[0].mxu0 %v2546
        %v2716 = vpop.f32.mrb[0].mxu0
        %v2717 = vadd.f32 0.0, %v2716
        %v2718 = vpop.f32.mrb[0].mxu0
        %2719 = vmatprep.mubr.f32.mxu0 0.0
        %2720 = vmatmul.mubr.f32.gmra.mrb[0].mxu0 %v2549
        %v2721 = vpop.f32.mrb[0].mxu0
        %v2722 = vadd.f32 0.0, %v2721
        %v2723 = vpop.f32.mrb[0].mxu0
        %2724 = vmatprep.mubr.f32.mxu0 0.0
        %2725 = vmatmul.mubr.f32.gmra.mrb[0].mxu0 %v2552
        %v2726 = vpop.f32.mrb[0].mxu0
        %v2727 = vadd.f32 0.0, %v2726
        %v2728 = vpop.f32.mrb[0].mxu0
        %2729 = vmatprep.mubr.f32.mxu0 0.0
        %2730 = vmatmul.mubr.f32.gmra.mrb[0].mxu0 %v2555
        %v2731 = vpop.f32.mrb[0].mxu0
        %v2732 = vadd.f32 0.0, %v2731
        %v2733 = vpop.f32.mrb[0].mxu0
        %2734 = vmatprep.mubr.f32.mxu0 0.0
        %2735 = vmatmul.mubr.f32.gmra.mrb[0].mxu0 %v2558
        %v2736 = vpop.f32.mrb[0].mxu0
        %v2737 = vadd.f32 0.0, %v2736
        %v2738 = vpop.f32.mrb[0].mxu0
        %2739 = vmatprep.mubr.f32.mxu0 0.0
        %2740 = vmatmul.mubr.f32.gmra.mrb[0].mxu0 %v2561
        %v2741 = vpop.f32.mrb[0].mxu0
        %v2742 = vadd.f32 0.0, %v2741
        %v2743 = vpop.f32.mrb[0].mxu0
        %2744 = vmatprep.mubr.f32.mxu0 0.0
        %2745 = vmatmul.mubr.f32.gmra.mrb[0].mxu0 %v2564
        %v2746 = vpop.f32.mrb[0].mxu0
        %v2747 = vadd.f32 0.0, %v2746
        %v2748 = vpop.f32.mrb[0].mxu0
        %2749 = vmatprep.mubr.f32.mxu0 0.0
        %2750 = vmatmul.mubr.f32.gmra.mrb[0].mxu0 %v2567
        %v2751 = vpop.f32.mrb[0].mxu0
        %v2752 = vadd.f32 0.0, %v2751
        %v2753 = vpop.f32.mrb[0].mxu0
        %2754 = vmatprep.mubr.f32.mxu0 0.0
        %2755 = vmatmul.mubr.f32.gmra.mrb[0].mxu0 %v2570
        %v2756 = vpop.f32.mrb[0].mxu0
        %v2757 = vadd.f32 0.0, %v2756
        %v2758 = vpop.f32.mrb[0].mxu0
        %2759 = vmatprep.mubr.f32.mxu0 0.0
        %2760 = vmatmul.mubr.f32.gmra.mrb[0].mxu0 %v2573
        %v2761 = vpop.f32.mrb[0].mxu0
        %v2762 = vadd.f32 0.0, %v2761
        %v2763 = vpop.f32.mrb[0].mxu0
        %2764 = vmatprep.mubr.f32.mxu0 0.0
        %2765 = vmatmul.mubr.f32.gmra.mrb[0].mxu0 %v2576
        %v2766 = vpop.f32.mrb[0].mxu0
        %v2767 = vadd.f32 0.0, %v2766
        %v2768 = vpop.f32.mrb[0].mxu0
        %2769 = vmatprep.mubr.f32.mxu0 0.0
        %2770 = vmatmul.mubr.f32.gmra.mrb[0].mxu0 %v2579
        %v2771 = vpop.f32.mrb[0].mxu0
        %v2772 = vadd.f32 0.0, %v2771
        %v2773 = vpop.f32.mrb[0].mxu0
        %2774 = vmatprep.mubr.f32.mxu0 0.0
        %2775 = vmatmul.mubr.f32.gmra.mrb[0].mxu0 %v2582
        %v2776 = vpop.f32.mrb[0].mxu0
        %v2777 = vadd.f32 0.0, %v2776
        %v2778 = vpop.f32.mrb[0].mxu0
        %2779 = vmatprep.mubr.f32.mxu0 0.0
        %2780 = vmatmul.mubr.f32.gmra.mrb[0].mxu0 %v2585
        %v2781 = vpop.f32.mrb[0].mxu0
        %v2782 = vadd.f32 0.0, %v2781
        %v2783 = vpop.f32.mrb[0].mxu0
        %2784 = vmatprep.mubr.f32.mxu0 0.0
        %2785 = vmatmul.mubr.f32.gmra.mrb[0].mxu0 %v2588
        %v2786 = vpop.f32.mrb[0].mxu0
        %v2787 = vadd.f32 0.0, %v2786
        %v2788 = vpop.f32.mrb[0].mxu0
        %2789 = vmatprep.mubr.f32.mxu0 0.0
        %2790 = vmatmul.mubr.f32.gmra.mrb[0].mxu0 %v2591
        %v2791 = vpop.f32.mrb[0].mxu0
        %v2792 = vadd.f32 0.0, %v2791
        %v2793 = vpop.f32.mrb[0].mxu0
        %2794 = vmatprep.mubr.f32.mxu0 0.0
        %2795 = vmatmul.mubr.f32.gmra.mrb[0].mxu0 %v2594
        %v2796 = vpop.f32.mrb[0].mxu0
        %v2797 = vadd.f32 0.0, %v2796
        %v2798 = vpop.f32.mrb[0].mxu0
        %2799 = vmatprep.mubr.f32.mxu0 0.0
        %2800 = vmatmul.mubr.f32.gmra.mrb[0].mxu0 %v2597
        %v2801 = vpop.f32.mrb[0].mxu0
        %v2802 = vadd.f32 0.0, %v2801
        %v2803 = vpop.f32.mrb[0].mxu0
        %2804 = vmatprep.mubr.f32.mxu0 0.0
        %2805 = vmatmul.mubr.f32.gmra.mrb[0].mxu0 %v2600
        %v2806 = vpop.f32.mrb[0].mxu0
        %v2807 = vadd.f32 0.0, %v2806
        %v2808 = vpop.f32.mrb[0].mxu0
        %2809 = vmatprep.mubr.f32.mxu0 0.0
        %2810 = vmatmul.mubr.f32.gmra.mrb[0].mxu0 %v2603
        %v2811 = vpop.f32.mrb[0].mxu0
        %v2812 = vadd.f32 0.0, %v2811
        %v2813 = vpop.f32.mrb[0].mxu0
        %2814 = vmatprep.mubr.f32.mxu0 0.0
        %2815 = vmatmul.mubr.f32.gmra.mrb[0].mxu0 %v2606
        %v2816 = vpop.f32.mrb[0].mxu0
        %v2817 = vadd.f32 0.0, %v2816
        %v2818 = vpop.f32.mrb[0].mxu0
        %2819 = vmatprep.mubr.f32.mxu0 0.0
        %2820 = vmatmul.mubr.f32.gmra.mrb[0].mxu0 %v2609
        %v2821 = vpop.f32.mrb[0].mxu0
        %v2822 = vadd.f32 0.0, %v2821
        %v2823 = vpop.f32.mrb[0].mxu0
        %2824 = vmatprep.mubr.f32.mxu0 0.0
        %2825 = vmatmul.mubr.f32.gmra.mrb[0].mxu0 %v2612
        %v2826 = vpop.f32.mrb[0].mxu0
        %v2827 = vadd.f32 0.0, %v2826
        %v2828 = vpop.f32.mrb[0].mxu0
        %2829 = vmatprep.mubr.f32.mxu0 0.0
        %2830 = vmatmul.mubr.f32.gmra.mrb[0].mxu0 %v2615
        %v2831 = vpop.f32.mrb[0].mxu0
        %v2832 = vadd.f32 0.0, %v2831
        %v2833 = vpop.f32.mrb[0].mxu0
        %2834 = vmatprep.mubr.f32.mxu0 0.0
        %2835 = vmatmul.mubr.f32.gmra.mrb[0].mxu0 %v2618
        %v2836 = vpop.f32.mrb[0].mxu0
        %v2837 = vadd.f32 0.0, %v2836
        %v2838 = vpop.f32.mrb[0].mxu0
        %2839 = vmatprep.mubr.f32.mxu0 0.0
        %2840 = vmatmul.mubr.f32.gmra.mrb[0].mxu0 %v2621
        %v2841 = vpop.f32.mrb[0].mxu0
        %v2842 = vadd.f32 0.0, %v2841
        %v2843 = vpop.f32.mrb[0].mxu0
        %2844 = vmatprep.mubr.f32.mxu0 0.0
        %2845 = vmatmul.mubr.f32.gmra.mrb[0].mxu0 %v2624
        %v2846 = vpop.f32.mrb[0].mxu0
        %v2847 = vadd.f32 0.0, %v2846
        %v2848 = vpop.f32.mrb[0].mxu0
        %2849 = vmatprep.mubr.f32.mxu0 0.0
        %2850 = vmatmul.mubr.f32.gmra.mrb[0].mxu0 %v2627
        %v2851 = vpop.f32.mrb[0].mxu0
        %v2852 = vadd.f32 0.0, %v2851
        %v2853 = vpop.f32.mrb[0].mxu0
        %2854 = vmatprep.mubr.f32.mxu0 0.0
        %2855 = vmatmul.mubr.f32.gmra.mrb[0].mxu0 %v2630
        %v2856 = vpop.f32.mrb[0].mxu0
        %v2857 = vadd.f32 0.0, %v2856
        %v2858 = vpop.f32.mrb[0].mxu0
        %2859 = vdwg.mxu0
        %v2860 = vadd.f32 %v2469, %v2702
        %v2861 = vadd.f32 %v2470, %v2707
        %v2862 = vadd.f32 %v2471, %v2712
        %v2863 = vadd.f32 %v2472, %v2717
        %v2864 = vadd.f32 %v2473, %v2722
        %v2865 = vadd.f32 %v2474, %v2727
        %v2866 = vadd.f32 %v2475, %v2732
        %v2867 = vadd.f32 %v2476, %v2737
        %v2868 = vadd.f32 %v2477, %v2742
        %v2869 = vadd.f32 %v2478, %v2747
        %v2870 = vadd.f32 %v2479, %v2752
        %v2871 = vadd.f32 %v2480, %v2757
        %v2872 = vadd.f32 %v2481, %v2762
        %v2873 = vadd.f32 %v2482, %v2767
        %v2874 = vadd.f32 %v2483, %v2772
        %v2875 = vadd.f32 %v2484, %v2777
        %v2876 = vadd.f32 %v2485, %v2782
        %v2877 = vadd.f32 %v2486, %v2787
        %v2878 = vadd.f32 %v2487, %v2792
        %v2879 = vadd.f32 %v2488, %v2797
        %v2880 = vadd.f32 %v2489, %v2802
        %v2881 = vadd.f32 %v2490, %v2807
        %v2882 = vadd.f32 %v2491, %v2812
        %v2883 = vadd.f32 %v2492, %v2817
        %v2884 = vadd.f32 %v2493, %v2822
        %v2885 = vadd.f32 %v2494, %v2827
        %v2886 = vadd.f32 %v2495, %v2832
        %v2887 = vadd.f32 %v2496, %v2837
        %v2888 = vadd.f32 %v2497, %v2842
        %v2889 = vadd.f32 %v2498, %v2847
        %v2890 = vadd.f32 %v2499, %v2852
        %v2891 = vadd.f32 %v2500, %v2857
        %v2892 = vld [vmem:[%s2501 + $0x1] sm:$0xff]
        %v2893 = vld [vmem:[%s2501 + $0x9] sm:$0xff]
        %v2894 = vld [vmem:[%s2501 + $0x19] sm:$0xff]
        %v2895 = vld [vmem:[%s2501 + $0x21] sm:$0xff]
        %v2896 = vld [vmem:[%s2501 + $0x31] sm:$0xff]
        %v2897 = vld [vmem:[%s2501 + $0x39] sm:$0xff]
        %v2898 = vld [vmem:[%s2501 + $0x49] sm:$0xff]
        %v2899 = vld [vmem:[%s2501 + $0x51] sm:$0xff]
        %v2900 = vld [vmem:[%s2501 + $0x61] sm:$0xff]
        %v2901 = vld [vmem:[%s2501 + $0x69] sm:$0xff]
        %v2902 = vld [vmem:[%s2501 + $0x79] sm:$0xff]
        %v2903 = vld [vmem:[%s2501 + $0x81] sm:$0xff]
        %v2904 = vld [vmem:[%s2501 + $0x91] sm:$0xff]
        %v2905 = vld [vmem:[%s2501 + $0x99] sm:$0xff]
        %v2906 = vld [vmem:[%s2501 + $0xa9] sm:$0xff]
        %v2907 = vld [vmem:[%s2501 + $0xb1] sm:$0xff]
        %v2908 = vld [vmem:[%s2501 + $0xc1] sm:$0xff]
        %v2909 = vld [vmem:[%s2501 + $0xc9] sm:$0xff]
        %v2910 = vld [vmem:[%s2501 + $0xd9] sm:$0xff]
        %v2911 = vld [vmem:[%s2501 + $0xe1] sm:$0xff]
        %v2912 = vld [vmem:[%s2501 + $0xf1] sm:$0xff]
        %v2913 = vld [vmem:[%s2501 + $0xf9] sm:$0xff]
        %v2914 = vld [vmem:[%s2501 + $0x109] sm:$0xff]
        %v2915 = vld [vmem:[%s2501 + $0x111] sm:$0xff]
        %v2916 = vld [vmem:[%s2501 + $0x121] sm:$0xff]
        %v2917 = vld [vmem:[%s2501 + $0x129] sm:$0xff]
        %v2918 = vld [vmem:[%s2501 + $0x139] sm:$0xff]
        %v2919 = vld [vmem:[%s2501 + $0x141] sm:$0xff]
        %v2920 = vld [vmem:[%s2501 + $0x151] sm:$0xff]
        %v2921 = vld [vmem:[%s2501 + $0x159] sm:$0xff]
        %v2922 = vld [vmem:[%s2501 + $0x169] sm:$0xff]
        %v2923 = vld [vmem:[%s2501 + $0x171] sm:$0xff]
        %s2924 = scalar_lea.vmem %s1, 28
        %v2925 = vld [vmem:[%s2924] sm:$0xf]
        %v2927 = vsel %vm290, %v2892, 0
        %v2930 = vsel %vm290, %v2893, 0
        %v2933 = vsel %vm290, %v2894, 0
        %v2936 = vsel %vm290, %v2895, 0
        %v2939 = vsel %vm290, %v2896, 0
        %v2942 = vsel %vm290, %v2897, 0
        %v2945 = vsel %vm290, %v2898, 0
        %v2948 = vsel %vm290, %v2899, 0
        %v2951 = vsel %vm290, %v2900, 0
        %v2954 = vsel %vm290, %v2901, 0
        %v2957 = vsel %vm290, %v2902, 0
        %v2960 = vsel %vm290, %v2903, 0
        %v2963 = vsel %vm290, %v2904, 0
        %v2966 = vsel %vm290, %v2905, 0
        %v2969 = vsel %vm290, %v2906, 0
        %v2972 = vsel %vm290, %v2907, 0
        %v2975 = vsel %vm290, %v2908, 0
        %v2978 = vsel %vm290, %v2909, 0
        %v2981 = vsel %vm290, %v2910, 0
        %v2984 = vsel %vm290, %v2911, 0
        %v2987 = vsel %vm290, %v2912, 0
        %v2990 = vsel %vm290, %v2913, 0
        %v2993 = vsel %vm290, %v2914, 0
        %v2996 = vsel %vm290, %v2915, 0
        %v2999 = vsel %vm290, %v2916, 0
        %v3002 = vsel %vm290, %v2917, 0
        %v3005 = vsel %vm290, %v2918, 0
        %v3008 = vsel %vm290, %v2919, 0
        %v3011 = vsel %vm290, %v2920, 0
        %v3014 = vsel %vm290, %v2921, 0
        %v3017 = vsel %vm290, %v2922, 0
        %v3020 = vsel %vm290, %v2923, 0
        %v3023 = vsel %vm387, %v2925, 0
        %3025 = vmatprep.subr.mxu0 0.0
        %3026 = vmatpush1.msra.mxu0 %v3023
        %3027 = vmatprep.subr.mxu0 0.0
        %3028 = vmatpush1.msra.mxu0 0.0
        %3029 = vmatprep.subr.mxu0 0.0
        %3030 = vmatpush1.msra.mxu0 0.0
        %3031 = vmatprep.subr.mxu0 0.0
        %3032 = vmatpush1.msra.mxu0 0.0
        %3033 = vmatprep.subr.mxu0 0.0
        %3034 = vmatpush1.msra.mxu0 0.0
        %3035 = vmatprep.subr.mxu0 0.0
        %3036 = vmatpush1.msra.mxu0 0.0
        %3037 = vmatprep.subr.mxu0 0.0
        %3038 = vmatpush1.msra.mxu0 0.0
        %3039 = vmatprep.subr.mxu0 0.0
        %3040 = vmatpush1.msra.mxu0 0.0
        %3041 = vmatprep.subr.mxu0 0.0
        %3042 = vmatpush1.msra.mxu0 0.0
        %3043 = vmatprep.subr.mxu0 0.0
        %3044 = vmatpush1.msra.mxu0 0.0
        %3045 = vmatprep.subr.mxu0 0.0
        %3046 = vmatpush1.msra.mxu0 0.0
        %3047 = vmatprep.subr.mxu0 0.0
        %3048 = vmatpush1.msra.mxu0 0.0
        %3049 = vmatprep.subr.mxu0 0.0
        %3050 = vmatpush1.msra.mxu0 0.0
        %3051 = vmatprep.subr.mxu0 0.0
        %3052 = vmatpush1.msra.mxu0 0.0
        %3053 = vmatprep.subr.mxu0 0.0
        %3054 = vmatpush1.msra.mxu0 0.0
        %3055 = vmatprep.subr.mxu0 0.0
        %3056 = vmatpush1.msra.mxu0 0.0
        %3057 = vmatprep.subr.mxu0 0.0
        %3058 = vmatpush1.msra.mxu0 0.0
        %3059 = vmatprep.subr.mxu0 0.0
        %3060 = vmatpush1.msra.mxu0 0.0
        %3061 = vmatprep.subr.mxu0 0.0
        %3062 = vmatpush1.msra.mxu0 0.0
        %3063 = vmatprep.subr.mxu0 0.0
        %3064 = vmatpush1.msra.mxu0 0.0
        %3065 = vmatprep.subr.mxu0 0.0
        %3066 = vmatpush1.msra.mxu0 0.0
        %3067 = vmatprep.subr.mxu0 0.0
        %3068 = vmatpush1.msra.mxu0 0.0
        %3069 = vmatprep.subr.mxu0 0.0
        %3070 = vmatpush1.msra.mxu0 0.0
        %3071 = vmatprep.subr.mxu0 0.0
        %3072 = vmatpush1.msra.mxu0 0.0
        %3073 = vmatprep.subr.mxu0 0.0
        %3074 = vmatpush1.msra.mxu0 0.0
        %3075 = vmatprep.subr.mxu0 0.0
        %3076 = vmatpush1.msra.mxu0 0.0
        %3077 = vmatprep.subr.mxu0 0.0
        %3078 = vmatpush1.msra.mxu0 0.0
        %3079 = vmatprep.subr.mxu0 0.0
        %3080 = vmatpush1.msra.mxu0 0.0
        %3081 = vmatprep.subr.mxu0 0.0
        %3082 = vmatpush1.msra.mxu0 0.0
        %3083 = vmatprep.subr.mxu0 0.0
        %3084 = vmatpush1.msra.mxu0 0.0
        %3085 = vmatprep.subr.mxu0 0.0
        %3086 = vmatpush1.msra.mxu0 0.0
        %3087 = vmatprep.subr.mxu0 0.0
        %3088 = vmatpush1.msra.mxu0 0.0
        %3089 = vmatprep.mubr.f32.mxu0 0.0
        %3090 = vmatmul.mubr.f32.gmra.mrb[0].mxu0 %v2927
        %v3091 = vpop.f32.mrb[0].mxu0
        %v3092 = vadd.f32 0.0, %v3091
        %v3093 = vpop.f32.mrb[0].mxu0
        %3094 = vmatprep.mubr.f32.mxu0 0.0
        %3095 = vmatmul.mubr.f32.gmra.mrb[0].mxu0 %v2930
        %v3096 = vpop.f32.mrb[0].mxu0
        %v3097 = vadd.f32 0.0, %v3096
        %v3098 = vpop.f32.mrb[0].mxu0
        %3099 = vmatprep.mubr.f32.mxu0 0.0
        %3100 = vmatmul.mubr.f32.gmra.mrb[0].mxu0 %v2933
        %v3101 = vpop.f32.mrb[0].mxu0
        %v3102 = vadd.f32 0.0, %v3101
        %v3103 = vpop.f32.mrb[0].mxu0
        %3104 = vmatprep.mubr.f32.mxu0 0.0
        %3105 = vmatmul.mubr.f32.gmra.mrb[0].mxu0 %v2936
        %v3106 = vpop.f32.mrb[0].mxu0
        %v3107 = vadd.f32 0.0, %v3106
        %v3108 = vpop.f32.mrb[0].mxu0
        %3109 = vmatprep.mubr.f32.mxu0 0.0
        %3110 = vmatmul.mubr.f32.gmra.mrb[0].mxu0 %v2939
        %v3111 = vpop.f32.mrb[0].mxu0
        %v3112 = vadd.f32 0.0, %v3111
        %v3113 = vpop.f32.mrb[0].mxu0
        %3114 = vmatprep.mubr.f32.mxu0 0.0
        %3115 = vmatmul.mubr.f32.gmra.mrb[0].mxu0 %v2942
        %v3116 = vpop.f32.mrb[0].mxu0
        %v3117 = vadd.f32 0.0, %v3116
        %v3118 = vpop.f32.mrb[0].mxu0
        %3119 = vmatprep.mubr.f32.mxu0 0.0
        %3120 = vmatmul.mubr.f32.gmra.mrb[0].mxu0 %v2945
        %v3121 = vpop.f32.mrb[0].mxu0
        %v3122 = vadd.f32 0.0, %v3121
        %v3123 = vpop.f32.mrb[0].mxu0
        %3124 = vmatprep.mubr.f32.mxu0 0.0
        %3125 = vmatmul.mubr.f32.gmra.mrb[0].mxu0 %v2948
        %v3126 = vpop.f32.mrb[0].mxu0
        %v3127 = vadd.f32 0.0, %v3126
        %v3128 = vpop.f32.mrb[0].mxu0
        %3129 = vmatprep.mubr.f32.mxu0 0.0
        %3130 = vmatmul.mubr.f32.gmra.mrb[0].mxu0 %v2951
        %v3131 = vpop.f32.mrb[0].mxu0
        %v3132 = vadd.f32 0.0, %v3131
        %v3133 = vpop.f32.mrb[0].mxu0
        %3134 = vmatprep.mubr.f32.mxu0 0.0
        %3135 = vmatmul.mubr.f32.gmra.mrb[0].mxu0 %v2954
        %v3136 = vpop.f32.mrb[0].mxu0
        %v3137 = vadd.f32 0.0, %v3136
        %v3138 = vpop.f32.mrb[0].mxu0
        %3139 = vmatprep.mubr.f32.mxu0 0.0
        %3140 = vmatmul.mubr.f32.gmra.mrb[0].mxu0 %v2957
        %v3141 = vpop.f32.mrb[0].mxu0
        %v3142 = vadd.f32 0.0, %v3141
        %v3143 = vpop.f32.mrb[0].mxu0
        %3144 = vmatprep.mubr.f32.mxu0 0.0
        %3145 = vmatmul.mubr.f32.gmra.mrb[0].mxu0 %v2960
        %v3146 = vpop.f32.mrb[0].mxu0
        %v3147 = vadd.f32 0.0, %v3146
        %v3148 = vpop.f32.mrb[0].mxu0
        %3149 = vmatprep.mubr.f32.mxu0 0.0
        %3150 = vmatmul.mubr.f32.gmra.mrb[0].mxu0 %v2963
        %v3151 = vpop.f32.mrb[0].mxu0
        %v3152 = vadd.f32 0.0, %v3151
        %v3153 = vpop.f32.mrb[0].mxu0
        %3154 = vmatprep.mubr.f32.mxu0 0.0
        %3155 = vmatmul.mubr.f32.gmra.mrb[0].mxu0 %v2966
        %v3156 = vpop.f32.mrb[0].mxu0
        %v3157 = vadd.f32 0.0, %v3156
        %v3158 = vpop.f32.mrb[0].mxu0
        %3159 = vmatprep.mubr.f32.mxu0 0.0
        %3160 = vmatmul.mubr.f32.gmra.mrb[0].mxu0 %v2969
        %v3161 = vpop.f32.mrb[0].mxu0
        %v3162 = vadd.f32 0.0, %v3161
        %v3163 = vpop.f32.mrb[0].mxu0
        %3164 = vmatprep.mubr.f32.mxu0 0.0
        %3165 = vmatmul.mubr.f32.gmra.mrb[0].mxu0 %v2972
        %v3166 = vpop.f32.mrb[0].mxu0
        %v3167 = vadd.f32 0.0, %v3166
        %v3168 = vpop.f32.mrb[0].mxu0
        %3169 = vmatprep.mubr.f32.mxu0 0.0
        %3170 = vmatmul.mubr.f32.gmra.mrb[0].mxu0 %v2975
        %v3171 = vpop.f32.mrb[0].mxu0
        %v3172 = vadd.f32 0.0, %v3171
        %v3173 = vpop.f32.mrb[0].mxu0
        %3174 = vmatprep.mubr.f32.mxu0 0.0
        %3175 = vmatmul.mubr.f32.gmra.mrb[0].mxu0 %v2978
        %v3176 = vpop.f32.mrb[0].mxu0
        %v3177 = vadd.f32 0.0, %v3176
        %v3178 = vpop.f32.mrb[0].mxu0
        %3179 = vmatprep.mubr.f32.mxu0 0.0
        %3180 = vmatmul.mubr.f32.gmra.mrb[0].mxu0 %v2981
        %v3181 = vpop.f32.mrb[0].mxu0
        %v3182 = vadd.f32 0.0, %v3181
        %v3183 = vpop.f32.mrb[0].mxu0
        %3184 = vmatprep.mubr.f32.mxu0 0.0
        %3185 = vmatmul.mubr.f32.gmra.mrb[0].mxu0 %v2984
        %v3186 = vpop.f32.mrb[0].mxu0
        %v3187 = vadd.f32 0.0, %v3186
        %v3188 = vpop.f32.mrb[0].mxu0
        %3189 = vmatprep.mubr.f32.mxu0 0.0
        %3190 = vmatmul.mubr.f32.gmra.mrb[0].mxu0 %v2987
        %v3191 = vpop.f32.mrb[0].mxu0
        %v3192 = vadd.f32 0.0, %v3191
        %v3193 = vpop.f32.mrb[0].mxu0
        %3194 = vmatprep.mubr.f32.mxu0 0.0
        %3195 = vmatmul.mubr.f32.gmra.mrb[0].mxu0 %v2990
        %v3196 = vpop.f32.mrb[0].mxu0
        %v3197 = vadd.f32 0.0, %v3196
        %v3198 = vpop.f32.mrb[0].mxu0
        %3199 = vmatprep.mubr.f32.mxu0 0.0
        %3200 = vmatmul.mubr.f32.gmra.mrb[0].mxu0 %v2993
        %v3201 = vpop.f32.mrb[0].mxu0
        %v3202 = vadd.f32 0.0, %v3201
        %v3203 = vpop.f32.mrb[0].mxu0
        %3204 = vmatprep.mubr.f32.mxu0 0.0
        %3205 = vmatmul.mubr.f32.gmra.mrb[0].mxu0 %v2996
        %v3206 = vpop.f32.mrb[0].mxu0
        %v3207 = vadd.f32 0.0, %v3206
        %v3208 = vpop.f32.mrb[0].mxu0
        %3209 = vmatprep.mubr.f32.mxu0 0.0
        %3210 = vmatmul.mubr.f32.gmra.mrb[0].mxu0 %v2999
        %v3211 = vpop.f32.mrb[0].mxu0
        %v3212 = vadd.f32 0.0, %v3211
        %v3213 = vpop.f32.mrb[0].mxu0
        %3214 = vmatprep.mubr.f32.mxu0 0.0
        %3215 = vmatmul.mubr.f32.gmra.mrb[0].mxu0 %v3002
        %v3216 = vpop.f32.mrb[0].mxu0
        %v3217 = vadd.f32 0.0, %v3216
        %v3218 = vpop.f32.mrb[0].mxu0
        %3219 = vmatprep.mubr.f32.mxu0 0.0
        %3220 = vmatmul.mubr.f32.gmra.mrb[0].mxu0 %v3005
        %v3221 = vpop.f32.mrb[0].mxu0
        %v3222 = vadd.f32 0.0, %v3221
        %v3223 = vpop.f32.mrb[0].mxu0
        %3224 = vmatprep.mubr.f32.mxu0 0.0
        %3225 = vmatmul.mubr.f32.gmra.mrb[0].mxu0 %v3008
        %v3226 = vpop.f32.mrb[0].mxu0
        %v3227 = vadd.f32 0.0, %v3226
        %v3228 = vpop.f32.mrb[0].mxu0
        %3229 = vmatprep.mubr.f32.mxu0 0.0
        %3230 = vmatmul.mubr.f32.gmra.mrb[0].mxu0 %v3011
        %v3231 = vpop.f32.mrb[0].mxu0
        %v3232 = vadd.f32 0.0, %v3231
        %v3233 = vpop.f32.mrb[0].mxu0
        %3234 = vmatprep.mubr.f32.mxu0 0.0
        %3235 = vmatmul.mubr.f32.gmra.mrb[0].mxu0 %v3014
        %v3236 = vpop.f32.mrb[0].mxu0
        %v3237 = vadd.f32 0.0, %v3236
        %v3238 = vpop.f32.mrb[0].mxu0
        %3239 = vmatprep.mubr.f32.mxu0 0.0
        %3240 = vmatmul.mubr.f32.gmra.mrb[0].mxu0 %v3017
        %v3241 = vpop.f32.mrb[0].mxu0
        %v3242 = vadd.f32 0.0, %v3241
        %v3243 = vpop.f32.mrb[0].mxu0
        %3244 = vmatprep.mubr.f32.mxu0 0.0
        %3245 = vmatmul.mubr.f32.gmra.mrb[0].mxu0 %v3020
        %v3246 = vpop.f32.mrb[0].mxu0
        %v3247 = vadd.f32 0.0, %v3246
        %v3248 = vpop.f32.mrb[0].mxu0
        %3249 = vdwg.mxu0
        %v3250 = vadd.f32 %v2860, %v3092
        %v3251 = vadd.f32 %v2861, %v3097
        %v3252 = vadd.f32 %v2862, %v3102
        %v3253 = vadd.f32 %v2863, %v3107
        %v3254 = vadd.f32 %v2864, %v3112
        %v3255 = vadd.f32 %v2865, %v3117
        %v3256 = vadd.f32 %v2866, %v3122
        %v3257 = vadd.f32 %v2867, %v3127
        %v3258 = vadd.f32 %v2868, %v3132
        %v3259 = vadd.f32 %v2869, %v3137
        %v3260 = vadd.f32 %v2870, %v3142
        %v3261 = vadd.f32 %v2871, %v3147
        %v3262 = vadd.f32 %v2872, %v3152
        %v3263 = vadd.f32 %v2873, %v3157
        %v3264 = vadd.f32 %v2874, %v3162
        %v3265 = vadd.f32 %v2875, %v3167
        %v3266 = vadd.f32 %v2876, %v3172
        %v3267 = vadd.f32 %v2877, %v3177
        %v3268 = vadd.f32 %v2878, %v3182
        %v3269 = vadd.f32 %v2879, %v3187
        %v3270 = vadd.f32 %v2880, %v3192
        %v3271 = vadd.f32 %v2881, %v3197
        %v3272 = vadd.f32 %v2882, %v3202
        %v3273 = vadd.f32 %v2883, %v3207
        %v3274 = vadd.f32 %v2884, %v3212
        %v3275 = vadd.f32 %v2885, %v3217
        %v3276 = vadd.f32 %v2886, %v3222
        %v3277 = vadd.f32 %v2887, %v3227
        %v3278 = vadd.f32 %v2888, %v3232
        %v3279 = vadd.f32 %v2889, %v3237
        %v3280 = vadd.f32 %v2890, %v3242
        %v3281 = vadd.f32 %v2891, %v3247
        %v3282 = vld [vmem:[%s2501 + $0x2] sm:$0xff]
        %v3283 = vld [vmem:[%s2501 + $0xa] sm:$0xff]
        %v3284 = vld [vmem:[%s2501 + $0x1a] sm:$0xff]
        %v3285 = vld [vmem:[%s2501 + $0x22] sm:$0xff]
        %v3286 = vld [vmem:[%s2501 + $0x32] sm:$0xff]
        %v3287 = vld [vmem:[%s2501 + $0x3a] sm:$0xff]
        %v3288 = vld [vmem:[%s2501 + $0x4a] sm:$0xff]
        %v3289 = vld [vmem:[%s2501 + $0x52] sm:$0xff]
        %v3290 = vld [vmem:[%s2501 + $0x62] sm:$0xff]
        %v3291 = vld [vmem:[%s2501 + $0x6a] sm:$0xff]
        %v3292 = vld [vmem:[%s2501 + $0x7a] sm:$0xff]
        %v3293 = vld [vmem:[%s2501 + $0x82] sm:$0xff]
        %v3294 = vld [vmem:[%s2501 + $0x92] sm:$0xff]
        %v3295 = vld [vmem:[%s2501 + $0x9a] sm:$0xff]
        %v3296 = vld [vmem:[%s2501 + $0xaa] sm:$0xff]
        %v3297 = vld [vmem:[%s2501 + $0xb2] sm:$0xff]
        %v3298 = vld [vmem:[%s2501 + $0xc2] sm:$0xff]
        %v3299 = vld [vmem:[%s2501 + $0xca] sm:$0xff]
        %v3300 = vld [vmem:[%s2501 + $0xda] sm:$0xff]
        %v3301 = vld [vmem:[%s2501 + $0xe2] sm:$0xff]
        %v3302 = vld [vmem:[%s2501 + $0xf2] sm:$0xff]
        %v3303 = vld [vmem:[%s2501 + $0xfa] sm:$0xff]
        %v3304 = vld [vmem:[%s2501 + $0x10a] sm:$0xff]
        %v3305 = vld [vmem:[%s2501 + $0x112] sm:$0xff]
        %v3306 = vld [vmem:[%s2501 + $0x122] sm:$0xff]
        %v3307 = vld [vmem:[%s2501 + $0x12a] sm:$0xff]
        %v3308 = vld [vmem:[%s2501 + $0x13a] sm:$0xff]
        %v3309 = vld [vmem:[%s2501 + $0x142] sm:$0xff]
        %v3310 = vld [vmem:[%s2501 + $0x152] sm:$0xff]
        %v3311 = vld [vmem:[%s2501 + $0x15a] sm:$0xff]
        %v3312 = vld [vmem:[%s2501 + $0x16a] sm:$0xff]
        %v3313 = vld [vmem:[%s2501 + $0x172] sm:$0xff]
        %s3314 = scalar_lea.vmem %s1, 32
        %v3315 = vld [vmem:[%s3314] sm:$0xf]
        %v3317 = vsel %vm290, %v3282, 0
        %v3320 = vsel %vm290, %v3283, 0
        %v3323 = vsel %vm290, %v3284, 0
        %v3326 = vsel %vm290, %v3285, 0
        %v3329 = vsel %vm290, %v3286, 0
        %v3332 = vsel %vm290, %v3287, 0
        %v3335 = vsel %vm290, %v3288, 0
        %v3338 = vsel %vm290, %v3289, 0
        %v3341 = vsel %vm290, %v3290, 0
        %v3344 = vsel %vm290, %v3291, 0
        %v3347 = vsel %vm290, %v3292, 0
        %v3350 = vsel %vm290, %v3293, 0
        %v3353 = vsel %vm290, %v3294, 0
        %v3356 = vsel %vm290, %v3295, 0
        %v3359 = vsel %vm290, %v3296, 0
        %v3362 = vsel %vm290, %v3297, 0
        %v3365 = vsel %vm290, %v3298, 0
        %v3368 = vsel %vm290, %v3299, 0
        %v3371 = vsel %vm290, %v3300, 0
        %v3374 = vsel %vm290, %v3301, 0
        %v3377 = vsel %vm290, %v3302, 0
        %v3380 = vsel %vm290, %v3303, 0
        %v3383 = vsel %vm290, %v3304, 0
        %v3386 = vsel %vm290, %v3305, 0
        %v3389 = vsel %vm290, %v3306, 0
        %v3392 = vsel %vm290, %v3307, 0
        %v3395 = vsel %vm290, %v3308, 0
        %v3398 = vsel %vm290, %v3309, 0
        %v3401 = vsel %vm290, %v3310, 0
        %v3404 = vsel %vm290, %v3311, 0
        %v3407 = vsel %vm290, %v3312, 0
        %v3410 = vsel %vm290, %v3313, 0
        %v3413 = vsel %vm387, %v3315, 0
        %3415 = vmatprep.subr.mxu0 0.0
        %3416 = vmatpush1.msra.mxu0 %v3413
        %3417 = vmatprep.subr.mxu0 0.0
        %3418 = vmatpush1.msra.mxu0 0.0
        %3419 = vmatprep.subr.mxu0 0.0
        %3420 = vmatpush1.msra.mxu0 0.0
        %3421 = vmatprep.subr.mxu0 0.0
        %3422 = vmatpush1.msra.mxu0 0.0
        %3423 = vmatprep.subr.mxu0 0.0
        %3424 = vmatpush1.msra.mxu0 0.0
        %3425 = vmatprep.subr.mxu0 0.0
        %3426 = vmatpush1.msra.mxu0 0.0
        %3427 = vmatprep.subr.mxu0 0.0
        %3428 = vmatpush1.msra.mxu0 0.0
        %3429 = vmatprep.subr.mxu0 0.0
        %3430 = vmatpush1.msra.mxu0 0.0
        %3431 = vmatprep.subr.mxu0 0.0
        %3432 = vmatpush1.msra.mxu0 0.0
        %3433 = vmatprep.subr.mxu0 0.0
        %3434 = vmatpush1.msra.mxu0 0.0
        %3435 = vmatprep.subr.mxu0 0.0
        %3436 = vmatpush1.msra.mxu0 0.0
        %3437 = vmatprep.subr.mxu0 0.0
        %3438 = vmatpush1.msra.mxu0 0.0
        %3439 = vmatprep.subr.mxu0 0.0
        %3440 = vmatpush1.msra.mxu0 0.0
        %3441 = vmatprep.subr.mxu0 0.0
        %3442 = vmatpush1.msra.mxu0 0.0
        %3443 = vmatprep.subr.mxu0 0.0
        %3444 = vmatpush1.msra.mxu0 0.0
        %3445 = vmatprep.subr.mxu0 0.0
        %3446 = vmatpush1.msra.mxu0 0.0
        %3447 = vmatprep.subr.mxu0 0.0
        %3448 = vmatpush1.msra.mxu0 0.0
        %3449 = vmatprep.subr.mxu0 0.0
        %3450 = vmatpush1.msra.mxu0 0.0
        %3451 = vmatprep.subr.mxu0 0.0
        %3452 = vmatpush1.msra.mxu0 0.0
        %3453 = vmatprep.subr.mxu0 0.0
        %3454 = vmatpush1.msra.mxu0 0.0
        %3455 = vmatprep.subr.mxu0 0.0
        %3456 = vmatpush1.msra.mxu0 0.0
        %3457 = vmatprep.subr.mxu0 0.0
        %3458 = vmatpush1.msra.mxu0 0.0
        %3459 = vmatprep.subr.mxu0 0.0
        %3460 = vmatpush1.msra.mxu0 0.0
        %3461 = vmatprep.subr.mxu0 0.0
        %3462 = vmatpush1.msra.mxu0 0.0
        %3463 = vmatprep.subr.mxu0 0.0
        %3464 = vmatpush1.msra.mxu0 0.0
        %3465 = vmatprep.subr.mxu0 0.0
        %3466 = vmatpush1.msra.mxu0 0.0
        %3467 = vmatprep.subr.mxu0 0.0
        %3468 = vmatpush1.msra.mxu0 0.0
        %3469 = vmatprep.subr.mxu0 0.0
        %3470 = vmatpush1.msra.mxu0 0.0
        %3471 = vmatprep.subr.mxu0 0.0
        %3472 = vmatpush1.msra.mxu0 0.0
        %3473 = vmatprep.subr.mxu0 0.0
        %3474 = vmatpush1.msra.mxu0 0.0
        %3475 = vmatprep.subr.mxu0 0.0
        %3476 = vmatpush1.msra.mxu0 0.0
        %3477 = vmatprep.subr.mxu0 0.0
        %3478 = vmatpush1.msra.mxu0 0.0
        %3479 = vmatprep.mubr.f32.mxu0 0.0
        %3480 = vmatmul.mubr.f32.gmra.mrb[0].mxu0 %v3317
        %v3481 = vpop.f32.mrb[0].mxu0
        %v3482 = vadd.f32 0.0, %v3481
        %v3483 = vpop.f32.mrb[0].mxu0
        %3484 = vmatprep.mubr.f32.mxu0 0.0
        %3485 = vmatmul.mubr.f32.gmra.mrb[0].mxu0 %v3320
        %v3486 = vpop.f32.mrb[0].mxu0
        %v3487 = vadd.f32 0.0, %v3486
        %v3488 = vpop.f32.mrb[0].mxu0
        %3489 = vmatprep.mubr.f32.mxu0 0.0
        %3490 = vmatmul.mubr.f32.gmra.mrb[0].mxu0 %v3323
        %v3491 = vpop.f32.mrb[0].mxu0
        %v3492 = vadd.f32 0.0, %v3491
        %v3493 = vpop.f32.mrb[0].mxu0
        %3494 = vmatprep.mubr.f32.mxu0 0.0
        %3495 = vmatmul.mubr.f32.gmra.mrb[0].mxu0 %v3326
        %v3496 = vpop.f32.mrb[0].mxu0
        %v3497 = vadd.f32 0.0, %v3496
        %v3498 = vpop.f32.mrb[0].mxu0
        %3499 = vmatprep.mubr.f32.mxu0 0.0
        %3500 = vmatmul.mubr.f32.gmra.mrb[0].mxu0 %v3329
        %v3501 = vpop.f32.mrb[0].mxu0
        %v3502 = vadd.f32 0.0, %v3501
        %v3503 = vpop.f32.mrb[0].mxu0
        %3504 = vmatprep.mubr.f32.mxu0 0.0
        %3505 = vmatmul.mubr.f32.gmra.mrb[0].mxu0 %v3332
        %v3506 = vpop.f32.mrb[0].mxu0
        %v3507 = vadd.f32 0.0, %v3506
        %v3508 = vpop.f32.mrb[0].mxu0
        %3509 = vmatprep.mubr.f32.mxu0 0.0
        %3510 = vmatmul.mubr.f32.gmra.mrb[0].mxu0 %v3335
        %v3511 = vpop.f32.mrb[0].mxu0
        %v3512 = vadd.f32 0.0, %v3511
        %v3513 = vpop.f32.mrb[0].mxu0
        %3514 = vmatprep.mubr.f32.mxu0 0.0
        %3515 = vmatmul.mubr.f32.gmra.mrb[0].mxu0 %v3338
        %v3516 = vpop.f32.mrb[0].mxu0
        %v3517 = vadd.f32 0.0, %v3516
        %v3518 = vpop.f32.mrb[0].mxu0
        %3519 = vmatprep.mubr.f32.mxu0 0.0
        %3520 = vmatmul.mubr.f32.gmra.mrb[0].mxu0 %v3341
        %v3521 = vpop.f32.mrb[0].mxu0
        %v3522 = vadd.f32 0.0, %v3521
        %v3523 = vpop.f32.mrb[0].mxu0
        %3524 = vmatprep.mubr.f32.mxu0 0.0
        %3525 = vmatmul.mubr.f32.gmra.mrb[0].mxu0 %v3344
        %v3526 = vpop.f32.mrb[0].mxu0
        %v3527 = vadd.f32 0.0, %v3526
        %v3528 = vpop.f32.mrb[0].mxu0
        %3529 = vmatprep.mubr.f32.mxu0 0.0
        %3530 = vmatmul.mubr.f32.gmra.mrb[0].mxu0 %v3347
        %v3531 = vpop.f32.mrb[0].mxu0
        %v3532 = vadd.f32 0.0, %v3531
        %v3533 = vpop.f32.mrb[0].mxu0
        %3534 = vmatprep.mubr.f32.mxu0 0.0
        %3535 = vmatmul.mubr.f32.gmra.mrb[0].mxu0 %v3350
        %v3536 = vpop.f32.mrb[0].mxu0
        %v3537 = vadd.f32 0.0, %v3536
        %v3538 = vpop.f32.mrb[0].mxu0
        %3539 = vmatprep.mubr.f32.mxu0 0.0
        %3540 = vmatmul.mubr.f32.gmra.mrb[0].mxu0 %v3353
        %v3541 = vpop.f32.mrb[0].mxu0
        %v3542 = vadd.f32 0.0, %v3541
        %v3543 = vpop.f32.mrb[0].mxu0
        %3544 = vmatprep.mubr.f32.mxu0 0.0
        %3545 = vmatmul.mubr.f32.gmra.mrb[0].mxu0 %v3356
        %v3546 = vpop.f32.mrb[0].mxu0
        %v3547 = vadd.f32 0.0, %v3546
        %v3548 = vpop.f32.mrb[0].mxu0
        %3549 = vmatprep.mubr.f32.mxu0 0.0
        %3550 = vmatmul.mubr.f32.gmra.mrb[0].mxu0 %v3359
        %v3551 = vpop.f32.mrb[0].mxu0
        %v3552 = vadd.f32 0.0, %v3551
        %v3553 = vpop.f32.mrb[0].mxu0
        %3554 = vmatprep.mubr.f32.mxu0 0.0
        %3555 = vmatmul.mubr.f32.gmra.mrb[0].mxu0 %v3362
        %v3556 = vpop.f32.mrb[0].mxu0
        %v3557 = vadd.f32 0.0, %v3556
        %v3558 = vpop.f32.mrb[0].mxu0
        %3559 = vmatprep.mubr.f32.mxu0 0.0
        %3560 = vmatmul.mubr.f32.gmra.mrb[0].mxu0 %v3365
        %v3561 = vpop.f32.mrb[0].mxu0
        %v3562 = vadd.f32 0.0, %v3561
        %v3563 = vpop.f32.mrb[0].mxu0
        %3564 = vmatprep.mubr.f32.mxu0 0.0
        %3565 = vmatmul.mubr.f32.gmra.mrb[0].mxu0 %v3368
        %v3566 = vpop.f32.mrb[0].mxu0
        %v3567 = vadd.f32 0.0, %v3566
        %v3568 = vpop.f32.mrb[0].mxu0
        %3569 = vmatprep.mubr.f32.mxu0 0.0
        %3570 = vmatmul.mubr.f32.gmra.mrb[0].mxu0 %v3371
        %v3571 = vpop.f32.mrb[0].mxu0
        %v3572 = vadd.f32 0.0, %v3571
        %v3573 = vpop.f32.mrb[0].mxu0
        %3574 = vmatprep.mubr.f32.mxu0 0.0
        %3575 = vmatmul.mubr.f32.gmra.mrb[0].mxu0 %v3374
        %v3576 = vpop.f32.mrb[0].mxu0
        %v3577 = vadd.f32 0.0, %v3576
        %v3578 = vpop.f32.mrb[0].mxu0
        %3579 = vmatprep.mubr.f32.mxu0 0.0
        %3580 = vmatmul.mubr.f32.gmra.mrb[0].mxu0 %v3377
        %v3581 = vpop.f32.mrb[0].mxu0
        %v3582 = vadd.f32 0.0, %v3581
        %v3583 = vpop.f32.mrb[0].mxu0
        %3584 = vmatprep.mubr.f32.mxu0 0.0
        %3585 = vmatmul.mubr.f32.gmra.mrb[0].mxu0 %v3380
        %v3586 = vpop.f32.mrb[0].mxu0
        %v3587 = vadd.f32 0.0, %v3586
        %v3588 = vpop.f32.mrb[0].mxu0
        %3589 = vmatprep.mubr.f32.mxu0 0.0
        %3590 = vmatmul.mubr.f32.gmra.mrb[0].mxu0 %v3383
        %v3591 = vpop.f32.mrb[0].mxu0
        %v3592 = vadd.f32 0.0, %v3591
        %v3593 = vpop.f32.mrb[0].mxu0
        %3594 = vmatprep.mubr.f32.mxu0 0.0
        %3595 = vmatmul.mubr.f32.gmra.mrb[0].mxu0 %v3386
        %v3596 = vpop.f32.mrb[0].mxu0
        %v3597 = vadd.f32 0.0, %v3596
        %v3598 = vpop.f32.mrb[0].mxu0
        %3599 = vmatprep.mubr.f32.mxu0 0.0
        %3600 = vmatmul.mubr.f32.gmra.mrb[0].mxu0 %v3389
        %v3601 = vpop.f32.mrb[0].mxu0
        %v3602 = vadd.f32 0.0, %v3601
        %v3603 = vpop.f32.mrb[0].mxu0
        %3604 = vmatprep.mubr.f32.mxu0 0.0
        %3605 = vmatmul.mubr.f32.gmra.mrb[0].mxu0 %v3392
        %v3606 = vpop.f32.mrb[0].mxu0
        %v3607 = vadd.f32 0.0, %v3606
        %v3608 = vpop.f32.mrb[0].mxu0
        %3609 = vmatprep.mubr.f32.mxu0 0.0
        %3610 = vmatmul.mubr.f32.gmra.mrb[0].mxu0 %v3395
        %v3611 = vpop.f32.mrb[0].mxu0
        %v3612 = vadd.f32 0.0, %v3611
        %v3613 = vpop.f32.mrb[0].mxu0
        %3614 = vmatprep.mubr.f32.mxu0 0.0
        %3615 = vmatmul.mubr.f32.gmra.mrb[0].mxu0 %v3398
        %v3616 = vpop.f32.mrb[0].mxu0
        %v3617 = vadd.f32 0.0, %v3616
        %v3618 = vpop.f32.mrb[0].mxu0
        %3619 = vmatprep.mubr.f32.mxu0 0.0
        %3620 = vmatmul.mubr.f32.gmra.mrb[0].mxu0 %v3401
        %v3621 = vpop.f32.mrb[0].mxu0
        %v3622 = vadd.f32 0.0, %v3621
        %v3623 = vpop.f32.mrb[0].mxu0
        %3624 = vmatprep.mubr.f32.mxu0 0.0
        %3625 = vmatmul.mubr.f32.gmra.mrb[0].mxu0 %v3404
        %v3626 = vpop.f32.mrb[0].mxu0
        %v3627 = vadd.f32 0.0, %v3626
        %v3628 = vpop.f32.mrb[0].mxu0
        %3629 = vmatprep.mubr.f32.mxu0 0.0
        %3630 = vmatmul.mubr.f32.gmra.mrb[0].mxu0 %v3407
        %v3631 = vpop.f32.mrb[0].mxu0
        %v3632 = vadd.f32 0.0, %v3631
        %v3633 = vpop.f32.mrb[0].mxu0
        %3634 = vmatprep.mubr.f32.mxu0 0.0
        %3635 = vmatmul.mubr.f32.gmra.mrb[0].mxu0 %v3410
        %v3636 = vpop.f32.mrb[0].mxu0
        %v3637 = vadd.f32 0.0, %v3636
        %v3638 = vpop.f32.mrb[0].mxu0
        %3639 = vdwg.mxu0
        %v3640 = vadd.f32 %v3250, %v3482
        %v3641 = vadd.f32 %v3251, %v3487
        %v3642 = vadd.f32 %v3252, %v3492
        %v3643 = vadd.f32 %v3253, %v3497
        %v3644 = vadd.f32 %v3254, %v3502
        %v3645 = vadd.f32 %v3255, %v3507
        %v3646 = vadd.f32 %v3256, %v3512
        %v3647 = vadd.f32 %v3257, %v3517
        %v3648 = vadd.f32 %v3258, %v3522
        %v3649 = vadd.f32 %v3259, %v3527
        %v3650 = vadd.f32 %v3260, %v3532
        %v3651 = vadd.f32 %v3261, %v3537
        %v3652 = vadd.f32 %v3262, %v3542
        %v3653 = vadd.f32 %v3263, %v3547
        %v3654 = vadd.f32 %v3264, %v3552
        %v3655 = vadd.f32 %v3265, %v3557
        %v3656 = vadd.f32 %v3266, %v3562
        %v3657 = vadd.f32 %v3267, %v3567
        %v3658 = vadd.f32 %v3268, %v3572
        %v3659 = vadd.f32 %v3269, %v3577
        %v3660 = vadd.f32 %v3270, %v3582
        %v3661 = vadd.f32 %v3271, %v3587
        %v3662 = vadd.f32 %v3272, %v3592
        %v3663 = vadd.f32 %v3273, %v3597
        %v3664 = vadd.f32 %v3274, %v3602
        %v3665 = vadd.f32 %v3275, %v3607
        %v3666 = vadd.f32 %v3276, %v3612
        %v3667 = vadd.f32 %v3277, %v3617
        %v3668 = vadd.f32 %v3278, %v3622
        %v3669 = vadd.f32 %v3279, %v3627
        %v3670 = vadd.f32 %v3280, %v3632
        %v3671 = vadd.f32 %v3281, %v3637
        %v3672 = vld [vmem:[%s2] sm:$0x1]
        %v3674 = vlaneseq
        %v3675 = vshrl.u32 %v3674, 7
        %v3676 = vsub.s32 0, %v3675
        %v3677 = vrot.slane %v3672, %v3676
        %v3679 = vadd.f32 %v3640, %v3677
        %v3680 = vadd.f32 %v3641, %v3677
        %v3681 = vadd.f32 %v3642, %v3677
        %v3682 = vadd.f32 %v3643, %v3677
        %v3683 = vadd.f32 %v3644, %v3677
        %v3684 = vadd.f32 %v3645, %v3677
        %v3685 = vadd.f32 %v3646, %v3677
        %v3686 = vadd.f32 %v3647, %v3677
        %v3687 = vadd.f32 %v3648, %v3677
        %v3688 = vadd.f32 %v3649, %v3677
        %v3689 = vadd.f32 %v3650, %v3677
        %v3690 = vadd.f32 %v3651, %v3677
        %v3691 = vadd.f32 %v3652, %v3677
        %v3692 = vadd.f32 %v3653, %v3677
        %v3693 = vadd.f32 %v3654, %v3677
        %v3694 = vadd.f32 %v3655, %v3677
        %v3695 = vadd.f32 %v3656, %v3677
        %v3696 = vadd.f32 %v3657, %v3677
        %v3697 = vadd.f32 %v3658, %v3677
        %v3698 = vadd.f32 %v3659, %v3677
        %v3699 = vadd.f32 %v3660, %v3677
        %v3700 = vadd.f32 %v3661, %v3677
        %v3701 = vadd.f32 %v3662, %v3677
        %v3702 = vadd.f32 %v3663, %v3677
        %v3703 = vadd.f32 %v3664, %v3677
        %v3704 = vadd.f32 %v3665, %v3677
        %v3705 = vadd.f32 %v3666, %v3677
        %v3706 = vadd.f32 %v3667, %v3677
        %v3707 = vadd.f32 %v3668, %v3677
        %v3708 = vadd.f32 %v3669, %v3677
        %v3709 = vadd.f32 %v3670, %v3677
        %v3710 = vadd.f32 %v3671, %v3677
        %vm3711 = vcmp.ge.f32.partialorder %v3679, 0.0
        %vm3712 = vcmp.ge.f32.partialorder %v3680, 0.0
        %vm3713 = vcmp.ge.f32.partialorder %v3681, 0.0
        %vm3714 = vcmp.ge.f32.partialorder %v3682, 0.0
        %vm3715 = vcmp.ge.f32.partialorder %v3683, 0.0
        %vm3716 = vcmp.ge.f32.partialorder %v3684, 0.0
        %vm3717 = vcmp.ge.f32.partialorder %v3685, 0.0
        %vm3718 = vcmp.ge.f32.partialorder %v3686, 0.0
        %vm3719 = vcmp.ge.f32.partialorder %v3687, 0.0
        %vm3720 = vcmp.ge.f32.partialorder %v3688, 0.0
        %vm3721 = vcmp.ge.f32.partialorder %v3689, 0.0
        %vm3722 = vcmp.ge.f32.partialorder %v3690, 0.0
        %vm3723 = vcmp.ge.f32.partialorder %v3691, 0.0
        %vm3724 = vcmp.ge.f32.partialorder %v3692, 0.0
        %vm3725 = vcmp.ge.f32.partialorder %v3693, 0.0
        %vm3726 = vcmp.ge.f32.partialorder %v3694, 0.0
        %vm3727 = vcmp.ge.f32.partialorder %v3695, 0.0
        %vm3728 = vcmp.ge.f32.partialorder %v3696, 0.0
        %vm3729 = vcmp.ge.f32.partialorder %v3697, 0.0
        %vm3730 = vcmp.ge.f32.partialorder %v3698, 0.0
        %vm3731 = vcmp.ge.f32.partialorder %v3699, 0.0
        %vm3732 = vcmp.ge.f32.partialorder %v3700, 0.0
        %vm3733 = vcmp.ge.f32.partialorder %v3701, 0.0
        %vm3734 = vcmp.ge.f32.partialorder %v3702, 0.0
        %vm3735 = vcmp.ge.f32.partialorder %v3703, 0.0
        %vm3736 = vcmp.ge.f32.partialorder %v3704, 0.0
        %vm3737 = vcmp.ge.f32.partialorder %v3705, 0.0
        %vm3738 = vcmp.ge.f32.partialorder %v3706, 0.0
        %vm3739 = vcmp.ge.f32.partialorder %v3707, 0.0
        %vm3740 = vcmp.ge.f32.partialorder %v3708, 0.0
        %vm3741 = vcmp.ge.f32.partialorder %v3709, 0.0
        %vm3742 = vcmp.ge.f32.partialorder %v3710, 0.0
        %v3743 = vmul.f32 %v3679, 0.01
        %v3744 = vmul.f32 %v3680, 0.01
        %v3745 = vmul.f32 %v3681, 0.01
        %v3746 = vmul.f32 %v3682, 0.01
        %v3747 = vmul.f32 %v3683, 0.01
        %v3748 = vmul.f32 %v3684, 0.01
        %v3749 = vmul.f32 %v3685, 0.01
        %v3750 = vmul.f32 %v3686, 0.01
        %v3751 = vmul.f32 %v3687, 0.01
        %v3752 = vmul.f32 %v3688, 0.01
        %v3753 = vmul.f32 %v3689, 0.01
        %v3754 = vmul.f32 %v3690, 0.01
        %v3755 = vmul.f32 %v3691, 0.01
        %v3756 = vmul.f32 %v3692, 0.01
        %v3757 = vmul.f32 %v3693, 0.01
        %v3758 = vmul.f32 %v3694, 0.01
        %v3759 = vmul.f32 %v3695, 0.01
        %v3760 = vmul.f32 %v3696, 0.01
        %v3761 = vmul.f32 %v3697, 0.01
        %v3762 = vmul.f32 %v3698, 0.01
        %v3763 = vmul.f32 %v3699, 0.01
        %v3764 = vmul.f32 %v3700, 0.01
        %v3765 = vmul.f32 %v3701, 0.01
        %v3766 = vmul.f32 %v3702, 0.01
        %v3767 = vmul.f32 %v3703, 0.01
        %v3768 = vmul.f32 %v3704, 0.01
        %v3769 = vmul.f32 %v3705, 0.01
        %v3770 = vmul.f32 %v3706, 0.01
        %v3771 = vmul.f32 %v3707, 0.01
        %v3772 = vmul.f32 %v3708, 0.01
        %v3773 = vmul.f32 %v3709, 0.01
        %v3774 = vmul.f32 %v3710, 0.01
        %v3775 = vsel %vm3711, %v3679, %v3743
        %v3776 = vsel %vm3712, %v3680, %v3744
        %v3777 = vsel %vm3713, %v3681, %v3745
        %v3778 = vsel %vm3714, %v3682, %v3746
        %v3779 = vsel %vm3715, %v3683, %v3747
        %v3780 = vsel %vm3716, %v3684, %v3748
        %v3781 = vsel %vm3717, %v3685, %v3749
        %v3782 = vsel %vm3718, %v3686, %v3750
        %v3783 = vsel %vm3719, %v3687, %v3751
        %v3784 = vsel %vm3720, %v3688, %v3752
        %v3785 = vsel %vm3721, %v3689, %v3753
        %v3786 = vsel %vm3722, %v3690, %v3754
        %v3787 = vsel %vm3723, %v3691, %v3755
        %v3788 = vsel %vm3724, %v3692, %v3756
        %v3789 = vsel %vm3725, %v3693, %v3757
        %v3790 = vsel %vm3726, %v3694, %v3758
        %v3791 = vsel %vm3727, %v3695, %v3759
        %v3792 = vsel %vm3728, %v3696, %v3760
        %v3793 = vsel %vm3729, %v3697, %v3761
        %v3794 = vsel %vm3730, %v3698, %v3762
        %v3795 = vsel %vm3731, %v3699, %v3763
        %v3796 = vsel %vm3732, %v3700, %v3764
        %v3797 = vsel %vm3733, %v3701, %v3765
        %v3798 = vsel %vm3734, %v3702, %v3766
        %v3799 = vsel %vm3735, %v3703, %v3767
        %v3800 = vsel %vm3736, %v3704, %v3768
        %v3801 = vsel %vm3737, %v3705, %v3769
        %v3802 = vsel %vm3738, %v3706, %v3770
        %v3803 = vsel %vm3739, %v3707, %v3771
        %v3804 = vsel %vm3740, %v3708, %v3772
        %v3805 = vsel %vm3741, %v3709, %v3773
        %v3806 = vsel %vm3742, %v3710, %v3774
        %vm3807 = vcmask 64512
        %3808 = vst.msk [vmem:[#allocation2] sm:$0xff] %vm3807, 0.0
        %3809 = vst.msk [vmem:[#allocation2 + $0x8] sm:$0xff] %vm3807, 0.0
        %vm3810 = vcmask 58368
        %3811 = vst.msk [vmem:[#allocation2 + $0x10] sm:$0x3] %vm3810, 0.0
        %s3812 = scalar_lea.vmem [#allocation2], 408
        %3813 = vst.msk [vmem:[%s3812] sm:$0xff] %vm3807, 0.0
        %3814 = vst.msk [vmem:[%s3812 + $0x8] sm:$0xff] %vm3807, 0.0
        %3815 = vst.msk [vmem:[%s3812 + $0x10] sm:$0x3] %vm3810, 0.0
        %vm3816 = vcmask 57344
        %3817 = vst.msk [vmem:[#allocation2] sm:$0x1] %vm3816, 0.0
        %3818 = vst.msk [vmem:[#allocation2 + $0x18] sm:$0x1] %vm3816, 0.0
        %3819 = vst.msk [vmem:[#allocation2 + $0x30] sm:$0x1] %vm3816, 0.0
        %3820 = vst.msk [vmem:[#allocation2 + $0x48] sm:$0x1] %vm3816, 0.0
        %3821 = vst.msk [vmem:[#allocation2 + $0x60] sm:$0x1] %vm3816, 0.0
        %3822 = vst.msk [vmem:[#allocation2 + $0x78] sm:$0x1] %vm3816, 0.0
        %3823 = vst.msk [vmem:[#allocation2 + $0x90] sm:$0x1] %vm3816, 0.0
        %3824 = vst.msk [vmem:[#allocation2 + $0xa8] sm:$0x1] %vm3816, 0.0
        %3825 = vst.msk [vmem:[#allocation2 + $0xc0] sm:$0x1] %vm3816, 0.0
        %3826 = vst.msk [vmem:[#allocation2 + $0xd8] sm:$0x1] %vm3816, 0.0
        %3827 = vst.msk [vmem:[#allocation2 + $0xf0] sm:$0x1] %vm3816, 0.0
        %3828 = vst.msk [vmem:[#allocation2 + $0x108] sm:$0x1] %vm3816, 0.0
        %3829 = vst.msk [vmem:[#allocation2 + $0x120] sm:$0x1] %vm3816, 0.0
        %3830 = vst.msk [vmem:[#allocation2 + $0x138] sm:$0x1] %vm3816, 0.0
        %3831 = vst.msk [vmem:[#allocation2 + $0x150] sm:$0x1] %vm3816, 0.0
        %3832 = vst.msk [vmem:[#allocation2 + $0x168] sm:$0x1] %vm3816, 0.0
        %3833 = vst.msk [vmem:[#allocation2 + $0x180] sm:$0x1] %vm3816, 0.0
        %3834 = vst.msk [vmem:[#allocation2 + $0x198] sm:$0x1] %vm3816, 0.0
        %3835 = vst.msk [vmem:[#allocation2 + $0x11] sm:$0x1] %vm3816, 0.0
        %3836 = vst.msk [vmem:[#allocation2 + $0x29] sm:$0x1] %vm3816, 0.0
        %3837 = vst.msk [vmem:[#allocation2 + $0x41] sm:$0x1] %vm3816, 0.0
        %3838 = vst.msk [vmem:[#allocation2 + $0x59] sm:$0x1] %vm3816, 0.0
        %3839 = vst.msk [vmem:[#allocation2 + $0x71] sm:$0x1] %vm3816, 0.0
        %3840 = vst.msk [vmem:[#allocation2 + $0x89] sm:$0x1] %vm3816, 0.0
        %3841 = vst.msk [vmem:[#allocation2 + $0xa1] sm:$0x1] %vm3816, 0.0
        %3842 = vst.msk [vmem:[#allocation2 + $0xb9] sm:$0x1] %vm3816, 0.0
        %3843 = vst.msk [vmem:[#allocation2 + $0xd1] sm:$0x1] %vm3816, 0.0
        %3844 = vst.msk [vmem:[#allocation2 + $0xe9] sm:$0x1] %vm3816, 0.0
        %3845 = vst.msk [vmem:[#allocation2 + $0x101] sm:$0x1] %vm3816, 0.0
        %3846 = vst.msk [vmem:[#allocation2 + $0x119] sm:$0x1] %vm3816, 0.0
        %3847 = vst.msk [vmem:[#allocation2 + $0x131] sm:$0x1] %vm3816, 0.0
        %3848 = vst.msk [vmem:[#allocation2 + $0x149] sm:$0x1] %vm3816, 0.0
        %3849 = vst.msk [vmem:[#allocation2 + $0x161] sm:$0x1] %vm3816, 0.0
        %3850 = vst.msk [vmem:[#allocation2 + $0x179] sm:$0x1] %vm3816, 0.0
        %3851 = vst.msk [vmem:[#allocation2 + $0x191] sm:$0x1] %vm3816, 0.0
        %3852 = vst.msk [vmem:[#allocation2 + $0x1a9] sm:$0x1] %vm3816, 0.0
        %s3853 = scalar_lea.vmem [#allocation2], 24
        %3854 = vst.msk [vmem:[%s3853 + $0x1] sm:$0xff] %vm3807, %v3775
        %3855 = vst.msk [vmem:[%s3853 + $0x9] sm:$0xff] %vm3807, %v3776
        %3856 = vst.msk [vmem:[%s3853 + $0x19] sm:$0xff] %vm3807, %v3777
        %3857 = vst.msk [vmem:[%s3853 + $0x21] sm:$0xff] %vm3807, %v3778
        %3858 = vst.msk [vmem:[%s3853 + $0x31] sm:$0xff] %vm3807, %v3779
        %3859 = vst.msk [vmem:[%s3853 + $0x39] sm:$0xff] %vm3807, %v3780
        %3860 = vst.msk [vmem:[%s3853 + $0x49] sm:$0xff] %vm3807, %v3781
        %3861 = vst.msk [vmem:[%s3853 + $0x51] sm:$0xff] %vm3807, %v3782
        %3862 = vst.msk [vmem:[%s3853 + $0x61] sm:$0xff] %vm3807, %v3783
        %3863 = vst.msk [vmem:[%s3853 + $0x69] sm:$0xff] %vm3807, %v3784
        %3864 = vst.msk [vmem:[%s3853 + $0x79] sm:$0xff] %vm3807, %v3785
        %3865 = vst.msk [vmem:[%s3853 + $0x81] sm:$0xff] %vm3807, %v3786
        %3866 = vst.msk [vmem:[%s3853 + $0x91] sm:$0xff] %vm3807, %v3787
        %3867 = vst.msk [vmem:[%s3853 + $0x99] sm:$0xff] %vm3807, %v3788
        %3868 = vst.msk [vmem:[%s3853 + $0xa9] sm:$0xff] %vm3807, %v3789
        %3869 = vst.msk [vmem:[%s3853 + $0xb1] sm:$0xff] %vm3807, %v3790
        %3870 = vst.msk [vmem:[%s3853 + $0xc1] sm:$0xff] %vm3807, %v3791
        %3871 = vst.msk [vmem:[%s3853 + $0xc9] sm:$0xff] %vm3807, %v3792
        %3872 = vst.msk [vmem:[%s3853 + $0xd9] sm:$0xff] %vm3807, %v3793
        %3873 = vst.msk [vmem:[%s3853 + $0xe1] sm:$0xff] %vm3807, %v3794
        %3874 = vst.msk [vmem:[%s3853 + $0xf1] sm:$0xff] %vm3807, %v3795
        %3875 = vst.msk [vmem:[%s3853 + $0xf9] sm:$0xff] %vm3807, %v3796
        %3876 = vst.msk [vmem:[%s3853 + $0x109] sm:$0xff] %vm3807, %v3797
        %3877 = vst.msk [vmem:[%s3853 + $0x111] sm:$0xff] %vm3807, %v3798
        %3878 = vst.msk [vmem:[%s3853 + $0x121] sm:$0xff] %vm3807, %v3799
        %3879 = vst.msk [vmem:[%s3853 + $0x129] sm:$0xff] %vm3807, %v3800
        %3880 = vst.msk [vmem:[%s3853 + $0x139] sm:$0xff] %vm3807, %v3801
        %3881 = vst.msk [vmem:[%s3853 + $0x141] sm:$0xff] %vm3807, %v3802
        %3882 = vst.msk [vmem:[%s3853 + $0x151] sm:$0xff] %vm3807, %v3803
        %3883 = vst.msk [vmem:[%s3853 + $0x159] sm:$0xff] %vm3807, %v3804
        %3884 = vst.msk [vmem:[%s3853 + $0x169] sm:$0xff] %vm3807, %v3805
        %3885 = vst.msk [vmem:[%s3853 + $0x171] sm:$0xff] %vm3807, %v3806
        %v3886 = vld [vmem:[#allocation2] sm:$0xff]
        %v3887 = vld [vmem:[#allocation2 + $0x8] sm:$0xff]
        %v3888 = vld [vmem:[#allocation2 + $0x18] sm:$0xff]
        %v3889 = vld [vmem:[#allocation2 + $0x20] sm:$0xff]
        %v3890 = vld [vmem:[#allocation2 + $0x30] sm:$0xff]
        %v3891 = vld [vmem:[#allocation2 + $0x38] sm:$0xff]
        %v3892 = vld [vmem:[#allocation2 + $0x48] sm:$0xff]
        %v3893 = vld [vmem:[#allocation2 + $0x50] sm:$0xff]
        %v3894 = vld [vmem:[#allocation2 + $0x60] sm:$0xff]
        %v3895 = vld [vmem:[#allocation2 + $0x68] sm:$0xff]
        %v3896 = vld [vmem:[#allocation2 + $0x78] sm:$0xff]
        %v3897 = vld [vmem:[#allocation2 + $0x80] sm:$0xff]
        %v3898 = vld [vmem:[#allocation2 + $0x90] sm:$0xff]
        %v3899 = vld [vmem:[#allocation2 + $0x98] sm:$0xff]
        %v3900 = vld [vmem:[#allocation2 + $0xa8] sm:$0xff]
        %v3901 = vld [vmem:[#allocation2 + $0xb0] sm:$0xff]
        %v3902 = vld [vmem:[#allocation2 + $0xc0] sm:$0xff]
        %v3903 = vld [vmem:[#allocation2 + $0xc8] sm:$0xff]
        %v3904 = vld [vmem:[#allocation2 + $0xd8] sm:$0xff]
        %v3905 = vld [vmem:[#allocation2 + $0xe0] sm:$0xff]
        %v3906 = vld [vmem:[#allocation2 + $0xf0] sm:$0xff]
        %v3907 = vld [vmem:[#allocation2 + $0xf8] sm:$0xff]
        %v3908 = vld [vmem:[#allocation2 + $0x108] sm:$0xff]
        %v3909 = vld [vmem:[#allocation2 + $0x110] sm:$0xff]
        %v3910 = vld [vmem:[#allocation2 + $0x120] sm:$0xff]
        %v3911 = vld [vmem:[#allocation2 + $0x128] sm:$0xff]
        %v3912 = vld [vmem:[#allocation2 + $0x138] sm:$0xff]
        %v3913 = vld [vmem:[#allocation2 + $0x140] sm:$0xff]
        %v3914 = vld [vmem:[#allocation2 + $0x150] sm:$0xff]
        %v3915 = vld [vmem:[#allocation2 + $0x158] sm:$0xff]
        %v3916 = vld [vmem:[#allocation2 + $0x168] sm:$0xff]
        %v3917 = vld [vmem:[#allocation2 + $0x170] sm:$0xff]
        %v3918 = vld [vmem:[%s3] sm:$0xff]
        %v3919 = vld [vmem:[#allocation2 + $0x1] sm:$0xff]
        %v3920 = vld [vmem:[#allocation2 + $0x9] sm:$0xff]
        %v3921 = vld [vmem:[#allocation2 + $0x19] sm:$0xff]
        %v3922 = vld [vmem:[#allocation2 + $0x21] sm:$0xff]
        %v3923 = vld [vmem:[#allocation2 + $0x31] sm:$0xff]
        %v3924 = vld [vmem:[#allocation2 + $0x39] sm:$0xff]
        %v3925 = vld [vmem:[#allocation2 + $0x49] sm:$0xff]
        %v3926 = vld [vmem:[#allocation2 + $0x51] sm:$0xff]
        %v3927 = vld [vmem:[#allocation2 + $0x61] sm:$0xff]
        %v3928 = vld [vmem:[#allocation2 + $0x69] sm:$0xff]
        %v3929 = vld [vmem:[#allocation2 + $0x79] sm:$0xff]
        %v3930 = vld [vmem:[#allocation2 + $0x81] sm:$0xff]
        %v3931 = vld [vmem:[#allocation2 + $0x91] sm:$0xff]
        %v3932 = vld [vmem:[#allocation2 + $0x99] sm:$0xff]
        %v3933 = vld [vmem:[#allocation2 + $0xa9] sm:$0xff]
        %v3934 = vld [vmem:[#allocation2 + $0xb1] sm:$0xff]
        %v3935 = vld [vmem:[#allocation2 + $0xc1] sm:$0xff]
        %v3936 = vld [vmem:[#allocation2 + $0xc9] sm:$0xff]
        %v3937 = vld [vmem:[#allocation2 + $0xd9] sm:$0xff]
        %v3938 = vld [vmem:[#allocation2 + $0xe1] sm:$0xff]
        %v3939 = vld [vmem:[#allocation2 + $0xf1] sm:$0xff]
        %v3940 = vld [vmem:[#allocation2 + $0xf9] sm:$0xff]
        %v3941 = vld [vmem:[#allocation2 + $0x109] sm:$0xff]
        %v3942 = vld [vmem:[#allocation2 + $0x111] sm:$0xff]
        %v3943 = vld [vmem:[#allocation2 + $0x121] sm:$0xff]
        %v3944 = vld [vmem:[#allocation2 + $0x129] sm:$0xff]
        %v3945 = vld [vmem:[#allocation2 + $0x139] sm:$0xff]
        %v3946 = vld [vmem:[#allocation2 + $0x141] sm:$0xff]
        %v3947 = vld [vmem:[#allocation2 + $0x151] sm:$0xff]
        %v3948 = vld [vmem:[#allocation2 + $0x159] sm:$0xff]
        %v3949 = vld [vmem:[#allocation2 + $0x169] sm:$0xff]
        %v3950 = vld [vmem:[#allocation2 + $0x171] sm:$0xff]
        %s3951 = scalar_lea.vmem %s3, 8
        %v3952 = vld [vmem:[%s3951] sm:$0xff]
        %v3954 = vsel %vm3807, %v3919, 0
        %v3957 = vsel %vm3807, %v3920, 0
        %v3960 = vsel %vm3807, %v3921, 0
        %v3963 = vsel %vm3807, %v3922, 0
        %v3966 = vsel %vm3807, %v3923, 0
        %v3969 = vsel %vm3807, %v3924, 0
        %v3972 = vsel %vm3807, %v3925, 0
        %v3975 = vsel %vm3807, %v3926, 0
        %v3978 = vsel %vm3807, %v3927, 0
        %v3981 = vsel %vm3807, %v3928, 0
        %v3984 = vsel %vm3807, %v3929, 0
        %v3987 = vsel %vm3807, %v3930, 0
        %v3990 = vsel %vm3807, %v3931, 0
        %v3993 = vsel %vm3807, %v3932, 0
        %v3996 = vsel %vm3807, %v3933, 0
        %v3999 = vsel %vm3807, %v3934, 0
        %v4002 = vsel %vm3807, %v3935, 0
        %v4005 = vsel %vm3807, %v3936, 0
        %v4008 = vsel %vm3807, %v3937, 0
        %v4011 = vsel %vm3807, %v3938, 0
        %v4014 = vsel %vm3807, %v3939, 0
        %v4017 = vsel %vm3807, %v3940, 0
        %v4020 = vsel %vm3807, %v3941, 0
        %v4023 = vsel %vm3807, %v3942, 0
        %v4026 = vsel %vm3807, %v3943, 0
        %v4029 = vsel %vm3807, %v3944, 0
        %v4032 = vsel %vm3807, %v3945, 0
        %v4035 = vsel %vm3807, %v3946, 0
        %v4038 = vsel %vm3807, %v3947, 0
        %v4041 = vsel %vm3807, %v3948, 0
        %v4044 = vsel %vm3807, %v3949, 0
        %v4047 = vsel %vm3807, %v3950, 0
        %4049 = vmatprep.subr.mxu0 0.0
        %4050 = vmatpush1.msra.mxu0 %v3952
        %4051 = vmatprep.subr.mxu0 0.0
        %4052 = vmatpush1.msra.mxu0 0.0
        %4053 = vmatprep.subr.mxu0 0.0
        %4054 = vmatpush1.msra.mxu0 0.0
        %4055 = vmatprep.subr.mxu0 0.0
        %4056 = vmatpush1.msra.mxu0 0.0
        %4057 = vmatprep.subr.mxu0 0.0
        %4058 = vmatpush1.msra.mxu0 0.0
        %4059 = vmatprep.subr.mxu0 0.0
        %4060 = vmatpush1.msra.mxu0 0.0
        %4061 = vmatprep.subr.mxu0 0.0
        %4062 = vmatpush1.msra.mxu0 0.0
        %4063 = vmatprep.subr.mxu0 0.0
        %4064 = vmatpush1.msra.mxu0 0.0
        %4065 = vmatprep.subr.mxu0 0.0
        %4066 = vmatpush1.msra.mxu0 0.0
        %4067 = vmatprep.subr.mxu0 0.0
        %4068 = vmatpush1.msra.mxu0 0.0
        %4069 = vmatprep.subr.mxu0 0.0
        %4070 = vmatpush1.msra.mxu0 0.0
        %4071 = vmatprep.subr.mxu0 0.0
        %4072 = vmatpush1.msra.mxu0 0.0
        %4073 = vmatprep.subr.mxu0 0.0
        %4074 = vmatpush1.msra.mxu0 0.0
        %4075 = vmatprep.subr.mxu0 0.0
        %4076 = vmatpush1.msra.mxu0 0.0
        %4077 = vmatprep.subr.mxu0 0.0
        %4078 = vmatpush1.msra.mxu0 0.0
        %4079 = vmatprep.subr.mxu0 0.0
        %4080 = vmatpush1.msra.mxu0 0.0
        %4081 = vmatprep.subr.mxu0 0.0
        %4082 = vmatpush1.msra.mxu0 0.0
        %4083 = vmatprep.subr.mxu0 0.0
        %4084 = vmatpush1.msra.mxu0 0.0
        %4085 = vmatprep.subr.mxu0 0.0
        %4086 = vmatpush1.msra.mxu0 0.0
        %4087 = vmatprep.subr.mxu0 0.0
        %4088 = vmatpush1.msra.mxu0 0.0
        %4089 = vmatprep.subr.mxu0 0.0
        %4090 = vmatpush1.msra.mxu0 0.0
        %4091 = vmatprep.subr.mxu0 0.0
        %4092 = vmatpush1.msra.mxu0 0.0
        %4093 = vmatprep.subr.mxu0 0.0
        %4094 = vmatpush1.msra.mxu0 0.0
        %4095 = vmatprep.subr.mxu0 0.0
        %4096 = vmatpush1.msra.mxu0 0.0
        %4097 = vmatprep.subr.mxu0 0.0
        %4098 = vmatpush1.msra.mxu0 0.0
        %4099 = vmatprep.subr.mxu0 0.0
        %4100 = vmatpush1.msra.mxu0 0.0
        %4101 = vmatprep.subr.mxu0 0.0
        %4102 = vmatpush1.msra.mxu0 0.0
        %4103 = vmatprep.subr.mxu0 0.0
        %4104 = vmatpush1.msra.mxu0 0.0
        %4105 = vmatprep.subr.mxu0 0.0
        %4106 = vmatpush1.msra.mxu0 0.0
        %4107 = vmatprep.subr.mxu0 0.0
        %4108 = vmatpush1.msra.mxu0 0.0
        %4109 = vmatprep.subr.mxu0 0.0
        %4110 = vmatpush1.msra.mxu0 0.0
        %4111 = vmatprep.subr.mxu0 0.0
        %4112 = vmatpush1.msra.mxu0 0.0
        %4113 = vmatprep.mubr.f32.mxu0 0.0
        %4114 = vmatmul.mubr.f32.gmra.mrb[0].mxu0 %v3954
        %v4115 = vpop.f32.mrb[0].mxu0
        %v4116 = vadd.f32 0.0, %v4115
        %v4117 = vpop.f32.mrb[0].mxu0
        %4118 = vmatprep.mubr.f32.mxu0 0.0
        %4119 = vmatmul.mubr.f32.gmra.mrb[0].mxu0 %v3957
        %v4120 = vpop.f32.mrb[0].mxu0
        %v4121 = vadd.f32 0.0, %v4120
        %v4122 = vpop.f32.mrb[0].mxu0
        %4123 = vmatprep.mubr.f32.mxu0 0.0
        %4124 = vmatmul.mubr.f32.gmra.mrb[0].mxu0 %v3960
        %v4125 = vpop.f32.mrb[0].mxu0
        %v4126 = vadd.f32 0.0, %v4125
        %v4127 = vpop.f32.mrb[0].mxu0
        %4128 = vmatprep.mubr.f32.mxu0 0.0
        %4129 = vmatmul.mubr.f32.gmra.mrb[0].mxu0 %v3963
        %v4130 = vpop.f32.mrb[0].mxu0
        %v4131 = vadd.f32 0.0, %v4130
        %v4132 = vpop.f32.mrb[0].mxu0
        %4133 = vmatprep.mubr.f32.mxu0 0.0
        %4134 = vmatmul.mubr.f32.gmra.mrb[0].mxu0 %v3966
        %v4135 = vpop.f32.mrb[0].mxu0
        %v4136 = vadd.f32 0.0, %v4135
        %v4137 = vpop.f32.mrb[0].mxu0
        %4138 = vmatprep.mubr.f32.mxu0 0.0
        %4139 = vmatmul.mubr.f32.gmra.mrb[0].mxu0 %v3969
        %v4140 = vpop.f32.mrb[0].mxu0
        %v4141 = vadd.f32 0.0, %v4140
        %v4142 = vpop.f32.mrb[0].mxu0
        %4143 = vmatprep.mubr.f32.mxu0 0.0
        %4144 = vmatmul.mubr.f32.gmra.mrb[0].mxu0 %v3972
        %v4145 = vpop.f32.mrb[0].mxu0
        %v4146 = vadd.f32 0.0, %v4145
        %v4147 = vpop.f32.mrb[0].mxu0
        %4148 = vmatprep.mubr.f32.mxu0 0.0
        %4149 = vmatmul.mubr.f32.gmra.mrb[0].mxu0 %v3975
        %v4150 = vpop.f32.mrb[0].mxu0
        %v4151 = vadd.f32 0.0, %v4150
        %v4152 = vpop.f32.mrb[0].mxu0
        %4153 = vmatprep.mubr.f32.mxu0 0.0
        %4154 = vmatmul.mubr.f32.gmra.mrb[0].mxu0 %v3978
        %v4155 = vpop.f32.mrb[0].mxu0
        %v4156 = vadd.f32 0.0, %v4155
        %v4157 = vpop.f32.mrb[0].mxu0
        %4158 = vmatprep.mubr.f32.mxu0 0.0
        %4159 = vmatmul.mubr.f32.gmra.mrb[0].mxu0 %v3981
        %v4160 = vpop.f32.mrb[0].mxu0
        %v4161 = vadd.f32 0.0, %v4160
        %v4162 = vpop.f32.mrb[0].mxu0
        %4163 = vmatprep.mubr.f32.mxu0 0.0
        %4164 = vmatmul.mubr.f32.gmra.mrb[0].mxu0 %v3984
        %v4165 = vpop.f32.mrb[0].mxu0
        %v4166 = vadd.f32 0.0, %v4165
        %v4167 = vpop.f32.mrb[0].mxu0
        %4168 = vmatprep.mubr.f32.mxu0 0.0
        %4169 = vmatmul.mubr.f32.gmra.mrb[0].mxu0 %v3987
        %v4170 = vpop.f32.mrb[0].mxu0
        %v4171 = vadd.f32 0.0, %v4170
        %v4172 = vpop.f32.mrb[0].mxu0
        %4173 = vmatprep.mubr.f32.mxu0 0.0
        %4174 = vmatmul.mubr.f32.gmra.mrb[0].mxu0 %v3990
        %v4175 = vpop.f32.mrb[0].mxu0
        %v4176 = vadd.f32 0.0, %v4175
        %v4177 = vpop.f32.mrb[0].mxu0
        %4178 = vmatprep.mubr.f32.mxu0 0.0
        %4179 = vmatmul.mubr.f32.gmra.mrb[0].mxu0 %v3993
        %v4180 = vpop.f32.mrb[0].mxu0
        %v4181 = vadd.f32 0.0, %v4180
        %v4182 = vpop.f32.mrb[0].mxu0
        %4183 = vmatprep.mubr.f32.mxu0 0.0
        %4184 = vmatmul.mubr.f32.gmra.mrb[0].mxu0 %v3996
        %v4185 = vpop.f32.mrb[0].mxu0
        %v4186 = vadd.f32 0.0, %v4185
        %v4187 = vpop.f32.mrb[0].mxu0
        %4188 = vmatprep.mubr.f32.mxu0 0.0
        %4189 = vmatmul.mubr.f32.gmra.mrb[0].mxu0 %v3999
        %v4190 = vpop.f32.mrb[0].mxu0
        %v4191 = vadd.f32 0.0, %v4190
        %v4192 = vpop.f32.mrb[0].mxu0
        %4193 = vmatprep.mubr.f32.mxu0 0.0
        %4194 = vmatmul.mubr.f32.gmra.mrb[0].mxu0 %v4002
        %v4195 = vpop.f32.mrb[0].mxu0
        %v4196 = vadd.f32 0.0, %v4195
        %v4197 = vpop.f32.mrb[0].mxu0
        %4198 = vmatprep.mubr.f32.mxu0 0.0
        %4199 = vmatmul.mubr.f32.gmra.mrb[0].mxu0 %v4005
        %v4200 = vpop.f32.mrb[0].mxu0
        %v4201 = vadd.f32 0.0, %v4200
        %v4202 = vpop.f32.mrb[0].mxu0
        %4203 = vmatprep.mubr.f32.mxu0 0.0
        %4204 = vmatmul.mubr.f32.gmra.mrb[0].mxu0 %v4008
        %v4205 = vpop.f32.mrb[0].mxu0
        %v4206 = vadd.f32 0.0, %v4205
        %v4207 = vpop.f32.mrb[0].mxu0
        %4208 = vmatprep.mubr.f32.mxu0 0.0
        %4209 = vmatmul.mubr.f32.gmra.mrb[0].mxu0 %v4011
        %v4210 = vpop.f32.mrb[0].mxu0
        %v4211 = vadd.f32 0.0, %v4210
        %v4212 = vpop.f32.mrb[0].mxu0
        %4213 = vmatprep.mubr.f32.mxu0 0.0
        %4214 = vmatmul.mubr.f32.gmra.mrb[0].mxu0 %v4014
        %v4215 = vpop.f32.mrb[0].mxu0
        %v4216 = vadd.f32 0.0, %v4215
        %v4217 = vpop.f32.mrb[0].mxu0
        %4218 = vmatprep.mubr.f32.mxu0 0.0
        %4219 = vmatmul.mubr.f32.gmra.mrb[0].mxu0 %v4017
        %v4220 = vpop.f32.mrb[0].mxu0
        %v4221 = vadd.f32 0.0, %v4220
        %v4222 = vpop.f32.mrb[0].mxu0
        %4223 = vmatprep.mubr.f32.mxu0 0.0
        %4224 = vmatmul.mubr.f32.gmra.mrb[0].mxu0 %v4020
        %v4225 = vpop.f32.mrb[0].mxu0
        %v4226 = vadd.f32 0.0, %v4225
        %v4227 = vpop.f32.mrb[0].mxu0
        %4228 = vmatprep.mubr.f32.mxu0 0.0
        %4229 = vmatmul.mubr.f32.gmra.mrb[0].mxu0 %v4023
        %v4230 = vpop.f32.mrb[0].mxu0
        %v4231 = vadd.f32 0.0, %v4230
        %v4232 = vpop.f32.mrb[0].mxu0
        %4233 = vmatprep.mubr.f32.mxu0 0.0
        %4234 = vmatmul.mubr.f32.gmra.mrb[0].mxu0 %v4026
        %v4235 = vpop.f32.mrb[0].mxu0
        %v4236 = vadd.f32 0.0, %v4235
        %v4237 = vpop.f32.mrb[0].mxu0
        %4238 = vmatprep.mubr.f32.mxu0 0.0
        %4239 = vmatmul.mubr.f32.gmra.mrb[0].mxu0 %v4029
        %v4240 = vpop.f32.mrb[0].mxu0
        %v4241 = vadd.f32 0.0, %v4240
        %v4242 = vpop.f32.mrb[0].mxu0
        %4243 = vmatprep.mubr.f32.mxu0 0.0
        %4244 = vmatmul.mubr.f32.gmra.mrb[0].mxu0 %v4032
        %v4245 = vpop.f32.mrb[0].mxu0
        %v4246 = vadd.f32 0.0, %v4245
        %v4247 = vpop.f32.mrb[0].mxu0
        %4248 = vmatprep.mubr.f32.mxu0 0.0
        %4249 = vmatmul.mubr.f32.gmra.mrb[0].mxu0 %v4035
        %v4250 = vpop.f32.mrb[0].mxu0
        %v4251 = vadd.f32 0.0, %v4250
        %v4252 = vpop.f32.mrb[0].mxu0
        %4253 = vmatprep.mubr.f32.mxu0 0.0
        %4254 = vmatmul.mubr.f32.gmra.mrb[0].mxu0 %v4038
        %v4255 = vpop.f32.mrb[0].mxu0
        %v4256 = vadd.f32 0.0, %v4255
        %v4257 = vpop.f32.mrb[0].mxu0
        %4258 = vmatprep.mubr.f32.mxu0 0.0
        %4259 = vmatmul.mubr.f32.gmra.mrb[0].mxu0 %v4041
        %v4260 = vpop.f32.mrb[0].mxu0
        %v4261 = vadd.f32 0.0, %v4260
        %v4262 = vpop.f32.mrb[0].mxu0
        %4263 = vmatprep.mubr.f32.mxu0 0.0
        %4264 = vmatmul.mubr.f32.gmra.mrb[0].mxu0 %v4044
        %v4265 = vpop.f32.mrb[0].mxu0
        %v4266 = vadd.f32 0.0, %v4265
        %v4267 = vpop.f32.mrb[0].mxu0
        %4268 = vmatprep.mubr.f32.mxu0 0.0
        %4269 = vmatmul.mubr.f32.gmra.mrb[0].mxu0 %v4047
        %v4270 = vpop.f32.mrb[0].mxu0
        %v4271 = vadd.f32 0.0, %v4270
        %v4272 = vpop.f32.mrb[0].mxu0
        %4273 = vdwg.mxu0
        %v4275 = vsel %vm3807, %v3886, 0
        %v4278 = vsel %vm3807, %v3887, 0
        %v4281 = vsel %vm3807, %v3888, 0
        %v4284 = vsel %vm3807, %v3889, 0
        %v4287 = vsel %vm3807, %v3890, 0
        %v4290 = vsel %vm3807, %v3891, 0
        %v4293 = vsel %vm3807, %v3892, 0
        %v4296 = vsel %vm3807, %v3893, 0
        %v4299 = vsel %vm3807, %v3894, 0
        %v4302 = vsel %vm3807, %v3895, 0
        %v4305 = vsel %vm3807, %v3896, 0
        %v4308 = vsel %vm3807, %v3897, 0
        %v4311 = vsel %vm3807, %v3898, 0
        %v4314 = vsel %vm3807, %v3899, 0
        %v4317 = vsel %vm3807, %v3900, 0
        %v4320 = vsel %vm3807, %v3901, 0
        %v4323 = vsel %vm3807, %v3902, 0
        %v4326 = vsel %vm3807, %v3903, 0
        %v4329 = vsel %vm3807, %v3904, 0
        %v4332 = vsel %vm3807, %v3905, 0
        %v4335 = vsel %vm3807, %v3906, 0
        %v4338 = vsel %vm3807, %v3907, 0
        %v4341 = vsel %vm3807, %v3908, 0
        %v4344 = vsel %vm3807, %v3909, 0
        %v4347 = vsel %vm3807, %v3910, 0
        %v4350 = vsel %vm3807, %v3911, 0
        %v4353 = vsel %vm3807, %v3912, 0
        %v4356 = vsel %vm3807, %v3913, 0
        %v4359 = vsel %vm3807, %v3914, 0
        %v4362 = vsel %vm3807, %v3915, 0
        %v4365 = vsel %vm3807, %v3916, 0
        %v4368 = vsel %vm3807, %v3917, 0
        %4370 = vmatprep.subr.mxu0 0.0
        %4371 = vmatpush1.msra.mxu0 %v3918
        %4372 = vmatprep.subr.mxu0 0.0
        %4373 = vmatpush1.msra.mxu0 0.0
        %4374 = vmatprep.subr.mxu0 0.0
        %4375 = vmatpush1.msra.mxu0 0.0
        %4376 = vmatprep.subr.mxu0 0.0
        %4377 = vmatpush1.msra.mxu0 0.0
        %4378 = vmatprep.subr.mxu0 0.0
        %4379 = vmatpush1.msra.mxu0 0.0
        %4380 = vmatprep.subr.mxu0 0.0
        %4381 = vmatpush1.msra.mxu0 0.0
        %4382 = vmatprep.subr.mxu0 0.0
        %4383 = vmatpush1.msra.mxu0 0.0
        %4384 = vmatprep.subr.mxu0 0.0
        %4385 = vmatpush1.msra.mxu0 0.0
        %4386 = vmatprep.subr.mxu0 0.0
        %4387 = vmatpush1.msra.mxu0 0.0
        %4388 = vmatprep.subr.mxu0 0.0
        %4389 = vmatpush1.msra.mxu0 0.0
        %4390 = vmatprep.subr.mxu0 0.0
        %4391 = vmatpush1.msra.mxu0 0.0
        %4392 = vmatprep.subr.mxu0 0.0
        %4393 = vmatpush1.msra.mxu0 0.0
        %4394 = vmatprep.subr.mxu0 0.0
        %4395 = vmatpush1.msra.mxu0 0.0
        %4396 = vmatprep.subr.mxu0 0.0
        %4397 = vmatpush1.msra.mxu0 0.0
        %4398 = vmatprep.subr.mxu0 0.0
        %4399 = vmatpush1.msra.mxu0 0.0
        %4400 = vmatprep.subr.mxu0 0.0
        %4401 = vmatpush1.msra.mxu0 0.0
        %4402 = vmatprep.subr.mxu0 0.0
        %4403 = vmatpush1.msra.mxu0 0.0
        %4404 = vmatprep.subr.mxu0 0.0
        %4405 = vmatpush1.msra.mxu0 0.0
        %4406 = vmatprep.subr.mxu0 0.0
        %4407 = vmatpush1.msra.mxu0 0.0
        %4408 = vmatprep.subr.mxu0 0.0
        %4409 = vmatpush1.msra.mxu0 0.0
        %4410 = vmatprep.subr.mxu0 0.0
        %4411 = vmatpush1.msra.mxu0 0.0
        %4412 = vmatprep.subr.mxu0 0.0
        %4413 = vmatpush1.msra.mxu0 0.0
        %4414 = vmatprep.subr.mxu0 0.0
        %4415 = vmatpush1.msra.mxu0 0.0
        %4416 = vmatprep.subr.mxu0 0.0
        %4417 = vmatpush1.msra.mxu0 0.0
        %4418 = vmatprep.subr.mxu0 0.0
        %4419 = vmatpush1.msra.mxu0 0.0
        %4420 = vmatprep.subr.mxu0 0.0
        %4421 = vmatpush1.msra.mxu0 0.0
        %4422 = vmatprep.subr.mxu0 0.0
        %4423 = vmatpush1.msra.mxu0 0.0
        %4424 = vmatprep.subr.mxu0 0.0
        %4425 = vmatpush1.msra.mxu0 0.0
        %4426 = vmatprep.subr.mxu0 0.0
        %4427 = vmatpush1.msra.mxu0 0.0
        %4428 = vmatprep.subr.mxu0 0.0
        %4429 = vmatpush1.msra.mxu0 0.0
        %4430 = vmatprep.subr.mxu0 0.0
        %4431 = vmatpush1.msra.mxu0 0.0
        %4432 = vmatprep.subr.mxu0 0.0
        %4433 = vmatpush1.msra.mxu0 0.0
        %4434 = vmatprep.mubr.f32.mxu0 0.0
        %4435 = vmatmul.mubr.f32.gmra.mrb[0].mxu0 %v4275
        %v4436 = vpop.f32.mrb[0].mxu0
        %v4437 = vadd.f32 %v4116, %v4436
        %v4438 = vpop.f32.mrb[0].mxu0
        %4439 = vmatprep.mubr.f32.mxu0 0.0
        %4440 = vmatmul.mubr.f32.gmra.mrb[0].mxu0 %v4278
        %v4441 = vpop.f32.mrb[0].mxu0
        %v4442 = vadd.f32 %v4121, %v4441
        %v4443 = vpop.f32.mrb[0].mxu0
        %4444 = vmatprep.mubr.f32.mxu0 0.0
        %4445 = vmatmul.mubr.f32.gmra.mrb[0].mxu0 %v4281
        %v4446 = vpop.f32.mrb[0].mxu0
        %v4447 = vadd.f32 %v4126, %v4446
        %v4448 = vpop.f32.mrb[0].mxu0
        %4449 = vmatprep.mubr.f32.mxu0 0.0
        %4450 = vmatmul.mubr.f32.gmra.mrb[0].mxu0 %v4284
        %v4451 = vpop.f32.mrb[0].mxu0
        %v4452 = vadd.f32 %v4131, %v4451
        %v4453 = vpop.f32.mrb[0].mxu0
        %4454 = vmatprep.mubr.f32.mxu0 0.0
        %4455 = vmatmul.mubr.f32.gmra.mrb[0].mxu0 %v4287
        %v4456 = vpop.f32.mrb[0].mxu0
        %v4457 = vadd.f32 %v4136, %v4456
        %v4458 = vpop.f32.mrb[0].mxu0
        %4459 = vmatprep.mubr.f32.mxu0 0.0
        %4460 = vmatmul.mubr.f32.gmra.mrb[0].mxu0 %v4290
        %v4461 = vpop.f32.mrb[0].mxu0
        %v4462 = vadd.f32 %v4141, %v4461
        %v4463 = vpop.f32.mrb[0].mxu0
        %4464 = vmatprep.mubr.f32.mxu0 0.0
        %4465 = vmatmul.mubr.f32.gmra.mrb[0].mxu0 %v4293
        %v4466 = vpop.f32.mrb[0].mxu0
        %v4467 = vadd.f32 %v4146, %v4466
        %v4468 = vpop.f32.mrb[0].mxu0
        %4469 = vmatprep.mubr.f32.mxu0 0.0
        %4470 = vmatmul.mubr.f32.gmra.mrb[0].mxu0 %v4296
        %v4471 = vpop.f32.mrb[0].mxu0
        %v4472 = vadd.f32 %v4151, %v4471
        %v4473 = vpop.f32.mrb[0].mxu0
        %4474 = vmatprep.mubr.f32.mxu0 0.0
        %4475 = vmatmul.mubr.f32.gmra.mrb[0].mxu0 %v4299
        %v4476 = vpop.f32.mrb[0].mxu0
        %v4477 = vadd.f32 %v4156, %v4476
        %v4478 = vpop.f32.mrb[0].mxu0
        %4479 = vmatprep.mubr.f32.mxu0 0.0
        %4480 = vmatmul.mubr.f32.gmra.mrb[0].mxu0 %v4302
        %v4481 = vpop.f32.mrb[0].mxu0
        %v4482 = vadd.f32 %v4161, %v4481
        %v4483 = vpop.f32.mrb[0].mxu0
        %4484 = vmatprep.mubr.f32.mxu0 0.0
        %4485 = vmatmul.mubr.f32.gmra.mrb[0].mxu0 %v4305
        %v4486 = vpop.f32.mrb[0].mxu0
        %v4487 = vadd.f32 %v4166, %v4486
        %v4488 = vpop.f32.mrb[0].mxu0
        %4489 = vmatprep.mubr.f32.mxu0 0.0
        %4490 = vmatmul.mubr.f32.gmra.mrb[0].mxu0 %v4308
        %v4491 = vpop.f32.mrb[0].mxu0
        %v4492 = vadd.f32 %v4171, %v4491
        %v4493 = vpop.f32.mrb[0].mxu0
        %4494 = vmatprep.mubr.f32.mxu0 0.0
        %4495 = vmatmul.mubr.f32.gmra.mrb[0].mxu0 %v4311
        %v4496 = vpop.f32.mrb[0].mxu0
        %v4497 = vadd.f32 %v4176, %v4496
        %v4498 = vpop.f32.mrb[0].mxu0
        %4499 = vmatprep.mubr.f32.mxu0 0.0
        %4500 = vmatmul.mubr.f32.gmra.mrb[0].mxu0 %v4314
        %v4501 = vpop.f32.mrb[0].mxu0
        %v4502 = vadd.f32 %v4181, %v4501
        %v4503 = vpop.f32.mrb[0].mxu0
        %4504 = vmatprep.mubr.f32.mxu0 0.0
        %4505 = vmatmul.mubr.f32.gmra.mrb[0].mxu0 %v4317
        %v4506 = vpop.f32.mrb[0].mxu0
        %v4507 = vadd.f32 %v4186, %v4506
        %v4508 = vpop.f32.mrb[0].mxu0
        %4509 = vmatprep.mubr.f32.mxu0 0.0
        %4510 = vmatmul.mubr.f32.gmra.mrb[0].mxu0 %v4320
        %v4511 = vpop.f32.mrb[0].mxu0
        %v4512 = vadd.f32 %v4191, %v4511
        %v4513 = vpop.f32.mrb[0].mxu0
        %4514 = vmatprep.mubr.f32.mxu0 0.0
        %4515 = vmatmul.mubr.f32.gmra.mrb[0].mxu0 %v4323
        %v4516 = vpop.f32.mrb[0].mxu0
        %v4517 = vadd.f32 %v4196, %v4516
        %v4518 = vpop.f32.mrb[0].mxu0
        %4519 = vmatprep.mubr.f32.mxu0 0.0
        %4520 = vmatmul.mubr.f32.gmra.mrb[0].mxu0 %v4326
        %v4521 = vpop.f32.mrb[0].mxu0
        %v4522 = vadd.f32 %v4201, %v4521
        %v4523 = vpop.f32.mrb[0].mxu0
        %4524 = vmatprep.mubr.f32.mxu0 0.0
        %4525 = vmatmul.mubr.f32.gmra.mrb[0].mxu0 %v4329
        %v4526 = vpop.f32.mrb[0].mxu0
        %v4527 = vadd.f32 %v4206, %v4526
        %v4528 = vpop.f32.mrb[0].mxu0
        %4529 = vmatprep.mubr.f32.mxu0 0.0
        %4530 = vmatmul.mubr.f32.gmra.mrb[0].mxu0 %v4332
        %v4531 = vpop.f32.mrb[0].mxu0
        %v4532 = vadd.f32 %v4211, %v4531
        %v4533 = vpop.f32.mrb[0].mxu0
        %4534 = vmatprep.mubr.f32.mxu0 0.0
        %4535 = vmatmul.mubr.f32.gmra.mrb[0].mxu0 %v4335
        %v4536 = vpop.f32.mrb[0].mxu0
        %v4537 = vadd.f32 %v4216, %v4536
        %v4538 = vpop.f32.mrb[0].mxu0
        %4539 = vmatprep.mubr.f32.mxu0 0.0
        %4540 = vmatmul.mubr.f32.gmra.mrb[0].mxu0 %v4338
        %v4541 = vpop.f32.mrb[0].mxu0
        %v4542 = vadd.f32 %v4221, %v4541
        %v4543 = vpop.f32.mrb[0].mxu0
        %4544 = vmatprep.mubr.f32.mxu0 0.0
        %4545 = vmatmul.mubr.f32.gmra.mrb[0].mxu0 %v4341
        %v4546 = vpop.f32.mrb[0].mxu0
        %v4547 = vadd.f32 %v4226, %v4546
        %v4548 = vpop.f32.mrb[0].mxu0
        %4549 = vmatprep.mubr.f32.mxu0 0.0
        %4550 = vmatmul.mubr.f32.gmra.mrb[0].mxu0 %v4344
        %v4551 = vpop.f32.mrb[0].mxu0
        %v4552 = vadd.f32 %v4231, %v4551
        %v4553 = vpop.f32.mrb[0].mxu0
        %4554 = vmatprep.mubr.f32.mxu0 0.0
        %4555 = vmatmul.mubr.f32.gmra.mrb[0].mxu0 %v4347
        %v4556 = vpop.f32.mrb[0].mxu0
        %v4557 = vadd.f32 %v4236, %v4556
        %v4558 = vpop.f32.mrb[0].mxu0
        %4559 = vmatprep.mubr.f32.mxu0 0.0
        %4560 = vmatmul.mubr.f32.gmra.mrb[0].mxu0 %v4350
        %v4561 = vpop.f32.mrb[0].mxu0
        %v4562 = vadd.f32 %v4241, %v4561
        %v4563 = vpop.f32.mrb[0].mxu0
        %4564 = vmatprep.mubr.f32.mxu0 0.0
        %4565 = vmatmul.mubr.f32.gmra.mrb[0].mxu0 %v4353
        %v4566 = vpop.f32.mrb[0].mxu0
        %v4567 = vadd.f32 %v4246, %v4566
        %v4568 = vpop.f32.mrb[0].mxu0
        %4569 = vmatprep.mubr.f32.mxu0 0.0
        %4570 = vmatmul.mubr.f32.gmra.mrb[0].mxu0 %v4356
        %v4571 = vpop.f32.mrb[0].mxu0
        %v4572 = vadd.f32 %v4251, %v4571
        %v4573 = vpop.f32.mrb[0].mxu0
        %4574 = vmatprep.mubr.f32.mxu0 0.0
        %4575 = vmatmul.mubr.f32.gmra.mrb[0].mxu0 %v4359
        %v4576 = vpop.f32.mrb[0].mxu0
        %v4577 = vadd.f32 %v4256, %v4576
        %v4578 = vpop.f32.mrb[0].mxu0
        %4579 = vmatprep.mubr.f32.mxu0 0.0
        %4580 = vmatmul.mubr.f32.gmra.mrb[0].mxu0 %v4362
        %v4581 = vpop.f32.mrb[0].mxu0
        %v4582 = vadd.f32 %v4261, %v4581
        %v4583 = vpop.f32.mrb[0].mxu0
        %4584 = vmatprep.mubr.f32.mxu0 0.0
        %4585 = vmatmul.mubr.f32.gmra.mrb[0].mxu0 %v4365
        %v4586 = vpop.f32.mrb[0].mxu0
        %v4587 = vadd.f32 %v4266, %v4586
        %v4588 = vpop.f32.mrb[0].mxu0
        %4589 = vmatprep.mubr.f32.mxu0 0.0
        %4590 = vmatmul.mubr.f32.gmra.mrb[0].mxu0 %v4368
        %v4591 = vpop.f32.mrb[0].mxu0
        %v4592 = vadd.f32 %v4271, %v4591
        %v4593 = vpop.f32.mrb[0].mxu0
        %4594 = vdwg.mxu0
        %v4595 = vld [vmem:[#allocation2 + $0x2] sm:$0xff]
        %v4596 = vld [vmem:[#allocation2 + $0xa] sm:$0xff]
        %v4597 = vld [vmem:[#allocation2 + $0x1a] sm:$0xff]
        %v4598 = vld [vmem:[#allocation2 + $0x22] sm:$0xff]
        %v4599 = vld [vmem:[#allocation2 + $0x32] sm:$0xff]
        %v4600 = vld [vmem:[#allocation2 + $0x3a] sm:$0xff]
        %v4601 = vld [vmem:[#allocation2 + $0x4a] sm:$0xff]
        %v4602 = vld [vmem:[#allocation2 + $0x52] sm:$0xff]
        %v4603 = vld [vmem:[#allocation2 + $0x62] sm:$0xff]
        %v4604 = vld [vmem:[#allocation2 + $0x6a] sm:$0xff]
        %v4605 = vld [vmem:[#allocation2 + $0x7a] sm:$0xff]
        %v4606 = vld [vmem:[#allocation2 + $0x82] sm:$0xff]
        %v4607 = vld [vmem:[#allocation2 + $0x92] sm:$0xff]
        %v4608 = vld [vmem:[#allocation2 + $0x9a] sm:$0xff]
        %v4609 = vld [vmem:[#allocation2 + $0xaa] sm:$0xff]
        %v4610 = vld [vmem:[#allocation2 + $0xb2] sm:$0xff]
        %v4611 = vld [vmem:[#allocation2 + $0xc2] sm:$0xff]
        %v4612 = vld [vmem:[#allocation2 + $0xca] sm:$0xff]
        %v4613 = vld [vmem:[#allocation2 + $0xda] sm:$0xff]
        %v4614 = vld [vmem:[#allocation2 + $0xe2] sm:$0xff]
        %v4615 = vld [vmem:[#allocation2 + $0xf2] sm:$0xff]
        %v4616 = vld [vmem:[#allocation2 + $0xfa] sm:$0xff]
        %v4617 = vld [vmem:[#allocation2 + $0x10a] sm:$0xff]
        %v4618 = vld [vmem:[#allocation2 + $0x112] sm:$0xff]
        %v4619 = vld [vmem:[#allocation2 + $0x122] sm:$0xff]
        %v4620 = vld [vmem:[#allocation2 + $0x12a] sm:$0xff]
        %v4621 = vld [vmem:[#allocation2 + $0x13a] sm:$0xff]
        %v4622 = vld [vmem:[#allocation2 + $0x142] sm:$0xff]
        %v4623 = vld [vmem:[#allocation2 + $0x152] sm:$0xff]
        %v4624 = vld [vmem:[#allocation2 + $0x15a] sm:$0xff]
        %v4625 = vld [vmem:[#allocation2 + $0x16a] sm:$0xff]
        %v4626 = vld [vmem:[#allocation2 + $0x172] sm:$0xff]
        %s4627 = scalar_lea.vmem %s3, 16
        %v4628 = vld [vmem:[%s4627] sm:$0xff]
        %v4630 = vsel %vm3807, %v4595, 0
        %v4633 = vsel %vm3807, %v4596, 0
        %v4636 = vsel %vm3807, %v4597, 0
        %v4639 = vsel %vm3807, %v4598, 0
        %v4642 = vsel %vm3807, %v4599, 0
        %v4645 = vsel %vm3807, %v4600, 0
        %v4648 = vsel %vm3807, %v4601, 0
        %v4651 = vsel %vm3807, %v4602, 0
        %v4654 = vsel %vm3807, %v4603, 0
        %v4657 = vsel %vm3807, %v4604, 0
        %v4660 = vsel %vm3807, %v4605, 0
        %v4663 = vsel %vm3807, %v4606, 0
        %v4666 = vsel %vm3807, %v4607, 0
        %v4669 = vsel %vm3807, %v4608, 0
        %v4672 = vsel %vm3807, %v4609, 0
        %v4675 = vsel %vm3807, %v4610, 0
        %v4678 = vsel %vm3807, %v4611, 0
        %v4681 = vsel %vm3807, %v4612, 0
        %v4684 = vsel %vm3807, %v4613, 0
        %v4687 = vsel %vm3807, %v4614, 0
        %v4690 = vsel %vm3807, %v4615, 0
        %v4693 = vsel %vm3807, %v4616, 0
        %v4696 = vsel %vm3807, %v4617, 0
        %v4699 = vsel %vm3807, %v4618, 0
        %v4702 = vsel %vm3807, %v4619, 0
        %v4705 = vsel %vm3807, %v4620, 0
        %v4708 = vsel %vm3807, %v4621, 0
        %v4711 = vsel %vm3807, %v4622, 0
        %v4714 = vsel %vm3807, %v4623, 0
        %v4717 = vsel %vm3807, %v4624, 0
        %v4720 = vsel %vm3807, %v4625, 0
        %v4723 = vsel %vm3807, %v4626, 0
        %4725 = vmatprep.subr.mxu0 0.0
        %4726 = vmatpush1.msra.mxu0 %v4628
        %4727 = vmatprep.subr.mxu0 0.0
        %4728 = vmatpush1.msra.mxu0 0.0
        %4729 = vmatprep.subr.mxu0 0.0
        %4730 = vmatpush1.msra.mxu0 0.0
        %4731 = vmatprep.subr.mxu0 0.0
        %4732 = vmatpush1.msra.mxu0 0.0
        %4733 = vmatprep.subr.mxu0 0.0
        %4734 = vmatpush1.msra.mxu0 0.0
        %4735 = vmatprep.subr.mxu0 0.0
        %4736 = vmatpush1.msra.mxu0 0.0
        %4737 = vmatprep.subr.mxu0 0.0
        %4738 = vmatpush1.msra.mxu0 0.0
        %4739 = vmatprep.subr.mxu0 0.0
        %4740 = vmatpush1.msra.mxu0 0.0
        %4741 = vmatprep.subr.mxu0 0.0
        %4742 = vmatpush1.msra.mxu0 0.0
        %4743 = vmatprep.subr.mxu0 0.0
        %4744 = vmatpush1.msra.mxu0 0.0
        %4745 = vmatprep.subr.mxu0 0.0
        %4746 = vmatpush1.msra.mxu0 0.0
        %4747 = vmatprep.subr.mxu0 0.0
        %4748 = vmatpush1.msra.mxu0 0.0
        %4749 = vmatprep.subr.mxu0 0.0
        %4750 = vmatpush1.msra.mxu0 0.0
        %4751 = vmatprep.subr.mxu0 0.0
        %4752 = vmatpush1.msra.mxu0 0.0
        %4753 = vmatprep.subr.mxu0 0.0
        %4754 = vmatpush1.msra.mxu0 0.0
        %4755 = vmatprep.subr.mxu0 0.0
        %4756 = vmatpush1.msra.mxu0 0.0
        %4757 = vmatprep.subr.mxu0 0.0
        %4758 = vmatpush1.msra.mxu0 0.0
        %4759 = vmatprep.subr.mxu0 0.0
        %4760 = vmatpush1.msra.mxu0 0.0
        %4761 = vmatprep.subr.mxu0 0.0
        %4762 = vmatpush1.msra.mxu0 0.0
        %4763 = vmatprep.subr.mxu0 0.0
        %4764 = vmatpush1.msra.mxu0 0.0
        %4765 = vmatprep.subr.mxu0 0.0
        %4766 = vmatpush1.msra.mxu0 0.0
        %4767 = vmatprep.subr.mxu0 0.0
        %4768 = vmatpush1.msra.mxu0 0.0
        %4769 = vmatprep.subr.mxu0 0.0
        %4770 = vmatpush1.msra.mxu0 0.0
        %4771 = vmatprep.subr.mxu0 0.0
        %4772 = vmatpush1.msra.mxu0 0.0
        %4773 = vmatprep.subr.mxu0 0.0
        %4774 = vmatpush1.msra.mxu0 0.0
        %4775 = vmatprep.subr.mxu0 0.0
        %4776 = vmatpush1.msra.mxu0 0.0
        %4777 = vmatprep.subr.mxu0 0.0
        %4778 = vmatpush1.msra.mxu0 0.0
        %4779 = vmatprep.subr.mxu0 0.0
        %4780 = vmatpush1.msra.mxu0 0.0
        %4781 = vmatprep.subr.mxu0 0.0
        %4782 = vmatpush1.msra.mxu0 0.0
        %4783 = vmatprep.subr.mxu0 0.0
        %4784 = vmatpush1.msra.mxu0 0.0
        %4785 = vmatprep.subr.mxu0 0.0
        %4786 = vmatpush1.msra.mxu0 0.0
        %4787 = vmatprep.subr.mxu0 0.0
        %4788 = vmatpush1.msra.mxu0 0.0
        %4789 = vmatprep.mubr.f32.mxu0 0.0
        %4790 = vmatmul.mubr.f32.gmra.mrb[0].mxu0 %v4630
        %v4791 = vpop.f32.mrb[0].mxu0
        %v4792 = vadd.f32 0.0, %v4791
        %v4793 = vpop.f32.mrb[0].mxu0
        %4794 = vmatprep.mubr.f32.mxu0 0.0
        %4795 = vmatmul.mubr.f32.gmra.mrb[0].mxu0 %v4633
        %v4796 = vpop.f32.mrb[0].mxu0
        %v4797 = vadd.f32 0.0, %v4796
        %v4798 = vpop.f32.mrb[0].mxu0
        %4799 = vmatprep.mubr.f32.mxu0 0.0
        %4800 = vmatmul.mubr.f32.gmra.mrb[0].mxu0 %v4636
        %v4801 = vpop.f32.mrb[0].mxu0
        %v4802 = vadd.f32 0.0, %v4801
        %v4803 = vpop.f32.mrb[0].mxu0
        %4804 = vmatprep.mubr.f32.mxu0 0.0
        %4805 = vmatmul.mubr.f32.gmra.mrb[0].mxu0 %v4639
        %v4806 = vpop.f32.mrb[0].mxu0
        %v4807 = vadd.f32 0.0, %v4806
        %v4808 = vpop.f32.mrb[0].mxu0
        %4809 = vmatprep.mubr.f32.mxu0 0.0
        %4810 = vmatmul.mubr.f32.gmra.mrb[0].mxu0 %v4642
        %v4811 = vpop.f32.mrb[0].mxu0
        %v4812 = vadd.f32 0.0, %v4811
        %v4813 = vpop.f32.mrb[0].mxu0
        %4814 = vmatprep.mubr.f32.mxu0 0.0
        %4815 = vmatmul.mubr.f32.gmra.mrb[0].mxu0 %v4645
        %v4816 = vpop.f32.mrb[0].mxu0
        %v4817 = vadd.f32 0.0, %v4816
        %v4818 = vpop.f32.mrb[0].mxu0
        %4819 = vmatprep.mubr.f32.mxu0 0.0
        %4820 = vmatmul.mubr.f32.gmra.mrb[0].mxu0 %v4648
        %v4821 = vpop.f32.mrb[0].mxu0
        %v4822 = vadd.f32 0.0, %v4821
        %v4823 = vpop.f32.mrb[0].mxu0
        %4824 = vmatprep.mubr.f32.mxu0 0.0
        %4825 = vmatmul.mubr.f32.gmra.mrb[0].mxu0 %v4651
        %v4826 = vpop.f32.mrb[0].mxu0
        %v4827 = vadd.f32 0.0, %v4826
        %v4828 = vpop.f32.mrb[0].mxu0
        %4829 = vmatprep.mubr.f32.mxu0 0.0
        %4830 = vmatmul.mubr.f32.gmra.mrb[0].mxu0 %v4654
        %v4831 = vpop.f32.mrb[0].mxu0
        %v4832 = vadd.f32 0.0, %v4831
        %v4833 = vpop.f32.mrb[0].mxu0
        %4834 = vmatprep.mubr.f32.mxu0 0.0
        %4835 = vmatmul.mubr.f32.gmra.mrb[0].mxu0 %v4657
        %v4836 = vpop.f32.mrb[0].mxu0
        %v4837 = vadd.f32 0.0, %v4836
        %v4838 = vpop.f32.mrb[0].mxu0
        %4839 = vmatprep.mubr.f32.mxu0 0.0
        %4840 = vmatmul.mubr.f32.gmra.mrb[0].mxu0 %v4660
        %v4841 = vpop.f32.mrb[0].mxu0
        %v4842 = vadd.f32 0.0, %v4841
        %v4843 = vpop.f32.mrb[0].mxu0
        %4844 = vmatprep.mubr.f32.mxu0 0.0
        %4845 = vmatmul.mubr.f32.gmra.mrb[0].mxu0 %v4663
        %v4846 = vpop.f32.mrb[0].mxu0
        %v4847 = vadd.f32 0.0, %v4846
        %v4848 = vpop.f32.mrb[0].mxu0
        %4849 = vmatprep.mubr.f32.mxu0 0.0
        %4850 = vmatmul.mubr.f32.gmra.mrb[0].mxu0 %v4666
        %v4851 = vpop.f32.mrb[0].mxu0
        %v4852 = vadd.f32 0.0, %v4851
        %v4853 = vpop.f32.mrb[0].mxu0
        %4854 = vmatprep.mubr.f32.mxu0 0.0
        %4855 = vmatmul.mubr.f32.gmra.mrb[0].mxu0 %v4669
        %v4856 = vpop.f32.mrb[0].mxu0
        %v4857 = vadd.f32 0.0, %v4856
        %v4858 = vpop.f32.mrb[0].mxu0
        %4859 = vmatprep.mubr.f32.mxu0 0.0
        %4860 = vmatmul.mubr.f32.gmra.mrb[0].mxu0 %v4672
        %v4861 = vpop.f32.mrb[0].mxu0
        %v4862 = vadd.f32 0.0, %v4861
        %v4863 = vpop.f32.mrb[0].mxu0
        %4864 = vmatprep.mubr.f32.mxu0 0.0
        %4865 = vmatmul.mubr.f32.gmra.mrb[0].mxu0 %v4675
        %v4866 = vpop.f32.mrb[0].mxu0
        %v4867 = vadd.f32 0.0, %v4866
        %v4868 = vpop.f32.mrb[0].mxu0
        %4869 = vmatprep.mubr.f32.mxu0 0.0
        %4870 = vmatmul.mubr.f32.gmra.mrb[0].mxu0 %v4678
        %v4871 = vpop.f32.mrb[0].mxu0
        %v4872 = vadd.f32 0.0, %v4871
        %v4873 = vpop.f32.mrb[0].mxu0
        %4874 = vmatprep.mubr.f32.mxu0 0.0
        %4875 = vmatmul.mubr.f32.gmra.mrb[0].mxu0 %v4681
        %v4876 = vpop.f32.mrb[0].mxu0
        %v4877 = vadd.f32 0.0, %v4876
        %v4878 = vpop.f32.mrb[0].mxu0
        %4879 = vmatprep.mubr.f32.mxu0 0.0
        %4880 = vmatmul.mubr.f32.gmra.mrb[0].mxu0 %v4684
        %v4881 = vpop.f32.mrb[0].mxu0
        %v4882 = vadd.f32 0.0, %v4881
        %v4883 = vpop.f32.mrb[0].mxu0
        %4884 = vmatprep.mubr.f32.mxu0 0.0
        %4885 = vmatmul.mubr.f32.gmra.mrb[0].mxu0 %v4687
        %v4886 = vpop.f32.mrb[0].mxu0
        %v4887 = vadd.f32 0.0, %v4886
        %v4888 = vpop.f32.mrb[0].mxu0
        %4889 = vmatprep.mubr.f32.mxu0 0.0
        %4890 = vmatmul.mubr.f32.gmra.mrb[0].mxu0 %v4690
        %v4891 = vpop.f32.mrb[0].mxu0
        %v4892 = vadd.f32 0.0, %v4891
        %v4893 = vpop.f32.mrb[0].mxu0
        %4894 = vmatprep.mubr.f32.mxu0 0.0
        %4895 = vmatmul.mubr.f32.gmra.mrb[0].mxu0 %v4693
        %v4896 = vpop.f32.mrb[0].mxu0
        %v4897 = vadd.f32 0.0, %v4896
        %v4898 = vpop.f32.mrb[0].mxu0
        %4899 = vmatprep.mubr.f32.mxu0 0.0
        %4900 = vmatmul.mubr.f32.gmra.mrb[0].mxu0 %v4696
        %v4901 = vpop.f32.mrb[0].mxu0
        %v4902 = vadd.f32 0.0, %v4901
        %v4903 = vpop.f32.mrb[0].mxu0
        %4904 = vmatprep.mubr.f32.mxu0 0.0
        %4905 = vmatmul.mubr.f32.gmra.mrb[0].mxu0 %v4699
        %v4906 = vpop.f32.mrb[0].mxu0
        %v4907 = vadd.f32 0.0, %v4906
        %v4908 = vpop.f32.mrb[0].mxu0
        %4909 = vmatprep.mubr.f32.mxu0 0.0
        %4910 = vmatmul.mubr.f32.gmra.mrb[0].mxu0 %v4702
        %v4911 = vpop.f32.mrb[0].mxu0
        %v4912 = vadd.f32 0.0, %v4911
        %v4913 = vpop.f32.mrb[0].mxu0
        %4914 = vmatprep.mubr.f32.mxu0 0.0
        %4915 = vmatmul.mubr.f32.gmra.mrb[0].mxu0 %v4705
        %v4916 = vpop.f32.mrb[0].mxu0
        %v4917 = vadd.f32 0.0, %v4916
        %v4918 = vpop.f32.mrb[0].mxu0
        %4919 = vmatprep.mubr.f32.mxu0 0.0
        %4920 = vmatmul.mubr.f32.gmra.mrb[0].mxu0 %v4708
        %v4921 = vpop.f32.mrb[0].mxu0
        %v4922 = vadd.f32 0.0, %v4921
        %v4923 = vpop.f32.mrb[0].mxu0
        %4924 = vmatprep.mubr.f32.mxu0 0.0
        %4925 = vmatmul.mubr.f32.gmra.mrb[0].mxu0 %v4711
        %v4926 = vpop.f32.mrb[0].mxu0
        %v4927 = vadd.f32 0.0, %v4926
        %v4928 = vpop.f32.mrb[0].mxu0
        %4929 = vmatprep.mubr.f32.mxu0 0.0
        %4930 = vmatmul.mubr.f32.gmra.mrb[0].mxu0 %v4714
        %v4931 = vpop.f32.mrb[0].mxu0
        %v4932 = vadd.f32 0.0, %v4931
        %v4933 = vpop.f32.mrb[0].mxu0
        %4934 = vmatprep.mubr.f32.mxu0 0.0
        %4935 = vmatmul.mubr.f32.gmra.mrb[0].mxu0 %v4717
        %v4936 = vpop.f32.mrb[0].mxu0
        %v4937 = vadd.f32 0.0, %v4936
        %v4938 = vpop.f32.mrb[0].mxu0
        %4939 = vmatprep.mubr.f32.mxu0 0.0
        %4940 = vmatmul.mubr.f32.gmra.mrb[0].mxu0 %v4720
        %v4941 = vpop.f32.mrb[0].mxu0
        %v4942 = vadd.f32 0.0, %v4941
        %v4943 = vpop.f32.mrb[0].mxu0
        %4944 = vmatprep.mubr.f32.mxu0 0.0
        %4945 = vmatmul.mubr.f32.gmra.mrb[0].mxu0 %v4723
        %v4946 = vpop.f32.mrb[0].mxu0
        %v4947 = vadd.f32 0.0, %v4946
        %v4948 = vpop.f32.mrb[0].mxu0
        %4949 = vdwg.mxu0
        %v4950 = vadd.f32 %v4437, %v4792
        %v4951 = vadd.f32 %v4442, %v4797
        %v4952 = vadd.f32 %v4447, %v4802
        %v4953 = vadd.f32 %v4452, %v4807
        %v4954 = vadd.f32 %v4457, %v4812
        %v4955 = vadd.f32 %v4462, %v4817
        %v4956 = vadd.f32 %v4467, %v4822
        %v4957 = vadd.f32 %v4472, %v4827
        %v4958 = vadd.f32 %v4477, %v4832
        %v4959 = vadd.f32 %v4482, %v4837
        %v4960 = vadd.f32 %v4487, %v4842
        %v4961 = vadd.f32 %v4492, %v4847
        %v4962 = vadd.f32 %v4497, %v4852
        %v4963 = vadd.f32 %v4502, %v4857
        %v4964 = vadd.f32 %v4507, %v4862
        %v4965 = vadd.f32 %v4512, %v4867
        %v4966 = vadd.f32 %v4517, %v4872
        %v4967 = vadd.f32 %v4522, %v4877
        %v4968 = vadd.f32 %v4527, %v4882
        %v4969 = vadd.f32 %v4532, %v4887
        %v4970 = vadd.f32 %v4537, %v4892
        %v4971 = vadd.f32 %v4542, %v4897
        %v4972 = vadd.f32 %v4547, %v4902
        %v4973 = vadd.f32 %v4552, %v4907
        %v4974 = vadd.f32 %v4557, %v4912
        %v4975 = vadd.f32 %v4562, %v4917
        %v4976 = vadd.f32 %v4567, %v4922
        %v4977 = vadd.f32 %v4572, %v4927
        %v4978 = vadd.f32 %v4577, %v4932
        %v4979 = vadd.f32 %v4582, %v4937
        %v4980 = vadd.f32 %v4587, %v4942
        %v4981 = vadd.f32 %v4592, %v4947
        %v4982 = vld [vmem:[%s3853] sm:$0xff]
        %v4983 = vld [vmem:[%s3853 + $0x8] sm:$0xff]
        %v4984 = vld [vmem:[%s3853 + $0x18] sm:$0xff]
        %v4985 = vld [vmem:[%s3853 + $0x20] sm:$0xff]
        %v4986 = vld [vmem:[%s3853 + $0x30] sm:$0xff]
        %v4987 = vld [vmem:[%s3853 + $0x38] sm:$0xff]
        %v4988 = vld [vmem:[%s3853 + $0x48] sm:$0xff]
        %v4989 = vld [vmem:[%s3853 + $0x50] sm:$0xff]
        %v4990 = vld [vmem:[%s3853 + $0x60] sm:$0xff]
        %v4991 = vld [vmem:[%s3853 + $0x68] sm:$0xff]
        %v4992 = vld [vmem:[%s3853 + $0x78] sm:$0xff]
        %v4993 = vld [vmem:[%s3853 + $0x80] sm:$0xff]
        %v4994 = vld [vmem:[%s3853 + $0x90] sm:$0xff]
        %v4995 = vld [vmem:[%s3853 + $0x98] sm:$0xff]
        %v4996 = vld [vmem:[%s3853 + $0xa8] sm:$0xff]
        %v4997 = vld [vmem:[%s3853 + $0xb0] sm:$0xff]
        %v4998 = vld [vmem:[%s3853 + $0xc0] sm:$0xff]
        %v4999 = vld [vmem:[%s3853 + $0xc8] sm:$0xff]
        %v5000 = vld [vmem:[%s3853 + $0xd8] sm:$0xff]
        %v5001 = vld [vmem:[%s3853 + $0xe0] sm:$0xff]
        %v5002 = vld [vmem:[%s3853 + $0xf0] sm:$0xff]
        %v5003 = vld [vmem:[%s3853 + $0xf8] sm:$0xff]
        %v5004 = vld [vmem:[%s3853 + $0x108] sm:$0xff]
        %v5005 = vld [vmem:[%s3853 + $0x110] sm:$0xff]
        %v5006 = vld [vmem:[%s3853 + $0x120] sm:$0xff]
        %v5007 = vld [vmem:[%s3853 + $0x128] sm:$0xff]
        %v5008 = vld [vmem:[%s3853 + $0x138] sm:$0xff]
        %v5009 = vld [vmem:[%s3853 + $0x140] sm:$0xff]
        %v5010 = vld [vmem:[%s3853 + $0x150] sm:$0xff]
        %v5011 = vld [vmem:[%s3853 + $0x158] sm:$0xff]
        %v5012 = vld [vmem:[%s3853 + $0x168] sm:$0xff]
        %v5013 = vld [vmem:[%s3853 + $0x170] sm:$0xff]
        %s5014 = scalar_lea.vmem %s3, 24
        %v5015 = vld [vmem:[%s5014] sm:$0xff]
        %v5017 = vsel %vm3807, %v4982, 0
        %v5020 = vsel %vm3807, %v4983, 0
        %v5023 = vsel %vm3807, %v4984, 0
        %v5026 = vsel %vm3807, %v4985, 0
        %v5029 = vsel %vm3807, %v4986, 0
        %v5032 = vsel %vm3807, %v4987, 0
        %v5035 = vsel %vm3807, %v4988, 0
        %v5038 = vsel %vm3807, %v4989, 0
        %v5041 = vsel %vm3807, %v4990, 0
        %v5044 = vsel %vm3807, %v4991, 0
        %v5047 = vsel %vm3807, %v4992, 0
        %v5050 = vsel %vm3807, %v4993, 0
        %v5053 = vsel %vm3807, %v4994, 0
        %v5056 = vsel %vm3807, %v4995, 0
        %v5059 = vsel %vm3807, %v4996, 0
        %v5062 = vsel %vm3807, %v4997, 0
        %v5065 = vsel %vm3807, %v4998, 0
        %v5068 = vsel %vm3807, %v4999, 0
        %v5071 = vsel %vm3807, %v5000, 0
        %v5074 = vsel %vm3807, %v5001, 0
        %v5077 = vsel %vm3807, %v5002, 0
        %v5080 = vsel %vm3807, %v5003, 0
        %v5083 = vsel %vm3807, %v5004, 0
        %v5086 = vsel %vm3807, %v5005, 0
        %v5089 = vsel %vm3807, %v5006, 0
        %v5092 = vsel %vm3807, %v5007, 0
        %v5095 = vsel %vm3807, %v5008, 0
        %v5098 = vsel %vm3807, %v5009, 0
        %v5101 = vsel %vm3807, %v5010, 0
        %v5104 = vsel %vm3807, %v5011, 0
        %v5107 = vsel %vm3807, %v5012, 0
        %v5110 = vsel %vm3807, %v5013, 0
        %5112 = vmatprep.subr.mxu0 0.0
        %5113 = vmatpush1.msra.mxu0 %v5015
        %5114 = vmatprep.subr.mxu0 0.0
        %5115 = vmatpush1.msra.mxu0 0.0
        %5116 = vmatprep.subr.mxu0 0.0
        %5117 = vmatpush1.msra.mxu0 0.0
        %5118 = vmatprep.subr.mxu0 0.0
        %5119 = vmatpush1.msra.mxu0 0.0
        %5120 = vmatprep.subr.mxu0 0.0
        %5121 = vmatpush1.msra.mxu0 0.0
        %5122 = vmatprep.subr.mxu0 0.0
        %5123 = vmatpush1.msra.mxu0 0.0
        %5124 = vmatprep.subr.mxu0 0.0
        %5125 = vmatpush1.msra.mxu0 0.0
        %5126 = vmatprep.subr.mxu0 0.0
        %5127 = vmatpush1.msra.mxu0 0.0
        %5128 = vmatprep.subr.mxu0 0.0
        %5129 = vmatpush1.msra.mxu0 0.0
        %5130 = vmatprep.subr.mxu0 0.0
        %5131 = vmatpush1.msra.mxu0 0.0
        %5132 = vmatprep.subr.mxu0 0.0
        %5133 = vmatpush1.msra.mxu0 0.0
        %5134 = vmatprep.subr.mxu0 0.0
        %5135 = vmatpush1.msra.mxu0 0.0
        %5136 = vmatprep.subr.mxu0 0.0
        %5137 = vmatpush1.msra.mxu0 0.0
        %5138 = vmatprep.subr.mxu0 0.0
        %5139 = vmatpush1.msra.mxu0 0.0
        %5140 = vmatprep.subr.mxu0 0.0
        %5141 = vmatpush1.msra.mxu0 0.0
        %5142 = vmatprep.subr.mxu0 0.0
        %5143 = vmatpush1.msra.mxu0 0.0
        %5144 = vmatprep.subr.mxu0 0.0
        %5145 = vmatpush1.msra.mxu0 0.0
        %5146 = vmatprep.subr.mxu0 0.0
        %5147 = vmatpush1.msra.mxu0 0.0
        %5148 = vmatprep.subr.mxu0 0.0
        %5149 = vmatpush1.msra.mxu0 0.0
        %5150 = vmatprep.subr.mxu0 0.0
        %5151 = vmatpush1.msra.mxu0 0.0
        %5152 = vmatprep.subr.mxu0 0.0
        %5153 = vmatpush1.msra.mxu0 0.0
        %5154 = vmatprep.subr.mxu0 0.0
        %5155 = vmatpush1.msra.mxu0 0.0
        %5156 = vmatprep.subr.mxu0 0.0
        %5157 = vmatpush1.msra.mxu0 0.0
        %5158 = vmatprep.subr.mxu0 0.0
        %5159 = vmatpush1.msra.mxu0 0.0
        %5160 = vmatprep.subr.mxu0 0.0
        %5161 = vmatpush1.msra.mxu0 0.0
        %5162 = vmatprep.subr.mxu0 0.0
        %5163 = vmatpush1.msra.mxu0 0.0
        %5164 = vmatprep.subr.mxu0 0.0
        %5165 = vmatpush1.msra.mxu0 0.0
        %5166 = vmatprep.subr.mxu0 0.0
        %5167 = vmatpush1.msra.mxu0 0.0
        %5168 = vmatprep.subr.mxu0 0.0
        %5169 = vmatpush1.msra.mxu0 0.0
        %5170 = vmatprep.subr.mxu0 0.0
        %5171 = vmatpush1.msra.mxu0 0.0
        %5172 = vmatprep.subr.mxu0 0.0
        %5173 = vmatpush1.msra.mxu0 0.0
        %5174 = vmatprep.subr.mxu0 0.0
        %5175 = vmatpush1.msra.mxu0 0.0
        %5176 = vmatprep.mubr.f32.mxu0 0.0
        %5177 = vmatmul.mubr.f32.gmra.mrb[0].mxu0 %v5017
        %v5178 = vpop.f32.mrb[0].mxu0
        %v5179 = vadd.f32 0.0, %v5178
        %v5180 = vpop.f32.mrb[0].mxu0
        %5181 = vmatprep.mubr.f32.mxu0 0.0
        %5182 = vmatmul.mubr.f32.gmra.mrb[0].mxu0 %v5020
        %v5183 = vpop.f32.mrb[0].mxu0
        %v5184 = vadd.f32 0.0, %v5183
        %v5185 = vpop.f32.mrb[0].mxu0
        %5186 = vmatprep.mubr.f32.mxu0 0.0
        %5187 = vmatmul.mubr.f32.gmra.mrb[0].mxu0 %v5023
        %v5188 = vpop.f32.mrb[0].mxu0
        %v5189 = vadd.f32 0.0, %v5188
        %v5190 = vpop.f32.mrb[0].mxu0
        %5191 = vmatprep.mubr.f32.mxu0 0.0
        %5192 = vmatmul.mubr.f32.gmra.mrb[0].mxu0 %v5026
        %v5193 = vpop.f32.mrb[0].mxu0
        %v5194 = vadd.f32 0.0, %v5193
        %v5195 = vpop.f32.mrb[0].mxu0
        %5196 = vmatprep.mubr.f32.mxu0 0.0
        %5197 = vmatmul.mubr.f32.gmra.mrb[0].mxu0 %v5029
        %v5198 = vpop.f32.mrb[0].mxu0
        %v5199 = vadd.f32 0.0, %v5198
        %v5200 = vpop.f32.mrb[0].mxu0
        %5201 = vmatprep.mubr.f32.mxu0 0.0
        %5202 = vmatmul.mubr.f32.gmra.mrb[0].mxu0 %v5032
        %v5203 = vpop.f32.mrb[0].mxu0
        %v5204 = vadd.f32 0.0, %v5203
        %v5205 = vpop.f32.mrb[0].mxu0
        %5206 = vmatprep.mubr.f32.mxu0 0.0
        %5207 = vmatmul.mubr.f32.gmra.mrb[0].mxu0 %v5035
        %v5208 = vpop.f32.mrb[0].mxu0
        %v5209 = vadd.f32 0.0, %v5208
        %v5210 = vpop.f32.mrb[0].mxu0
        %5211 = vmatprep.mubr.f32.mxu0 0.0
        %5212 = vmatmul.mubr.f32.gmra.mrb[0].mxu0 %v5038
        %v5213 = vpop.f32.mrb[0].mxu0
        %v5214 = vadd.f32 0.0, %v5213
        %v5215 = vpop.f32.mrb[0].mxu0
        %5216 = vmatprep.mubr.f32.mxu0 0.0
        %5217 = vmatmul.mubr.f32.gmra.mrb[0].mxu0 %v5041
        %v5218 = vpop.f32.mrb[0].mxu0
        %v5219 = vadd.f32 0.0, %v5218
        %v5220 = vpop.f32.mrb[0].mxu0
        %5221 = vmatprep.mubr.f32.mxu0 0.0
        %5222 = vmatmul.mubr.f32.gmra.mrb[0].mxu0 %v5044
        %v5223 = vpop.f32.mrb[0].mxu0
        %v5224 = vadd.f32 0.0, %v5223
        %v5225 = vpop.f32.mrb[0].mxu0
        %5226 = vmatprep.mubr.f32.mxu0 0.0
        %5227 = vmatmul.mubr.f32.gmra.mrb[0].mxu0 %v5047
        %v5228 = vpop.f32.mrb[0].mxu0
        %v5229 = vadd.f32 0.0, %v5228
        %v5230 = vpop.f32.mrb[0].mxu0
        %5231 = vmatprep.mubr.f32.mxu0 0.0
        %5232 = vmatmul.mubr.f32.gmra.mrb[0].mxu0 %v5050
        %v5233 = vpop.f32.mrb[0].mxu0
        %v5234 = vadd.f32 0.0, %v5233
        %v5235 = vpop.f32.mrb[0].mxu0
        %5236 = vmatprep.mubr.f32.mxu0 0.0
        %5237 = vmatmul.mubr.f32.gmra.mrb[0].mxu0 %v5053
        %v5238 = vpop.f32.mrb[0].mxu0
        %v5239 = vadd.f32 0.0, %v5238
        %v5240 = vpop.f32.mrb[0].mxu0
        %5241 = vmatprep.mubr.f32.mxu0 0.0
        %5242 = vmatmul.mubr.f32.gmra.mrb[0].mxu0 %v5056
        %v5243 = vpop.f32.mrb[0].mxu0
        %v5244 = vadd.f32 0.0, %v5243
        %v5245 = vpop.f32.mrb[0].mxu0
        %5246 = vmatprep.mubr.f32.mxu0 0.0
        %5247 = vmatmul.mubr.f32.gmra.mrb[0].mxu0 %v5059
        %v5248 = vpop.f32.mrb[0].mxu0
        %v5249 = vadd.f32 0.0, %v5248
        %v5250 = vpop.f32.mrb[0].mxu0
        %5251 = vmatprep.mubr.f32.mxu0 0.0
        %5252 = vmatmul.mubr.f32.gmra.mrb[0].mxu0 %v5062
        %v5253 = vpop.f32.mrb[0].mxu0
        %v5254 = vadd.f32 0.0, %v5253
        %v5255 = vpop.f32.mrb[0].mxu0
        %5256 = vmatprep.mubr.f32.mxu0 0.0
        %5257 = vmatmul.mubr.f32.gmra.mrb[0].mxu0 %v5065
        %v5258 = vpop.f32.mrb[0].mxu0
        %v5259 = vadd.f32 0.0, %v5258
        %v5260 = vpop.f32.mrb[0].mxu0
        %5261 = vmatprep.mubr.f32.mxu0 0.0
        %5262 = vmatmul.mubr.f32.gmra.mrb[0].mxu0 %v5068
        %v5263 = vpop.f32.mrb[0].mxu0
        %v5264 = vadd.f32 0.0, %v5263
        %v5265 = vpop.f32.mrb[0].mxu0
        %5266 = vmatprep.mubr.f32.mxu0 0.0
        %5267 = vmatmul.mubr.f32.gmra.mrb[0].mxu0 %v5071
        %v5268 = vpop.f32.mrb[0].mxu0
        %v5269 = vadd.f32 0.0, %v5268
        %v5270 = vpop.f32.mrb[0].mxu0
        %5271 = vmatprep.mubr.f32.mxu0 0.0
        %5272 = vmatmul.mubr.f32.gmra.mrb[0].mxu0 %v5074
        %v5273 = vpop.f32.mrb[0].mxu0
        %v5274 = vadd.f32 0.0, %v5273
        %v5275 = vpop.f32.mrb[0].mxu0
        %5276 = vmatprep.mubr.f32.mxu0 0.0
        %5277 = vmatmul.mubr.f32.gmra.mrb[0].mxu0 %v5077
        %v5278 = vpop.f32.mrb[0].mxu0
        %v5279 = vadd.f32 0.0, %v5278
        %v5280 = vpop.f32.mrb[0].mxu0
        %5281 = vmatprep.mubr.f32.mxu0 0.0
        %5282 = vmatmul.mubr.f32.gmra.mrb[0].mxu0 %v5080
        %v5283 = vpop.f32.mrb[0].mxu0
        %v5284 = vadd.f32 0.0, %v5283
        %v5285 = vpop.f32.mrb[0].mxu0
        %5286 = vmatprep.mubr.f32.mxu0 0.0
        %5287 = vmatmul.mubr.f32.gmra.mrb[0].mxu0 %v5083
        %v5288 = vpop.f32.mrb[0].mxu0
        %v5289 = vadd.f32 0.0, %v5288
        %v5290 = vpop.f32.mrb[0].mxu0
        %5291 = vmatprep.mubr.f32.mxu0 0.0
        %5292 = vmatmul.mubr.f32.gmra.mrb[0].mxu0 %v5086
        %v5293 = vpop.f32.mrb[0].mxu0
        %v5294 = vadd.f32 0.0, %v5293
        %v5295 = vpop.f32.mrb[0].mxu0
        %5296 = vmatprep.mubr.f32.mxu0 0.0
        %5297 = vmatmul.mubr.f32.gmra.mrb[0].mxu0 %v5089
        %v5298 = vpop.f32.mrb[0].mxu0
        %v5299 = vadd.f32 0.0, %v5298
        %v5300 = vpop.f32.mrb[0].mxu0
        %5301 = vmatprep.mubr.f32.mxu0 0.0
        %5302 = vmatmul.mubr.f32.gmra.mrb[0].mxu0 %v5092
        %v5303 = vpop.f32.mrb[0].mxu0
        %v5304 = vadd.f32 0.0, %v5303
        %v5305 = vpop.f32.mrb[0].mxu0
        %5306 = vmatprep.mubr.f32.mxu0 0.0
        %5307 = vmatmul.mubr.f32.gmra.mrb[0].mxu0 %v5095
        %v5308 = vpop.f32.mrb[0].mxu0
        %v5309 = vadd.f32 0.0, %v5308
        %v5310 = vpop.f32.mrb[0].mxu0
        %5311 = vmatprep.mubr.f32.mxu0 0.0
        %5312 = vmatmul.mubr.f32.gmra.mrb[0].mxu0 %v5098
        %v5313 = vpop.f32.mrb[0].mxu0
        %v5314 = vadd.f32 0.0, %v5313
        %v5315 = vpop.f32.mrb[0].mxu0
        %5316 = vmatprep.mubr.f32.mxu0 0.0
        %5317 = vmatmul.mubr.f32.gmra.mrb[0].mxu0 %v5101
        %v5318 = vpop.f32.mrb[0].mxu0
        %v5319 = vadd.f32 0.0, %v5318
        %v5320 = vpop.f32.mrb[0].mxu0
        %5321 = vmatprep.mubr.f32.mxu0 0.0
        %5322 = vmatmul.mubr.f32.gmra.mrb[0].mxu0 %v5104
        %v5323 = vpop.f32.mrb[0].mxu0
        %v5324 = vadd.f32 0.0, %v5323
        %v5325 = vpop.f32.mrb[0].mxu0
        %5326 = vmatprep.mubr.f32.mxu0 0.0
        %5327 = vmatmul.mubr.f32.gmra.mrb[0].mxu0 %v5107
        %v5328 = vpop.f32.mrb[0].mxu0
        %v5329 = vadd.f32 0.0, %v5328
        %v5330 = vpop.f32.mrb[0].mxu0
        %5331 = vmatprep.mubr.f32.mxu0 0.0
        %5332 = vmatmul.mubr.f32.gmra.mrb[0].mxu0 %v5110
        %v5333 = vpop.f32.mrb[0].mxu0
        %v5334 = vadd.f32 0.0, %v5333
        %v5335 = vpop.f32.mrb[0].mxu0
        %5336 = vdwg.mxu0
        %v5337 = vadd.f32 %v4950, %v5179
        %v5338 = vadd.f32 %v4951, %v5184
        %v5339 = vadd.f32 %v4952, %v5189
        %v5340 = vadd.f32 %v4953, %v5194
        %v5341 = vadd.f32 %v4954, %v5199
        %v5342 = vadd.f32 %v4955, %v5204
        %v5343 = vadd.f32 %v4956, %v5209
        %v5344 = vadd.f32 %v4957, %v5214
        %v5345 = vadd.f32 %v4958, %v5219
        %v5346 = vadd.f32 %v4959, %v5224
        %v5347 = vadd.f32 %v4960, %v5229
        %v5348 = vadd.f32 %v4961, %v5234
        %v5349 = vadd.f32 %v4962, %v5239
        %v5350 = vadd.f32 %v4963, %v5244
        %v5351 = vadd.f32 %v4964, %v5249
        %v5352 = vadd.f32 %v4965, %v5254
        %v5353 = vadd.f32 %v4966, %v5259
        %v5354 = vadd.f32 %v4967, %v5264
        %v5355 = vadd.f32 %v4968, %v5269
        %v5356 = vadd.f32 %v4969, %v5274
        %v5357 = vadd.f32 %v4970, %v5279
        %v5358 = vadd.f32 %v4971, %v5284
        %v5359 = vadd.f32 %v4972, %v5289
        %v5360 = vadd.f32 %v4973, %v5294
        %v5361 = vadd.f32 %v4974, %v5299
        %v5362 = vadd.f32 %v4975, %v5304
        %v5363 = vadd.f32 %v4976, %v5309
        %v5364 = vadd.f32 %v4977, %v5314
        %v5365 = vadd.f32 %v4978, %v5319
        %v5366 = vadd.f32 %v4979, %v5324
        %v5367 = vadd.f32 %v4980, %v5329
        %v5368 = vadd.f32 %v4981, %v5334
        %v5369 = vld [vmem:[%s3853 + $0x1] sm:$0xff]
        %v5370 = vld [vmem:[%s3853 + $0x9] sm:$0xff]
        %v5371 = vld [vmem:[%s3853 + $0x19] sm:$0xff]
        %v5372 = vld [vmem:[%s3853 + $0x21] sm:$0xff]
        %v5373 = vld [vmem:[%s3853 + $0x31] sm:$0xff]
        %v5374 = vld [vmem:[%s3853 + $0x39] sm:$0xff]
        %v5375 = vld [vmem:[%s3853 + $0x49] sm:$0xff]
        %v5376 = vld [vmem:[%s3853 + $0x51] sm:$0xff]
        %v5377 = vld [vmem:[%s3853 + $0x61] sm:$0xff]
        %v5378 = vld [vmem:[%s3853 + $0x69] sm:$0xff]
        %v5379 = vld [vmem:[%s3853 + $0x79] sm:$0xff]
        %v5380 = vld [vmem:[%s3853 + $0x81] sm:$0xff]
        %v5381 = vld [vmem:[%s3853 + $0x91] sm:$0xff]
        %v5382 = vld [vmem:[%s3853 + $0x99] sm:$0xff]
        %v5383 = vld [vmem:[%s3853 + $0xa9] sm:$0xff]
        %v5384 = vld [vmem:[%s3853 + $0xb1] sm:$0xff]
        %v5385 = vld [vmem:[%s3853 + $0xc1] sm:$0xff]
        %v5386 = vld [vmem:[%s3853 + $0xc9] sm:$0xff]
        %v5387 = vld [vmem:[%s3853 + $0xd9] sm:$0xff]
        %v5388 = vld [vmem:[%s3853 + $0xe1] sm:$0xff]
        %v5389 = vld [vmem:[%s3853 + $0xf1] sm:$0xff]
        %v5390 = vld [vmem:[%s3853 + $0xf9] sm:$0xff]
        %v5391 = vld [vmem:[%s3853 + $0x109] sm:$0xff]
        %v5392 = vld [vmem:[%s3853 + $0x111] sm:$0xff]
        %v5393 = vld [vmem:[%s3853 + $0x121] sm:$0xff]
        %v5394 = vld [vmem:[%s3853 + $0x129] sm:$0xff]
        %v5395 = vld [vmem:[%s3853 + $0x139] sm:$0xff]
        %v5396 = vld [vmem:[%s3853 + $0x141] sm:$0xff]
        %v5397 = vld [vmem:[%s3853 + $0x151] sm:$0xff]
        %v5398 = vld [vmem:[%s3853 + $0x159] sm:$0xff]
        %v5399 = vld [vmem:[%s3853 + $0x169] sm:$0xff]
        %v5400 = vld [vmem:[%s3853 + $0x171] sm:$0xff]
        %s5401 = scalar_lea.vmem %s3, 32
        %v5402 = vld [vmem:[%s5401] sm:$0xff]
        %v5404 = vsel %vm3807, %v5369, 0
        %v5407 = vsel %vm3807, %v5370, 0
        %v5410 = vsel %vm3807, %v5371, 0
        %v5413 = vsel %vm3807, %v5372, 0
        %v5416 = vsel %vm3807, %v5373, 0
        %v5419 = vsel %vm3807, %v5374, 0
        %v5422 = vsel %vm3807, %v5375, 0
        %v5425 = vsel %vm3807, %v5376, 0
        %v5428 = vsel %vm3807, %v5377, 0
        %v5431 = vsel %vm3807, %v5378, 0
        %v5434 = vsel %vm3807, %v5379, 0
        %v5437 = vsel %vm3807, %v5380, 0
        %v5440 = vsel %vm3807, %v5381, 0
        %v5443 = vsel %vm3807, %v5382, 0
        %v5446 = vsel %vm3807, %v5383, 0
        %v5449 = vsel %vm3807, %v5384, 0
        %v5452 = vsel %vm3807, %v5385, 0
        %v5455 = vsel %vm3807, %v5386, 0
        %v5458 = vsel %vm3807, %v5387, 0
        %v5461 = vsel %vm3807, %v5388, 0
        %v5464 = vsel %vm3807, %v5389, 0
        %v5467 = vsel %vm3807, %v5390, 0
        %v5470 = vsel %vm3807, %v5391, 0
        %v5473 = vsel %vm3807, %v5392, 0
        %v5476 = vsel %vm3807, %v5393, 0
        %v5479 = vsel %vm3807, %v5394, 0
        %v5482 = vsel %vm3807, %v5395, 0
        %v5485 = vsel %vm3807, %v5396, 0
        %v5488 = vsel %vm3807, %v5397, 0
        %v5491 = vsel %vm3807, %v5398, 0
        %v5494 = vsel %vm3807, %v5399, 0
        %v5497 = vsel %vm3807, %v5400, 0
        %5499 = vmatprep.subr.mxu0 0.0
        %5500 = vmatpush1.msra.mxu0 %v5402
        %5501 = vmatprep.subr.mxu0 0.0
        %5502 = vmatpush1.msra.mxu0 0.0
        %5503 = vmatprep.subr.mxu0 0.0
        %5504 = vmatpush1.msra.mxu0 0.0
        %5505 = vmatprep.subr.mxu0 0.0
        %5506 = vmatpush1.msra.mxu0 0.0
        %5507 = vmatprep.subr.mxu0 0.0
        %5508 = vmatpush1.msra.mxu0 0.0
        %5509 = vmatprep.subr.mxu0 0.0
        %5510 = vmatpush1.msra.mxu0 0.0
        %5511 = vmatprep.subr.mxu0 0.0
        %5512 = vmatpush1.msra.mxu0 0.0
        %5513 = vmatprep.subr.mxu0 0.0
        %5514 = vmatpush1.msra.mxu0 0.0
        %5515 = vmatprep.subr.mxu0 0.0
        %5516 = vmatpush1.msra.mxu0 0.0
        %5517 = vmatprep.subr.mxu0 0.0
        %5518 = vmatpush1.msra.mxu0 0.0
        %5519 = vmatprep.subr.mxu0 0.0
        %5520 = vmatpush1.msra.mxu0 0.0
        %5521 = vmatprep.subr.mxu0 0.0
        %5522 = vmatpush1.msra.mxu0 0.0
        %5523 = vmatprep.subr.mxu0 0.0
        %5524 = vmatpush1.msra.mxu0 0.0
        %5525 = vmatprep.subr.mxu0 0.0
        %5526 = vmatpush1.msra.mxu0 0.0
        %5527 = vmatprep.subr.mxu0 0.0
        %5528 = vmatpush1.msra.mxu0 0.0
        %5529 = vmatprep.subr.mxu0 0.0
        %5530 = vmatpush1.msra.mxu0 0.0
        %5531 = vmatprep.subr.mxu0 0.0
        %5532 = vmatpush1.msra.mxu0 0.0
        %5533 = vmatprep.subr.mxu0 0.0
        %5534 = vmatpush1.msra.mxu0 0.0
        %5535 = vmatprep.subr.mxu0 0.0
        %5536 = vmatpush1.msra.mxu0 0.0
        %5537 = vmatprep.subr.mxu0 0.0
        %5538 = vmatpush1.msra.mxu0 0.0
        %5539 = vmatprep.subr.mxu0 0.0
        %5540 = vmatpush1.msra.mxu0 0.0
        %5541 = vmatprep.subr.mxu0 0.0
        %5542 = vmatpush1.msra.mxu0 0.0
        %5543 = vmatprep.subr.mxu0 0.0
        %5544 = vmatpush1.msra.mxu0 0.0
        %5545 = vmatprep.subr.mxu0 0.0
        %5546 = vmatpush1.msra.mxu0 0.0
        %5547 = vmatprep.subr.mxu0 0.0
        %5548 = vmatpush1.msra.mxu0 0.0
        %5549 = vmatprep.subr.mxu0 0.0
        %5550 = vmatpush1.msra.mxu0 0.0
        %5551 = vmatprep.subr.mxu0 0.0
        %5552 = vmatpush1.msra.mxu0 0.0
        %5553 = vmatprep.subr.mxu0 0.0
        %5554 = vmatpush1.msra.mxu0 0.0
        %5555 = vmatprep.subr.mxu0 0.0
        %5556 = vmatpush1.msra.mxu0 0.0
        %5557 = vmatprep.subr.mxu0 0.0
        %5558 = vmatpush1.msra.mxu0 0.0
        %5559 = vmatprep.subr.mxu0 0.0
        %5560 = vmatpush1.msra.mxu0 0.0
        %5561 = vmatprep.subr.mxu0 0.0
        %5562 = vmatpush1.msra.mxu0 0.0
        %5563 = vmatprep.mubr.f32.mxu0 0.0
        %5564 = vmatmul.mubr.f32.gmra.mrb[0].mxu0 %v5404
        %v5565 = vpop.f32.mrb[0].mxu0
        %v5566 = vadd.f32 0.0, %v5565
        %v5567 = vpop.f32.mrb[0].mxu0
        %5568 = vmatprep.mubr.f32.mxu0 0.0
        %5569 = vmatmul.mubr.f32.gmra.mrb[0].mxu0 %v5407
        %v5570 = vpop.f32.mrb[0].mxu0
        %v5571 = vadd.f32 0.0, %v5570
        %v5572 = vpop.f32.mrb[0].mxu0
        %5573 = vmatprep.mubr.f32.mxu0 0.0
        %5574 = vmatmul.mubr.f32.gmra.mrb[0].mxu0 %v5410
        %v5575 = vpop.f32.mrb[0].mxu0
        %v5576 = vadd.f32 0.0, %v5575
        %v5577 = vpop.f32.mrb[0].mxu0
        %5578 = vmatprep.mubr.f32.mxu0 0.0
        %5579 = vmatmul.mubr.f32.gmra.mrb[0].mxu0 %v5413
        %v5580 = vpop.f32.mrb[0].mxu0
        %v5581 = vadd.f32 0.0, %v5580
        %v5582 = vpop.f32.mrb[0].mxu0
        %5583 = vmatprep.mubr.f32.mxu0 0.0
        %5584 = vmatmul.mubr.f32.gmra.mrb[0].mxu0 %v5416
        %v5585 = vpop.f32.mrb[0].mxu0
        %v5586 = vadd.f32 0.0, %v5585
        %v5587 = vpop.f32.mrb[0].mxu0
        %5588 = vmatprep.mubr.f32.mxu0 0.0
        %5589 = vmatmul.mubr.f32.gmra.mrb[0].mxu0 %v5419
        %v5590 = vpop.f32.mrb[0].mxu0
        %v5591 = vadd.f32 0.0, %v5590
        %v5592 = vpop.f32.mrb[0].mxu0
        %5593 = vmatprep.mubr.f32.mxu0 0.0
        %5594 = vmatmul.mubr.f32.gmra.mrb[0].mxu0 %v5422
        %v5595 = vpop.f32.mrb[0].mxu0
        %v5596 = vadd.f32 0.0, %v5595
        %v5597 = vpop.f32.mrb[0].mxu0
        %5598 = vmatprep.mubr.f32.mxu0 0.0
        %5599 = vmatmul.mubr.f32.gmra.mrb[0].mxu0 %v5425
        %v5600 = vpop.f32.mrb[0].mxu0
        %v5601 = vadd.f32 0.0, %v5600
        %v5602 = vpop.f32.mrb[0].mxu0
        %5603 = vmatprep.mubr.f32.mxu0 0.0
        %5604 = vmatmul.mubr.f32.gmra.mrb[0].mxu0 %v5428
        %v5605 = vpop.f32.mrb[0].mxu0
        %v5606 = vadd.f32 0.0, %v5605
        %v5607 = vpop.f32.mrb[0].mxu0
        %5608 = vmatprep.mubr.f32.mxu0 0.0
        %5609 = vmatmul.mubr.f32.gmra.mrb[0].mxu0 %v5431
        %v5610 = vpop.f32.mrb[0].mxu0
        %v5611 = vadd.f32 0.0, %v5610
        %v5612 = vpop.f32.mrb[0].mxu0
        %5613 = vmatprep.mubr.f32.mxu0 0.0
        %5614 = vmatmul.mubr.f32.gmra.mrb[0].mxu0 %v5434
        %v5615 = vpop.f32.mrb[0].mxu0
        %v5616 = vadd.f32 0.0, %v5615
        %v5617 = vpop.f32.mrb[0].mxu0
        %5618 = vmatprep.mubr.f32.mxu0 0.0
        %5619 = vmatmul.mubr.f32.gmra.mrb[0].mxu0 %v5437
        %v5620 = vpop.f32.mrb[0].mxu0
        %v5621 = vadd.f32 0.0, %v5620
        %v5622 = vpop.f32.mrb[0].mxu0
        %5623 = vmatprep.mubr.f32.mxu0 0.0
        %5624 = vmatmul.mubr.f32.gmra.mrb[0].mxu0 %v5440
        %v5625 = vpop.f32.mrb[0].mxu0
        %v5626 = vadd.f32 0.0, %v5625
        %v5627 = vpop.f32.mrb[0].mxu0
        %5628 = vmatprep.mubr.f32.mxu0 0.0
        %5629 = vmatmul.mubr.f32.gmra.mrb[0].mxu0 %v5443
        %v5630 = vpop.f32.mrb[0].mxu0
        %v5631 = vadd.f32 0.0, %v5630
        %v5632 = vpop.f32.mrb[0].mxu0
        %5633 = vmatprep.mubr.f32.mxu0 0.0
        %5634 = vmatmul.mubr.f32.gmra.mrb[0].mxu0 %v5446
        %v5635 = vpop.f32.mrb[0].mxu0
        %v5636 = vadd.f32 0.0, %v5635
        %v5637 = vpop.f32.mrb[0].mxu0
        %5638 = vmatprep.mubr.f32.mxu0 0.0
        %5639 = vmatmul.mubr.f32.gmra.mrb[0].mxu0 %v5449
        %v5640 = vpop.f32.mrb[0].mxu0
        %v5641 = vadd.f32 0.0, %v5640
        %v5642 = vpop.f32.mrb[0].mxu0
        %5643 = vmatprep.mubr.f32.mxu0 0.0
        %5644 = vmatmul.mubr.f32.gmra.mrb[0].mxu0 %v5452
        %v5645 = vpop.f32.mrb[0].mxu0
        %v5646 = vadd.f32 0.0, %v5645
        %v5647 = vpop.f32.mrb[0].mxu0
        %5648 = vmatprep.mubr.f32.mxu0 0.0
        %5649 = vmatmul.mubr.f32.gmra.mrb[0].mxu0 %v5455
        %v5650 = vpop.f32.mrb[0].mxu0
        %v5651 = vadd.f32 0.0, %v5650
        %v5652 = vpop.f32.mrb[0].mxu0
        %5653 = vmatprep.mubr.f32.mxu0 0.0
        %5654 = vmatmul.mubr.f32.gmra.mrb[0].mxu0 %v5458
        %v5655 = vpop.f32.mrb[0].mxu0
        %v5656 = vadd.f32 0.0, %v5655
        %v5657 = vpop.f32.mrb[0].mxu0
        %5658 = vmatprep.mubr.f32.mxu0 0.0
        %5659 = vmatmul.mubr.f32.gmra.mrb[0].mxu0 %v5461
        %v5660 = vpop.f32.mrb[0].mxu0
        %v5661 = vadd.f32 0.0, %v5660
        %v5662 = vpop.f32.mrb[0].mxu0
        %5663 = vmatprep.mubr.f32.mxu0 0.0
        %5664 = vmatmul.mubr.f32.gmra.mrb[0].mxu0 %v5464
        %v5665 = vpop.f32.mrb[0].mxu0
        %v5666 = vadd.f32 0.0, %v5665
        %v5667 = vpop.f32.mrb[0].mxu0
        %5668 = vmatprep.mubr.f32.mxu0 0.0
        %5669 = vmatmul.mubr.f32.gmra.mrb[0].mxu0 %v5467
        %v5670 = vpop.f32.mrb[0].mxu0
        %v5671 = vadd.f32 0.0, %v5670
        %v5672 = vpop.f32.mrb[0].mxu0
        %5673 = vmatprep.mubr.f32.mxu0 0.0
        %5674 = vmatmul.mubr.f32.gmra.mrb[0].mxu0 %v5470
        %v5675 = vpop.f32.mrb[0].mxu0
        %v5676 = vadd.f32 0.0, %v5675
        %v5677 = vpop.f32.mrb[0].mxu0
        %5678 = vmatprep.mubr.f32.mxu0 0.0
        %5679 = vmatmul.mubr.f32.gmra.mrb[0].mxu0 %v5473
        %v5680 = vpop.f32.mrb[0].mxu0
        %v5681 = vadd.f32 0.0, %v5680
        %v5682 = vpop.f32.mrb[0].mxu0
        %5683 = vmatprep.mubr.f32.mxu0 0.0
        %5684 = vmatmul.mubr.f32.gmra.mrb[0].mxu0 %v5476
        %v5685 = vpop.f32.mrb[0].mxu0
        %v5686 = vadd.f32 0.0, %v5685
        %v5687 = vpop.f32.mrb[0].mxu0
        %5688 = vmatprep.mubr.f32.mxu0 0.0
        %5689 = vmatmul.mubr.f32.gmra.mrb[0].mxu0 %v5479
        %v5690 = vpop.f32.mrb[0].mxu0
        %v5691 = vadd.f32 0.0, %v5690
        %v5692 = vpop.f32.mrb[0].mxu0
        %5693 = vmatprep.mubr.f32.mxu0 0.0
        %5694 = vmatmul.mubr.f32.gmra.mrb[0].mxu0 %v5482
        %v5695 = vpop.f32.mrb[0].mxu0
        %v5696 = vadd.f32 0.0, %v5695
        %v5697 = vpop.f32.mrb[0].mxu0
        %5698 = vmatprep.mubr.f32.mxu0 0.0
        %5699 = vmatmul.mubr.f32.gmra.mrb[0].mxu0 %v5485
        %v5700 = vpop.f32.mrb[0].mxu0
        %v5701 = vadd.f32 0.0, %v5700
        %v5702 = vpop.f32.mrb[0].mxu0
        %5703 = vmatprep.mubr.f32.mxu0 0.0
        %5704 = vmatmul.mubr.f32.gmra.mrb[0].mxu0 %v5488
        %v5705 = vpop.f32.mrb[0].mxu0
        %v5706 = vadd.f32 0.0, %v5705
        %v5707 = vpop.f32.mrb[0].mxu0
        %5708 = vmatprep.mubr.f32.mxu0 0.0
        %5709 = vmatmul.mubr.f32.gmra.mrb[0].mxu0 %v5491
        %v5710 = vpop.f32.mrb[0].mxu0
        %v5711 = vadd.f32 0.0, %v5710
        %v5712 = vpop.f32.mrb[0].mxu0
        %5713 = vmatprep.mubr.f32.mxu0 0.0
        %5714 = vmatmul.mubr.f32.gmra.mrb[0].mxu0 %v5494
        %v5715 = vpop.f32.mrb[0].mxu0
        %v5716 = vadd.f32 0.0, %v5715
        %v5717 = vpop.f32.mrb[0].mxu0
        %5718 = vmatprep.mubr.f32.mxu0 0.0
        %5719 = vmatmul.mubr.f32.gmra.mrb[0].mxu0 %v5497
        %v5720 = vpop.f32.mrb[0].mxu0
        %v5721 = vadd.f32 0.0, %v5720
        %v5722 = vpop.f32.mrb[0].mxu0
        %5723 = vdwg.mxu0
        %v5724 = vadd.f32 %v5337, %v5566
        %v5725 = vadd.f32 %v5338, %v5571
        %v5726 = vadd.f32 %v5339, %v5576
        %v5727 = vadd.f32 %v5340, %v5581
        %v5728 = vadd.f32 %v5341, %v5586
        %v5729 = vadd.f32 %v5342, %v5591
        %v5730 = vadd.f32 %v5343, %v5596
        %v5731 = vadd.f32 %v5344, %v5601
        %v5732 = vadd.f32 %v5345, %v5606
        %v5733 = vadd.f32 %v5346, %v5611
        %v5734 = vadd.f32 %v5347, %v5616
        %v5735 = vadd.f32 %v5348, %v5621
        %v5736 = vadd.f32 %v5349, %v5626
        %v5737 = vadd.f32 %v5350, %v5631
        %v5738 = vadd.f32 %v5351, %v5636
        %v5739 = vadd.f32 %v5352, %v5641
        %v5740 = vadd.f32 %v5353, %v5646
        %v5741 = vadd.f32 %v5354, %v5651
        %v5742 = vadd.f32 %v5355, %v5656
        %v5743 = vadd.f32 %v5356, %v5661
        %v5744 = vadd.f32 %v5357, %v5666
        %v5745 = vadd.f32 %v5358, %v5671
        %v5746 = vadd.f32 %v5359, %v5676
        %v5747 = vadd.f32 %v5360, %v5681
        %v5748 = vadd.f32 %v5361, %v5686
        %v5749 = vadd.f32 %v5362, %v5691
        %v5750 = vadd.f32 %v5363, %v5696
        %v5751 = vadd.f32 %v5364, %v5701
        %v5752 = vadd.f32 %v5365, %v5706
        %v5753 = vadd.f32 %v5366, %v5711
        %v5754 = vadd.f32 %v5367, %v5716
        %v5755 = vadd.f32 %v5368, %v5721
        %v5756 = vld [vmem:[%s3853 + $0x2] sm:$0xff]
        %v5757 = vld [vmem:[%s3853 + $0xa] sm:$0xff]
        %v5758 = vld [vmem:[%s3853 + $0x1a] sm:$0xff]
        %v5759 = vld [vmem:[%s3853 + $0x22] sm:$0xff]
        %v5760 = vld [vmem:[%s3853 + $0x32] sm:$0xff]
        %v5761 = vld [vmem:[%s3853 + $0x3a] sm:$0xff]
        %v5762 = vld [vmem:[%s3853 + $0x4a] sm:$0xff]
        %v5763 = vld [vmem:[%s3853 + $0x52] sm:$0xff]
        %v5764 = vld [vmem:[%s3853 + $0x62] sm:$0xff]
        %v5765 = vld [vmem:[%s3853 + $0x6a] sm:$0xff]
        %v5766 = vld [vmem:[%s3853 + $0x7a] sm:$0xff]
        %v5767 = vld [vmem:[%s3853 + $0x82] sm:$0xff]
        %v5768 = vld [vmem:[%s3853 + $0x92] sm:$0xff]
        %v5769 = vld [vmem:[%s3853 + $0x9a] sm:$0xff]
        %v5770 = vld [vmem:[%s3853 + $0xaa] sm:$0xff]
        %v5771 = vld [vmem:[%s3853 + $0xb2] sm:$0xff]
        %v5772 = vld [vmem:[%s3853 + $0xc2] sm:$0xff]
        %v5773 = vld [vmem:[%s3853 + $0xca] sm:$0xff]
        %v5774 = vld [vmem:[%s3853 + $0xda] sm:$0xff]
        %v5775 = vld [vmem:[%s3853 + $0xe2] sm:$0xff]
        %v5776 = vld [vmem:[%s3853 + $0xf2] sm:$0xff]
        %v5777 = vld [vmem:[%s3853 + $0xfa] sm:$0xff]
        %v5778 = vld [vmem:[%s3853 + $0x10a] sm:$0xff]
        %v5779 = vld [vmem:[%s3853 + $0x112] sm:$0xff]
        %v5780 = vld [vmem:[%s3853 + $0x122] sm:$0xff]
        %v5781 = vld [vmem:[%s3853 + $0x12a] sm:$0xff]
        %v5782 = vld [vmem:[%s3853 + $0x13a] sm:$0xff]
        %v5783 = vld [vmem:[%s3853 + $0x142] sm:$0xff]
        %v5784 = vld [vmem:[%s3853 + $0x152] sm:$0xff]
        %v5785 = vld [vmem:[%s3853 + $0x15a] sm:$0xff]
        %v5786 = vld [vmem:[%s3853 + $0x16a] sm:$0xff]
        %v5787 = vld [vmem:[%s3853 + $0x172] sm:$0xff]
        %s5788 = scalar_lea.vmem %s3, 40
        %v5789 = vld [vmem:[%s5788] sm:$0xff]
        %v5791 = vsel %vm3807, %v5756, 0
        %v5794 = vsel %vm3807, %v5757, 0
        %v5797 = vsel %vm3807, %v5758, 0
        %v5800 = vsel %vm3807, %v5759, 0
        %v5803 = vsel %vm3807, %v5760, 0
        %v5806 = vsel %vm3807, %v5761, 0
        %v5809 = vsel %vm3807, %v5762, 0
        %v5812 = vsel %vm3807, %v5763, 0
        %v5815 = vsel %vm3807, %v5764, 0
        %v5818 = vsel %vm3807, %v5765, 0
        %v5821 = vsel %vm3807, %v5766, 0
        %v5824 = vsel %vm3807, %v5767, 0
        %v5827 = vsel %vm3807, %v5768, 0
        %v5830 = vsel %vm3807, %v5769, 0
        %v5833 = vsel %vm3807, %v5770, 0
        %v5836 = vsel %vm3807, %v5771, 0
        %v5839 = vsel %vm3807, %v5772, 0
        %v5842 = vsel %vm3807, %v5773, 0
        %v5845 = vsel %vm3807, %v5774, 0
        %v5848 = vsel %vm3807, %v5775, 0
        %v5851 = vsel %vm3807, %v5776, 0
        %v5854 = vsel %vm3807, %v5777, 0
        %v5857 = vsel %vm3807, %v5778, 0
        %v5860 = vsel %vm3807, %v5779, 0
        %v5863 = vsel %vm3807, %v5780, 0
        %v5866 = vsel %vm3807, %v5781, 0
        %v5869 = vsel %vm3807, %v5782, 0
        %v5872 = vsel %vm3807, %v5783, 0
        %v5875 = vsel %vm3807, %v5784, 0
        %v5878 = vsel %vm3807, %v5785, 0
        %v5881 = vsel %vm3807, %v5786, 0
        %v5884 = vsel %vm3807, %v5787, 0
        %5886 = vmatprep.subr.mxu0 0.0
        %5887 = vmatpush1.msra.mxu0 %v5789
        %5888 = vmatprep.subr.mxu0 0.0
        %5889 = vmatpush1.msra.mxu0 0.0
        %5890 = vmatprep.subr.mxu0 0.0
        %5891 = vmatpush1.msra.mxu0 0.0
        %5892 = vmatprep.subr.mxu0 0.0
        %5893 = vmatpush1.msra.mxu0 0.0
        %5894 = vmatprep.subr.mxu0 0.0
        %5895 = vmatpush1.msra.mxu0 0.0
        %5896 = vmatprep.subr.mxu0 0.0
        %5897 = vmatpush1.msra.mxu0 0.0
        %5898 = vmatprep.subr.mxu0 0.0
        %5899 = vmatpush1.msra.mxu0 0.0
        %5900 = vmatprep.subr.mxu0 0.0
        %5901 = vmatpush1.msra.mxu0 0.0
        %5902 = vmatprep.subr.mxu0 0.0
        %5903 = vmatpush1.msra.mxu0 0.0
        %5904 = vmatprep.subr.mxu0 0.0
        %5905 = vmatpush1.msra.mxu0 0.0
        %5906 = vmatprep.subr.mxu0 0.0
        %5907 = vmatpush1.msra.mxu0 0.0
        %5908 = vmatprep.subr.mxu0 0.0
        %5909 = vmatpush1.msra.mxu0 0.0
        %5910 = vmatprep.subr.mxu0 0.0
        %5911 = vmatpush1.msra.mxu0 0.0
        %5912 = vmatprep.subr.mxu0 0.0
        %5913 = vmatpush1.msra.mxu0 0.0
        %5914 = vmatprep.subr.mxu0 0.0
        %5915 = vmatpush1.msra.mxu0 0.0
        %5916 = vmatprep.subr.mxu0 0.0
        %5917 = vmatpush1.msra.mxu0 0.0
        %5918 = vmatprep.subr.mxu0 0.0
        %5919 = vmatpush1.msra.mxu0 0.0
        %5920 = vmatprep.subr.mxu0 0.0
        %5921 = vmatpush1.msra.mxu0 0.0
        %5922 = vmatprep.subr.mxu0 0.0
        %5923 = vmatpush1.msra.mxu0 0.0
        %5924 = vmatprep.subr.mxu0 0.0
        %5925 = vmatpush1.msra.mxu0 0.0
        %5926 = vmatprep.subr.mxu0 0.0
        %5927 = vmatpush1.msra.mxu0 0.0
        %5928 = vmatprep.subr.mxu0 0.0
        %5929 = vmatpush1.msra.mxu0 0.0
        %5930 = vmatprep.subr.mxu0 0.0
        %5931 = vmatpush1.msra.mxu0 0.0
        %5932 = vmatprep.subr.mxu0 0.0
        %5933 = vmatpush1.msra.mxu0 0.0
        %5934 = vmatprep.subr.mxu0 0.0
        %5935 = vmatpush1.msra.mxu0 0.0
        %5936 = vmatprep.subr.mxu0 0.0
        %5937 = vmatpush1.msra.mxu0 0.0
        %5938 = vmatprep.subr.mxu0 0.0
        %5939 = vmatpush1.msra.mxu0 0.0
        %5940 = vmatprep.subr.mxu0 0.0
        %5941 = vmatpush1.msra.mxu0 0.0
        %5942 = vmatprep.subr.mxu0 0.0
        %5943 = vmatpush1.msra.mxu0 0.0
        %5944 = vmatprep.subr.mxu0 0.0
        %5945 = vmatpush1.msra.mxu0 0.0
        %5946 = vmatprep.subr.mxu0 0.0
        %5947 = vmatpush1.msra.mxu0 0.0
        %5948 = vmatprep.subr.mxu0 0.0
        %5949 = vmatpush1.msra.mxu0 0.0
        %5950 = vmatprep.mubr.f32.mxu0 0.0
        %5951 = vmatmul.mubr.f32.gmra.mrb[0].mxu0 %v5791
        %v5952 = vpop.f32.mrb[0].mxu0
        %v5953 = vadd.f32 0.0, %v5952
        %v5954 = vpop.f32.mrb[0].mxu0
        %5955 = vmatprep.mubr.f32.mxu0 0.0
        %5956 = vmatmul.mubr.f32.gmra.mrb[0].mxu0 %v5794
        %v5957 = vpop.f32.mrb[0].mxu0
        %v5958 = vadd.f32 0.0, %v5957
        %v5959 = vpop.f32.mrb[0].mxu0
        %5960 = vmatprep.mubr.f32.mxu0 0.0
        %5961 = vmatmul.mubr.f32.gmra.mrb[0].mxu0 %v5797
        %v5962 = vpop.f32.mrb[0].mxu0
        %v5963 = vadd.f32 0.0, %v5962
        %v5964 = vpop.f32.mrb[0].mxu0
        %5965 = vmatprep.mubr.f32.mxu0 0.0
        %5966 = vmatmul.mubr.f32.gmra.mrb[0].mxu0 %v5800
        %v5967 = vpop.f32.mrb[0].mxu0
        %v5968 = vadd.f32 0.0, %v5967
        %v5969 = vpop.f32.mrb[0].mxu0
        %5970 = vmatprep.mubr.f32.mxu0 0.0
        %5971 = vmatmul.mubr.f32.gmra.mrb[0].mxu0 %v5803
        %v5972 = vpop.f32.mrb[0].mxu0
        %v5973 = vadd.f32 0.0, %v5972
        %v5974 = vpop.f32.mrb[0].mxu0
        %5975 = vmatprep.mubr.f32.mxu0 0.0
        %5976 = vmatmul.mubr.f32.gmra.mrb[0].mxu0 %v5806
        %v5977 = vpop.f32.mrb[0].mxu0
        %v5978 = vadd.f32 0.0, %v5977
        %v5979 = vpop.f32.mrb[0].mxu0
        %5980 = vmatprep.mubr.f32.mxu0 0.0
        %5981 = vmatmul.mubr.f32.gmra.mrb[0].mxu0 %v5809
        %v5982 = vpop.f32.mrb[0].mxu0
        %v5983 = vadd.f32 0.0, %v5982
        %v5984 = vpop.f32.mrb[0].mxu0
        %5985 = vmatprep.mubr.f32.mxu0 0.0
        %5986 = vmatmul.mubr.f32.gmra.mrb[0].mxu0 %v5812
        %v5987 = vpop.f32.mrb[0].mxu0
        %v5988 = vadd.f32 0.0, %v5987
        %v5989 = vpop.f32.mrb[0].mxu0
        %5990 = vmatprep.mubr.f32.mxu0 0.0
        %5991 = vmatmul.mubr.f32.gmra.mrb[0].mxu0 %v5815
        %v5992 = vpop.f32.mrb[0].mxu0
        %v5993 = vadd.f32 0.0, %v5992
        %v5994 = vpop.f32.mrb[0].mxu0
        %5995 = vmatprep.mubr.f32.mxu0 0.0
        %5996 = vmatmul.mubr.f32.gmra.mrb[0].mxu0 %v5818
        %v5997 = vpop.f32.mrb[0].mxu0
        %v5998 = vadd.f32 0.0, %v5997
        %v5999 = vpop.f32.mrb[0].mxu0
        %6000 = vmatprep.mubr.f32.mxu0 0.0
        %6001 = vmatmul.mubr.f32.gmra.mrb[0].mxu0 %v5821
        %v6002 = vpop.f32.mrb[0].mxu0
        %v6003 = vadd.f32 0.0, %v6002
        %v6004 = vpop.f32.mrb[0].mxu0
        %6005 = vmatprep.mubr.f32.mxu0 0.0
        %6006 = vmatmul.mubr.f32.gmra.mrb[0].mxu0 %v5824
        %v6007 = vpop.f32.mrb[0].mxu0
        %v6008 = vadd.f32 0.0, %v6007
        %v6009 = vpop.f32.mrb[0].mxu0
        %6010 = vmatprep.mubr.f32.mxu0 0.0
        %6011 = vmatmul.mubr.f32.gmra.mrb[0].mxu0 %v5827
        %v6012 = vpop.f32.mrb[0].mxu0
        %v6013 = vadd.f32 0.0, %v6012
        %v6014 = vpop.f32.mrb[0].mxu0
        %6015 = vmatprep.mubr.f32.mxu0 0.0
        %6016 = vmatmul.mubr.f32.gmra.mrb[0].mxu0 %v5830
        %v6017 = vpop.f32.mrb[0].mxu0
        %v6018 = vadd.f32 0.0, %v6017
        %v6019 = vpop.f32.mrb[0].mxu0
        %6020 = vmatprep.mubr.f32.mxu0 0.0
        %6021 = vmatmul.mubr.f32.gmra.mrb[0].mxu0 %v5833
        %v6022 = vpop.f32.mrb[0].mxu0
        %v6023 = vadd.f32 0.0, %v6022
        %v6024 = vpop.f32.mrb[0].mxu0
        %6025 = vmatprep.mubr.f32.mxu0 0.0
        %6026 = vmatmul.mubr.f32.gmra.mrb[0].mxu0 %v5836
        %v6027 = vpop.f32.mrb[0].mxu0
        %v6028 = vadd.f32 0.0, %v6027
        %v6029 = vpop.f32.mrb[0].mxu0
        %6030 = vmatprep.mubr.f32.mxu0 0.0
        %6031 = vmatmul.mubr.f32.gmra.mrb[0].mxu0 %v5839
        %v6032 = vpop.f32.mrb[0].mxu0
        %v6033 = vadd.f32 0.0, %v6032
        %v6034 = vpop.f32.mrb[0].mxu0
        %6035 = vmatprep.mubr.f32.mxu0 0.0
        %6036 = vmatmul.mubr.f32.gmra.mrb[0].mxu0 %v5842
        %v6037 = vpop.f32.mrb[0].mxu0
        %v6038 = vadd.f32 0.0, %v6037
        %v6039 = vpop.f32.mrb[0].mxu0
        %6040 = vmatprep.mubr.f32.mxu0 0.0
        %6041 = vmatmul.mubr.f32.gmra.mrb[0].mxu0 %v5845
        %v6042 = vpop.f32.mrb[0].mxu0
        %v6043 = vadd.f32 0.0, %v6042
        %v6044 = vpop.f32.mrb[0].mxu0
        %6045 = vmatprep.mubr.f32.mxu0 0.0
        %6046 = vmatmul.mubr.f32.gmra.mrb[0].mxu0 %v5848
        %v6047 = vpop.f32.mrb[0].mxu0
        %v6048 = vadd.f32 0.0, %v6047
        %v6049 = vpop.f32.mrb[0].mxu0
        %6050 = vmatprep.mubr.f32.mxu0 0.0
        %6051 = vmatmul.mubr.f32.gmra.mrb[0].mxu0 %v5851
        %v6052 = vpop.f32.mrb[0].mxu0
        %v6053 = vadd.f32 0.0, %v6052
        %v6054 = vpop.f32.mrb[0].mxu0
        %6055 = vmatprep.mubr.f32.mxu0 0.0
        %6056 = vmatmul.mubr.f32.gmra.mrb[0].mxu0 %v5854
        %v6057 = vpop.f32.mrb[0].mxu0
        %v6058 = vadd.f32 0.0, %v6057
        %v6059 = vpop.f32.mrb[0].mxu0
        %6060 = vmatprep.mubr.f32.mxu0 0.0
        %6061 = vmatmul.mubr.f32.gmra.mrb[0].mxu0 %v5857
        %v6062 = vpop.f32.mrb[0].mxu0
        %v6063 = vadd.f32 0.0, %v6062
        %v6064 = vpop.f32.mrb[0].mxu0
        %6065 = vmatprep.mubr.f32.mxu0 0.0
        %6066 = vmatmul.mubr.f32.gmra.mrb[0].mxu0 %v5860
        %v6067 = vpop.f32.mrb[0].mxu0
        %v6068 = vadd.f32 0.0, %v6067
        %v6069 = vpop.f32.mrb[0].mxu0
        %6070 = vmatprep.mubr.f32.mxu0 0.0
        %6071 = vmatmul.mubr.f32.gmra.mrb[0].mxu0 %v5863
        %v6072 = vpop.f32.mrb[0].mxu0
        %v6073 = vadd.f32 0.0, %v6072
        %v6074 = vpop.f32.mrb[0].mxu0
        %6075 = vmatprep.mubr.f32.mxu0 0.0
        %6076 = vmatmul.mubr.f32.gmra.mrb[0].mxu0 %v5866
        %v6077 = vpop.f32.mrb[0].mxu0
        %v6078 = vadd.f32 0.0, %v6077
        %v6079 = vpop.f32.mrb[0].mxu0
        %6080 = vmatprep.mubr.f32.mxu0 0.0
        %6081 = vmatmul.mubr.f32.gmra.mrb[0].mxu0 %v5869
        %v6082 = vpop.f32.mrb[0].mxu0
        %v6083 = vadd.f32 0.0, %v6082
        %v6084 = vpop.f32.mrb[0].mxu0
        %6085 = vmatprep.mubr.f32.mxu0 0.0
        %6086 = vmatmul.mubr.f32.gmra.mrb[0].mxu0 %v5872
        %v6087 = vpop.f32.mrb[0].mxu0
        %v6088 = vadd.f32 0.0, %v6087
        %v6089 = vpop.f32.mrb[0].mxu0
        %6090 = vmatprep.mubr.f32.mxu0 0.0
        %6091 = vmatmul.mubr.f32.gmra.mrb[0].mxu0 %v5875
        %v6092 = vpop.f32.mrb[0].mxu0
        %v6093 = vadd.f32 0.0, %v6092
        %v6094 = vpop.f32.mrb[0].mxu0
        %6095 = vmatprep.mubr.f32.mxu0 0.0
        %6096 = vmatmul.mubr.f32.gmra.mrb[0].mxu0 %v5878
        %v6097 = vpop.f32.mrb[0].mxu0
        %v6098 = vadd.f32 0.0, %v6097
        %v6099 = vpop.f32.mrb[0].mxu0
        %6100 = vmatprep.mubr.f32.mxu0 0.0
        %6101 = vmatmul.mubr.f32.gmra.mrb[0].mxu0 %v5881
        %v6102 = vpop.f32.mrb[0].mxu0
        %v6103 = vadd.f32 0.0, %v6102
        %v6104 = vpop.f32.mrb[0].mxu0
        %6105 = vmatprep.mubr.f32.mxu0 0.0
        %6106 = vmatmul.mubr.f32.gmra.mrb[0].mxu0 %v5884
        %v6107 = vpop.f32.mrb[0].mxu0
        %v6108 = vadd.f32 0.0, %v6107
        %v6109 = vpop.f32.mrb[0].mxu0
        %6110 = vdwg.mxu0
        %v6111 = vadd.f32 %v5724, %v5953
        %v6112 = vadd.f32 %v5725, %v5958
        %v6113 = vadd.f32 %v5726, %v5963
        %v6114 = vadd.f32 %v5727, %v5968
        %v6115 = vadd.f32 %v5728, %v5973
        %v6116 = vadd.f32 %v5729, %v5978
        %v6117 = vadd.f32 %v5730, %v5983
        %v6118 = vadd.f32 %v5731, %v5988
        %v6119 = vadd.f32 %v5732, %v5993
        %v6120 = vadd.f32 %v5733, %v5998
        %v6121 = vadd.f32 %v5734, %v6003
        %v6122 = vadd.f32 %v5735, %v6008
        %v6123 = vadd.f32 %v5736, %v6013
        %v6124 = vadd.f32 %v5737, %v6018
        %v6125 = vadd.f32 %v5738, %v6023
        %v6126 = vadd.f32 %v5739, %v6028
        %v6127 = vadd.f32 %v5740, %v6033
        %v6128 = vadd.f32 %v5741, %v6038
        %v6129 = vadd.f32 %v5742, %v6043
        %v6130 = vadd.f32 %v5743, %v6048
        %v6131 = vadd.f32 %v5744, %v6053
        %v6132 = vadd.f32 %v5745, %v6058
        %v6133 = vadd.f32 %v5746, %v6063
        %v6134 = vadd.f32 %v5747, %v6068
        %v6135 = vadd.f32 %v5748, %v6073
        %v6136 = vadd.f32 %v5749, %v6078
        %v6137 = vadd.f32 %v5750, %v6083
        %v6138 = vadd.f32 %v5751, %v6088
        %v6139 = vadd.f32 %v5752, %v6093
        %v6140 = vadd.f32 %v5753, %v6098
        %v6141 = vadd.f32 %v5754, %v6103
        %v6142 = vadd.f32 %v5755, %v6108
        %s6143 = scalar_lea.vmem [#allocation2], 48
        %v6144 = vld [vmem:[%s6143] sm:$0xff]
        %v6145 = vld [vmem:[%s6143 + $0x8] sm:$0xff]
        %v6146 = vld [vmem:[%s6143 + $0x18] sm:$0xff]
        %v6147 = vld [vmem:[%s6143 + $0x20] sm:$0xff]
        %v6148 = vld [vmem:[%s6143 + $0x30] sm:$0xff]
        %v6149 = vld [vmem:[%s6143 + $0x38] sm:$0xff]
        %v6150 = vld [vmem:[%s6143 + $0x48] sm:$0xff]
        %v6151 = vld [vmem:[%s6143 + $0x50] sm:$0xff]
        %v6152 = vld [vmem:[%s6143 + $0x60] sm:$0xff]
        %v6153 = vld [vmem:[%s6143 + $0x68] sm:$0xff]
        %v6154 = vld [vmem:[%s6143 + $0x78] sm:$0xff]
        %v6155 = vld [vmem:[%s6143 + $0x80] sm:$0xff]
        %v6156 = vld [vmem:[%s6143 + $0x90] sm:$0xff]
        %v6157 = vld [vmem:[%s6143 + $0x98] sm:$0xff]
        %v6158 = vld [vmem:[%s6143 + $0xa8] sm:$0xff]
        %v6159 = vld [vmem:[%s6143 + $0xb0] sm:$0xff]
        %v6160 = vld [vmem:[%s6143 + $0xc0] sm:$0xff]
        %v6161 = vld [vmem:[%s6143 + $0xc8] sm:$0xff]
        %v6162 = vld [vmem:[%s6143 + $0xd8] sm:$0xff]
        %v6163 = vld [vmem:[%s6143 + $0xe0] sm:$0xff]
        %v6164 = vld [vmem:[%s6143 + $0xf0] sm:$0xff]
        %v6165 = vld [vmem:[%s6143 + $0xf8] sm:$0xff]
        %v6166 = vld [vmem:[%s6143 + $0x108] sm:$0xff]
        %v6167 = vld [vmem:[%s6143 + $0x110] sm:$0xff]
        %v6168 = vld [vmem:[%s6143 + $0x120] sm:$0xff]
        %v6169 = vld [vmem:[%s6143 + $0x128] sm:$0xff]
        %v6170 = vld [vmem:[%s6143 + $0x138] sm:$0xff]
        %v6171 = vld [vmem:[%s6143 + $0x140] sm:$0xff]
        %v6172 = vld [vmem:[%s6143 + $0x150] sm:$0xff]
        %v6173 = vld [vmem:[%s6143 + $0x158] sm:$0xff]
        %v6174 = vld [vmem:[%s6143 + $0x168] sm:$0xff]
        %v6175 = vld [vmem:[%s6143 + $0x170] sm:$0xff]
        %s6176 = scalar_lea.vmem %s3, 48
        %v6177 = vld [vmem:[%s6176] sm:$0xff]
        %v6179 = vsel %vm3807, %v6144, 0
        %v6182 = vsel %vm3807, %v6145, 0
        %v6185 = vsel %vm3807, %v6146, 0
        %v6188 = vsel %vm3807, %v6147, 0
        %v6191 = vsel %vm3807, %v6148, 0
        %v6194 = vsel %vm3807, %v6149, 0
        %v6197 = vsel %vm3807, %v6150, 0
        %v6200 = vsel %vm3807, %v6151, 0
        %v6203 = vsel %vm3807, %v6152, 0
        %v6206 = vsel %vm3807, %v6153, 0
        %v6209 = vsel %vm3807, %v6154, 0
        %v6212 = vsel %vm3807, %v6155, 0
        %v6215 = vsel %vm3807, %v6156, 0
        %v6218 = vsel %vm3807, %v6157, 0
        %v6221 = vsel %vm3807, %v6158, 0
        %v6224 = vsel %vm3807, %v6159, 0
        %v6227 = vsel %vm3807, %v6160, 0
        %v6230 = vsel %vm3807, %v6161, 0
        %v6233 = vsel %vm3807, %v6162, 0
        %v6236 = vsel %vm3807, %v6163, 0
        %v6239 = vsel %vm3807, %v6164, 0
        %v6242 = vsel %vm3807, %v6165, 0
        %v6245 = vsel %vm3807, %v6166, 0
        %v6248 = vsel %vm3807, %v6167, 0
        %v6251 = vsel %vm3807, %v6168, 0
        %v6254 = vsel %vm3807, %v6169, 0
        %v6257 = vsel %vm3807, %v6170, 0
        %v6260 = vsel %vm3807, %v6171, 0
        %v6263 = vsel %vm3807, %v6172, 0
        %v6266 = vsel %vm3807, %v6173, 0
        %v6269 = vsel %vm3807, %v6174, 0
        %v6272 = vsel %vm3807, %v6175, 0
        %6274 = vmatprep.subr.mxu0 0.0
        %6275 = vmatpush1.msra.mxu0 %v6177
        %6276 = vmatprep.subr.mxu0 0.0
        %6277 = vmatpush1.msra.mxu0 0.0
        %6278 = vmatprep.subr.mxu0 0.0
        %6279 = vmatpush1.msra.mxu0 0.0
        %6280 = vmatprep.subr.mxu0 0.0
        %6281 = vmatpush1.msra.mxu0 0.0
        %6282 = vmatprep.subr.mxu0 0.0
        %6283 = vmatpush1.msra.mxu0 0.0
        %6284 = vmatprep.subr.mxu0 0.0
        %6285 = vmatpush1.msra.mxu0 0.0
        %6286 = vmatprep.subr.mxu0 0.0
        %6287 = vmatpush1.msra.mxu0 0.0
        %6288 = vmatprep.subr.mxu0 0.0
        %6289 = vmatpush1.msra.mxu0 0.0
        %6290 = vmatprep.subr.mxu0 0.0
        %6291 = vmatpush1.msra.mxu0 0.0
        %6292 = vmatprep.subr.mxu0 0.0
        %6293 = vmatpush1.msra.mxu0 0.0
        %6294 = vmatprep.subr.mxu0 0.0
        %6295 = vmatpush1.msra.mxu0 0.0
        %6296 = vmatprep.subr.mxu0 0.0
        %6297 = vmatpush1.msra.mxu0 0.0
        %6298 = vmatprep.subr.mxu0 0.0
        %6299 = vmatpush1.msra.mxu0 0.0
        %6300 = vmatprep.subr.mxu0 0.0
        %6301 = vmatpush1.msra.mxu0 0.0
        %6302 = vmatprep.subr.mxu0 0.0
        %6303 = vmatpush1.msra.mxu0 0.0
        %6304 = vmatprep.subr.mxu0 0.0
        %6305 = vmatpush1.msra.mxu0 0.0
        %6306 = vmatprep.subr.mxu0 0.0
        %6307 = vmatpush1.msra.mxu0 0.0
        %6308 = vmatprep.subr.mxu0 0.0
        %6309 = vmatpush1.msra.mxu0 0.0
        %6310 = vmatprep.subr.mxu0 0.0
        %6311 = vmatpush1.msra.mxu0 0.0
        %6312 = vmatprep.subr.mxu0 0.0
        %6313 = vmatpush1.msra.mxu0 0.0
        %6314 = vmatprep.subr.mxu0 0.0
        %6315 = vmatpush1.msra.mxu0 0.0
        %6316 = vmatprep.subr.mxu0 0.0
        %6317 = vmatpush1.msra.mxu0 0.0
        %6318 = vmatprep.subr.mxu0 0.0
        %6319 = vmatpush1.msra.mxu0 0.0
        %6320 = vmatprep.subr.mxu0 0.0
        %6321 = vmatpush1.msra.mxu0 0.0
        %6322 = vmatprep.subr.mxu0 0.0
        %6323 = vmatpush1.msra.mxu0 0.0
        %6324 = vmatprep.subr.mxu0 0.0
        %6325 = vmatpush1.msra.mxu0 0.0
        %6326 = vmatprep.subr.mxu0 0.0
        %6327 = vmatpush1.msra.mxu0 0.0
        %6328 = vmatprep.subr.mxu0 0.0
        %6329 = vmatpush1.msra.mxu0 0.0
        %6330 = vmatprep.subr.mxu0 0.0
        %6331 = vmatpush1.msra.mxu0 0.0
        %6332 = vmatprep.subr.mxu0 0.0
        %6333 = vmatpush1.msra.mxu0 0.0
        %6334 = vmatprep.subr.mxu0 0.0
        %6335 = vmatpush1.msra.mxu0 0.0
        %6336 = vmatprep.subr.mxu0 0.0
        %6337 = vmatpush1.msra.mxu0 0.0
        %6338 = vmatprep.mubr.f32.mxu0 0.0
        %6339 = vmatmul.mubr.f32.gmra.mrb[0].mxu0 %v6179
        %v6340 = vpop.f32.mrb[0].mxu0
        %v6341 = vadd.f32 0.0, %v6340
        %v6342 = vpop.f32.mrb[0].mxu0
        %6343 = vmatprep.mubr.f32.mxu0 0.0
        %6344 = vmatmul.mubr.f32.gmra.mrb[0].mxu0 %v6182
        %v6345 = vpop.f32.mrb[0].mxu0
        %v6346 = vadd.f32 0.0, %v6345
        %v6347 = vpop.f32.mrb[0].mxu0
        %6348 = vmatprep.mubr.f32.mxu0 0.0
        %6349 = vmatmul.mubr.f32.gmra.mrb[0].mxu0 %v6185
        %v6350 = vpop.f32.mrb[0].mxu0
        %v6351 = vadd.f32 0.0, %v6350
        %v6352 = vpop.f32.mrb[0].mxu0
        %6353 = vmatprep.mubr.f32.mxu0 0.0
        %6354 = vmatmul.mubr.f32.gmra.mrb[0].mxu0 %v6188
        %v6355 = vpop.f32.mrb[0].mxu0
        %v6356 = vadd.f32 0.0, %v6355
        %v6357 = vpop.f32.mrb[0].mxu0
        %6358 = vmatprep.mubr.f32.mxu0 0.0
        %6359 = vmatmul.mubr.f32.gmra.mrb[0].mxu0 %v6191
        %v6360 = vpop.f32.mrb[0].mxu0
        %v6361 = vadd.f32 0.0, %v6360
        %v6362 = vpop.f32.mrb[0].mxu0
        %6363 = vmatprep.mubr.f32.mxu0 0.0
        %6364 = vmatmul.mubr.f32.gmra.mrb[0].mxu0 %v6194
        %v6365 = vpop.f32.mrb[0].mxu0
        %v6366 = vadd.f32 0.0, %v6365
        %v6367 = vpop.f32.mrb[0].mxu0
        %6368 = vmatprep.mubr.f32.mxu0 0.0
        %6369 = vmatmul.mubr.f32.gmra.mrb[0].mxu0 %v6197
        %v6370 = vpop.f32.mrb[0].mxu0
        %v6371 = vadd.f32 0.0, %v6370
        %v6372 = vpop.f32.mrb[0].mxu0
        %6373 = vmatprep.mubr.f32.mxu0 0.0
        %6374 = vmatmul.mubr.f32.gmra.mrb[0].mxu0 %v6200
        %v6375 = vpop.f32.mrb[0].mxu0
        %v6376 = vadd.f32 0.0, %v6375
        %v6377 = vpop.f32.mrb[0].mxu0
        %6378 = vmatprep.mubr.f32.mxu0 0.0
        %6379 = vmatmul.mubr.f32.gmra.mrb[0].mxu0 %v6203
        %v6380 = vpop.f32.mrb[0].mxu0
        %v6381 = vadd.f32 0.0, %v6380
        %v6382 = vpop.f32.mrb[0].mxu0
        %6383 = vmatprep.mubr.f32.mxu0 0.0
        %6384 = vmatmul.mubr.f32.gmra.mrb[0].mxu0 %v6206
        %v6385 = vpop.f32.mrb[0].mxu0
        %v6386 = vadd.f32 0.0, %v6385
        %v6387 = vpop.f32.mrb[0].mxu0
        %6388 = vmatprep.mubr.f32.mxu0 0.0
        %6389 = vmatmul.mubr.f32.gmra.mrb[0].mxu0 %v6209
        %v6390 = vpop.f32.mrb[0].mxu0
        %v6391 = vadd.f32 0.0, %v6390
        %v6392 = vpop.f32.mrb[0].mxu0
        %6393 = vmatprep.mubr.f32.mxu0 0.0
        %6394 = vmatmul.mubr.f32.gmra.mrb[0].mxu0 %v6212
        %v6395 = vpop.f32.mrb[0].mxu0
        %v6396 = vadd.f32 0.0, %v6395
        %v6397 = vpop.f32.mrb[0].mxu0
        %6398 = vmatprep.mubr.f32.mxu0 0.0
        %6399 = vmatmul.mubr.f32.gmra.mrb[0].mxu0 %v6215
        %v6400 = vpop.f32.mrb[0].mxu0
        %v6401 = vadd.f32 0.0, %v6400
        %v6402 = vpop.f32.mrb[0].mxu0
        %6403 = vmatprep.mubr.f32.mxu0 0.0
        %6404 = vmatmul.mubr.f32.gmra.mrb[0].mxu0 %v6218
        %v6405 = vpop.f32.mrb[0].mxu0
        %v6406 = vadd.f32 0.0, %v6405
        %v6407 = vpop.f32.mrb[0].mxu0
        %6408 = vmatprep.mubr.f32.mxu0 0.0
        %6409 = vmatmul.mubr.f32.gmra.mrb[0].mxu0 %v6221
        %v6410 = vpop.f32.mrb[0].mxu0
        %v6411 = vadd.f32 0.0, %v6410
        %v6412 = vpop.f32.mrb[0].mxu0
        %6413 = vmatprep.mubr.f32.mxu0 0.0
        %6414 = vmatmul.mubr.f32.gmra.mrb[0].mxu0 %v6224
        %v6415 = vpop.f32.mrb[0].mxu0
        %v6416 = vadd.f32 0.0, %v6415
        %v6417 = vpop.f32.mrb[0].mxu0
        %6418 = vmatprep.mubr.f32.mxu0 0.0
        %6419 = vmatmul.mubr.f32.gmra.mrb[0].mxu0 %v6227
        %v6420 = vpop.f32.mrb[0].mxu0
        %v6421 = vadd.f32 0.0, %v6420
        %v6422 = vpop.f32.mrb[0].mxu0
        %6423 = vmatprep.mubr.f32.mxu0 0.0
        %6424 = vmatmul.mubr.f32.gmra.mrb[0].mxu0 %v6230
        %v6425 = vpop.f32.mrb[0].mxu0
        %v6426 = vadd.f32 0.0, %v6425
        %v6427 = vpop.f32.mrb[0].mxu0
        %6428 = vmatprep.mubr.f32.mxu0 0.0
        %6429 = vmatmul.mubr.f32.gmra.mrb[0].mxu0 %v6233
        %v6430 = vpop.f32.mrb[0].mxu0
        %v6431 = vadd.f32 0.0, %v6430
        %v6432 = vpop.f32.mrb[0].mxu0
        %6433 = vmatprep.mubr.f32.mxu0 0.0
        %6434 = vmatmul.mubr.f32.gmra.mrb[0].mxu0 %v6236
        %v6435 = vpop.f32.mrb[0].mxu0
        %v6436 = vadd.f32 0.0, %v6435
        %v6437 = vpop.f32.mrb[0].mxu0
        %6438 = vmatprep.mubr.f32.mxu0 0.0
        %6439 = vmatmul.mubr.f32.gmra.mrb[0].mxu0 %v6239
        %v6440 = vpop.f32.mrb[0].mxu0
        %v6441 = vadd.f32 0.0, %v6440
        %v6442 = vpop.f32.mrb[0].mxu0
        %6443 = vmatprep.mubr.f32.mxu0 0.0
        %6444 = vmatmul.mubr.f32.gmra.mrb[0].mxu0 %v6242
        %v6445 = vpop.f32.mrb[0].mxu0
        %v6446 = vadd.f32 0.0, %v6445
        %v6447 = vpop.f32.mrb[0].mxu0
        %6448 = vmatprep.mubr.f32.mxu0 0.0
        %6449 = vmatmul.mubr.f32.gmra.mrb[0].mxu0 %v6245
        %v6450 = vpop.f32.mrb[0].mxu0
        %v6451 = vadd.f32 0.0, %v6450
        %v6452 = vpop.f32.mrb[0].mxu0
        %6453 = vmatprep.mubr.f32.mxu0 0.0
        %6454 = vmatmul.mubr.f32.gmra.mrb[0].mxu0 %v6248
        %v6455 = vpop.f32.mrb[0].mxu0
        %v6456 = vadd.f32 0.0, %v6455
        %v6457 = vpop.f32.mrb[0].mxu0
        %6458 = vmatprep.mubr.f32.mxu0 0.0
        %6459 = vmatmul.mubr.f32.gmra.mrb[0].mxu0 %v6251
        %v6460 = vpop.f32.mrb[0].mxu0
        %v6461 = vadd.f32 0.0, %v6460
        %v6462 = vpop.f32.mrb[0].mxu0
        %6463 = vmatprep.mubr.f32.mxu0 0.0
        %6464 = vmatmul.mubr.f32.gmra.mrb[0].mxu0 %v6254
        %v6465 = vpop.f32.mrb[0].mxu0
        %v6466 = vadd.f32 0.0, %v6465
        %v6467 = vpop.f32.mrb[0].mxu0
        %6468 = vmatprep.mubr.f32.mxu0 0.0
        %6469 = vmatmul.mubr.f32.gmra.mrb[0].mxu0 %v6257
        %v6470 = vpop.f32.mrb[0].mxu0
        %v6471 = vadd.f32 0.0, %v6470
        %v6472 = vpop.f32.mrb[0].mxu0
        %6473 = vmatprep.mubr.f32.mxu0 0.0
        %6474 = vmatmul.mubr.f32.gmra.mrb[0].mxu0 %v6260
        %v6475 = vpop.f32.mrb[0].mxu0
        %v6476 = vadd.f32 0.0, %v6475
        %v6477 = vpop.f32.mrb[0].mxu0
        %6478 = vmatprep.mubr.f32.mxu0 0.0
        %6479 = vmatmul.mubr.f32.gmra.mrb[0].mxu0 %v6263
        %v6480 = vpop.f32.mrb[0].mxu0
        %v6481 = vadd.f32 0.0, %v6480
        %v6482 = vpop.f32.mrb[0].mxu0
        %6483 = vmatprep.mubr.f32.mxu0 0.0
        %6484 = vmatmul.mubr.f32.gmra.mrb[0].mxu0 %v6266
        %v6485 = vpop.f32.mrb[0].mxu0
        %v6486 = vadd.f32 0.0, %v6485
        %v6487 = vpop.f32.mrb[0].mxu0
        %6488 = vmatprep.mubr.f32.mxu0 0.0
        %6489 = vmatmul.mubr.f32.gmra.mrb[0].mxu0 %v6269
        %v6490 = vpop.f32.mrb[0].mxu0
        %v6491 = vadd.f32 0.0, %v6490
        %v6492 = vpop.f32.mrb[0].mxu0
        %6493 = vmatprep.mubr.f32.mxu0 0.0
        %6494 = vmatmul.mubr.f32.gmra.mrb[0].mxu0 %v6272
        %v6495 = vpop.f32.mrb[0].mxu0
        %v6496 = vadd.f32 0.0, %v6495
        %v6497 = vpop.f32.mrb[0].mxu0
        %6498 = vdwg.mxu0
        %v6499 = vadd.f32 %v6111, %v6341
        %v6500 = vadd.f32 %v6112, %v6346
        %v6501 = vadd.f32 %v6113, %v6351
        %v6502 = vadd.f32 %v6114, %v6356
        %v6503 = vadd.f32 %v6115, %v6361
        %v6504 = vadd.f32 %v6116, %v6366
        %v6505 = vadd.f32 %v6117, %v6371
        %v6506 = vadd.f32 %v6118, %v6376
        %v6507 = vadd.f32 %v6119, %v6381
        %v6508 = vadd.f32 %v6120, %v6386
        %v6509 = vadd.f32 %v6121, %v6391
        %v6510 = vadd.f32 %v6122, %v6396
        %v6511 = vadd.f32 %v6123, %v6401
        %v6512 = vadd.f32 %v6124, %v6406
        %v6513 = vadd.f32 %v6125, %v6411
        %v6514 = vadd.f32 %v6126, %v6416
        %v6515 = vadd.f32 %v6127, %v6421
        %v6516 = vadd.f32 %v6128, %v6426
        %v6517 = vadd.f32 %v6129, %v6431
        %v6518 = vadd.f32 %v6130, %v6436
        %v6519 = vadd.f32 %v6131, %v6441
        %v6520 = vadd.f32 %v6132, %v6446
        %v6521 = vadd.f32 %v6133, %v6451
        %v6522 = vadd.f32 %v6134, %v6456
        %v6523 = vadd.f32 %v6135, %v6461
        %v6524 = vadd.f32 %v6136, %v6466
        %v6525 = vadd.f32 %v6137, %v6471
        %v6526 = vadd.f32 %v6138, %v6476
        %v6527 = vadd.f32 %v6139, %v6481
        %v6528 = vadd.f32 %v6140, %v6486
        %v6529 = vadd.f32 %v6141, %v6491
        %v6530 = vadd.f32 %v6142, %v6496
        %v6531 = vld [vmem:[%s6143 + $0x1] sm:$0xff]
        %v6532 = vld [vmem:[%s6143 + $0x9] sm:$0xff]
        %v6533 = vld [vmem:[%s6143 + $0x19] sm:$0xff]
        %v6534 = vld [vmem:[%s6143 + $0x21] sm:$0xff]
        %v6535 = vld [vmem:[%s6143 + $0x31] sm:$0xff]
        %v6536 = vld [vmem:[%s6143 + $0x39] sm:$0xff]
        %v6537 = vld [vmem:[%s6143 + $0x49] sm:$0xff]
        %v6538 = vld [vmem:[%s6143 + $0x51] sm:$0xff]
        %v6539 = vld [vmem:[%s6143 + $0x61] sm:$0xff]
        %v6540 = vld [vmem:[%s6143 + $0x69] sm:$0xff]
        %v6541 = vld [vmem:[%s6143 + $0x79] sm:$0xff]
        %v6542 = vld [vmem:[%s6143 + $0x81] sm:$0xff]
        %v6543 = vld [vmem:[%s6143 + $0x91] sm:$0xff]
        %v6544 = vld [vmem:[%s6143 + $0x99] sm:$0xff]
        %v6545 = vld [vmem:[%s6143 + $0xa9] sm:$0xff]
        %v6546 = vld [vmem:[%s6143 + $0xb1] sm:$0xff]
        %v6547 = vld [vmem:[%s6143 + $0xc1] sm:$0xff]
        %v6548 = vld [vmem:[%s6143 + $0xc9] sm:$0xff]
        %v6549 = vld [vmem:[%s6143 + $0xd9] sm:$0xff]
        %v6550 = vld [vmem:[%s6143 + $0xe1] sm:$0xff]
        %v6551 = vld [vmem:[%s6143 + $0xf1] sm:$0xff]
        %v6552 = vld [vmem:[%s6143 + $0xf9] sm:$0xff]
        %v6553 = vld [vmem:[%s6143 + $0x109] sm:$0xff]
        %v6554 = vld [vmem:[%s6143 + $0x111] sm:$0xff]
        %v6555 = vld [vmem:[%s6143 + $0x121] sm:$0xff]
        %v6556 = vld [vmem:[%s6143 + $0x129] sm:$0xff]
        %v6557 = vld [vmem:[%s6143 + $0x139] sm:$0xff]
        %v6558 = vld [vmem:[%s6143 + $0x141] sm:$0xff]
        %v6559 = vld [vmem:[%s6143 + $0x151] sm:$0xff]
        %v6560 = vld [vmem:[%s6143 + $0x159] sm:$0xff]
        %v6561 = vld [vmem:[%s6143 + $0x169] sm:$0xff]
        %v6562 = vld [vmem:[%s6143 + $0x171] sm:$0xff]
        %s6563 = scalar_lea.vmem %s3, 56
        %v6564 = vld [vmem:[%s6563] sm:$0xff]
        %v6566 = vsel %vm3807, %v6531, 0
        %v6569 = vsel %vm3807, %v6532, 0
        %v6572 = vsel %vm3807, %v6533, 0
        %v6575 = vsel %vm3807, %v6534, 0
        %v6578 = vsel %vm3807, %v6535, 0
        %v6581 = vsel %vm3807, %v6536, 0
        %v6584 = vsel %vm3807, %v6537, 0
        %v6587 = vsel %vm3807, %v6538, 0
        %v6590 = vsel %vm3807, %v6539, 0
        %v6593 = vsel %vm3807, %v6540, 0
        %v6596 = vsel %vm3807, %v6541, 0
        %v6599 = vsel %vm3807, %v6542, 0
        %v6602 = vsel %vm3807, %v6543, 0
        %v6605 = vsel %vm3807, %v6544, 0
        %v6608 = vsel %vm3807, %v6545, 0
        %v6611 = vsel %vm3807, %v6546, 0
        %v6614 = vsel %vm3807, %v6547, 0
        %v6617 = vsel %vm3807, %v6548, 0
        %v6620 = vsel %vm3807, %v6549, 0
        %v6623 = vsel %vm3807, %v6550, 0
        %v6626 = vsel %vm3807, %v6551, 0
        %v6629 = vsel %vm3807, %v6552, 0
        %v6632 = vsel %vm3807, %v6553, 0
        %v6635 = vsel %vm3807, %v6554, 0
        %v6638 = vsel %vm3807, %v6555, 0
        %v6641 = vsel %vm3807, %v6556, 0
        %v6644 = vsel %vm3807, %v6557, 0
        %v6647 = vsel %vm3807, %v6558, 0
        %v6650 = vsel %vm3807, %v6559, 0
        %v6653 = vsel %vm3807, %v6560, 0
        %v6656 = vsel %vm3807, %v6561, 0
        %v6659 = vsel %vm3807, %v6562, 0
        %6661 = vmatprep.subr.mxu0 0.0
        %6662 = vmatpush1.msra.mxu0 %v6564
        %6663 = vmatprep.subr.mxu0 0.0
        %6664 = vmatpush1.msra.mxu0 0.0
        %6665 = vmatprep.subr.mxu0 0.0
        %6666 = vmatpush1.msra.mxu0 0.0
        %6667 = vmatprep.subr.mxu0 0.0
        %6668 = vmatpush1.msra.mxu0 0.0
        %6669 = vmatprep.subr.mxu0 0.0
        %6670 = vmatpush1.msra.mxu0 0.0
        %6671 = vmatprep.subr.mxu0 0.0
        %6672 = vmatpush1.msra.mxu0 0.0
        %6673 = vmatprep.subr.mxu0 0.0
        %6674 = vmatpush1.msra.mxu0 0.0
        %6675 = vmatprep.subr.mxu0 0.0
        %6676 = vmatpush1.msra.mxu0 0.0
        %6677 = vmatprep.subr.mxu0 0.0
        %6678 = vmatpush1.msra.mxu0 0.0
        %6679 = vmatprep.subr.mxu0 0.0
        %6680 = vmatpush1.msra.mxu0 0.0
        %6681 = vmatprep.subr.mxu0 0.0
        %6682 = vmatpush1.msra.mxu0 0.0
        %6683 = vmatprep.subr.mxu0 0.0
        %6684 = vmatpush1.msra.mxu0 0.0
        %6685 = vmatprep.subr.mxu0 0.0
        %6686 = vmatpush1.msra.mxu0 0.0
        %6687 = vmatprep.subr.mxu0 0.0
        %6688 = vmatpush1.msra.mxu0 0.0
        %6689 = vmatprep.subr.mxu0 0.0
        %6690 = vmatpush1.msra.mxu0 0.0
        %6691 = vmatprep.subr.mxu0 0.0
        %6692 = vmatpush1.msra.mxu0 0.0
        %6693 = vmatprep.subr.mxu0 0.0
        %6694 = vmatpush1.msra.mxu0 0.0
        %6695 = vmatprep.subr.mxu0 0.0
        %6696 = vmatpush1.msra.mxu0 0.0
        %6697 = vmatprep.subr.mxu0 0.0
        %6698 = vmatpush1.msra.mxu0 0.0
        %6699 = vmatprep.subr.mxu0 0.0
        %6700 = vmatpush1.msra.mxu0 0.0
        %6701 = vmatprep.subr.mxu0 0.0
        %6702 = vmatpush1.msra.mxu0 0.0
        %6703 = vmatprep.subr.mxu0 0.0
        %6704 = vmatpush1.msra.mxu0 0.0
        %6705 = vmatprep.subr.mxu0 0.0
        %6706 = vmatpush1.msra.mxu0 0.0
        %6707 = vmatprep.subr.mxu0 0.0
        %6708 = vmatpush1.msra.mxu0 0.0
        %6709 = vmatprep.subr.mxu0 0.0
        %6710 = vmatpush1.msra.mxu0 0.0
        %6711 = vmatprep.subr.mxu0 0.0
        %6712 = vmatpush1.msra.mxu0 0.0
        %6713 = vmatprep.subr.mxu0 0.0
        %6714 = vmatpush1.msra.mxu0 0.0
        %6715 = vmatprep.subr.mxu0 0.0
        %6716 = vmatpush1.msra.mxu0 0.0
        %6717 = vmatprep.subr.mxu0 0.0
        %6718 = vmatpush1.msra.mxu0 0.0
        %6719 = vmatprep.subr.mxu0 0.0
        %6720 = vmatpush1.msra.mxu0 0.0
        %6721 = vmatprep.subr.mxu0 0.0
        %6722 = vmatpush1.msra.mxu0 0.0
        %6723 = vmatprep.subr.mxu0 0.0
        %6724 = vmatpush1.msra.mxu0 0.0
        %6725 = vmatprep.mubr.f32.mxu0 0.0
        %6726 = vmatmul.mubr.f32.gmra.mrb[0].mxu0 %v6566
        %v6727 = vpop.f32.mrb[0].mxu0
        %v6728 = vadd.f32 0.0, %v6727
        %v6729 = vpop.f32.mrb[0].mxu0
        %6730 = vmatprep.mubr.f32.mxu0 0.0
        %6731 = vmatmul.mubr.f32.gmra.mrb[0].mxu0 %v6569
        %v6732 = vpop.f32.mrb[0].mxu0
        %v6733 = vadd.f32 0.0, %v6732
        %v6734 = vpop.f32.mrb[0].mxu0
        %6735 = vmatprep.mubr.f32.mxu0 0.0
        %6736 = vmatmul.mubr.f32.gmra.mrb[0].mxu0 %v6572
        %v6737 = vpop.f32.mrb[0].mxu0
        %v6738 = vadd.f32 0.0, %v6737
        %v6739 = vpop.f32.mrb[0].mxu0
        %6740 = vmatprep.mubr.f32.mxu0 0.0
        %6741 = vmatmul.mubr.f32.gmra.mrb[0].mxu0 %v6575
        %v6742 = vpop.f32.mrb[0].mxu0
        %v6743 = vadd.f32 0.0, %v6742
        %v6744 = vpop.f32.mrb[0].mxu0
        %6745 = vmatprep.mubr.f32.mxu0 0.0
        %6746 = vmatmul.mubr.f32.gmra.mrb[0].mxu0 %v6578
        %v6747 = vpop.f32.mrb[0].mxu0
        %v6748 = vadd.f32 0.0, %v6747
        %v6749 = vpop.f32.mrb[0].mxu0
        %6750 = vmatprep.mubr.f32.mxu0 0.0
        %6751 = vmatmul.mubr.f32.gmra.mrb[0].mxu0 %v6581
        %v6752 = vpop.f32.mrb[0].mxu0
        %v6753 = vadd.f32 0.0, %v6752
        %v6754 = vpop.f32.mrb[0].mxu0
        %6755 = vmatprep.mubr.f32.mxu0 0.0
        %6756 = vmatmul.mubr.f32.gmra.mrb[0].mxu0 %v6584
        %v6757 = vpop.f32.mrb[0].mxu0
        %v6758 = vadd.f32 0.0, %v6757
        %v6759 = vpop.f32.mrb[0].mxu0
        %6760 = vmatprep.mubr.f32.mxu0 0.0
        %6761 = vmatmul.mubr.f32.gmra.mrb[0].mxu0 %v6587
        %v6762 = vpop.f32.mrb[0].mxu0
        %v6763 = vadd.f32 0.0, %v6762
        %v6764 = vpop.f32.mrb[0].mxu0
        %6765 = vmatprep.mubr.f32.mxu0 0.0
        %6766 = vmatmul.mubr.f32.gmra.mrb[0].mxu0 %v6590
        %v6767 = vpop.f32.mrb[0].mxu0
        %v6768 = vadd.f32 0.0, %v6767
        %v6769 = vpop.f32.mrb[0].mxu0
        %6770 = vmatprep.mubr.f32.mxu0 0.0
        %6771 = vmatmul.mubr.f32.gmra.mrb[0].mxu0 %v6593
        %v6772 = vpop.f32.mrb[0].mxu0
        %v6773 = vadd.f32 0.0, %v6772
        %v6774 = vpop.f32.mrb[0].mxu0
        %6775 = vmatprep.mubr.f32.mxu0 0.0
        %6776 = vmatmul.mubr.f32.gmra.mrb[0].mxu0 %v6596
        %v6777 = vpop.f32.mrb[0].mxu0
        %v6778 = vadd.f32 0.0, %v6777
        %v6779 = vpop.f32.mrb[0].mxu0
        %6780 = vmatprep.mubr.f32.mxu0 0.0
        %6781 = vmatmul.mubr.f32.gmra.mrb[0].mxu0 %v6599
        %v6782 = vpop.f32.mrb[0].mxu0
        %v6783 = vadd.f32 0.0, %v6782
        %v6784 = vpop.f32.mrb[0].mxu0
        %6785 = vmatprep.mubr.f32.mxu0 0.0
        %6786 = vmatmul.mubr.f32.gmra.mrb[0].mxu0 %v6602
        %v6787 = vpop.f32.mrb[0].mxu0
        %v6788 = vadd.f32 0.0, %v6787
        %v6789 = vpop.f32.mrb[0].mxu0
        %6790 = vmatprep.mubr.f32.mxu0 0.0
        %6791 = vmatmul.mubr.f32.gmra.mrb[0].mxu0 %v6605
        %v6792 = vpop.f32.mrb[0].mxu0
        %v6793 = vadd.f32 0.0, %v6792
        %v6794 = vpop.f32.mrb[0].mxu0
        %6795 = vmatprep.mubr.f32.mxu0 0.0
        %6796 = vmatmul.mubr.f32.gmra.mrb[0].mxu0 %v6608
        %v6797 = vpop.f32.mrb[0].mxu0
        %v6798 = vadd.f32 0.0, %v6797
        %v6799 = vpop.f32.mrb[0].mxu0
        %6800 = vmatprep.mubr.f32.mxu0 0.0
        %6801 = vmatmul.mubr.f32.gmra.mrb[0].mxu0 %v6611
        %v6802 = vpop.f32.mrb[0].mxu0
        %v6803 = vadd.f32 0.0, %v6802
        %v6804 = vpop.f32.mrb[0].mxu0
        %6805 = vmatprep.mubr.f32.mxu0 0.0
        %6806 = vmatmul.mubr.f32.gmra.mrb[0].mxu0 %v6614
        %v6807 = vpop.f32.mrb[0].mxu0
        %v6808 = vadd.f32 0.0, %v6807
        %v6809 = vpop.f32.mrb[0].mxu0
        %6810 = vmatprep.mubr.f32.mxu0 0.0
        %6811 = vmatmul.mubr.f32.gmra.mrb[0].mxu0 %v6617
        %v6812 = vpop.f32.mrb[0].mxu0
        %v6813 = vadd.f32 0.0, %v6812
        %v6814 = vpop.f32.mrb[0].mxu0
        %6815 = vmatprep.mubr.f32.mxu0 0.0
        %6816 = vmatmul.mubr.f32.gmra.mrb[0].mxu0 %v6620
        %v6817 = vpop.f32.mrb[0].mxu0
        %v6818 = vadd.f32 0.0, %v6817
        %v6819 = vpop.f32.mrb[0].mxu0
        %6820 = vmatprep.mubr.f32.mxu0 0.0
        %6821 = vmatmul.mubr.f32.gmra.mrb[0].mxu0 %v6623
        %v6822 = vpop.f32.mrb[0].mxu0
        %v6823 = vadd.f32 0.0, %v6822
        %v6824 = vpop.f32.mrb[0].mxu0
        %6825 = vmatprep.mubr.f32.mxu0 0.0
        %6826 = vmatmul.mubr.f32.gmra.mrb[0].mxu0 %v6626
        %v6827 = vpop.f32.mrb[0].mxu0
        %v6828 = vadd.f32 0.0, %v6827
        %v6829 = vpop.f32.mrb[0].mxu0
        %6830 = vmatprep.mubr.f32.mxu0 0.0
        %6831 = vmatmul.mubr.f32.gmra.mrb[0].mxu0 %v6629
        %v6832 = vpop.f32.mrb[0].mxu0
        %v6833 = vadd.f32 0.0, %v6832
        %v6834 = vpop.f32.mrb[0].mxu0
        %6835 = vmatprep.mubr.f32.mxu0 0.0
        %6836 = vmatmul.mubr.f32.gmra.mrb[0].mxu0 %v6632
        %v6837 = vpop.f32.mrb[0].mxu0
        %v6838 = vadd.f32 0.0, %v6837
        %v6839 = vpop.f32.mrb[0].mxu0
        %6840 = vmatprep.mubr.f32.mxu0 0.0
        %6841 = vmatmul.mubr.f32.gmra.mrb[0].mxu0 %v6635
        %v6842 = vpop.f32.mrb[0].mxu0
        %v6843 = vadd.f32 0.0, %v6842
        %v6844 = vpop.f32.mrb[0].mxu0
        %6845 = vmatprep.mubr.f32.mxu0 0.0
        %6846 = vmatmul.mubr.f32.gmra.mrb[0].mxu0 %v6638
        %v6847 = vpop.f32.mrb[0].mxu0
        %v6848 = vadd.f32 0.0, %v6847
        %v6849 = vpop.f32.mrb[0].mxu0
        %6850 = vmatprep.mubr.f32.mxu0 0.0
        %6851 = vmatmul.mubr.f32.gmra.mrb[0].mxu0 %v6641
        %v6852 = vpop.f32.mrb[0].mxu0
        %v6853 = vadd.f32 0.0, %v6852
        %v6854 = vpop.f32.mrb[0].mxu0
        %6855 = vmatprep.mubr.f32.mxu0 0.0
        %6856 = vmatmul.mubr.f32.gmra.mrb[0].mxu0 %v6644
        %v6857 = vpop.f32.mrb[0].mxu0
        %v6858 = vadd.f32 0.0, %v6857
        %v6859 = vpop.f32.mrb[0].mxu0
        %6860 = vmatprep.mubr.f32.mxu0 0.0
        %6861 = vmatmul.mubr.f32.gmra.mrb[0].mxu0 %v6647
        %v6862 = vpop.f32.mrb[0].mxu0
        %v6863 = vadd.f32 0.0, %v6862
        %v6864 = vpop.f32.mrb[0].mxu0
        %6865 = vmatprep.mubr.f32.mxu0 0.0
        %6866 = vmatmul.mubr.f32.gmra.mrb[0].mxu0 %v6650
        %v6867 = vpop.f32.mrb[0].mxu0
        %v6868 = vadd.f32 0.0, %v6867
        %v6869 = vpop.f32.mrb[0].mxu0
        %6870 = vmatprep.mubr.f32.mxu0 0.0
        %6871 = vmatmul.mubr.f32.gmra.mrb[0].mxu0 %v6653
        %v6872 = vpop.f32.mrb[0].mxu0
        %v6873 = vadd.f32 0.0, %v6872
        %v6874 = vpop.f32.mrb[0].mxu0
        %6875 = vmatprep.mubr.f32.mxu0 0.0
        %6876 = vmatmul.mubr.f32.gmra.mrb[0].mxu0 %v6656
        %v6877 = vpop.f32.mrb[0].mxu0
        %v6878 = vadd.f32 0.0, %v6877
        %v6879 = vpop.f32.mrb[0].mxu0
        %6880 = vmatprep.mubr.f32.mxu0 0.0
        %6881 = vmatmul.mubr.f32.gmra.mrb[0].mxu0 %v6659
        %v6882 = vpop.f32.mrb[0].mxu0
        %v6883 = vadd.f32 0.0, %v6882
        %v6884 = vpop.f32.mrb[0].mxu0
        %6885 = vdwg.mxu0
        %v6886 = vadd.f32 %v6499, %v6728
        %v6887 = vadd.f32 %v6500, %v6733
        %v6888 = vadd.f32 %v6501, %v6738
        %v6889 = vadd.f32 %v6502, %v6743
        %v6890 = vadd.f32 %v6503, %v6748
        %v6891 = vadd.f32 %v6504, %v6753
        %v6892 = vadd.f32 %v6505, %v6758
        %v6893 = vadd.f32 %v6506, %v6763
        %v6894 = vadd.f32 %v6507, %v6768
        %v6895 = vadd.f32 %v6508, %v6773
        %v6896 = vadd.f32 %v6509, %v6778
        %v6897 = vadd.f32 %v6510, %v6783
        %v6898 = vadd.f32 %v6511, %v6788
        %v6899 = vadd.f32 %v6512, %v6793
        %v6900 = vadd.f32 %v6513, %v6798
        %v6901 = vadd.f32 %v6514, %v6803
        %v6902 = vadd.f32 %v6515, %v6808
        %v6903 = vadd.f32 %v6516, %v6813
        %v6904 = vadd.f32 %v6517, %v6818
        %v6905 = vadd.f32 %v6518, %v6823
        %v6906 = vadd.f32 %v6519, %v6828
        %v6907 = vadd.f32 %v6520, %v6833
        %v6908 = vadd.f32 %v6521, %v6838
        %v6909 = vadd.f32 %v6522, %v6843
        %v6910 = vadd.f32 %v6523, %v6848
        %v6911 = vadd.f32 %v6524, %v6853
        %v6912 = vadd.f32 %v6525, %v6858
        %v6913 = vadd.f32 %v6526, %v6863
        %v6914 = vadd.f32 %v6527, %v6868
        %v6915 = vadd.f32 %v6528, %v6873
        %v6916 = vadd.f32 %v6529, %v6878
        %v6917 = vadd.f32 %v6530, %v6883
        %v6918 = vld [vmem:[%s6143 + $0x2] sm:$0xff]
        %v6919 = vld [vmem:[%s6143 + $0xa] sm:$0xff]
        %v6920 = vld [vmem:[%s6143 + $0x1a] sm:$0xff]
        %v6921 = vld [vmem:[%s6143 + $0x22] sm:$0xff]
        %v6922 = vld [vmem:[%s6143 + $0x32] sm:$0xff]
        %v6923 = vld [vmem:[%s6143 + $0x3a] sm:$0xff]
        %v6924 = vld [vmem:[%s6143 + $0x4a] sm:$0xff]
        %v6925 = vld [vmem:[%s6143 + $0x52] sm:$0xff]
        %v6926 = vld [vmem:[%s6143 + $0x62] sm:$0xff]
        %v6927 = vld [vmem:[%s6143 + $0x6a] sm:$0xff]
        %v6928 = vld [vmem:[%s6143 + $0x7a] sm:$0xff]
        %v6929 = vld [vmem:[%s6143 + $0x82] sm:$0xff]
        %v6930 = vld [vmem:[%s6143 + $0x92] sm:$0xff]
        %v6931 = vld [vmem:[%s6143 + $0x9a] sm:$0xff]
        %v6932 = vld [vmem:[%s6143 + $0xaa] sm:$0xff]
        %v6933 = vld [vmem:[%s6143 + $0xb2] sm:$0xff]
        %v6934 = vld [vmem:[%s6143 + $0xc2] sm:$0xff]
        %v6935 = vld [vmem:[%s6143 + $0xca] sm:$0xff]
        %v6936 = vld [vmem:[%s6143 + $0xda] sm:$0xff]
        %v6937 = vld [vmem:[%s6143 + $0xe2] sm:$0xff]
        %v6938 = vld [vmem:[%s6143 + $0xf2] sm:$0xff]
        %v6939 = vld [vmem:[%s6143 + $0xfa] sm:$0xff]
        %v6940 = vld [vmem:[%s6143 + $0x10a] sm:$0xff]
        %v6941 = vld [vmem:[%s6143 + $0x112] sm:$0xff]
        %v6942 = vld [vmem:[%s6143 + $0x122] sm:$0xff]
        %v6943 = vld [vmem:[%s6143 + $0x12a] sm:$0xff]
        %v6944 = vld [vmem:[%s6143 + $0x13a] sm:$0xff]
        %v6945 = vld [vmem:[%s6143 + $0x142] sm:$0xff]
        %v6946 = vld [vmem:[%s6143 + $0x152] sm:$0xff]
        %v6947 = vld [vmem:[%s6143 + $0x15a] sm:$0xff]
        %v6948 = vld [vmem:[%s6143 + $0x16a] sm:$0xff]
        %v6949 = vld [vmem:[%s6143 + $0x172] sm:$0xff]
        %s6950 = scalar_lea.vmem %s3, 64
        %v6951 = vld [vmem:[%s6950] sm:$0xff]
        %v6953 = vsel %vm3807, %v6918, 0
        %v6956 = vsel %vm3807, %v6919, 0
        %v6959 = vsel %vm3807, %v6920, 0
        %v6962 = vsel %vm3807, %v6921, 0
        %v6965 = vsel %vm3807, %v6922, 0
        %v6968 = vsel %vm3807, %v6923, 0
        %v6971 = vsel %vm3807, %v6924, 0
        %v6974 = vsel %vm3807, %v6925, 0
        %v6977 = vsel %vm3807, %v6926, 0
        %v6980 = vsel %vm3807, %v6927, 0
        %v6983 = vsel %vm3807, %v6928, 0
        %v6986 = vsel %vm3807, %v6929, 0
        %v6989 = vsel %vm3807, %v6930, 0
        %v6992 = vsel %vm3807, %v6931, 0
        %v6995 = vsel %vm3807, %v6932, 0
        %v6998 = vsel %vm3807, %v6933, 0
        %v7001 = vsel %vm3807, %v6934, 0
        %v7004 = vsel %vm3807, %v6935, 0
        %v7007 = vsel %vm3807, %v6936, 0
        %v7010 = vsel %vm3807, %v6937, 0
        %v7013 = vsel %vm3807, %v6938, 0
        %v7016 = vsel %vm3807, %v6939, 0
        %v7019 = vsel %vm3807, %v6940, 0
        %v7022 = vsel %vm3807, %v6941, 0
        %v7025 = vsel %vm3807, %v6942, 0
        %v7028 = vsel %vm3807, %v6943, 0
        %v7031 = vsel %vm3807, %v6944, 0
        %v7034 = vsel %vm3807, %v6945, 0
        %v7037 = vsel %vm3807, %v6946, 0
        %v7040 = vsel %vm3807, %v6947, 0
        %v7043 = vsel %vm3807, %v6948, 0
        %v7046 = vsel %vm3807, %v6949, 0
        %7048 = vmatprep.subr.mxu0 0.0
        %7049 = vmatpush1.msra.mxu0 %v6951
        %7050 = vmatprep.subr.mxu0 0.0
        %7051 = vmatpush1.msra.mxu0 0.0
        %7052 = vmatprep.subr.mxu0 0.0
        %7053 = vmatpush1.msra.mxu0 0.0
        %7054 = vmatprep.subr.mxu0 0.0
        %7055 = vmatpush1.msra.mxu0 0.0
        %7056 = vmatprep.subr.mxu0 0.0
        %7057 = vmatpush1.msra.mxu0 0.0
        %7058 = vmatprep.subr.mxu0 0.0
        %7059 = vmatpush1.msra.mxu0 0.0
        %7060 = vmatprep.subr.mxu0 0.0
        %7061 = vmatpush1.msra.mxu0 0.0
        %7062 = vmatprep.subr.mxu0 0.0
        %7063 = vmatpush1.msra.mxu0 0.0
        %7064 = vmatprep.subr.mxu0 0.0
        %7065 = vmatpush1.msra.mxu0 0.0
        %7066 = vmatprep.subr.mxu0 0.0
        %7067 = vmatpush1.msra.mxu0 0.0
        %7068 = vmatprep.subr.mxu0 0.0
        %7069 = vmatpush1.msra.mxu0 0.0
        %7070 = vmatprep.subr.mxu0 0.0
        %7071 = vmatpush1.msra.mxu0 0.0
        %7072 = vmatprep.subr.mxu0 0.0
        %7073 = vmatpush1.msra.mxu0 0.0
        %7074 = vmatprep.subr.mxu0 0.0
        %7075 = vmatpush1.msra.mxu0 0.0
        %7076 = vmatprep.subr.mxu0 0.0
        %7077 = vmatpush1.msra.mxu0 0.0
        %7078 = vmatprep.subr.mxu0 0.0
        %7079 = vmatpush1.msra.mxu0 0.0
        %7080 = vmatprep.subr.mxu0 0.0
        %7081 = vmatpush1.msra.mxu0 0.0
        %7082 = vmatprep.subr.mxu0 0.0
        %7083 = vmatpush1.msra.mxu0 0.0
        %7084 = vmatprep.subr.mxu0 0.0
        %7085 = vmatpush1.msra.mxu0 0.0
        %7086 = vmatprep.subr.mxu0 0.0
        %7087 = vmatpush1.msra.mxu0 0.0
        %7088 = vmatprep.subr.mxu0 0.0
        %7089 = vmatpush1.msra.mxu0 0.0
        %7090 = vmatprep.subr.mxu0 0.0
        %7091 = vmatpush1.msra.mxu0 0.0
        %7092 = vmatprep.subr.mxu0 0.0
        %7093 = vmatpush1.msra.mxu0 0.0
        %7094 = vmatprep.subr.mxu0 0.0
        %7095 = vmatpush1.msra.mxu0 0.0
        %7096 = vmatprep.subr.mxu0 0.0
        %7097 = vmatpush1.msra.mxu0 0.0
        %7098 = vmatprep.subr.mxu0 0.0
        %7099 = vmatpush1.msra.mxu0 0.0
        %7100 = vmatprep.subr.mxu0 0.0
        %7101 = vmatpush1.msra.mxu0 0.0
        %7102 = vmatprep.subr.mxu0 0.0
        %7103 = vmatpush1.msra.mxu0 0.0
        %7104 = vmatprep.subr.mxu0 0.0
        %7105 = vmatpush1.msra.mxu0 0.0
        %7106 = vmatprep.subr.mxu0 0.0
        %7107 = vmatpush1.msra.mxu0 0.0
        %7108 = vmatprep.subr.mxu0 0.0
        %7109 = vmatpush1.msra.mxu0 0.0
        %7110 = vmatprep.subr.mxu0 0.0
        %7111 = vmatpush1.msra.mxu0 0.0
        %7112 = vmatprep.mubr.f32.mxu0 0.0
        %7113 = vmatmul.mubr.f32.gmra.mrb[0].mxu0 %v6953
        %v7114 = vpop.f32.mrb[0].mxu0
        %v7115 = vadd.f32 0.0, %v7114
        %v7116 = vpop.f32.mrb[0].mxu0
        %7117 = vmatprep.mubr.f32.mxu0 0.0
        %7118 = vmatmul.mubr.f32.gmra.mrb[0].mxu0 %v6956
        %v7119 = vpop.f32.mrb[0].mxu0
        %v7120 = vadd.f32 0.0, %v7119
        %v7121 = vpop.f32.mrb[0].mxu0
        %7122 = vmatprep.mubr.f32.mxu0 0.0
        %7123 = vmatmul.mubr.f32.gmra.mrb[0].mxu0 %v6959
        %v7124 = vpop.f32.mrb[0].mxu0
        %v7125 = vadd.f32 0.0, %v7124
        %v7126 = vpop.f32.mrb[0].mxu0
        %7127 = vmatprep.mubr.f32.mxu0 0.0
        %7128 = vmatmul.mubr.f32.gmra.mrb[0].mxu0 %v6962
        %v7129 = vpop.f32.mrb[0].mxu0
        %v7130 = vadd.f32 0.0, %v7129
        %v7131 = vpop.f32.mrb[0].mxu0
        %7132 = vmatprep.mubr.f32.mxu0 0.0
        %7133 = vmatmul.mubr.f32.gmra.mrb[0].mxu0 %v6965
        %v7134 = vpop.f32.mrb[0].mxu0
        %v7135 = vadd.f32 0.0, %v7134
        %v7136 = vpop.f32.mrb[0].mxu0
        %7137 = vmatprep.mubr.f32.mxu0 0.0
        %7138 = vmatmul.mubr.f32.gmra.mrb[0].mxu0 %v6968
        %v7139 = vpop.f32.mrb[0].mxu0
        %v7140 = vadd.f32 0.0, %v7139
        %v7141 = vpop.f32.mrb[0].mxu0
        %7142 = vmatprep.mubr.f32.mxu0 0.0
        %7143 = vmatmul.mubr.f32.gmra.mrb[0].mxu0 %v6971
        %v7144 = vpop.f32.mrb[0].mxu0
        %v7145 = vadd.f32 0.0, %v7144
        %v7146 = vpop.f32.mrb[0].mxu0
        %7147 = vmatprep.mubr.f32.mxu0 0.0
        %7148 = vmatmul.mubr.f32.gmra.mrb[0].mxu0 %v6974
        %v7149 = vpop.f32.mrb[0].mxu0
        %v7150 = vadd.f32 0.0, %v7149
        %v7151 = vpop.f32.mrb[0].mxu0
        %7152 = vmatprep.mubr.f32.mxu0 0.0
        %7153 = vmatmul.mubr.f32.gmra.mrb[0].mxu0 %v6977
        %v7154 = vpop.f32.mrb[0].mxu0
        %v7155 = vadd.f32 0.0, %v7154
        %v7156 = vpop.f32.mrb[0].mxu0
        %7157 = vmatprep.mubr.f32.mxu0 0.0
        %7158 = vmatmul.mubr.f32.gmra.mrb[0].mxu0 %v6980
        %v7159 = vpop.f32.mrb[0].mxu0
        %v7160 = vadd.f32 0.0, %v7159
        %v7161 = vpop.f32.mrb[0].mxu0
        %7162 = vmatprep.mubr.f32.mxu0 0.0
        %7163 = vmatmul.mubr.f32.gmra.mrb[0].mxu0 %v6983
        %v7164 = vpop.f32.mrb[0].mxu0
        %v7165 = vadd.f32 0.0, %v7164
        %v7166 = vpop.f32.mrb[0].mxu0
        %7167 = vmatprep.mubr.f32.mxu0 0.0
        %7168 = vmatmul.mubr.f32.gmra.mrb[0].mxu0 %v6986
        %v7169 = vpop.f32.mrb[0].mxu0
        %v7170 = vadd.f32 0.0, %v7169
        %v7171 = vpop.f32.mrb[0].mxu0
        %7172 = vmatprep.mubr.f32.mxu0 0.0
        %7173 = vmatmul.mubr.f32.gmra.mrb[0].mxu0 %v6989
        %v7174 = vpop.f32.mrb[0].mxu0
        %v7175 = vadd.f32 0.0, %v7174
        %v7176 = vpop.f32.mrb[0].mxu0
        %7177 = vmatprep.mubr.f32.mxu0 0.0
        %7178 = vmatmul.mubr.f32.gmra.mrb[0].mxu0 %v6992
        %v7179 = vpop.f32.mrb[0].mxu0
        %v7180 = vadd.f32 0.0, %v7179
        %v7181 = vpop.f32.mrb[0].mxu0
        %7182 = vmatprep.mubr.f32.mxu0 0.0
        %7183 = vmatmul.mubr.f32.gmra.mrb[0].mxu0 %v6995
        %v7184 = vpop.f32.mrb[0].mxu0
        %v7185 = vadd.f32 0.0, %v7184
        %v7186 = vpop.f32.mrb[0].mxu0
        %7187 = vmatprep.mubr.f32.mxu0 0.0
        %7188 = vmatmul.mubr.f32.gmra.mrb[0].mxu0 %v6998
        %v7189 = vpop.f32.mrb[0].mxu0
        %v7190 = vadd.f32 0.0, %v7189
        %v7191 = vpop.f32.mrb[0].mxu0
        %7192 = vmatprep.mubr.f32.mxu0 0.0
        %7193 = vmatmul.mubr.f32.gmra.mrb[0].mxu0 %v7001
        %v7194 = vpop.f32.mrb[0].mxu0
        %v7195 = vadd.f32 0.0, %v7194
        %v7196 = vpop.f32.mrb[0].mxu0
        %7197 = vmatprep.mubr.f32.mxu0 0.0
        %7198 = vmatmul.mubr.f32.gmra.mrb[0].mxu0 %v7004
        %v7199 = vpop.f32.mrb[0].mxu0
        %v7200 = vadd.f32 0.0, %v7199
        %v7201 = vpop.f32.mrb[0].mxu0
        %7202 = vmatprep.mubr.f32.mxu0 0.0
        %7203 = vmatmul.mubr.f32.gmra.mrb[0].mxu0 %v7007
        %v7204 = vpop.f32.mrb[0].mxu0
        %v7205 = vadd.f32 0.0, %v7204
        %v7206 = vpop.f32.mrb[0].mxu0
        %7207 = vmatprep.mubr.f32.mxu0 0.0
        %7208 = vmatmul.mubr.f32.gmra.mrb[0].mxu0 %v7010
        %v7209 = vpop.f32.mrb[0].mxu0
        %v7210 = vadd.f32 0.0, %v7209
        %v7211 = vpop.f32.mrb[0].mxu0
        %7212 = vmatprep.mubr.f32.mxu0 0.0
        %7213 = vmatmul.mubr.f32.gmra.mrb[0].mxu0 %v7013
        %v7214 = vpop.f32.mrb[0].mxu0
        %v7215 = vadd.f32 0.0, %v7214
        %v7216 = vpop.f32.mrb[0].mxu0
        %7217 = vmatprep.mubr.f32.mxu0 0.0
        %7218 = vmatmul.mubr.f32.gmra.mrb[0].mxu0 %v7016
        %v7219 = vpop.f32.mrb[0].mxu0
        %v7220 = vadd.f32 0.0, %v7219
        %v7221 = vpop.f32.mrb[0].mxu0
        %7222 = vmatprep.mubr.f32.mxu0 0.0
        %7223 = vmatmul.mubr.f32.gmra.mrb[0].mxu0 %v7019
        %v7224 = vpop.f32.mrb[0].mxu0
        %v7225 = vadd.f32 0.0, %v7224
        %v7226 = vpop.f32.mrb[0].mxu0
        %7227 = vmatprep.mubr.f32.mxu0 0.0
        %7228 = vmatmul.mubr.f32.gmra.mrb[0].mxu0 %v7022
        %v7229 = vpop.f32.mrb[0].mxu0
        %v7230 = vadd.f32 0.0, %v7229
        %v7231 = vpop.f32.mrb[0].mxu0
        %7232 = vmatprep.mubr.f32.mxu0 0.0
        %7233 = vmatmul.mubr.f32.gmra.mrb[0].mxu0 %v7025
        %v7234 = vpop.f32.mrb[0].mxu0
        %v7235 = vadd.f32 0.0, %v7234
        %v7236 = vpop.f32.mrb[0].mxu0
        %7237 = vmatprep.mubr.f32.mxu0 0.0
        %7238 = vmatmul.mubr.f32.gmra.mrb[0].mxu0 %v7028
        %v7239 = vpop.f32.mrb[0].mxu0
        %v7240 = vadd.f32 0.0, %v7239
        %v7241 = vpop.f32.mrb[0].mxu0
        %7242 = vmatprep.mubr.f32.mxu0 0.0
        %7243 = vmatmul.mubr.f32.gmra.mrb[0].mxu0 %v7031
        %v7244 = vpop.f32.mrb[0].mxu0
        %v7245 = vadd.f32 0.0, %v7244
        %v7246 = vpop.f32.mrb[0].mxu0
        %7247 = vmatprep.mubr.f32.mxu0 0.0
        %7248 = vmatmul.mubr.f32.gmra.mrb[0].mxu0 %v7034
        %v7249 = vpop.f32.mrb[0].mxu0
        %v7250 = vadd.f32 0.0, %v7249
        %v7251 = vpop.f32.mrb[0].mxu0
        %7252 = vmatprep.mubr.f32.mxu0 0.0
        %7253 = vmatmul.mubr.f32.gmra.mrb[0].mxu0 %v7037
        %v7254 = vpop.f32.mrb[0].mxu0
        %v7255 = vadd.f32 0.0, %v7254
        %v7256 = vpop.f32.mrb[0].mxu0
        %7257 = vmatprep.mubr.f32.mxu0 0.0
        %7258 = vmatmul.mubr.f32.gmra.mrb[0].mxu0 %v7040
        %v7259 = vpop.f32.mrb[0].mxu0
        %v7260 = vadd.f32 0.0, %v7259
        %v7261 = vpop.f32.mrb[0].mxu0
        %7262 = vmatprep.mubr.f32.mxu0 0.0
        %7263 = vmatmul.mubr.f32.gmra.mrb[0].mxu0 %v7043
        %v7264 = vpop.f32.mrb[0].mxu0
        %v7265 = vadd.f32 0.0, %v7264
        %v7266 = vpop.f32.mrb[0].mxu0
        %7267 = vmatprep.mubr.f32.mxu0 0.0
        %7268 = vmatmul.mubr.f32.gmra.mrb[0].mxu0 %v7046
        %v7269 = vpop.f32.mrb[0].mxu0
        %v7270 = vadd.f32 0.0, %v7269
        %v7271 = vpop.f32.mrb[0].mxu0
        %7272 = vdwg.mxu0
        %v7273 = vadd.f32 %v6886, %v7115
        %v7274 = vadd.f32 %v6887, %v7120
        %v7275 = vadd.f32 %v6888, %v7125
        %v7276 = vadd.f32 %v6889, %v7130
        %v7277 = vadd.f32 %v6890, %v7135
        %v7278 = vadd.f32 %v6891, %v7140
        %v7279 = vadd.f32 %v6892, %v7145
        %v7280 = vadd.f32 %v6893, %v7150
        %v7281 = vadd.f32 %v6894, %v7155
        %v7282 = vadd.f32 %v6895, %v7160
        %v7283 = vadd.f32 %v6896, %v7165
        %v7284 = vadd.f32 %v6897, %v7170
        %v7285 = vadd.f32 %v6898, %v7175
        %v7286 = vadd.f32 %v6899, %v7180
        %v7287 = vadd.f32 %v6900, %v7185
        %v7288 = vadd.f32 %v6901, %v7190
        %v7289 = vadd.f32 %v6902, %v7195
        %v7290 = vadd.f32 %v6903, %v7200
        %v7291 = vadd.f32 %v6904, %v7205
        %v7292 = vadd.f32 %v6905, %v7210
        %v7293 = vadd.f32 %v6906, %v7215
        %v7294 = vadd.f32 %v6907, %v7220
        %v7295 = vadd.f32 %v6908, %v7225
        %v7296 = vadd.f32 %v6909, %v7230
        %v7297 = vadd.f32 %v6910, %v7235
        %v7298 = vadd.f32 %v6911, %v7240
        %v7299 = vadd.f32 %v6912, %v7245
        %v7300 = vadd.f32 %v6913, %v7250
        %v7301 = vadd.f32 %v6914, %v7255
        %v7302 = vadd.f32 %v6915, %v7260
        %v7303 = vadd.f32 %v6916, %v7265
        %v7304 = vadd.f32 %v6917, %v7270
        %v7305 = vld [vmem:[%s4] sm:$0x1]
        %v7307 = vlaneseq
        %v7308 = vshrl.u32 %v7307, 7
        %v7309 = vsub.s32 0, %v7308
        %v7310 = vrot.slane %v7305, %v7309
        %v7312 = vadd.f32 %v7273, %v7310
        %v7313 = vadd.f32 %v7274, %v7310
        %v7314 = vadd.f32 %v7275, %v7310
        %v7315 = vadd.f32 %v7276, %v7310
        %v7316 = vadd.f32 %v7277, %v7310
        %v7317 = vadd.f32 %v7278, %v7310
        %v7318 = vadd.f32 %v7279, %v7310
        %v7319 = vadd.f32 %v7280, %v7310
        %v7320 = vadd.f32 %v7281, %v7310
        %v7321 = vadd.f32 %v7282, %v7310
        %v7322 = vadd.f32 %v7283, %v7310
        %v7323 = vadd.f32 %v7284, %v7310
        %v7324 = vadd.f32 %v7285, %v7310
        %v7325 = vadd.f32 %v7286, %v7310
        %v7326 = vadd.f32 %v7287, %v7310
        %v7327 = vadd.f32 %v7288, %v7310
        %v7328 = vadd.f32 %v7289, %v7310
        %v7329 = vadd.f32 %v7290, %v7310
        %v7330 = vadd.f32 %v7291, %v7310
        %v7331 = vadd.f32 %v7292, %v7310
        %v7332 = vadd.f32 %v7293, %v7310
        %v7333 = vadd.f32 %v7294, %v7310
        %v7334 = vadd.f32 %v7295, %v7310
        %v7335 = vadd.f32 %v7296, %v7310
        %v7336 = vadd.f32 %v7297, %v7310
        %v7337 = vadd.f32 %v7298, %v7310
        %v7338 = vadd.f32 %v7299, %v7310
        %v7339 = vadd.f32 %v7300, %v7310
        %v7340 = vadd.f32 %v7301, %v7310
        %v7341 = vadd.f32 %v7302, %v7310
        %v7342 = vadd.f32 %v7303, %v7310
        %v7343 = vadd.f32 %v7304, %v7310
        %vm7344 = vcmp.ge.f32.partialorder %v7312, 0.0
        %vm7345 = vcmp.ge.f32.partialorder %v7313, 0.0
        %vm7346 = vcmp.ge.f32.partialorder %v7314, 0.0
        %vm7347 = vcmp.ge.f32.partialorder %v7315, 0.0
        %vm7348 = vcmp.ge.f32.partialorder %v7316, 0.0
        %vm7349 = vcmp.ge.f32.partialorder %v7317, 0.0
        %vm7350 = vcmp.ge.f32.partialorder %v7318, 0.0
        %vm7351 = vcmp.ge.f32.partialorder %v7319, 0.0
        %vm7352 = vcmp.ge.f32.partialorder %v7320, 0.0
        %vm7353 = vcmp.ge.f32.partialorder %v7321, 0.0
        %vm7354 = vcmp.ge.f32.partialorder %v7322, 0.0
        %vm7355 = vcmp.ge.f32.partialorder %v7323, 0.0
        %vm7356 = vcmp.ge.f32.partialorder %v7324, 0.0
        %vm7357 = vcmp.ge.f32.partialorder %v7325, 0.0
        %vm7358 = vcmp.ge.f32.partialorder %v7326, 0.0
        %vm7359 = vcmp.ge.f32.partialorder %v7327, 0.0
        %vm7360 = vcmp.ge.f32.partialorder %v7328, 0.0
        %vm7361 = vcmp.ge.f32.partialorder %v7329, 0.0
        %vm7362 = vcmp.ge.f32.partialorder %v7330, 0.0
        %vm7363 = vcmp.ge.f32.partialorder %v7331, 0.0
        %vm7364 = vcmp.ge.f32.partialorder %v7332, 0.0
        %vm7365 = vcmp.ge.f32.partialorder %v7333, 0.0
        %vm7366 = vcmp.ge.f32.partialorder %v7334, 0.0
        %vm7367 = vcmp.ge.f32.partialorder %v7335, 0.0
        %vm7368 = vcmp.ge.f32.partialorder %v7336, 0.0
        %vm7369 = vcmp.ge.f32.partialorder %v7337, 0.0
        %vm7370 = vcmp.ge.f32.partialorder %v7338, 0.0
        %vm7371 = vcmp.ge.f32.partialorder %v7339, 0.0
        %vm7372 = vcmp.ge.f32.partialorder %v7340, 0.0
        %vm7373 = vcmp.ge.f32.partialorder %v7341, 0.0
        %vm7374 = vcmp.ge.f32.partialorder %v7342, 0.0
        %vm7375 = vcmp.ge.f32.partialorder %v7343, 0.0
        %v7376 = vmul.f32 %v7312, 0.01
        %v7377 = vmul.f32 %v7313, 0.01
        %v7378 = vmul.f32 %v7314, 0.01
        %v7379 = vmul.f32 %v7315, 0.01
        %v7380 = vmul.f32 %v7316, 0.01
        %v7381 = vmul.f32 %v7317, 0.01
        %v7382 = vmul.f32 %v7318, 0.01
        %v7383 = vmul.f32 %v7319, 0.01
        %v7384 = vmul.f32 %v7320, 0.01
        %v7385 = vmul.f32 %v7321, 0.01
        %v7386 = vmul.f32 %v7322, 0.01
        %v7387 = vmul.f32 %v7323, 0.01
        %v7388 = vmul.f32 %v7324, 0.01
        %v7389 = vmul.f32 %v7325, 0.01
        %v7390 = vmul.f32 %v7326, 0.01
        %v7391 = vmul.f32 %v7327, 0.01
        %v7392 = vmul.f32 %v7328, 0.01
        %v7393 = vmul.f32 %v7329, 0.01
        %v7394 = vmul.f32 %v7330, 0.01
        %v7395 = vmul.f32 %v7331, 0.01
        %v7396 = vmul.f32 %v7332, 0.01
        %v7397 = vmul.f32 %v7333, 0.01
        %v7398 = vmul.f32 %v7334, 0.01
        %v7399 = vmul.f32 %v7335, 0.01
        %v7400 = vmul.f32 %v7336, 0.01
        %v7401 = vmul.f32 %v7337, 0.01
        %v7402 = vmul.f32 %v7338, 0.01
        %v7403 = vmul.f32 %v7339, 0.01
        %v7404 = vmul.f32 %v7340, 0.01
        %v7405 = vmul.f32 %v7341, 0.01
        %v7406 = vmul.f32 %v7342, 0.01
        %v7407 = vmul.f32 %v7343, 0.01
        %v7408 = vsel %vm7344, %v7312, %v7376
        %v7409 = vsel %vm7345, %v7313, %v7377
        %v7410 = vsel %vm7346, %v7314, %v7378
        %v7411 = vsel %vm7347, %v7315, %v7379
        %v7412 = vsel %vm7348, %v7316, %v7380
        %v7413 = vsel %vm7349, %v7317, %v7381
        %v7414 = vsel %vm7350, %v7318, %v7382
        %v7415 = vsel %vm7351, %v7319, %v7383
        %v7416 = vsel %vm7352, %v7320, %v7384
        %v7417 = vsel %vm7353, %v7321, %v7385
        %v7418 = vsel %vm7354, %v7322, %v7386
        %v7419 = vsel %vm7355, %v7323, %v7387
        %v7420 = vsel %vm7356, %v7324, %v7388
        %v7421 = vsel %vm7357, %v7325, %v7389
        %v7422 = vsel %vm7358, %v7326, %v7390
        %v7423 = vsel %vm7359, %v7327, %v7391
        %v7424 = vsel %vm7360, %v7328, %v7392
        %v7425 = vsel %vm7361, %v7329, %v7393
        %v7426 = vsel %vm7362, %v7330, %v7394
        %v7427 = vsel %vm7363, %v7331, %v7395
        %v7428 = vsel %vm7364, %v7332, %v7396
        %v7429 = vsel %vm7365, %v7333, %v7397
        %v7430 = vsel %vm7366, %v7334, %v7398
        %v7431 = vsel %vm7367, %v7335, %v7399
        %v7432 = vsel %vm7368, %v7336, %v7400
        %v7433 = vsel %vm7369, %v7337, %v7401
        %v7434 = vsel %vm7370, %v7338, %v7402
        %v7435 = vsel %vm7371, %v7339, %v7403
        %v7436 = vsel %vm7372, %v7340, %v7404
        %v7437 = vsel %vm7373, %v7341, %v7405
        %v7438 = vsel %vm7374, %v7342, %v7406
        %v7439 = vsel %vm7375, %v7343, %v7407
        %v7440 = vadd.f32 %v7408, %v7410
        %v7441 = vadd.f32 %v7409, %v7411
        %v7442 = vadd.f32 %v7412, %v7414
        %v7443 = vadd.f32 %v7413, %v7415
        %v7444 = vadd.f32 %v7416, %v7418
        %v7445 = vadd.f32 %v7417, %v7419
        %v7446 = vadd.f32 %v7420, %v7422
        %v7447 = vadd.f32 %v7421, %v7423
        %v7448 = vadd.f32 %v7424, %v7426
        %v7449 = vadd.f32 %v7425, %v7427
        %v7450 = vadd.f32 %v7428, %v7430
        %v7451 = vadd.f32 %v7429, %v7431
        %v7452 = vadd.f32 %v7432, %v7434
        %v7453 = vadd.f32 %v7433, %v7435
        %v7454 = vadd.f32 %v7436, %v7438
        %v7455 = vadd.f32 %v7437, %v7439
        %7456 = vst.msk [vmem:[#allocation3] sm:$0xff] %vm3807, %v7440
        %7457 = vst.msk [vmem:[#allocation3 + $0x8] sm:$0xff] %vm3807, %v7441
        %7458 = vst.msk [vmem:[#allocation3 + $0x10] sm:$0xff] %vm3807, %v7442
        %7459 = vst.msk [vmem:[#allocation3 + $0x18] sm:$0xff] %vm3807, %v7443
        %7460 = vst.msk [vmem:[#allocation3 + $0x20] sm:$0xff] %vm3807, %v7444
        %7461 = vst.msk [vmem:[#allocation3 + $0x28] sm:$0xff] %vm3807, %v7445
        %7462 = vst.msk [vmem:[#allocation3 + $0x30] sm:$0xff] %vm3807, %v7446
        %7463 = vst.msk [vmem:[#allocation3 + $0x38] sm:$0xff] %vm3807, %v7447
        %7464 = vst.msk [vmem:[#allocation3 + $0x40] sm:$0xff] %vm3807, %v7448
        %7465 = vst.msk [vmem:[#allocation3 + $0x48] sm:$0xff] %vm3807, %v7449
        %7466 = vst.msk [vmem:[#allocation3 + $0x50] sm:$0xff] %vm3807, %v7450
        %7467 = vst.msk [vmem:[#allocation3 + $0x58] sm:$0xff] %vm3807, %v7451
        %7468 = vst.msk [vmem:[#allocation3 + $0x60] sm:$0xff] %vm3807, %v7452
        %7469 = vst.msk [vmem:[#allocation3 + $0x68] sm:$0xff] %vm3807, %v7453
        %7470 = vst.msk [vmem:[#allocation3 + $0x70] sm:$0xff] %vm3807, %v7454
        %7471 = vst.msk [vmem:[#allocation3 + $0x78] sm:$0xff] %vm3807, %v7455
        %v7472 = vld [vmem:[#allocation3] ss:$2 sm:$0xff]
        %s7473 = scalar_lea.vmem [#allocation3], 16
        %v7474 = vld [vmem:[%s7473] ss:$2 sm:$0xff]
        %s7475 = scalar_lea.vmem [#allocation3], 32
        %v7476 = vld [vmem:[%s7475] ss:$2 sm:$0xff]
        %s7477 = scalar_lea.vmem [#allocation3], 48
        %v7478 = vld [vmem:[%s7477] ss:$2 sm:$0xff]
        %s7479 = scalar_lea.vmem [#allocation3], 64
        %v7480 = vld [vmem:[%s7479] ss:$2 sm:$0xff]
        %s7481 = scalar_lea.vmem [#allocation3], 80
        %v7482 = vld [vmem:[%s7481] ss:$2 sm:$0xff]
        %s7483 = scalar_lea.vmem [#allocation3], 96
        %v7484 = vld [vmem:[%s7483] ss:$2 sm:$0xff]
        %s7485 = scalar_lea.vmem [#allocation3], 112
        %v7486 = vld [vmem:[%s7485] ss:$2 sm:$0xff]
        %s7487 = scalar_lea.vmem [#allocation3], 1
        %v7488 = vld [vmem:[%s7487] ss:$2 sm:$0xff]
        %s7489 = scalar_lea.vmem [#allocation3], 17
        %v7490 = vld [vmem:[%s7489] ss:$2 sm:$0xff]
        %s7491 = scalar_lea.vmem [#allocation3], 33
        %v7492 = vld [vmem:[%s7491] ss:$2 sm:$0xff]
        %s7493 = scalar_lea.vmem [#allocation3], 49
        %v7494 = vld [vmem:[%s7493] ss:$2 sm:$0xff]
        %s7495 = scalar_lea.vmem [#allocation3], 65
        %v7496 = vld [vmem:[%s7495] ss:$2 sm:$0xff]
        %s7497 = scalar_lea.vmem [#allocation3], 81
        %v7498 = vld [vmem:[%s7497] ss:$2 sm:$0xff]
        %s7499 = scalar_lea.vmem [#allocation3], 97
        %v7500 = vld [vmem:[%s7499] ss:$2 sm:$0xff]
        %s7501 = scalar_lea.vmem [#allocation3], 113
        %v7502 = vld [vmem:[%s7501] ss:$2 sm:$0xff]
        %v7503 = vadd.f32 %v7472, %v7488
        %v7504 = vadd.f32 %v7474, %v7490
        %v7505 = vadd.f32 %v7476, %v7492
        %v7506 = vadd.f32 %v7478, %v7494
        %v7507 = vadd.f32 %v7480, %v7496
        %v7508 = vadd.f32 %v7482, %v7498
        %v7509 = vadd.f32 %v7484, %v7500
        %v7510 = vadd.f32 %v7486, %v7502
        %v7511 = vmul.f32 %v7503, 0.25
        %v7512 = vmul.f32 %v7504, 0.25
        %v7513 = vmul.f32 %v7505, 0.25
        %v7514 = vmul.f32 %v7506, 0.25
        %v7515 = vmul.f32 %v7507, 0.25
        %v7516 = vmul.f32 %v7508, 0.25
        %v7517 = vmul.f32 %v7509, 0.25
        %v7518 = vmul.f32 %v7510, 0.25
        %7519 = vxpose.xlu0.b32.start [1/16] %v7511, 128
        %7520 = vxpose.xlu0.b32.cont [2/16] %v7512, 128
        %7521 = vxpose.xlu0.b32.cont [3/16] %v7513, 128
        %7522 = vxpose.xlu0.b32.cont [4/16] %v7514, 128
        %7523 = vxpose.xlu0.b32.cont [5/16] %v7515, 128
        %7524 = vxpose.xlu0.b32.cont [6/16] %v7516, 128
        %7525 = vxpose.xlu0.b32.cont [7/16] %v7517, 128
        %7526 = vxpose.xlu0.b32.cont [8/16] %v7518, 128
        %7527 = vxpose.xlu0.b32.cont [9/16] 0.0, 128
        %7528 = vxpose.xlu0.b32.cont [10/16] 0.0, 128
        %7529 = vxpose.xlu0.b32.cont [11/16] 0.0, 128
        %7530 = vxpose.xlu0.b32.cont [12/16] 0.0, 128
        %7531 = vxpose.xlu0.b32.cont [13/16] 0.0, 128
        %7532 = vxpose.xlu0.b32.cont [14/16] 0.0, 128
        %7533 = vxpose.xlu0.b32.cont [15/16] 0.0, 128
        %7534 = vxpose.xlu0.b32.end [16/16] 0.0, 128
        %v7535 = vpop.trf.xlu0
        %v7536 = vpop.trf.xlu0
        %v7537 = vpop.trf.xlu0
        %v7538 = vpop.trf.xlu0
        %v7539 = vpop.trf.xlu0
        %v7540 = vpop.trf.xlu0
        %v7541 = vpop.trf.xlu0
        %v7542 = vpop.trf.xlu0
        %v7543 = vpop.trf.xlu0
        %v7544 = vpop.trf.xlu0
        %v7545 = vpop.trf.xlu0
        %v7546 = vpop.trf.xlu0
        %v7547 = vpop.trf.xlu0
        %v7548 = vpop.trf.xlu0
        %v7549 = vpop.trf.xlu0
        %v7550 = vpop.trf.xlu0
        %vm7551 = vcmask 523264
        %7552 = vst.msk [vmem:[%s217] sm:$0xff] %vm7551, %v7535
        %s7553 = sand.u32 %s137, 1
        %s7554 = scalar_lea.sflag [#allocation5], %s7553
        %s7555 = sand.u32 %s137, 1
        %s7556 = smul.addr %s7555, 8
        %s7557 = scalar_lea.vmem [#allocation4], %s7556
        // Predicated region
        $region41: #{tpu_custom_call.1} parent=39 // pred_check
          %p7558 = pneg %p147
        $region42: #{tpu_custom_call.1} parent=39 // pred_check_branch
          %7560 = sbr.rel (%p7558) target = $region44
        $region43: #{tpu_custom_call.1} parent=39 // pred_region
          %s7562 = ssub.s32 128, 128
          %7563 = vsyncadd %s7554, %s7562
          %s7564 = smul.addr %s19, 128
          %s7565 = scalar_lea.hbm %s5, %s7564
          %s7567 = sshll.u32 %s7557, 4
          %s7568 = int_to_ptr.vmem [resolvable:$true] %s7567
          %7570 = dma.vmem_to_hbm [thread:$0]  %s7568, 128, %s7565, %s7554
        $region44: #{tpu_custom_call.1} parent=39 // pred_fallthru
          _
      $region40: #{tpu_custom_call.1} parent=5 // pred_fallthru
        _
      %p7571 = scmp.le.s32.totalorder 2, %s14
      // Predicated region
      $region45: #{tpu_custom_call.1} parent=5 // pred_check
        %p7572 = pneg %p7571
      $region46: #{tpu_custom_call.1} parent=5 // pred_check_branch
        %7574 = sbr.rel (%p7572) target = $region48
      $region47: #{tpu_custom_call.1} parent=5 // pred_region
        %s7575 = ssub.s32 %s14, 2
        // Predicated region
        $region49: #{tpu_custom_call.1} parent=47 // pred_check
          %p7576 = pneg %p153
        $region50: #{tpu_custom_call.1} parent=47 // pred_check_branch
          %7578 = sbr.rel (%p7576) target = $region52
        $region51: #{tpu_custom_call.1} parent=47 // pred_region
          %s7579 = sand.u32 %s138, 1
          %s7580 = scalar_lea.sflag [#allocation5], %s7579
          %s7581 = sand.u32 %s138, 1
          %s7582 = smul.addr %s7581, 8
          %s7583 = scalar_lea.vmem [#allocation4], %s7582
          %7584 = dma.done %s7580, 128
        $region52: #{tpu_custom_call.1} parent=47 // pred_fallthru
          _
      $region48: #{tpu_custom_call.1} parent=5 // pred_fallthru
        _
    $region6: #{tpu_custom_call.1} parent=1 // loop_footer
      %s18 = sadd.s32 1, %s14
    $region7: #{tpu_custom_call.1} parent=1 // loop_footer_branch
      %13 = sbr.rel target = $region3
    $region8: #{tpu_custom_call.1} parent=1 // loop_exit
      _
    %7585 = vsyncpa [#allocation5], 1
    %s7586 = scalar_lea.sflag [#allocation5], 1
    %7587 = vsyncpa %s7586, 1

</llo_original>
